<compile_context>
chip_gen: v7x
topology: tpu7x:2x2x1
jax: 0.10.0
libtpu: 0.0.40
codegen_flags: <defaults>
</compile_context>

<pallas_src>
import functools

import jax
import jax.numpy as jnp
from jax.experimental import pallas as pl
from jax.experimental.pallas import tpu as pltpu


# ----------------------------------------------------------------------------
# Single fused kernel: conv-as-matmul + BN(eval) + LeakyReLU + avg-pool
#                      + LSTM input projection + unrolled LSTM + final Linear.
# ----------------------------------------------------------------------------
def _classifier_kernel(p_ref, w_ref, s_ref, t_ref, wih_ref, b_ref,
                       whh_ref, wrow_ref, bout_ref, out_ref,
                       *, n_frames, hw, batch, timesteps):
    # p_ref   : (BT*HW, 9C) bf16 im2col patches
    # w_ref   : (9C, CO)    bf16 conv weight as matrix
    # s_ref, t_ref : (1, CO) f32 BN-eval affine (conv bias folded in)
    # wih_ref : (CO, 4H)    f32 LSTM input projection (transposed, gate order i,f,g,o)
    # b_ref   : (1, 4H)     f32 combined LSTM bias (b_ih + b_hh)
    # whh_ref : (H, 4H)     bf16 recurrent weights (transposed)
    # wrow_ref: (T*B, H)    f32 output-layer weight rows (row r uses w_lin[r % T])
    # bout_ref: (1, 1)      f32 output-layer bias
    # out_ref : (B, 1)      f32
    CO = w_ref.shape[1]
    Hsz = whh_ref.shape[0]

    # ---- Conv(3x3, pad 1) as one big matmul; bf16 operands, f32 accumulate ----
    y = jnp.dot(p_ref[...], w_ref[...], preferred_element_type=jnp.float32)  # (BT*HW, CO)
    y = y * s_ref[...] + t_ref[...]            # BatchNorm2d (eval) + folded conv bias
    y = jnp.maximum(y, 0.01 * y)               # LeakyReLU(0.01)

    # ---- AdaptiveAvgPool2d(1): single reshape (layout-free) + one fused reduction ----
    pooled = jnp.sum(y.reshape(n_frames, hw, CO), axis=1) * jnp.float32(1.0 / hw)  # (BT, CO)

    # ---- LSTM input projection hoisted out of the serial recurrence ----
    gx = jnp.dot(pooled, wih_ref[...], preferred_element_type=jnp.float32) + b_ref[...]  # (BT, 4H)

    # ---- Single-layer LSTM, zero initial state (reset_states), statically unrolled ----
    whh = whh_ref[...]                         # read ONCE, reused (bf16) across all T steps
    h = jnp.zeros((batch, Hsz), jnp.float32)
    c = jnp.zeros((batch, Hsz), jnp.float32)
    hs = []
    for t in range(timesteps):
        # PyTorch view quirk (B*T,64)->(T,B,64): step t reads rows t*B .. t*B+B-1.
        g = gx[t * batch:(t + 1) * batch, :] + jnp.dot(
            h.astype(jnp.bfloat16), whh, preferred_element_type=jnp.float32)      # (B, 4H)
        i_g = jax.nn.sigmoid(g[:, 0 * Hsz:1 * Hsz])
        f_g = jax.nn.sigmoid(g[:, 1 * Hsz:2 * Hsz])
        g_g = jnp.tanh(g[:, 2 * Hsz:3 * Hsz])
        o_g = jax.nn.sigmoid(g[:, 3 * Hsz:4 * Hsz])
        c = f_g * c + i_g * g_g
        h = o_g * jnp.tanh(c)
        hs.append(h)

    # TODO(synk): F.dropout(p=0.5) on the LSTM outputs skipped (dropout=False / inference).

    # ---- Fused Linear(lstm_size*T -> 1) honoring PyTorch's (T,B,H)->(B,T*H) reshape ----
    # h_all row r = t*B + b is exactly PyTorch's flattened row order; its output weight
    # row is w_lin[r % T]; output i sums the contiguous rows r in [i*T, (i+1)*T).
    h_all = jnp.concatenate(hs, axis=0)                        # (T*B, H)
    d = jnp.sum(h_all * wrow_ref[...], axis=1, keepdims=True)  # (T*B, 1) per-row dots
    rows = [jnp.sum(d[i * timesteps:(i + 1) * timesteps, :], axis=0, keepdims=True)
            for i in range(batch)]
    out_ref[...] = jnp.concatenate(rows, axis=0) + bout_ref[...]


def classifier_fused(patches2d, w_mat_bf, bn_scale, bn_shift, w_ih, b_lstm,
                     w_hh_bf, w_rows, out_b, *, batch, timesteps, hw):
    n_frames = batch * timesteps
    K = patches2d.shape[1]
    CO = w_mat_bf.shape[1]
    G4 = w_ih.shape[1]
    Hsz = w_hh_bf.shape[0]
    kernel = functools.partial(_classifier_kernel, n_frames=n_frames, hw=hw,
                               batch=batch, timesteps=timesteps)
    return pl.pallas_call(
        kernel,
        out_shape=jax.ShapeDtypeStruct((batch, 1), jnp.float32),
        grid_spec=pltpu.PrefetchScalarGridSpec(
            num_scalar_prefetch=0,
            grid=(1,),
            in_specs=[
                pl.BlockSpec((n_frames * hw, K), lambda i: (0, 0)),
                pl.BlockSpec((K, CO), lambda i: (0, 0)),
                pl.BlockSpec((1, CO), lambda i: (0, 0)),
                pl.BlockSpec((1, CO), lambda i: (0, 0)),
                pl.BlockSpec((CO, G4), lambda i: (0, 0)),
                pl.BlockSpec((1, G4), lambda i: (0, 0)),
                pl.BlockSpec((Hsz, G4), lambda i: (0, 0)),
                pl.BlockSpec((n_frames, Hsz), lambda i: (0, 0)),
                pl.BlockSpec((1, 1), lambda i: (0, 0)),
            ],
            out_specs=pl.BlockSpec((batch, 1), lambda i: (0, 0)),
        ),
        compiler_params=pltpu.CompilerParams(dimension_semantics=("arbitrary",)),
    )(patches2d, w_mat_bf, bn_scale, bn_shift, w_ih, b_lstm, w_hh_bf, w_rows, out_b)


# ----------------------------------------------------------------------------
# Glue: im2col, parameter setup (all one-time prep hoisted here), forward, ref.
# ----------------------------------------------------------------------------
def im2col_3x3(x_nhwc):
    """(N, H, W, C) -> (N, H*W, 9*C) patches for a 3x3 conv with padding 1."""
    N, H, W, C = x_nhwc.shape
    xp = jnp.pad(x_nhwc, ((0, 0), (1, 1), (1, 1), (0, 0)))
    cols = [xp[:, dy:dy + H, dx:dx + W, :].reshape(N, H * W, C)
            for dy in range(3) for dx in range(3)]
    return jnp.concatenate(cols, axis=-1)


def init_params(key, frame_length, batch_size, c_in=3, conv_out=64, lstm_size=64):
    ks = jax.random.split(key, 8)
    conv_w = 0.1 * jax.random.normal(ks[0], (conv_out, c_in, 3, 3), jnp.float32)
    conv_b = 0.1 * jax.random.normal(ks[1], (conv_out,), jnp.float32)
    gamma = 1.0 + 0.1 * jax.random.normal(ks[2], (conv_out,), jnp.float32)
    beta = 0.1 * jax.random.normal(ks[3], (conv_out,), jnp.float32)
    running_mean = jnp.zeros((conv_out,), jnp.float32)
    running_var = jnp.ones((conv_out,), jnp.float32)
    eps = 1e-5
    s = gamma / jnp.sqrt(running_var + eps)
    t = beta + (conv_b - running_mean) * s
    # conv weight (CO, C, 3, 3) -> matrix (9*C, CO), rows ordered (dy, dx, c)
    w_mat = jnp.transpose(conv_w, (2, 3, 1, 0)).reshape(9 * c_in, conv_out)

    w_ih = 0.1 * jax.random.normal(ks[4], (4 * lstm_size, conv_out), jnp.float32)
    w_hh = 0.1 * jax.random.normal(ks[5], (4 * lstm_size, lstm_size), jnp.float32)
    b_ih = 0.1 * jax.random.normal(ks[6], (4 * lstm_size,), jnp.float32)
    b_hh = jnp.zeros((4 * lstm_size,), jnp.float32)

    out_w = 0.05 * jax.random.normal(ks[7], (1, lstm_size * frame_length), jnp.float32)
    out_b = jnp.zeros((1, 1), jnp.float32)

    # One-time prep hoisted out of the forward (data-independent):
    w_lin = out_w.reshape(frame_length, lstm_size)          # weight[0, s*H+h] -> (T, H)
    r = jnp.arange(frame_length * batch_size)
    w_rows = w_lin[r % frame_length]                        # (T*B, H): row r uses w_lin[r % T]

    return dict(
        # kernel-side (bf16 casts done once here, not per forward)
        conv_w_mat_bf16=w_mat.astype(jnp.bfloat16),         # (9C, CO)
        bn_scale=s.reshape(1, conv_out),
        bn_shift=t.reshape(1, conv_out),
        w_ih=w_ih.T,                                        # (CO, 4H), gate order i,f,g,o
        b_lstm=(b_ih + b_hh).reshape(1, 4 * lstm_size),
        w_hh_bf16=w_hh.T.astype(jnp.bfloat16),              # (H, 4H)
        w_rows=w_rows,                                      # (T*B, H)
        out_b=out_b,                                        # (1, 1)
        # f32 copies for the pure-JAX reference
        conv_w_mat=w_mat,
        w_hh=w_hh.T,
        out_w_lin=w_lin,
    )


@jax.jit
def classifier_forward(params, x):
    # x: (B, T, C, H, W) float32  (PyTorch layout)
    B, T, C, H, W = x.shape
    # Host-side glue kept minimal: single bf16 cast up front, then pad/slice/concat
    # (fuses into one XLA fusion over the half-width patch tensor).
    # TODO(synk): in-kernel im2col for large frame sizes to avoid the 9x HBM blow-up.
    frames_nhwc = jnp.transpose(x.reshape(B * T, C, H, W), (0, 2, 3, 1)).astype(jnp.bfloat16)
    patches2d = im2col_3x3(frames_nhwc).reshape(B * T * H * W, 9 * C)

    return classifier_fused(
        patches2d,
        params["conv_w_mat_bf16"], params["bn_scale"], params["bn_shift"],
        params["w_ih"], params["b_lstm"], params["w_hh_bf16"],
        params["w_rows"], params["out_b"],
        batch=B, timesteps=T, hw=H * W)                      # (B, 1)


def reference_forward(params, x):
    """Pure-JAX (f32) reference implementing the same forward semantics."""
    B, T, C, H, W = x.shape
    Hsz = params["w_hh"].shape[0]
    frames = jnp.transpose(x.reshape(B * T, C, H, W), (0, 2, 3, 1))
    patches = im2col_3x3(frames)                              # (BT, HW, 9C)
    y = jnp.einsum('npk,kc->npc', patches, params["conv_w_mat"])
    y = y * params["bn_scale"][None] + params["bn_shift"][None]
    y = jnp.where(y > 0, y, 0.01 * y)
    pooled = jnp.mean(y, axis=1)                              # (BT, CO)
    seq = pooled.reshape(T, B, -1)                            # PyTorch view quirk
    gates_x = seq @ params["w_ih"] + params["b_lstm"]         # (T, B, 4H)
    h = jnp.zeros((B, Hsz), jnp.float32)
    c = jnp.zeros((B, Hsz), jnp.float32)
    outs = []
    for t in range(T):
        g = gates_x[t] + h @ params["w_hh"]
        i = jax.nn.sigmoid(g[:, :Hsz])
        f = jax.nn.sigmoid(g[:, Hsz:2 * Hsz])
        gg = jnp.tanh(g[:, 2 * Hsz:3 * Hsz])
        o = jax.nn.sigmoid(g[:, 3 * Hsz:4 * Hsz])
        c = f * c + i * gg
        h = o * jnp.tanh(c)
        outs.append(h)
    lstm_out = jnp.stack(outs, axis=0)                        # (T, B, H)
    flat = lstm_out.reshape(B, -1)                            # PyTorch reshape quirk
    return flat @ params["out_w_lin"].reshape(T * Hsz, 1) + params["out_b"]


if __name__ == "__main__":
    key = jax.random.PRNGKey(0)
    k_x, k_p = jax.random.split(key)

    B, T, C, H, W = 2, 8, 3, 16, 16          # frame_length = T = 8
    x = jax.random.normal(k_x, (B, T, C, H, W), jnp.float32)
    params = init_params(k_p, frame_length=T, batch_size=B)

    out = classifier_forward(params, x)
    out = jax.block_until_ready(out)
    assert out.shape == (B, 1), out.shape
    assert bool(jnp.all(jnp.isfinite(out)))

    ref = reference_forward(params, x)
    assert bool(jnp.allclose(out, ref, rtol=5e-2, atol=5e-2)), (out, ref)

    print("KERNEL_OK")
</pallas_src>

<mosaic_0001>
module attributes {stable_mosaic.version = 11 : i64} {
  func.func @_classifier_kernel(%arg0: i32, %arg1: memref<4096x27xbf16, #tpu.memory_space<vmem>>, %arg2: memref<27x64xbf16, #tpu.memory_space<vmem>>, %arg3: memref<1x64xf32, #tpu.memory_space<vmem>>, %arg4: memref<1x64xf32, #tpu.memory_space<vmem>>, %arg5: memref<64x256xf32, #tpu.memory_space<vmem>>, %arg6: memref<1x256xf32, #tpu.memory_space<vmem>>, %arg7: memref<64x256xbf16, #tpu.memory_space<vmem>>, %arg8: memref<16x64xf32, #tpu.memory_space<vmem>>, %arg9: memref<1x1xf32, #tpu.memory_space<vmem>>, %arg10: memref<2x1xf32, #tpu.memory_space<vmem>>) attributes {dimension_semantics = [#tpu.dimension_semantics<arbitrary>], iteration_bounds = array<i64: 1>, scalar_prefetch = 0 : i64, scratch_operands = 0 : i64, tpu.core_type = #tpu.core_type<tc>, window_params = [{pipeline_mode = #tpu.pipeline_mode<synchronous>, transform_indices = @transform_0, window_bounds = array<i64: 4096, 27>}, {pipeline_mode = #tpu.pipeline_mode<synchronous>, transform_indices = @transform_1, window_bounds = array<i64: 27, 64>}, {pipeline_mode = #tpu.pipeline_mode<synchronous>, transform_indices = @transform_2, window_bounds = array<i64: 1, 64>}, {pipeline_mode = #tpu.pipeline_mode<synchronous>, transform_indices = @transform_3, window_bounds = array<i64: 1, 64>}, {pipeline_mode = #tpu.pipeline_mode<synchronous>, transform_indices = @transform_4, window_bounds = array<i64: 64, 256>}, {pipeline_mode = #tpu.pipeline_mode<synchronous>, transform_indices = @transform_5, window_bounds = array<i64: 1, 256>}, {pipeline_mode = #tpu.pipeline_mode<synchronous>, transform_indices = @transform_6, window_bounds = array<i64: 64, 256>}, {pipeline_mode = #tpu.pipeline_mode<synchronous>, transform_indices = @transform_7, window_bounds = array<i64: 16, 64>}, {pipeline_mode = #tpu.pipeline_mode<synchronous>, transform_indices = @transform_8, window_bounds = array<i64: 1, 1>}, {pipeline_mode = #tpu.pipeline_mode<synchronous>, transform_indices = @transform_9, window_bounds = array<i64: 2, 1>}]} {
    %c0 = arith.constant 0 : index
    %c0_0 = arith.constant 0 : index
    %0 = vector.load %arg1[%c0, %c0_0] : memref<4096x27xbf16, #tpu.memory_space<vmem>>, vector<4096x27xbf16>
    %c0_1 = arith.constant 0 : index
    %c0_2 = arith.constant 0 : index
    %1 = vector.load %arg2[%c0_1, %c0_2] : memref<27x64xbf16, #tpu.memory_space<vmem>>, vector<27x64xbf16>
    %cst = arith.constant dense<0.000000e+00> : vector<4096x64xf32>
    %2 = tpu.matmul %0, %1, %cst {dimension_numbers = #tpu.dot_dimension_numbers<[1], [0], [0], [1], [0, 0, 1, 1], [], []>} : vector<4096x27xbf16>, vector<27x64xbf16>, vector<4096x64xf32> -> vector<4096x64xf32>
    %c0_3 = arith.constant 0 : index
    %c0_4 = arith.constant 0 : index
    %3 = vector.load %arg3[%c0_3, %c0_4] : memref<1x64xf32, #tpu.memory_space<vmem>>, vector<1x64xf32>
    %4 = vector.broadcast %3 : vector<1x64xf32> to vector<4096x64xf32>
    %5 = arith.mulf %2, %4 : vector<4096x64xf32>
    %c0_5 = arith.constant 0 : index
    %c0_6 = arith.constant 0 : index
    %6 = vector.load %arg4[%c0_5, %c0_6] : memref<1x64xf32, #tpu.memory_space<vmem>>, vector<1x64xf32>
    %7 = vector.broadcast %6 : vector<1x64xf32> to vector<4096x64xf32>
    %8 = arith.addf %5, %7 : vector<4096x64xf32>
    %cst_7 = arith.constant 0.00999999977 : f32
    %9 = vector.broadcast %cst_7 : f32 to vector<4096x64xf32>
    %10 = arith.mulf %9, %8 : vector<4096x64xf32>
    %11 = arith.maximumf %8, %10 : vector<4096x64xf32>
    %12 = vector.shape_cast %11 : vector<4096x64xf32> to vector<16x256x64xf32>
    %cst_8 = arith.constant dense<0.000000e+00> : vector<16x64xf32>
    %13 = vector.multi_reduction <add>, %12, %cst_8 [1] : vector<16x256x64xf32> to vector<16x64xf32>
    %cst_9 = arith.constant 3.906250e-03 : f32
    %14 = vector.broadcast %cst_9 : f32 to vector<16x64xf32>
    %15 = arith.mulf %13, %14 : vector<16x64xf32>
    %c0_10 = arith.constant 0 : index
    %c0_11 = arith.constant 0 : index
    %16 = vector.load %arg5[%c0_10, %c0_11] : memref<64x256xf32, #tpu.memory_space<vmem>>, vector<64x256xf32>
    %cst_12 = arith.constant dense<0.000000e+00> : vector<16x256xf32>
    %17 = tpu.matmul %15, %16, %cst_12 {dimension_numbers = #tpu.dot_dimension_numbers<[1], [0], [0], [1], [0, 0, 1, 1], [], []>} : vector<16x64xf32>, vector<64x256xf32>, vector<16x256xf32> -> vector<16x256xf32>
    %c0_13 = arith.constant 0 : index
    %c0_14 = arith.constant 0 : index
    %18 = vector.load %arg6[%c0_13, %c0_14] : memref<1x256xf32, #tpu.memory_space<vmem>>, vector<1x256xf32>
    %19 = vector.broadcast %18 : vector<1x256xf32> to vector<16x256xf32>
    %20 = arith.addf %17, %19 : vector<16x256xf32>
    %c0_15 = arith.constant 0 : index
    %c0_16 = arith.constant 0 : index
    %21 = vector.load %arg7[%c0_15, %c0_16] : memref<64x256xbf16, #tpu.memory_space<vmem>>, vector<64x256xbf16>
    %cst_17 = arith.constant 0.000000e+00 : f32
    %22 = vector.broadcast %cst_17 : f32 to vector<2x64xf32>
    %cst_18 = arith.constant 0.000000e+00 : f32
    %23 = vector.broadcast %cst_18 : f32 to vector<2x64xf32>
    %24 = vector.extract_strided_slice %20 {offsets = [0, 0], sizes = [2, 256], strides = [1, 1]} : vector<16x256xf32> to vector<2x256xf32>
    %25 = arith.truncf %22 : vector<2x64xf32> to vector<2x64xbf16>
    %cst_19 = arith.constant dense<0.000000e+00> : vector<2x256xf32>
    %26 = tpu.matmul %25, %21, %cst_19 {dimension_numbers = #tpu.dot_dimension_numbers<[1], [0], [0], [1], [0, 0, 1, 1], [], []>} : vector<2x64xbf16>, vector<64x256xbf16>, vector<2x256xf32> -> vector<2x256xf32>
    %27 = arith.addf %24, %26 : vector<2x256xf32>
    %28 = vector.extract_strided_slice %27 {offsets = [0, 0], sizes = [2, 64], strides = [1, 1]} : vector<2x256xf32> to vector<2x64xf32>
    %29 = arith.negf %28 : vector<2x64xf32>
    %30 = math.exp %29 : vector<2x64xf32>
    %cst_20 = arith.constant 1.000000e+00 : f32
    %31 = vector.broadcast %cst_20 : f32 to vector<2x64xf32>
    %32 = arith.addf %31, %30 : vector<2x64xf32>
    %33 = arith.divf %31, %32 : vector<2x64xf32>
    %34 = vector.extract_strided_slice %27 {offsets = [0, 64], sizes = [2, 64], strides = [1, 1]} : vector<2x256xf32> to vector<2x64xf32>
    %35 = arith.negf %34 : vector<2x64xf32>
    %36 = math.exp %35 : vector<2x64xf32>
    %cst_21 = arith.constant 1.000000e+00 : f32
    %37 = vector.broadcast %cst_21 : f32 to vector<2x64xf32>
    %38 = arith.addf %37, %36 : vector<2x64xf32>
    %39 = arith.divf %37, %38 : vector<2x64xf32>
    %40 = vector.extract_strided_slice %27 {offsets = [0, 128], sizes = [2, 64], strides = [1, 1]} : vector<2x256xf32> to vector<2x64xf32>
    %41 = math.tanh %40 : vector<2x64xf32>
    %42 = vector.extract_strided_slice %27 {offsets = [0, 192], sizes = [2, 64], strides = [1, 1]} : vector<2x256xf32> to vector<2x64xf32>
    %43 = arith.negf %42 : vector<2x64xf32>
    %44 = math.exp %43 : vector<2x64xf32>
    %cst_22 = arith.constant 1.000000e+00 : f32
    %45 = vector.broadcast %cst_22 : f32 to vector<2x64xf32>
    %46 = arith.addf %45, %44 : vector<2x64xf32>
    %47 = arith.divf %45, %46 : vector<2x64xf32>
    %48 = arith.mulf %39, %23 : vector<2x64xf32>
    %49 = arith.mulf %33, %41 : vector<2x64xf32>
    %50 = arith.addf %48, %49 : vector<2x64xf32>
    %51 = math.tanh %50 : vector<2x64xf32>
    %52 = arith.mulf %47, %51 : vector<2x64xf32>
    %53 = vector.extract_strided_slice %20 {offsets = [2, 0], sizes = [2, 256], strides = [1, 1]} : vector<16x256xf32> to vector<2x256xf32>
    %54 = arith.truncf %52 : vector<2x64xf32> to vector<2x64xbf16>
    %cst_23 = arith.constant dense<0.000000e+00> : vector<2x256xf32>
    %55 = tpu.matmul %54, %21, %cst_23 {dimension_numbers = #tpu.dot_dimension_numbers<[1], [0], [0], [1], [0, 0, 1, 1], [], []>} : vector<2x64xbf16>, vector<64x256xbf16>, vector<2x256xf32> -> vector<2x256xf32>
    %56 = arith.addf %53, %55 : vector<2x256xf32>
    %57 = vector.extract_strided_slice %56 {offsets = [0, 0], sizes = [2, 64], strides = [1, 1]} : vector<2x256xf32> to vector<2x64xf32>
    %58 = arith.negf %57 : vector<2x64xf32>
    %59 = math.exp %58 : vector<2x64xf32>
    %cst_24 = arith.constant 1.000000e+00 : f32
    %60 = vector.broadcast %cst_24 : f32 to vector<2x64xf32>
    %61 = arith.addf %60, %59 : vector<2x64xf32>
    %62 = arith.divf %60, %61 : vector<2x64xf32>
    %63 = vector.extract_strided_slice %56 {offsets = [0, 64], sizes = [2, 64], strides = [1, 1]} : vector<2x256xf32> to vector<2x64xf32>
    %64 = arith.negf %63 : vector<2x64xf32>
    %65 = math.exp %64 : vector<2x64xf32>
    %cst_25 = arith.constant 1.000000e+00 : f32
    %66 = vector.broadcast %cst_25 : f32 to vector<2x64xf32>
    %67 = arith.addf %66, %65 : vector<2x64xf32>
    %68 = arith.divf %66, %67 : vector<2x64xf32>
    %69 = vector.extract_strided_slice %56 {offsets = [0, 128], sizes = [2, 64], strides = [1, 1]} : vector<2x256xf32> to vector<2x64xf32>
    %70 = math.tanh %69 : vector<2x64xf32>
    %71 = vector.extract_strided_slice %56 {offsets = [0, 192], sizes = [2, 64], strides = [1, 1]} : vector<2x256xf32> to vector<2x64xf32>
    %72 = arith.negf %71 : vector<2x64xf32>
    %73 = math.exp %72 : vector<2x64xf32>
    %cst_26 = arith.constant 1.000000e+00 : f32
    %74 = vector.broadcast %cst_26 : f32 to vector<2x64xf32>
    %75 = arith.addf %74, %73 : vector<2x64xf32>
    %76 = arith.divf %74, %75 : vector<2x64xf32>
    %77 = arith.mulf %68, %50 : vector<2x64xf32>
    %78 = arith.mulf %62, %70 : vector<2x64xf32>
    %79 = arith.addf %77, %78 : vector<2x64xf32>
    %80 = math.tanh %79 : vector<2x64xf32>
    %81 = arith.mulf %76, %80 : vector<2x64xf32>
    %82 = vector.extract_strided_slice %20 {offsets = [4, 0], sizes = [2, 256], strides = [1, 1]} : vector<16x256xf32> to vector<2x256xf32>
    %83 = arith.truncf %81 : vector<2x64xf32> to vector<2x64xbf16>
    %cst_27 = arith.constant dense<0.000000e+00> : vector<2x256xf32>
    %84 = tpu.matmul %83, %21, %cst_27 {dimension_numbers = #tpu.dot_dimension_numbers<[1], [0], [0], [1], [0, 0, 1, 1], [], []>} : vector<2x64xbf16>, vector<64x256xbf16>, vector<2x256xf32> -> vector<2x256xf32>
    %85 = arith.addf %82, %84 : vector<2x256xf32>
    %86 = vector.extract_strided_slice %85 {offsets = [0, 0], sizes = [2, 64], strides = [1, 1]} : vector<2x256xf32> to vector<2x64xf32>
    %87 = arith.negf %86 : vector<2x64xf32>
    %88 = math.exp %87 : vector<2x64xf32>
    %cst_28 = arith.constant 1.000000e+00 : f32
    %89 = vector.broadcast %cst_28 : f32 to vector<2x64xf32>
    %90 = arith.addf %89, %88 : vector<2x64xf32>
    %91 = arith.divf %89, %90 : vector<2x64xf32>
    %92 = vector.extract_strided_slice %85 {offsets = [0, 64], sizes = [2, 64], strides = [1, 1]} : vector<2x256xf32> to vector<2x64xf32>
    %93 = arith.negf %92 : vector<2x64xf32>
    %94 = math.exp %93 : vector<2x64xf32>
    %cst_29 = arith.constant 1.000000e+00 : f32
    %95 = vector.broadcast %cst_29 : f32 to vector<2x64xf32>
    %96 = arith.addf %95, %94 : vector<2x64xf32>
    %97 = arith.divf %95, %96 : vector<2x64xf32>
    %98 = vector.extract_strided_slice %85 {offsets = [0, 128], sizes = [2, 64], strides = [1, 1]} : vector<2x256xf32> to vector<2x64xf32>
    %99 = math.tanh %98 : vector<2x64xf32>
    %100 = vector.extract_strided_slice %85 {offsets = [0, 192], sizes = [2, 64], strides = [1, 1]} : vector<2x256xf32> to vector<2x64xf32>
    %101 = arith.negf %100 : vector<2x64xf32>
    %102 = math.exp %101 : vector<2x64xf32>
    %cst_30 = arith.constant 1.000000e+00 : f32
    %103 = vector.broadcast %cst_30 : f32 to vector<2x64xf32>
    %104 = arith.addf %103, %102 : vector<2x64xf32>
    %105 = arith.divf %103, %104 : vector<2x64xf32>
    %106 = arith.mulf %97, %79 : vector<2x64xf32>
    %107 = arith.mulf %91, %99 : vector<2x64xf32>
    %108 = arith.addf %106, %107 : vector<2x64xf32>
    %109 = math.tanh %108 : vector<2x64xf32>
    %110 = arith.mulf %105, %109 : vector<2x64xf32>
    %111 = vector.extract_strided_slice %20 {offsets = [6, 0], sizes = [2, 256], strides = [1, 1]} : vector<16x256xf32> to vector<2x256xf32>
    %112 = arith.truncf %110 : vector<2x64xf32> to vector<2x64xbf16>
    %cst_31 = arith.constant dense<0.000000e+00> : vector<2x256xf32>
    %113 = tpu.matmul %112, %21, %cst_31 {dimension_numbers = #tpu.dot_dimension_numbers<[1], [0], [0], [1], [0, 0, 1, 1], [], []>} : vector<2x64xbf16>, vector<64x256xbf16>, vector<2x256xf32> -> vector<2x256xf32>
    %114 = arith.addf %111, %113 : vector<2x256xf32>
    %115 = vector.extract_strided_slice %114 {offsets = [0, 0], sizes = [2, 64], strides = [1, 1]} : vector<2x256xf32> to vector<2x64xf32>
    %116 = arith.negf %115 : vector<2x64xf32>
    %117 = math.exp %116 : vector<2x64xf32>
    %cst_32 = arith.constant 1.000000e+00 : f32
    %118 = vector.broadcast %cst_32 : f32 to vector<2x64xf32>
    %119 = arith.addf %118, %117 : vector<2x64xf32>
    %120 = arith.divf %118, %119 : vector<2x64xf32>
    %121 = vector.extract_strided_slice %114 {offsets = [0, 64], sizes = [2, 64], strides = [1, 1]} : vector<2x256xf32> to vector<2x64xf32>
    %122 = arith.negf %121 : vector<2x64xf32>
    %123 = math.exp %122 : vector<2x64xf32>
    %cst_33 = arith.constant 1.000000e+00 : f32
    %124 = vector.broadcast %cst_33 : f32 to vector<2x64xf32>
    %125 = arith.addf %124, %123 : vector<2x64xf32>
    %126 = arith.divf %124, %125 : vector<2x64xf32>
    %127 = vector.extract_strided_slice %114 {offsets = [0, 128], sizes = [2, 64], strides = [1, 1]} : vector<2x256xf32> to vector<2x64xf32>
    %128 = math.tanh %127 : vector<2x64xf32>
    %129 = vector.extract_strided_slice %114 {offsets = [0, 192], sizes = [2, 64], strides = [1, 1]} : vector<2x256xf32> to vector<2x64xf32>
    %130 = arith.negf %129 : vector<2x64xf32>
    %131 = math.exp %130 : vector<2x64xf32>
    %cst_34 = arith.constant 1.000000e+00 : f32
    %132 = vector.broadcast %cst_34 : f32 to vector<2x64xf32>
    %133 = arith.addf %132, %131 : vector<2x64xf32>
    %134 = arith.divf %132, %133 : vector<2x64xf32>
    %135 = arith.mulf %126, %108 : vector<2x64xf32>
    %136 = arith.mulf %120, %128 : vector<2x64xf32>
    %137 = arith.addf %135, %136 : vector<2x64xf32>
    %138 = math.tanh %137 : vector<2x64xf32>
    %139 = arith.mulf %134, %138 : vector<2x64xf32>
    %140 = vector.extract_strided_slice %20 {offsets = [8, 0], sizes = [2, 256], strides = [1, 1]} : vector<16x256xf32> to vector<2x256xf32>
    %141 = arith.truncf %139 : vector<2x64xf32> to vector<2x64xbf16>
    %cst_35 = arith.constant dense<0.000000e+00> : vector<2x256xf32>
    %142 = tpu.matmul %141, %21, %cst_35 {dimension_numbers = #tpu.dot_dimension_numbers<[1], [0], [0], [1], [0, 0, 1, 1], [], []>} : vector<2x64xbf16>, vector<64x256xbf16>, vector<2x256xf32> -> vector<2x256xf32>
    %143 = arith.addf %140, %142 : vector<2x256xf32>
    %144 = vector.extract_strided_slice %143 {offsets = [0, 0], sizes = [2, 64], strides = [1, 1]} : vector<2x256xf32> to vector<2x64xf32>
    %145 = arith.negf %144 : vector<2x64xf32>
    %146 = math.exp %145 : vector<2x64xf32>
    %cst_36 = arith.constant 1.000000e+00 : f32
    %147 = vector.broadcast %cst_36 : f32 to vector<2x64xf32>
    %148 = arith.addf %147, %146 : vector<2x64xf32>
    %149 = arith.divf %147, %148 : vector<2x64xf32>
    %150 = vector.extract_strided_slice %143 {offsets = [0, 64], sizes = [2, 64], strides = [1, 1]} : vector<2x256xf32> to vector<2x64xf32>
    %151 = arith.negf %150 : vector<2x64xf32>
    %152 = math.exp %151 : vector<2x64xf32>
    %cst_37 = arith.constant 1.000000e+00 : f32
    %153 = vector.broadcast %cst_37 : f32 to vector<2x64xf32>
    %154 = arith.addf %153, %152 : vector<2x64xf32>
    %155 = arith.divf %153, %154 : vector<2x64xf32>
    %156 = vector.extract_strided_slice %143 {offsets = [0, 128], sizes = [2, 64], strides = [1, 1]} : vector<2x256xf32> to vector<2x64xf32>
    %157 = math.tanh %156 : vector<2x64xf32>
    %158 = vector.extract_strided_slice %143 {offsets = [0, 192], sizes = [2, 64], strides = [1, 1]} : vector<2x256xf32> to vector<2x64xf32>
    %159 = arith.negf %158 : vector<2x64xf32>
    %160 = math.exp %159 : vector<2x64xf32>
    %cst_38 = arith.constant 1.000000e+00 : f32
    %161 = vector.broadcast %cst_38 : f32 to vector<2x64xf32>
    %162 = arith.addf %161, %160 : vector<2x64xf32>
    %163 = arith.divf %161, %162 : vector<2x64xf32>
    %164 = arith.mulf %155, %137 : vector<2x64xf32>
    %165 = arith.mulf %149, %157 : vector<2x64xf32>
    %166 = arith.addf %164, %165 : vector<2x64xf32>
    %167 = math.tanh %166 : vector<2x64xf32>
    %168 = arith.mulf %163, %167 : vector<2x64xf32>
    %169 = vector.extract_strided_slice %20 {offsets = [10, 0], sizes = [2, 256], strides = [1, 1]} : vector<16x256xf32> to vector<2x256xf32>
    %170 = arith.truncf %168 : vector<2x64xf32> to vector<2x64xbf16>
    %cst_39 = arith.constant dense<0.000000e+00> : vector<2x256xf32>
    %171 = tpu.matmul %170, %21, %cst_39 {dimension_numbers = #tpu.dot_dimension_numbers<[1], [0], [0], [1], [0, 0, 1, 1], [], []>} : vector<2x64xbf16>, vector<64x256xbf16>, vector<2x256xf32> -> vector<2x256xf32>
    %172 = arith.addf %169, %171 : vector<2x256xf32>
    %173 = vector.extract_strided_slice %172 {offsets = [0, 0], sizes = [2, 64], strides = [1, 1]} : vector<2x256xf32> to vector<2x64xf32>
    %174 = arith.negf %173 : vector<2x64xf32>
    %175 = math.exp %174 : vector<2x64xf32>
    %cst_40 = arith.constant 1.000000e+00 : f32
    %176 = vector.broadcast %cst_40 : f32 to vector<2x64xf32>
    %177 = arith.addf %176, %175 : vector<2x64xf32>
    %178 = arith.divf %176, %177 : vector<2x64xf32>
    %179 = vector.extract_strided_slice %172 {offsets = [0, 64], sizes = [2, 64], strides = [1, 1]} : vector<2x256xf32> to vector<2x64xf32>
    %180 = arith.negf %179 : vector<2x64xf32>
    %181 = math.exp %180 : vector<2x64xf32>
    %cst_41 = arith.constant 1.000000e+00 : f32
    %182 = vector.broadcast %cst_41 : f32 to vector<2x64xf32>
    %183 = arith.addf %182, %181 : vector<2x64xf32>
    %184 = arith.divf %182, %183 : vector<2x64xf32>
    %185 = vector.extract_strided_slice %172 {offsets = [0, 128], sizes = [2, 64], strides = [1, 1]} : vector<2x256xf32> to vector<2x64xf32>
    %186 = math.tanh %185 : vector<2x64xf32>
    %187 = vector.extract_strided_slice %172 {offsets = [0, 192], sizes = [2, 64], strides = [1, 1]} : vector<2x256xf32> to vector<2x64xf32>
    %188 = arith.negf %187 : vector<2x64xf32>
    %189 = math.exp %188 : vector<2x64xf32>
    %cst_42 = arith.constant 1.000000e+00 : f32
    %190 = vector.broadcast %cst_42 : f32 to vector<2x64xf32>
    %191 = arith.addf %190, %189 : vector<2x64xf32>
    %192 = arith.divf %190, %191 : vector<2x64xf32>
    %193 = arith.mulf %184, %166 : vector<2x64xf32>
    %194 = arith.mulf %178, %186 : vector<2x64xf32>
    %195 = arith.addf %193, %194 : vector<2x64xf32>
    %196 = math.tanh %195 : vector<2x64xf32>
    %197 = arith.mulf %192, %196 : vector<2x64xf32>
    %198 = vector.extract_strided_slice %20 {offsets = [12, 0], sizes = [2, 256], strides = [1, 1]} : vector<16x256xf32> to vector<2x256xf32>
    %199 = arith.truncf %197 : vector<2x64xf32> to vector<2x64xbf16>
    %cst_43 = arith.constant dense<0.000000e+00> : vector<2x256xf32>
    %200 = tpu.matmul %199, %21, %cst_43 {dimension_numbers = #tpu.dot_dimension_numbers<[1], [0], [0], [1], [0, 0, 1, 1], [], []>} : vector<2x64xbf16>, vector<64x256xbf16>, vector<2x256xf32> -> vector<2x256xf32>
    %201 = arith.addf %198, %200 : vector<2x256xf32>
    %202 = vector.extract_strided_slice %201 {offsets = [0, 0], sizes = [2, 64], strides = [1, 1]} : vector<2x256xf32> to vector<2x64xf32>
    %203 = arith.negf %202 : vector<2x64xf32>
    %204 = math.exp %203 : vector<2x64xf32>
    %cst_44 = arith.constant 1.000000e+00 : f32
    %205 = vector.broadcast %cst_44 : f32 to vector<2x64xf32>
    %206 = arith.addf %205, %204 : vector<2x64xf32>
    %207 = arith.divf %205, %206 : vector<2x64xf32>
    %208 = vector.extract_strided_slice %201 {offsets = [0, 64], sizes = [2, 64], strides = [1, 1]} : vector<2x256xf32> to vector<2x64xf32>
    %209 = arith.negf %208 : vector<2x64xf32>
    %210 = math.exp %209 : vector<2x64xf32>
    %cst_45 = arith.constant 1.000000e+00 : f32
    %211 = vector.broadcast %cst_45 : f32 to vector<2x64xf32>
    %212 = arith.addf %211, %210 : vector<2x64xf32>
    %213 = arith.divf %211, %212 : vector<2x64xf32>
    %214 = vector.extract_strided_slice %201 {offsets = [0, 128], sizes = [2, 64], strides = [1, 1]} : vector<2x256xf32> to vector<2x64xf32>
    %215 = math.tanh %214 : vector<2x64xf32>
    %216 = vector.extract_strided_slice %201 {offsets = [0, 192], sizes = [2, 64], strides = [1, 1]} : vector<2x256xf32> to vector<2x64xf32>
    %217 = arith.negf %216 : vector<2x64xf32>
    %218 = math.exp %217 : vector<2x64xf32>
    %cst_46 = arith.constant 1.000000e+00 : f32
    %219 = vector.broadcast %cst_46 : f32 to vector<2x64xf32>
    %220 = arith.addf %219, %218 : vector<2x64xf32>
    %221 = arith.divf %219, %220 : vector<2x64xf32>
    %222 = arith.mulf %213, %195 : vector<2x64xf32>
    %223 = arith.mulf %207, %215 : vector<2x64xf32>
    %224 = arith.addf %222, %223 : vector<2x64xf32>
    %225 = math.tanh %224 : vector<2x64xf32>
    %226 = arith.mulf %221, %225 : vector<2x64xf32>
    %227 = vector.extract_strided_slice %20 {offsets = [14, 0], sizes = [2, 256], strides = [1, 1]} : vector<16x256xf32> to vector<2x256xf32>
    %228 = arith.truncf %226 : vector<2x64xf32> to vector<2x64xbf16>
    %cst_47 = arith.constant dense<0.000000e+00> : vector<2x256xf32>
    %229 = tpu.matmul %228, %21, %cst_47 {dimension_numbers = #tpu.dot_dimension_numbers<[1], [0], [0], [1], [0, 0, 1, 1], [], []>} : vector<2x64xbf16>, vector<64x256xbf16>, vector<2x256xf32> -> vector<2x256xf32>
    %230 = arith.addf %227, %229 : vector<2x256xf32>
    %231 = vector.extract_strided_slice %230 {offsets = [0, 0], sizes = [2, 64], strides = [1, 1]} : vector<2x256xf32> to vector<2x64xf32>
    %232 = arith.negf %231 : vector<2x64xf32>
    %233 = math.exp %232 : vector<2x64xf32>
    %cst_48 = arith.constant 1.000000e+00 : f32
    %234 = vector.broadcast %cst_48 : f32 to vector<2x64xf32>
    %235 = arith.addf %234, %233 : vector<2x64xf32>
    %236 = arith.divf %234, %235 : vector<2x64xf32>
    %237 = vector.extract_strided_slice %230 {offsets = [0, 64], sizes = [2, 64], strides = [1, 1]} : vector<2x256xf32> to vector<2x64xf32>
    %238 = arith.negf %237 : vector<2x64xf32>
    %239 = math.exp %238 : vector<2x64xf32>
    %cst_49 = arith.constant 1.000000e+00 : f32
    %240 = vector.broadcast %cst_49 : f32 to vector<2x64xf32>
    %241 = arith.addf %240, %239 : vector<2x64xf32>
    %242 = arith.divf %240, %241 : vector<2x64xf32>
    %243 = vector.extract_strided_slice %230 {offsets = [0, 128], sizes = [2, 64], strides = [1, 1]} : vector<2x256xf32> to vector<2x64xf32>
    %244 = math.tanh %243 : vector<2x64xf32>
    %245 = vector.extract_strided_slice %230 {offsets = [0, 192], sizes = [2, 64], strides = [1, 1]} : vector<2x256xf32> to vector<2x64xf32>
    %246 = arith.negf %245 : vector<2x64xf32>
    %247 = math.exp %246 : vector<2x64xf32>
    %cst_50 = arith.constant 1.000000e+00 : f32
    %248 = vector.broadcast %cst_50 : f32 to vector<2x64xf32>
    %249 = arith.addf %248, %247 : vector<2x64xf32>
    %250 = arith.divf %248, %249 : vector<2x64xf32>
    %251 = arith.mulf %242, %224 : vector<2x64xf32>
    %252 = arith.mulf %236, %244 : vector<2x64xf32>
    %253 = arith.addf %251, %252 : vector<2x64xf32>
    %254 = math.tanh %253 : vector<2x64xf32>
    %255 = arith.mulf %250, %254 : vector<2x64xf32>
    %256 = tpu.concatenate %52, %81, %110, %139, %168, %197, %226, %255 in 0 : vector<2x64xf32>, vector<2x64xf32>, vector<2x64xf32>, vector<2x64xf32>, vector<2x64xf32>, vector<2x64xf32>, vector<2x64xf32>, vector<2x64xf32> -> vector<16x64xf32>
    %c0_51 = arith.constant 0 : index
    %c0_52 = arith.constant 0 : index
    %257 = vector.load %arg8[%c0_51, %c0_52] : memref<16x64xf32, #tpu.memory_space<vmem>>, vector<16x64xf32>
    %258 = arith.mulf %256, %257 : vector<16x64xf32>
    %cst_53 = arith.constant dense<0.000000e+00> : vector<16xf32>
    %259 = vector.multi_reduction <add>, %258, %cst_53 [1] : vector<16x64xf32> to vector<16xf32>
    %260 = vector.shape_cast %259 : vector<16xf32> to vector<16x1xf32>
    %261 = vector.extract_strided_slice %260 {offsets = [0, 0], sizes = [8, 1], strides = [1, 1]} : vector<16x1xf32> to vector<8x1xf32>
    %cst_54 = arith.constant dense<0.000000e+00> : vector<1xf32>
    %262 = vector.multi_reduction <add>, %261, %cst_54 [0] : vector<8x1xf32> to vector<1xf32>
    %263 = vector.shape_cast %262 : vector<1xf32> to vector<1x1xf32>
    %264 = vector.extract_strided_slice %260 {offsets = [8, 0], sizes = [8, 1], strides = [1, 1]} : vector<16x1xf32> to vector<8x1xf32>
    %cst_55 = arith.constant dense<0.000000e+00> : vector<1xf32>
    %265 = vector.multi_reduction <add>, %264, %cst_55 [0] : vector<8x1xf32> to vector<1xf32>
    %266 = vector.shape_cast %265 : vector<1xf32> to vector<1x1xf32>
    %267 = tpu.concatenate %263, %266 in 0 : vector<1x1xf32>, vector<1x1xf32> -> vector<2x1xf32>
    %c0_56 = arith.constant 0 : index
    %c0_57 = arith.constant 0 : index
    %268 = vector.load %arg9[%c0_56, %c0_57] : memref<1x1xf32, #tpu.memory_space<vmem>>, vector<1x1xf32>
    %269 = vector.broadcast %268 : vector<1x1xf32> to vector<2x1xf32>
    %270 = arith.addf %267, %269 : vector<2x1xf32>
    %c0_58 = arith.constant 0 : index
    %c0_59 = arith.constant 0 : index
    %271 = vector.load %arg10[%c0_58, %c0_59] : memref<2x1xf32, #tpu.memory_space<vmem>>, vector<2x1xf32>
    tpu.vector_store %arg10[%c0_58, %c0_59], %270 {strides = array<i32>} : memref<2x1xf32, #tpu.memory_space<vmem>>, vector<2x1xf32>,
    return
  }
  func.func @transform_0(%arg0: i32) -> (i32, i32) {
    %c0_i32 = arith.constant 0 : i32
    %c0_i32_0 = arith.constant 0 : i32
    %c0_i32_1 = arith.constant 0 : i32
    return %c0_i32, %c0_i32_0 : i32, i32
  }
  func.func @transform_1(%arg0: i32) -> (i32, i32) {
    %c0_i32 = arith.constant 0 : i32
    %c0_i32_0 = arith.constant 0 : i32
    %c0_i32_1 = arith.constant 0 : i32
    return %c0_i32, %c0_i32_0 : i32, i32
  }
  func.func @transform_2(%arg0: i32) -> (i32, i32) {
    %c0_i32 = arith.constant 0 : i32
    %c0_i32_0 = arith.constant 0 : i32
    %c0_i32_1 = arith.constant 0 : i32
    return %c0_i32, %c0_i32_0 : i32, i32
  }
  func.func @transform_3(%arg0: i32) -> (i32, i32) {
    %c0_i32 = arith.constant 0 : i32
    %c0_i32_0 = arith.constant 0 : i32
    %c0_i32_1 = arith.constant 0 : i32
    return %c0_i32, %c0_i32_0 : i32, i32
  }
  func.func @transform_4(%arg0: i32) -> (i32, i32) {
    %c0_i32 = arith.constant 0 : i32
    %c0_i32_0 = arith.constant 0 : i32
    %c0_i32_1 = arith.constant 0 : i32
    return %c0_i32, %c0_i32_0 : i32, i32
  }
  func.func @transform_5(%arg0: i32) -> (i32, i32) {
    %c0_i32 = arith.constant 0 : i32
    %c0_i32_0 = arith.constant 0 : i32
    %c0_i32_1 = arith.constant 0 : i32
    return %c0_i32, %c0_i32_0 : i32, i32
  }
  func.func @transform_6(%arg0: i32) -> (i32, i32) {
    %c0_i32 = arith.constant 0 : i32
    %c0_i32_0 = arith.constant 0 : i32
    %c0_i32_1 = arith.constant 0 : i32
    return %c0_i32, %c0_i32_0 : i32, i32
  }
  func.func @transform_7(%arg0: i32) -> (i32, i32) {
    %c0_i32 = arith.constant 0 : i32
    %c0_i32_0 = arith.constant 0 : i32
    %c0_i32_1 = arith.constant 0 : i32
    return %c0_i32, %c0_i32_0 : i32, i32
  }
  func.func @transform_8(%arg0: i32) -> (i32, i32) {
    %c0_i32 = arith.constant 0 : i32
    %c0_i32_0 = arith.constant 0 : i32
    %c0_i32_1 = arith.constant 0 : i32
    return %c0_i32, %c0_i32_0 : i32, i32
  }
  func.func @transform_9(%arg0: i32) -> (i32, i32) {
    %c0_i32 = arith.constant 0 : i32
    %c0_i32_0 = arith.constant 0 : i32
    %c0_i32_1 = arith.constant 0 : i32
    return %c0_i32, %c0_i32_0 : i32, i32
  }
}

</mosaic_0001>

<llo_original>
// kernel: classifier_forward.1
$region0: #{classifier_forward.1}
  #allocation0 [shape = 'u32[]', space=smem, size = 0x4, offset = 0x4, fixed_abs, tag = 'smem constant byte address 0x4 - core index']
  #allocation1 [shape = 'u32[144,128]{1,0:T(1,128)}', space=vmem, size = 0x12000, scoped, tag = 'internal scratch']
  #allocation2 [shape = 'f32[1,1]{1,0:T(1,128)S(1)}', space=vmem, size = 0x200, scoped, tag = 'scoped memory for classifier_forward.1']
  %s0 = inlined_call_operand.vmem [shape: bf16[4096,27], index: 0, kind: input, shape index: {}]
  %s1 = inlined_call_operand.vmem [shape: bf16[27,64], index: 1, kind: input, shape index: {}]
  %s2 = inlined_call_operand.vmem [shape: f32[1,64], index: 2, kind: input, shape index: {}]
  %s3 = inlined_call_operand.vmem [shape: f32[1,64], index: 3, kind: input, shape index: {}]
  %s4 = inlined_call_operand.vmem [shape: f32[64,256], index: 4, kind: input, shape index: {}]
  %s5 = inlined_call_operand.vmem [shape: f32[1,256], index: 5, kind: input, shape index: {}]
  %s6 = inlined_call_operand.vmem [shape: bf16[64,256], index: 6, kind: input, shape index: {}]
  %s7 = inlined_call_operand.vmem [shape: f32[16,64], index: 7, kind: input, shape index: {}]
  %s8 = inlined_call_operand.<no memory space> [shape: f32[1,1], index: 8, kind: input, shape index: {}]
  %s9 = inlined_call_operand.vmem [shape: f32[2,1], index: 9, kind: output, shape index: {}]
  %s10 = sld [smem:[#allocation0]]
  $region46: #{classifier_forward.1} parent=0
    _
  %s12 = ssub.s32 1, %s10
  %s13 = scalar_select 0, %s12, %s10
  %v14 = vstv %s8
  %15 = vst [vmem:[#allocation2] sm:$0x1] %v14
  // Predicated region
  $region2: #{classifier_forward.1} parent=0 // pred_check
    _
  $region3: #{classifier_forward.1} parent=0 // pred_check_branch
    %17 = sbr.rel (0) target = $region5
  $region4: #{classifier_forward.1} parent=0 // pred_region
    _
  $region5: #{classifier_forward.1} parent=0 // pred_fallthru
    _
  // Predicated region
  $region6: #{classifier_forward.1} parent=0 // pred_check
    _
  $region7: #{classifier_forward.1} parent=0 // pred_check_branch
    %19 = sbr.rel (0) target = $region9
  $region8: #{classifier_forward.1} parent=0 // pred_region
    _
  $region9: #{classifier_forward.1} parent=0 // pred_fallthru
    _
  // Predicated region
  $region10: #{classifier_forward.1} parent=0 // pred_check
    _
  $region11: #{classifier_forward.1} parent=0 // pred_check_branch
    %21 = sbr.rel (0) target = $region13
  $region12: #{classifier_forward.1} parent=0 // pred_region
    _
  $region13: #{classifier_forward.1} parent=0 // pred_fallthru
    _
  // Predicated region
  $region14: #{classifier_forward.1} parent=0 // pred_check
    _
  $region15: #{classifier_forward.1} parent=0 // pred_check_branch
    %23 = sbr.rel (0) target = $region17
  $region16: #{classifier_forward.1} parent=0 // pred_region
    _
  $region17: #{classifier_forward.1} parent=0 // pred_fallthru
    _
  // Predicated region
  $region18: #{classifier_forward.1} parent=0 // pred_check
    _
  $region19: #{classifier_forward.1} parent=0 // pred_check_branch
    %25 = sbr.rel (0) target = $region21
  $region20: #{classifier_forward.1} parent=0 // pred_region
    _
  $region21: #{classifier_forward.1} parent=0 // pred_fallthru
    _
  // Predicated region
  $region22: #{classifier_forward.1} parent=0 // pred_check
    _
  $region23: #{classifier_forward.1} parent=0 // pred_check_branch
    %27 = sbr.rel (0) target = $region25
  $region24: #{classifier_forward.1} parent=0 // pred_region
    _
  $region25: #{classifier_forward.1} parent=0 // pred_fallthru
    _
  // Predicated region
  $region26: #{classifier_forward.1} parent=0 // pred_check
    _
  $region27: #{classifier_forward.1} parent=0 // pred_check_branch
    %29 = sbr.rel (0) target = $region29
  $region28: #{classifier_forward.1} parent=0 // pred_region
    _
  $region29: #{classifier_forward.1} parent=0 // pred_fallthru
    _
  // Predicated region
  $region30: #{classifier_forward.1} parent=0 // pred_check
    _
  $region31: #{classifier_forward.1} parent=0 // pred_check_branch
    %31 = sbr.rel (0) target = $region33
  $region32: #{classifier_forward.1} parent=0 // pred_region
    _
  $region33: #{classifier_forward.1} parent=0 // pred_fallthru
    _
  // Predicated region
  $region34: #{classifier_forward.1} parent=0 // pred_check
    _
  $region35: #{classifier_forward.1} parent=0 // pred_check_branch
    %33 = sbr.rel (0) target = $region37
  $region36: #{classifier_forward.1} parent=0 // pred_region
    _
  $region37: #{classifier_forward.1} parent=0 // pred_fallthru
    _
  %v35 = vld [vmem:[%s0] sm:$0xf]
  %v36 = vld [vmem:[%s0 + $0x4] sm:$0xf]
  %v37 = vld [vmem:[%s0 + $0x8] sm:$0xf]
  %v38 = vld [vmem:[%s0 + $0xc] sm:$0xf]
  %v39 = vld [vmem:[%s0 + $0x10] sm:$0xf]
  %v40 = vld [vmem:[%s0 + $0x14] sm:$0xf]
  %v41 = vld [vmem:[%s0 + $0x18] sm:$0xf]
  %v42 = vld [vmem:[%s0 + $0x1c] sm:$0xf]
  %v43 = vld [vmem:[%s0 + $0x20] sm:$0xf]
  %v44 = vld [vmem:[%s0 + $0x24] sm:$0xf]
  %v45 = vld [vmem:[%s0 + $0x28] sm:$0xf]
  %v46 = vld [vmem:[%s0 + $0x2c] sm:$0xf]
  %v47 = vld [vmem:[%s0 + $0x30] sm:$0xf]
  %v48 = vld [vmem:[%s0 + $0x34] sm:$0xf]
  %v49 = vld [vmem:[%s0 + $0x38] sm:$0xf]
  %v50 = vld [vmem:[%s0 + $0x3c] sm:$0xf]
  %v51 = vld [vmem:[%s0 + $0x40] sm:$0xf]
  %v52 = vld [vmem:[%s0 + $0x44] sm:$0xf]
  %v53 = vld [vmem:[%s0 + $0x48] sm:$0xf]
  %v54 = vld [vmem:[%s0 + $0x4c] sm:$0xf]
  %v55 = vld [vmem:[%s0 + $0x50] sm:$0xf]
  %v56 = vld [vmem:[%s0 + $0x54] sm:$0xf]
  %v57 = vld [vmem:[%s0 + $0x58] sm:$0xf]
  %v58 = vld [vmem:[%s0 + $0x5c] sm:$0xf]
  %v59 = vld [vmem:[%s0 + $0x60] sm:$0xf]
  %v60 = vld [vmem:[%s0 + $0x64] sm:$0xf]
  %v61 = vld [vmem:[%s0 + $0x68] sm:$0xf]
  %v62 = vld [vmem:[%s0 + $0x6c] sm:$0xf]
  %v63 = vld [vmem:[%s0 + $0x70] sm:$0xf]
  %v64 = vld [vmem:[%s0 + $0x74] sm:$0xf]
  %v65 = vld [vmem:[%s0 + $0x78] sm:$0xf]
  %v66 = vld [vmem:[%s0 + $0x7c] sm:$0xf]
  %v67 = vld [vmem:[%s0 + $0x80] sm:$0xf]
  %v68 = vld [vmem:[%s0 + $0x84] sm:$0xf]
  %v69 = vld [vmem:[%s0 + $0x88] sm:$0xf]
  %v70 = vld [vmem:[%s0 + $0x8c] sm:$0xf]
  %v71 = vld [vmem:[%s0 + $0x90] sm:$0xf]
  %v72 = vld [vmem:[%s0 + $0x94] sm:$0xf]
  %v73 = vld [vmem:[%s0 + $0x98] sm:$0xf]
  %v74 = vld [vmem:[%s0 + $0x9c] sm:$0xf]
  %v75 = vld [vmem:[%s0 + $0xa0] sm:$0xf]
  %v76 = vld [vmem:[%s0 + $0xa4] sm:$0xf]
  %v77 = vld [vmem:[%s0 + $0xa8] sm:$0xf]
  %v78 = vld [vmem:[%s0 + $0xac] sm:$0xf]
  %v79 = vld [vmem:[%s0 + $0xb0] sm:$0xf]
  %v80 = vld [vmem:[%s0 + $0xb4] sm:$0xf]
  %v81 = vld [vmem:[%s0 + $0xb8] sm:$0xf]
  %v82 = vld [vmem:[%s0 + $0xbc] sm:$0xf]
  %v83 = vld [vmem:[%s0 + $0xc0] sm:$0xf]
  %v84 = vld [vmem:[%s0 + $0xc4] sm:$0xf]
  %v85 = vld [vmem:[%s0 + $0xc8] sm:$0xf]
  %v86 = vld [vmem:[%s0 + $0xcc] sm:$0xf]
  %v87 = vld [vmem:[%s0 + $0xd0] sm:$0xf]
  %v88 = vld [vmem:[%s0 + $0xd4] sm:$0xf]
  %v89 = vld [vmem:[%s0 + $0xd8] sm:$0xf]
  %v90 = vld [vmem:[%s0 + $0xdc] sm:$0xf]
  %v91 = vld [vmem:[%s0 + $0xe0] sm:$0xf]
  %v92 = vld [vmem:[%s0 + $0xe4] sm:$0xf]
  %v93 = vld [vmem:[%s0 + $0xe8] sm:$0xf]
  %v94 = vld [vmem:[%s0 + $0xec] sm:$0xf]
  %v95 = vld [vmem:[%s0 + $0xf0] sm:$0xf]
  %v96 = vld [vmem:[%s0 + $0xf4] sm:$0xf]
  %v97 = vld [vmem:[%s0 + $0xf8] sm:$0xf]
  %v98 = vld [vmem:[%s0 + $0xfc] sm:$0xf]
  %v99 = vld [vmem:[%s0 + $0x100] sm:$0xf]
  %v100 = vld [vmem:[%s0 + $0x104] sm:$0xf]
  %v101 = vld [vmem:[%s0 + $0x108] sm:$0xf]
  %v102 = vld [vmem:[%s0 + $0x10c] sm:$0xf]
  %v103 = vld [vmem:[%s0 + $0x110] sm:$0xf]
  %v104 = vld [vmem:[%s0 + $0x114] sm:$0xf]
  %v105 = vld [vmem:[%s0 + $0x118] sm:$0xf]
  %v106 = vld [vmem:[%s0 + $0x11c] sm:$0xf]
  %v107 = vld [vmem:[%s0 + $0x120] sm:$0xf]
  %v108 = vld [vmem:[%s0 + $0x124] sm:$0xf]
  %v109 = vld [vmem:[%s0 + $0x128] sm:$0xf]
  %v110 = vld [vmem:[%s0 + $0x12c] sm:$0xf]
  %v111 = vld [vmem:[%s0 + $0x130] sm:$0xf]
  %v112 = vld [vmem:[%s0 + $0x134] sm:$0xf]
  %v113 = vld [vmem:[%s0 + $0x138] sm:$0xf]
  %v114 = vld [vmem:[%s0 + $0x13c] sm:$0xf]
  %v115 = vld [vmem:[%s0 + $0x140] sm:$0xf]
  %v116 = vld [vmem:[%s0 + $0x144] sm:$0xf]
  %v117 = vld [vmem:[%s0 + $0x148] sm:$0xf]
  %v118 = vld [vmem:[%s0 + $0x14c] sm:$0xf]
  %v119 = vld [vmem:[%s0 + $0x150] sm:$0xf]
  %v120 = vld [vmem:[%s0 + $0x154] sm:$0xf]
  %v121 = vld [vmem:[%s0 + $0x158] sm:$0xf]
  %v122 = vld [vmem:[%s0 + $0x15c] sm:$0xf]
  %v123 = vld [vmem:[%s0 + $0x160] sm:$0xf]
  %v124 = vld [vmem:[%s0 + $0x164] sm:$0xf]
  %v125 = vld [vmem:[%s0 + $0x168] sm:$0xf]
  %v126 = vld [vmem:[%s0 + $0x16c] sm:$0xf]
  %v127 = vld [vmem:[%s0 + $0x170] sm:$0xf]
  %v128 = vld [vmem:[%s0 + $0x174] sm:$0xf]
  %v129 = vld [vmem:[%s0 + $0x178] sm:$0xf]
  %v130 = vld [vmem:[%s0 + $0x17c] sm:$0xf]
  %v131 = vld [vmem:[%s0 + $0x180] sm:$0xf]
  %v132 = vld [vmem:[%s0 + $0x184] sm:$0xf]
  %v133 = vld [vmem:[%s0 + $0x188] sm:$0xf]
  %v134 = vld [vmem:[%s0 + $0x18c] sm:$0xf]
  %v135 = vld [vmem:[%s0 + $0x190] sm:$0xf]
  %v136 = vld [vmem:[%s0 + $0x194] sm:$0xf]
  %v137 = vld [vmem:[%s0 + $0x198] sm:$0xf]
  %v138 = vld [vmem:[%s0 + $0x19c] sm:$0xf]
  %v139 = vld [vmem:[%s0 + $0x1a0] sm:$0xf]
  %v140 = vld [vmem:[%s0 + $0x1a4] sm:$0xf]
  %v141 = vld [vmem:[%s0 + $0x1a8] sm:$0xf]
  %v142 = vld [vmem:[%s0 + $0x1ac] sm:$0xf]
  %v143 = vld [vmem:[%s0 + $0x1b0] sm:$0xf]
  %v144 = vld [vmem:[%s0 + $0x1b4] sm:$0xf]
  %v145 = vld [vmem:[%s0 + $0x1b8] sm:$0xf]
  %v146 = vld [vmem:[%s0 + $0x1bc] sm:$0xf]
  %v147 = vld [vmem:[%s0 + $0x1c0] sm:$0xf]
  %v148 = vld [vmem:[%s0 + $0x1c4] sm:$0xf]
  %v149 = vld [vmem:[%s0 + $0x1c8] sm:$0xf]
  %v150 = vld [vmem:[%s0 + $0x1cc] sm:$0xf]
  %v151 = vld [vmem:[%s0 + $0x1d0] sm:$0xf]
  %v152 = vld [vmem:[%s0 + $0x1d4] sm:$0xf]
  %v153 = vld [vmem:[%s0 + $0x1d8] sm:$0xf]
  %v154 = vld [vmem:[%s0 + $0x1dc] sm:$0xf]
  %v155 = vld [vmem:[%s0 + $0x1e0] sm:$0xf]
  %v156 = vld [vmem:[%s0 + $0x1e4] sm:$0xf]
  %v157 = vld [vmem:[%s0 + $0x1e8] sm:$0xf]
  %v158 = vld [vmem:[%s0 + $0x1ec] sm:$0xf]
  %v159 = vld [vmem:[%s0 + $0x1f0] sm:$0xf]
  %v160 = vld [vmem:[%s0 + $0x1f4] sm:$0xf]
  %v161 = vld [vmem:[%s0 + $0x1f8] sm:$0xf]
  %v162 = vld [vmem:[%s0 + $0x1fc] sm:$0xf]
  %v163 = vld [vmem:[%s0 + $0x200] sm:$0xf]
  %v164 = vld [vmem:[%s0 + $0x204] sm:$0xf]
  %v165 = vld [vmem:[%s0 + $0x208] sm:$0xf]
  %v166 = vld [vmem:[%s0 + $0x20c] sm:$0xf]
  %v167 = vld [vmem:[%s0 + $0x210] sm:$0xf]
  %v168 = vld [vmem:[%s0 + $0x214] sm:$0xf]
  %v169 = vld [vmem:[%s0 + $0x218] sm:$0xf]
  %v170 = vld [vmem:[%s0 + $0x21c] sm:$0xf]
  %v171 = vld [vmem:[%s0 + $0x220] sm:$0xf]
  %v172 = vld [vmem:[%s0 + $0x224] sm:$0xf]
  %v173 = vld [vmem:[%s0 + $0x228] sm:$0xf]
  %v174 = vld [vmem:[%s0 + $0x22c] sm:$0xf]
  %v175 = vld [vmem:[%s0 + $0x230] sm:$0xf]
  %v176 = vld [vmem:[%s0 + $0x234] sm:$0xf]
  %v177 = vld [vmem:[%s0 + $0x238] sm:$0xf]
  %v178 = vld [vmem:[%s0 + $0x23c] sm:$0xf]
  %v179 = vld [vmem:[%s0 + $0x240] sm:$0xf]
  %v180 = vld [vmem:[%s0 + $0x244] sm:$0xf]
  %v181 = vld [vmem:[%s0 + $0x248] sm:$0xf]
  %v182 = vld [vmem:[%s0 + $0x24c] sm:$0xf]
  %v183 = vld [vmem:[%s0 + $0x250] sm:$0xf]
  %v184 = vld [vmem:[%s0 + $0x254] sm:$0xf]
  %v185 = vld [vmem:[%s0 + $0x258] sm:$0xf]
  %v186 = vld [vmem:[%s0 + $0x25c] sm:$0xf]
  %v187 = vld [vmem:[%s0 + $0x260] sm:$0xf]
  %v188 = vld [vmem:[%s0 + $0x264] sm:$0xf]
  %v189 = vld [vmem:[%s0 + $0x268] sm:$0xf]
  %v190 = vld [vmem:[%s0 + $0x26c] sm:$0xf]
  %v191 = vld [vmem:[%s0 + $0x270] sm:$0xf]
  %v192 = vld [vmem:[%s0 + $0x274] sm:$0xf]
  %v193 = vld [vmem:[%s0 + $0x278] sm:$0xf]
  %v194 = vld [vmem:[%s0 + $0x27c] sm:$0xf]
  %v195 = vld [vmem:[%s0 + $0x280] sm:$0xf]
  %v196 = vld [vmem:[%s0 + $0x284] sm:$0xf]
  %v197 = vld [vmem:[%s0 + $0x288] sm:$0xf]
  %v198 = vld [vmem:[%s0 + $0x28c] sm:$0xf]
  %v199 = vld [vmem:[%s0 + $0x290] sm:$0xf]
  %v200 = vld [vmem:[%s0 + $0x294] sm:$0xf]
  %v201 = vld [vmem:[%s0 + $0x298] sm:$0xf]
  %v202 = vld [vmem:[%s0 + $0x29c] sm:$0xf]
  %v203 = vld [vmem:[%s0 + $0x2a0] sm:$0xf]
  %v204 = vld [vmem:[%s0 + $0x2a4] sm:$0xf]
  %v205 = vld [vmem:[%s0 + $0x2a8] sm:$0xf]
  %v206 = vld [vmem:[%s0 + $0x2ac] sm:$0xf]
  %v207 = vld [vmem:[%s0 + $0x2b0] sm:$0xf]
  %v208 = vld [vmem:[%s0 + $0x2b4] sm:$0xf]
  %v209 = vld [vmem:[%s0 + $0x2b8] sm:$0xf]
  %v210 = vld [vmem:[%s0 + $0x2bc] sm:$0xf]
  %v211 = vld [vmem:[%s0 + $0x2c0] sm:$0xf]
  %v212 = vld [vmem:[%s0 + $0x2c4] sm:$0xf]
  %v213 = vld [vmem:[%s0 + $0x2c8] sm:$0xf]
  %v214 = vld [vmem:[%s0 + $0x2cc] sm:$0xf]
  %v215 = vld [vmem:[%s0 + $0x2d0] sm:$0xf]
  %v216 = vld [vmem:[%s0 + $0x2d4] sm:$0xf]
  %v217 = vld [vmem:[%s0 + $0x2d8] sm:$0xf]
  %v218 = vld [vmem:[%s0 + $0x2dc] sm:$0xf]
  %v219 = vld [vmem:[%s0 + $0x2e0] sm:$0xf]
  %v220 = vld [vmem:[%s0 + $0x2e4] sm:$0xf]
  %v221 = vld [vmem:[%s0 + $0x2e8] sm:$0xf]
  %v222 = vld [vmem:[%s0 + $0x2ec] sm:$0xf]
  %v223 = vld [vmem:[%s0 + $0x2f0] sm:$0xf]
  %v224 = vld [vmem:[%s0 + $0x2f4] sm:$0xf]
  %v225 = vld [vmem:[%s0 + $0x2f8] sm:$0xf]
  %v226 = vld [vmem:[%s0 + $0x2fc] sm:$0xf]
  %v227 = vld [vmem:[%s0 + $0x300] sm:$0xf]
  %v228 = vld [vmem:[%s0 + $0x304] sm:$0xf]
  %v229 = vld [vmem:[%s0 + $0x308] sm:$0xf]
  %v230 = vld [vmem:[%s0 + $0x30c] sm:$0xf]
  %v231 = vld [vmem:[%s0 + $0x310] sm:$0xf]
  %v232 = vld [vmem:[%s0 + $0x314] sm:$0xf]
  %v233 = vld [vmem:[%s0 + $0x318] sm:$0xf]
  %v234 = vld [vmem:[%s0 + $0x31c] sm:$0xf]
  %v235 = vld [vmem:[%s0 + $0x320] sm:$0xf]
  %v236 = vld [vmem:[%s0 + $0x324] sm:$0xf]
  %v237 = vld [vmem:[%s0 + $0x328] sm:$0xf]
  %v238 = vld [vmem:[%s0 + $0x32c] sm:$0xf]
  %v239 = vld [vmem:[%s0 + $0x330] sm:$0xf]
  %v240 = vld [vmem:[%s0 + $0x334] sm:$0xf]
  %v241 = vld [vmem:[%s0 + $0x338] sm:$0xf]
  %v242 = vld [vmem:[%s0 + $0x33c] sm:$0xf]
  %v243 = vld [vmem:[%s0 + $0x340] sm:$0xf]
  %v244 = vld [vmem:[%s0 + $0x344] sm:$0xf]
  %v245 = vld [vmem:[%s0 + $0x348] sm:$0xf]
  %v246 = vld [vmem:[%s0 + $0x34c] sm:$0xf]
  %v247 = vld [vmem:[%s0 + $0x350] sm:$0xf]
  %v248 = vld [vmem:[%s0 + $0x354] sm:$0xf]
  %v249 = vld [vmem:[%s0 + $0x358] sm:$0xf]
  %v250 = vld [vmem:[%s0 + $0x35c] sm:$0xf]
  %v251 = vld [vmem:[%s0 + $0x360] sm:$0xf]
  %v252 = vld [vmem:[%s0 + $0x364] sm:$0xf]
  %v253 = vld [vmem:[%s0 + $0x368] sm:$0xf]
  %v254 = vld [vmem:[%s0 + $0x36c] sm:$0xf]
  %v255 = vld [vmem:[%s0 + $0x370] sm:$0xf]
  %v256 = vld [vmem:[%s0 + $0x374] sm:$0xf]
  %v257 = vld [vmem:[%s0 + $0x378] sm:$0xf]
  %v258 = vld [vmem:[%s0 + $0x37c] sm:$0xf]
  %v259 = vld [vmem:[%s0 + $0x380] sm:$0xf]
  %v260 = vld [vmem:[%s0 + $0x384] sm:$0xf]
  %v261 = vld [vmem:[%s0 + $0x388] sm:$0xf]
  %v262 = vld [vmem:[%s0 + $0x38c] sm:$0xf]
  %v263 = vld [vmem:[%s0 + $0x390] sm:$0xf]
  %v264 = vld [vmem:[%s0 + $0x394] sm:$0xf]
  %v265 = vld [vmem:[%s0 + $0x398] sm:$0xf]
  %v266 = vld [vmem:[%s0 + $0x39c] sm:$0xf]
  %v267 = vld [vmem:[%s0 + $0x3a0] sm:$0xf]
  %v268 = vld [vmem:[%s0 + $0x3a4] sm:$0xf]
  %v269 = vld [vmem:[%s0 + $0x3a8] sm:$0xf]
  %v270 = vld [vmem:[%s0 + $0x3ac] sm:$0xf]
  %v271 = vld [vmem:[%s0 + $0x3b0] sm:$0xf]
  %v272 = vld [vmem:[%s0 + $0x3b4] sm:$0xf]
  %v273 = vld [vmem:[%s0 + $0x3b8] sm:$0xf]
  %v274 = vld [vmem:[%s0 + $0x3bc] sm:$0xf]
  %v275 = vld [vmem:[%s0 + $0x3c0] sm:$0xf]
  %v276 = vld [vmem:[%s0 + $0x3c4] sm:$0xf]
  %v277 = vld [vmem:[%s0 + $0x3c8] sm:$0xf]
  %v278 = vld [vmem:[%s0 + $0x3cc] sm:$0xf]
  %v279 = vld [vmem:[%s0 + $0x3d0] sm:$0xf]
  %v280 = vld [vmem:[%s0 + $0x3d4] sm:$0xf]
  %v281 = vld [vmem:[%s0 + $0x3d8] sm:$0xf]
  %v282 = vld [vmem:[%s0 + $0x3dc] sm:$0xf]
  %v283 = vld [vmem:[%s0 + $0x3e0] sm:$0xf]
  %v284 = vld [vmem:[%s0 + $0x3e4] sm:$0xf]
  %v285 = vld [vmem:[%s0 + $0x3e8] sm:$0xf]
  %v286 = vld [vmem:[%s0 + $0x3ec] sm:$0xf]
  %v287 = vld [vmem:[%s0 + $0x3f0] sm:$0xf]
  %v288 = vld [vmem:[%s0 + $0x3f4] sm:$0xf]
  %v289 = vld [vmem:[%s0 + $0x3f8] sm:$0xf]
  %v290 = vld [vmem:[%s0 + $0x3fc] sm:$0xf]
  %v291 = vld [vmem:[%s0 + $0x400] sm:$0xf]
  %v292 = vld [vmem:[%s0 + $0x404] sm:$0xf]
  %v293 = vld [vmem:[%s0 + $0x408] sm:$0xf]
  %v294 = vld [vmem:[%s0 + $0x40c] sm:$0xf]
  %v295 = vld [vmem:[%s0 + $0x410] sm:$0xf]
  %v296 = vld [vmem:[%s0 + $0x414] sm:$0xf]
  %v297 = vld [vmem:[%s0 + $0x418] sm:$0xf]
  %v298 = vld [vmem:[%s0 + $0x41c] sm:$0xf]
  %v299 = vld [vmem:[%s0 + $0x420] sm:$0xf]
  %v300 = vld [vmem:[%s0 + $0x424] sm:$0xf]
  %v301 = vld [vmem:[%s0 + $0x428] sm:$0xf]
  %v302 = vld [vmem:[%s0 + $0x42c] sm:$0xf]
  %v303 = vld [vmem:[%s0 + $0x430] sm:$0xf]
  %v304 = vld [vmem:[%s0 + $0x434] sm:$0xf]
  %v305 = vld [vmem:[%s0 + $0x438] sm:$0xf]
  %v306 = vld [vmem:[%s0 + $0x43c] sm:$0xf]
  %v307 = vld [vmem:[%s0 + $0x440] sm:$0xf]
  %v308 = vld [vmem:[%s0 + $0x444] sm:$0xf]
  %v309 = vld [vmem:[%s0 + $0x448] sm:$0xf]
  %v310 = vld [vmem:[%s0 + $0x44c] sm:$0xf]
  %v311 = vld [vmem:[%s0 + $0x450] sm:$0xf]
  %v312 = vld [vmem:[%s0 + $0x454] sm:$0xf]
  %v313 = vld [vmem:[%s0 + $0x458] sm:$0xf]
  %v314 = vld [vmem:[%s0 + $0x45c] sm:$0xf]
  %v315 = vld [vmem:[%s0 + $0x460] sm:$0xf]
  %v316 = vld [vmem:[%s0 + $0x464] sm:$0xf]
  %v317 = vld [vmem:[%s0 + $0x468] sm:$0xf]
  %v318 = vld [vmem:[%s0 + $0x46c] sm:$0xf]
  %v319 = vld [vmem:[%s0 + $0x470] sm:$0xf]
  %v320 = vld [vmem:[%s0 + $0x474] sm:$0xf]
  %v321 = vld [vmem:[%s0 + $0x478] sm:$0xf]
  %v322 = vld [vmem:[%s0 + $0x47c] sm:$0xf]
  %v323 = vld [vmem:[%s0 + $0x480] sm:$0xf]
  %v324 = vld [vmem:[%s0 + $0x484] sm:$0xf]
  %v325 = vld [vmem:[%s0 + $0x488] sm:$0xf]
  %v326 = vld [vmem:[%s0 + $0x48c] sm:$0xf]
  %v327 = vld [vmem:[%s0 + $0x490] sm:$0xf]
  %v328 = vld [vmem:[%s0 + $0x494] sm:$0xf]
  %v329 = vld [vmem:[%s0 + $0x498] sm:$0xf]
  %v330 = vld [vmem:[%s0 + $0x49c] sm:$0xf]
  %v331 = vld [vmem:[%s0 + $0x4a0] sm:$0xf]
  %v332 = vld [vmem:[%s0 + $0x4a4] sm:$0xf]
  %v333 = vld [vmem:[%s0 + $0x4a8] sm:$0xf]
  %v334 = vld [vmem:[%s0 + $0x4ac] sm:$0xf]
  %v335 = vld [vmem:[%s0 + $0x4b0] sm:$0xf]
  %v336 = vld [vmem:[%s0 + $0x4b4] sm:$0xf]
  %v337 = vld [vmem:[%s0 + $0x4b8] sm:$0xf]
  %v338 = vld [vmem:[%s0 + $0x4bc] sm:$0xf]
  %v339 = vld [vmem:[%s0 + $0x4c0] sm:$0xf]
  %v340 = vld [vmem:[%s0 + $0x4c4] sm:$0xf]
  %v341 = vld [vmem:[%s0 + $0x4c8] sm:$0xf]
  %v342 = vld [vmem:[%s0 + $0x4cc] sm:$0xf]
  %v343 = vld [vmem:[%s0 + $0x4d0] sm:$0xf]
  %v344 = vld [vmem:[%s0 + $0x4d4] sm:$0xf]
  %v345 = vld [vmem:[%s0 + $0x4d8] sm:$0xf]
  %v346 = vld [vmem:[%s0 + $0x4dc] sm:$0xf]
  %v347 = vld [vmem:[%s0 + $0x4e0] sm:$0xf]
  %v348 = vld [vmem:[%s0 + $0x4e4] sm:$0xf]
  %v349 = vld [vmem:[%s0 + $0x4e8] sm:$0xf]
  %v350 = vld [vmem:[%s0 + $0x4ec] sm:$0xf]
  %v351 = vld [vmem:[%s0 + $0x4f0] sm:$0xf]
  %v352 = vld [vmem:[%s0 + $0x4f4] sm:$0xf]
  %v353 = vld [vmem:[%s0 + $0x4f8] sm:$0xf]
  %v354 = vld [vmem:[%s0 + $0x4fc] sm:$0xf]
  %v355 = vld [vmem:[%s0 + $0x500] sm:$0xf]
  %v356 = vld [vmem:[%s0 + $0x504] sm:$0xf]
  %v357 = vld [vmem:[%s0 + $0x508] sm:$0xf]
  %v358 = vld [vmem:[%s0 + $0x50c] sm:$0xf]
  %v359 = vld [vmem:[%s0 + $0x510] sm:$0xf]
  %v360 = vld [vmem:[%s0 + $0x514] sm:$0xf]
  %v361 = vld [vmem:[%s0 + $0x518] sm:$0xf]
  %v362 = vld [vmem:[%s0 + $0x51c] sm:$0xf]
  %v363 = vld [vmem:[%s0 + $0x520] sm:$0xf]
  %v364 = vld [vmem:[%s0 + $0x524] sm:$0xf]
  %v365 = vld [vmem:[%s0 + $0x528] sm:$0xf]
  %v366 = vld [vmem:[%s0 + $0x52c] sm:$0xf]
  %v367 = vld [vmem:[%s0 + $0x530] sm:$0xf]
  %v368 = vld [vmem:[%s0 + $0x534] sm:$0xf]
  %v369 = vld [vmem:[%s0 + $0x538] sm:$0xf]
  %v370 = vld [vmem:[%s0 + $0x53c] sm:$0xf]
  %v371 = vld [vmem:[%s0 + $0x540] sm:$0xf]
  %v372 = vld [vmem:[%s0 + $0x544] sm:$0xf]
  %v373 = vld [vmem:[%s0 + $0x548] sm:$0xf]
  %v374 = vld [vmem:[%s0 + $0x54c] sm:$0xf]
  %v375 = vld [vmem:[%s0 + $0x550] sm:$0xf]
  %v376 = vld [vmem:[%s0 + $0x554] sm:$0xf]
  %v377 = vld [vmem:[%s0 + $0x558] sm:$0xf]
  %v378 = vld [vmem:[%s0 + $0x55c] sm:$0xf]
  %v379 = vld [vmem:[%s0 + $0x560] sm:$0xf]
  %v380 = vld [vmem:[%s0 + $0x564] sm:$0xf]
  %v381 = vld [vmem:[%s0 + $0x568] sm:$0xf]
  %v382 = vld [vmem:[%s0 + $0x56c] sm:$0xf]
  %v383 = vld [vmem:[%s0 + $0x570] sm:$0xf]
  %v384 = vld [vmem:[%s0 + $0x574] sm:$0xf]
  %v385 = vld [vmem:[%s0 + $0x578] sm:$0xf]
  %v386 = vld [vmem:[%s0 + $0x57c] sm:$0xf]
  %v387 = vld [vmem:[%s0 + $0x580] sm:$0xf]
  %v388 = vld [vmem:[%s0 + $0x584] sm:$0xf]
  %v389 = vld [vmem:[%s0 + $0x588] sm:$0xf]
  %v390 = vld [vmem:[%s0 + $0x58c] sm:$0xf]
  %v391 = vld [vmem:[%s0 + $0x590] sm:$0xf]
  %v392 = vld [vmem:[%s0 + $0x594] sm:$0xf]
  %v393 = vld [vmem:[%s0 + $0x598] sm:$0xf]
  %v394 = vld [vmem:[%s0 + $0x59c] sm:$0xf]
  %v395 = vld [vmem:[%s0 + $0x5a0] sm:$0xf]
  %v396 = vld [vmem:[%s0 + $0x5a4] sm:$0xf]
  %v397 = vld [vmem:[%s0 + $0x5a8] sm:$0xf]
  %v398 = vld [vmem:[%s0 + $0x5ac] sm:$0xf]
  %v399 = vld [vmem:[%s0 + $0x5b0] sm:$0xf]
  %v400 = vld [vmem:[%s0 + $0x5b4] sm:$0xf]
  %v401 = vld [vmem:[%s0 + $0x5b8] sm:$0xf]
  %v402 = vld [vmem:[%s0 + $0x5bc] sm:$0xf]
  %v403 = vld [vmem:[%s0 + $0x5c0] sm:$0xf]
  %v404 = vld [vmem:[%s0 + $0x5c4] sm:$0xf]
  %v405 = vld [vmem:[%s0 + $0x5c8] sm:$0xf]
  %v406 = vld [vmem:[%s0 + $0x5cc] sm:$0xf]
  %v407 = vld [vmem:[%s0 + $0x5d0] sm:$0xf]
  %v408 = vld [vmem:[%s0 + $0x5d4] sm:$0xf]
  %v409 = vld [vmem:[%s0 + $0x5d8] sm:$0xf]
  %v410 = vld [vmem:[%s0 + $0x5dc] sm:$0xf]
  %v411 = vld [vmem:[%s0 + $0x5e0] sm:$0xf]
  %v412 = vld [vmem:[%s0 + $0x5e4] sm:$0xf]
  %v413 = vld [vmem:[%s0 + $0x5e8] sm:$0xf]
  %v414 = vld [vmem:[%s0 + $0x5ec] sm:$0xf]
  %v415 = vld [vmem:[%s0 + $0x5f0] sm:$0xf]
  %v416 = vld [vmem:[%s0 + $0x5f4] sm:$0xf]
  %v417 = vld [vmem:[%s0 + $0x5f8] sm:$0xf]
  %v418 = vld [vmem:[%s0 + $0x5fc] sm:$0xf]
  %v419 = vld [vmem:[%s0 + $0x600] sm:$0xf]
  %v420 = vld [vmem:[%s0 + $0x604] sm:$0xf]
  %v421 = vld [vmem:[%s0 + $0x608] sm:$0xf]
  %v422 = vld [vmem:[%s0 + $0x60c] sm:$0xf]
  %v423 = vld [vmem:[%s0 + $0x610] sm:$0xf]
  %v424 = vld [vmem:[%s0 + $0x614] sm:$0xf]
  %v425 = vld [vmem:[%s0 + $0x618] sm:$0xf]
  %v426 = vld [vmem:[%s0 + $0x61c] sm:$0xf]
  %v427 = vld [vmem:[%s0 + $0x620] sm:$0xf]
  %v428 = vld [vmem:[%s0 + $0x624] sm:$0xf]
  %v429 = vld [vmem:[%s0 + $0x628] sm:$0xf]
  %v430 = vld [vmem:[%s0 + $0x62c] sm:$0xf]
  %v431 = vld [vmem:[%s0 + $0x630] sm:$0xf]
  %v432 = vld [vmem:[%s0 + $0x634] sm:$0xf]
  %v433 = vld [vmem:[%s0 + $0x638] sm:$0xf]
  %v434 = vld [vmem:[%s0 + $0x63c] sm:$0xf]
  %v435 = vld [vmem:[%s0 + $0x640] sm:$0xf]
  %v436 = vld [vmem:[%s0 + $0x644] sm:$0xf]
  %v437 = vld [vmem:[%s0 + $0x648] sm:$0xf]
  %v438 = vld [vmem:[%s0 + $0x64c] sm:$0xf]
  %v439 = vld [vmem:[%s0 + $0x650] sm:$0xf]
  %v440 = vld [vmem:[%s0 + $0x654] sm:$0xf]
  %v441 = vld [vmem:[%s0 + $0x658] sm:$0xf]
  %v442 = vld [vmem:[%s0 + $0x65c] sm:$0xf]
  %v443 = vld [vmem:[%s0 + $0x660] sm:$0xf]
  %v444 = vld [vmem:[%s0 + $0x664] sm:$0xf]
  %v445 = vld [vmem:[%s0 + $0x668] sm:$0xf]
  %v446 = vld [vmem:[%s0 + $0x66c] sm:$0xf]
  %v447 = vld [vmem:[%s0 + $0x670] sm:$0xf]
  %v448 = vld [vmem:[%s0 + $0x674] sm:$0xf]
  %v449 = vld [vmem:[%s0 + $0x678] sm:$0xf]
  %v450 = vld [vmem:[%s0 + $0x67c] sm:$0xf]
  %v451 = vld [vmem:[%s0 + $0x680] sm:$0xf]
  %v452 = vld [vmem:[%s0 + $0x684] sm:$0xf]
  %v453 = vld [vmem:[%s0 + $0x688] sm:$0xf]
  %v454 = vld [vmem:[%s0 + $0x68c] sm:$0xf]
  %v455 = vld [vmem:[%s0 + $0x690] sm:$0xf]
  %v456 = vld [vmem:[%s0 + $0x694] sm:$0xf]
  %v457 = vld [vmem:[%s0 + $0x698] sm:$0xf]
  %v458 = vld [vmem:[%s0 + $0x69c] sm:$0xf]
  %v459 = vld [vmem:[%s0 + $0x6a0] sm:$0xf]
  %v460 = vld [vmem:[%s0 + $0x6a4] sm:$0xf]
  %v461 = vld [vmem:[%s0 + $0x6a8] sm:$0xf]
  %v462 = vld [vmem:[%s0 + $0x6ac] sm:$0xf]
  %v463 = vld [vmem:[%s0 + $0x6b0] sm:$0xf]
  %v464 = vld [vmem:[%s0 + $0x6b4] sm:$0xf]
  %v465 = vld [vmem:[%s0 + $0x6b8] sm:$0xf]
  %v466 = vld [vmem:[%s0 + $0x6bc] sm:$0xf]
  %v467 = vld [vmem:[%s0 + $0x6c0] sm:$0xf]
  %v468 = vld [vmem:[%s0 + $0x6c4] sm:$0xf]
  %v469 = vld [vmem:[%s0 + $0x6c8] sm:$0xf]
  %v470 = vld [vmem:[%s0 + $0x6cc] sm:$0xf]
  %v471 = vld [vmem:[%s0 + $0x6d0] sm:$0xf]
  %v472 = vld [vmem:[%s0 + $0x6d4] sm:$0xf]
  %v473 = vld [vmem:[%s0 + $0x6d8] sm:$0xf]
  %v474 = vld [vmem:[%s0 + $0x6dc] sm:$0xf]
  %v475 = vld [vmem:[%s0 + $0x6e0] sm:$0xf]
  %v476 = vld [vmem:[%s0 + $0x6e4] sm:$0xf]
  %v477 = vld [vmem:[%s0 + $0x6e8] sm:$0xf]
  %v478 = vld [vmem:[%s0 + $0x6ec] sm:$0xf]
  %v479 = vld [vmem:[%s0 + $0x6f0] sm:$0xf]
  %v480 = vld [vmem:[%s0 + $0x6f4] sm:$0xf]
  %v481 = vld [vmem:[%s0 + $0x6f8] sm:$0xf]
  %v482 = vld [vmem:[%s0 + $0x6fc] sm:$0xf]
  %v483 = vld [vmem:[%s0 + $0x700] sm:$0xf]
  %v484 = vld [vmem:[%s0 + $0x704] sm:$0xf]
  %v485 = vld [vmem:[%s0 + $0x708] sm:$0xf]
  %v486 = vld [vmem:[%s0 + $0x70c] sm:$0xf]
  %v487 = vld [vmem:[%s0 + $0x710] sm:$0xf]
  %v488 = vld [vmem:[%s0 + $0x714] sm:$0xf]
  %v489 = vld [vmem:[%s0 + $0x718] sm:$0xf]
  %v490 = vld [vmem:[%s0 + $0x71c] sm:$0xf]
  %v491 = vld [vmem:[%s0 + $0x720] sm:$0xf]
  %v492 = vld [vmem:[%s0 + $0x724] sm:$0xf]
  %v493 = vld [vmem:[%s0 + $0x728] sm:$0xf]
  %v494 = vld [vmem:[%s0 + $0x72c] sm:$0xf]
  %v495 = vld [vmem:[%s0 + $0x730] sm:$0xf]
  %v496 = vld [vmem:[%s0 + $0x734] sm:$0xf]
  %v497 = vld [vmem:[%s0 + $0x738] sm:$0xf]
  %v498 = vld [vmem:[%s0 + $0x73c] sm:$0xf]
  %v499 = vld [vmem:[%s0 + $0x740] sm:$0xf]
  %v500 = vld [vmem:[%s0 + $0x744] sm:$0xf]
  %v501 = vld [vmem:[%s0 + $0x748] sm:$0xf]
  %v502 = vld [vmem:[%s0 + $0x74c] sm:$0xf]
  %v503 = vld [vmem:[%s0 + $0x750] sm:$0xf]
  %v504 = vld [vmem:[%s0 + $0x754] sm:$0xf]
  %v505 = vld [vmem:[%s0 + $0x758] sm:$0xf]
  %v506 = vld [vmem:[%s0 + $0x75c] sm:$0xf]
  %v507 = vld [vmem:[%s0 + $0x760] sm:$0xf]
  %v508 = vld [vmem:[%s0 + $0x764] sm:$0xf]
  %v509 = vld [vmem:[%s0 + $0x768] sm:$0xf]
  %v510 = vld [vmem:[%s0 + $0x76c] sm:$0xf]
  %v511 = vld [vmem:[%s0 + $0x770] sm:$0xf]
  %v512 = vld [vmem:[%s0 + $0x774] sm:$0xf]
  %v513 = vld [vmem:[%s0 + $0x778] sm:$0xf]
  %v514 = vld [vmem:[%s0 + $0x77c] sm:$0xf]
  %v515 = vld [vmem:[%s0 + $0x780] sm:$0xf]
  %v516 = vld [vmem:[%s0 + $0x784] sm:$0xf]
  %v517 = vld [vmem:[%s0 + $0x788] sm:$0xf]
  %v518 = vld [vmem:[%s0 + $0x78c] sm:$0xf]
  %v519 = vld [vmem:[%s0 + $0x790] sm:$0xf]
  %v520 = vld [vmem:[%s0 + $0x794] sm:$0xf]
  %v521 = vld [vmem:[%s0 + $0x798] sm:$0xf]
  %v522 = vld [vmem:[%s0 + $0x79c] sm:$0xf]
  %v523 = vld [vmem:[%s0 + $0x7a0] sm:$0xf]
  %v524 = vld [vmem:[%s0 + $0x7a4] sm:$0xf]
  %v525 = vld [vmem:[%s0 + $0x7a8] sm:$0xf]
  %v526 = vld [vmem:[%s0 + $0x7ac] sm:$0xf]
  %v527 = vld [vmem:[%s0 + $0x7b0] sm:$0xf]
  %v528 = vld [vmem:[%s0 + $0x7b4] sm:$0xf]
  %v529 = vld [vmem:[%s0 + $0x7b8] sm:$0xf]
  %v530 = vld [vmem:[%s0 + $0x7bc] sm:$0xf]
  %v531 = vld [vmem:[%s0 + $0x7c0] sm:$0xf]
  %v532 = vld [vmem:[%s0 + $0x7c4] sm:$0xf]
  %v533 = vld [vmem:[%s0 + $0x7c8] sm:$0xf]
  %v534 = vld [vmem:[%s0 + $0x7cc] sm:$0xf]
  %v535 = vld [vmem:[%s0 + $0x7d0] sm:$0xf]
  %v536 = vld [vmem:[%s0 + $0x7d4] sm:$0xf]
  %v537 = vld [vmem:[%s0 + $0x7d8] sm:$0xf]
  %v538 = vld [vmem:[%s0 + $0x7dc] sm:$0xf]
  %v539 = vld [vmem:[%s0 + $0x7e0] sm:$0xf]
  %v540 = vld [vmem:[%s0 + $0x7e4] sm:$0xf]
  %v541 = vld [vmem:[%s0 + $0x7e8] sm:$0xf]
  %v542 = vld [vmem:[%s0 + $0x7ec] sm:$0xf]
  %v543 = vld [vmem:[%s0 + $0x7f0] sm:$0xf]
  %v544 = vld [vmem:[%s0 + $0x7f4] sm:$0xf]
  %v545 = vld [vmem:[%s0 + $0x7f8] sm:$0xf]
  %v546 = vld [vmem:[%s0 + $0x7fc] sm:$0xf]
  %v547 = vld [vmem:[%s1] sm:$0xf]
  %v548 = vld [vmem:[%s1 + $0x4] sm:$0xf]
  %v549 = vld [vmem:[%s1 + $0x8] sm:$0xf]
  %v550 = vld [vmem:[%s1 + $0xc] sm:$0x3]
  %v1063 = vunpack.c.l.b16 %v35
  %v1064 = vunpack.c.l.b16 %v36
  %v1065 = vunpack.c.l.b16 %v37
  %v1066 = vunpack.c.l.b16 %v38
  %v1067 = vunpack.c.l.b16 %v39
  %v1068 = vunpack.c.l.b16 %v40
  %v1069 = vunpack.c.l.b16 %v41
  %v1070 = vunpack.c.l.b16 %v42
  %v1071 = vunpack.c.l.b16 %v43
  %v1072 = vunpack.c.l.b16 %v44
  %v1073 = vunpack.c.l.b16 %v45
  %v1074 = vunpack.c.l.b16 %v46
  %v1075 = vunpack.c.l.b16 %v47
  %v1076 = vunpack.c.l.b16 %v48
  %v1077 = vunpack.c.l.b16 %v49
  %v1078 = vunpack.c.l.b16 %v50
  %v1079 = vunpack.c.l.b16 %v51
  %v1080 = vunpack.c.l.b16 %v52
  %v1081 = vunpack.c.l.b16 %v53
  %v1082 = vunpack.c.l.b16 %v54
  %v1083 = vunpack.c.l.b16 %v55
  %v1084 = vunpack.c.l.b16 %v56
  %v1085 = vunpack.c.l.b16 %v57
  %v1086 = vunpack.c.l.b16 %v58
  %v1087 = vunpack.c.l.b16 %v59
  %v1088 = vunpack.c.l.b16 %v60
  %v1089 = vunpack.c.l.b16 %v61
  %v1090 = vunpack.c.l.b16 %v62
  %v1091 = vunpack.c.l.b16 %v63
  %v1092 = vunpack.c.l.b16 %v64
  %v1093 = vunpack.c.l.b16 %v65
  %v1094 = vunpack.c.l.b16 %v66
  %v1095 = vunpack.c.l.b16 %v67
  %v1096 = vunpack.c.l.b16 %v68
  %v1097 = vunpack.c.l.b16 %v69
  %v1098 = vunpack.c.l.b16 %v70
  %v1099 = vunpack.c.l.b16 %v71
  %v1100 = vunpack.c.l.b16 %v72
  %v1101 = vunpack.c.l.b16 %v73
  %v1102 = vunpack.c.l.b16 %v74
  %v1103 = vunpack.c.l.b16 %v75
  %v1104 = vunpack.c.l.b16 %v76
  %v1105 = vunpack.c.l.b16 %v77
  %v1106 = vunpack.c.l.b16 %v78
  %v1107 = vunpack.c.l.b16 %v79
  %v1108 = vunpack.c.l.b16 %v80
  %v1109 = vunpack.c.l.b16 %v81
  %v1110 = vunpack.c.l.b16 %v82
  %v1111 = vunpack.c.l.b16 %v83
  %v1112 = vunpack.c.l.b16 %v84
  %v1113 = vunpack.c.l.b16 %v85
  %v1114 = vunpack.c.l.b16 %v86
  %v1115 = vunpack.c.l.b16 %v87
  %v1116 = vunpack.c.l.b16 %v88
  %v1117 = vunpack.c.l.b16 %v89
  %v1118 = vunpack.c.l.b16 %v90
  %v1119 = vunpack.c.l.b16 %v91
  %v1120 = vunpack.c.l.b16 %v92
  %v1121 = vunpack.c.l.b16 %v93
  %v1122 = vunpack.c.l.b16 %v94
  %v1123 = vunpack.c.l.b16 %v95
  %v1124 = vunpack.c.l.b16 %v96
  %v1125 = vunpack.c.l.b16 %v97
  %v1126 = vunpack.c.l.b16 %v98
  %v1127 = vunpack.c.l.b16 %v99
  %v1128 = vunpack.c.l.b16 %v100
  %v1129 = vunpack.c.l.b16 %v101
  %v1130 = vunpack.c.l.b16 %v102
  %v1131 = vunpack.c.l.b16 %v103
  %v1132 = vunpack.c.l.b16 %v104
  %v1133 = vunpack.c.l.b16 %v105
  %v1134 = vunpack.c.l.b16 %v106
  %v1135 = vunpack.c.l.b16 %v107
  %v1136 = vunpack.c.l.b16 %v108
  %v1137 = vunpack.c.l.b16 %v109
  %v1138 = vunpack.c.l.b16 %v110
  %v1139 = vunpack.c.l.b16 %v111
  %v1140 = vunpack.c.l.b16 %v112
  %v1141 = vunpack.c.l.b16 %v113
  %v1142 = vunpack.c.l.b16 %v114
  %v1143 = vunpack.c.l.b16 %v115
  %v1144 = vunpack.c.l.b16 %v116
  %v1145 = vunpack.c.l.b16 %v117
  %v1146 = vunpack.c.l.b16 %v118
  %v1147 = vunpack.c.l.b16 %v119
  %v1148 = vunpack.c.l.b16 %v120
  %v1149 = vunpack.c.l.b16 %v121
  %v1150 = vunpack.c.l.b16 %v122
  %v1151 = vunpack.c.l.b16 %v123
  %v1152 = vunpack.c.l.b16 %v124
  %v1153 = vunpack.c.l.b16 %v125
  %v1154 = vunpack.c.l.b16 %v126
  %v1155 = vunpack.c.l.b16 %v127
  %v1156 = vunpack.c.l.b16 %v128
  %v1157 = vunpack.c.l.b16 %v129
  %v1158 = vunpack.c.l.b16 %v130
  %v1159 = vunpack.c.l.b16 %v131
  %v1160 = vunpack.c.l.b16 %v132
  %v1161 = vunpack.c.l.b16 %v133
  %v1162 = vunpack.c.l.b16 %v134
  %v1163 = vunpack.c.l.b16 %v135
  %v1164 = vunpack.c.l.b16 %v136
  %v1165 = vunpack.c.l.b16 %v137
  %v1166 = vunpack.c.l.b16 %v138
  %v1167 = vunpack.c.l.b16 %v139
  %v1168 = vunpack.c.l.b16 %v140
  %v1169 = vunpack.c.l.b16 %v141
  %v1170 = vunpack.c.l.b16 %v142
  %v1171 = vunpack.c.l.b16 %v143
  %v1172 = vunpack.c.l.b16 %v144
  %v1173 = vunpack.c.l.b16 %v145
  %v1174 = vunpack.c.l.b16 %v146
  %v1175 = vunpack.c.l.b16 %v147
  %v1176 = vunpack.c.l.b16 %v148
  %v1177 = vunpack.c.l.b16 %v149
  %v1178 = vunpack.c.l.b16 %v150
  %v1179 = vunpack.c.l.b16 %v151
  %v1180 = vunpack.c.l.b16 %v152
  %v1181 = vunpack.c.l.b16 %v153
  %v1182 = vunpack.c.l.b16 %v154
  %v1183 = vunpack.c.l.b16 %v155
  %v1184 = vunpack.c.l.b16 %v156
  %v1185 = vunpack.c.l.b16 %v157
  %v1186 = vunpack.c.l.b16 %v158
  %v1187 = vunpack.c.l.b16 %v159
  %v1188 = vunpack.c.l.b16 %v160
  %v1189 = vunpack.c.l.b16 %v161
  %v1190 = vunpack.c.l.b16 %v162
  %v1191 = vunpack.c.l.b16 %v163
  %v1192 = vunpack.c.l.b16 %v164
  %v1193 = vunpack.c.l.b16 %v165
  %v1194 = vunpack.c.l.b16 %v166
  %v1195 = vunpack.c.l.b16 %v167
  %v1196 = vunpack.c.l.b16 %v168
  %v1197 = vunpack.c.l.b16 %v169
  %v1198 = vunpack.c.l.b16 %v170
  %v1199 = vunpack.c.l.b16 %v171
  %v1200 = vunpack.c.l.b16 %v172
  %v1201 = vunpack.c.l.b16 %v173
  %v1202 = vunpack.c.l.b16 %v174
  %v1203 = vunpack.c.l.b16 %v175
  %v1204 = vunpack.c.l.b16 %v176
  %v1205 = vunpack.c.l.b16 %v177
  %v1206 = vunpack.c.l.b16 %v178
  %v1207 = vunpack.c.l.b16 %v179
  %v1208 = vunpack.c.l.b16 %v180
  %v1209 = vunpack.c.l.b16 %v181
  %v1210 = vunpack.c.l.b16 %v182
  %v1211 = vunpack.c.l.b16 %v183
  %v1212 = vunpack.c.l.b16 %v184
  %v1213 = vunpack.c.l.b16 %v185
  %v1214 = vunpack.c.l.b16 %v186
  %v1215 = vunpack.c.l.b16 %v187
  %v1216 = vunpack.c.l.b16 %v188
  %v1217 = vunpack.c.l.b16 %v189
  %v1218 = vunpack.c.l.b16 %v190
  %v1219 = vunpack.c.l.b16 %v191
  %v1220 = vunpack.c.l.b16 %v192
  %v1221 = vunpack.c.l.b16 %v193
  %v1222 = vunpack.c.l.b16 %v194
  %v1223 = vunpack.c.l.b16 %v195
  %v1224 = vunpack.c.l.b16 %v196
  %v1225 = vunpack.c.l.b16 %v197
  %v1226 = vunpack.c.l.b16 %v198
  %v1227 = vunpack.c.l.b16 %v199
  %v1228 = vunpack.c.l.b16 %v200
  %v1229 = vunpack.c.l.b16 %v201
  %v1230 = vunpack.c.l.b16 %v202
  %v1231 = vunpack.c.l.b16 %v203
  %v1232 = vunpack.c.l.b16 %v204
  %v1233 = vunpack.c.l.b16 %v205
  %v1234 = vunpack.c.l.b16 %v206
  %v1235 = vunpack.c.l.b16 %v207
  %v1236 = vunpack.c.l.b16 %v208
  %v1237 = vunpack.c.l.b16 %v209
  %v1238 = vunpack.c.l.b16 %v210
  %v1239 = vunpack.c.l.b16 %v211
  %v1240 = vunpack.c.l.b16 %v212
  %v1241 = vunpack.c.l.b16 %v213
  %v1242 = vunpack.c.l.b16 %v214
  %v1243 = vunpack.c.l.b16 %v215
  %v1244 = vunpack.c.l.b16 %v216
  %v1245 = vunpack.c.l.b16 %v217
  %v1246 = vunpack.c.l.b16 %v218
  %v1247 = vunpack.c.l.b16 %v219
  %v1248 = vunpack.c.l.b16 %v220
  %v1249 = vunpack.c.l.b16 %v221
  %v1250 = vunpack.c.l.b16 %v222
  %v1251 = vunpack.c.l.b16 %v223
  %v1252 = vunpack.c.l.b16 %v224
  %v1253 = vunpack.c.l.b16 %v225
  %v1254 = vunpack.c.l.b16 %v226
  %v1255 = vunpack.c.l.b16 %v227
  %v1256 = vunpack.c.l.b16 %v228
  %v1257 = vunpack.c.l.b16 %v229
  %v1258 = vunpack.c.l.b16 %v230
  %v1259 = vunpack.c.l.b16 %v231
  %v1260 = vunpack.c.l.b16 %v232
  %v1261 = vunpack.c.l.b16 %v233
  %v1262 = vunpack.c.l.b16 %v234
  %v1263 = vunpack.c.l.b16 %v235
  %v1264 = vunpack.c.l.b16 %v236
  %v1265 = vunpack.c.l.b16 %v237
  %v1266 = vunpack.c.l.b16 %v238
  %v1267 = vunpack.c.l.b16 %v239
  %v1268 = vunpack.c.l.b16 %v240
  %v1269 = vunpack.c.l.b16 %v241
  %v1270 = vunpack.c.l.b16 %v242
  %v1271 = vunpack.c.l.b16 %v243
  %v1272 = vunpack.c.l.b16 %v244
  %v1273 = vunpack.c.l.b16 %v245
  %v1274 = vunpack.c.l.b16 %v246
  %v1275 = vunpack.c.l.b16 %v247
  %v1276 = vunpack.c.l.b16 %v248
  %v1277 = vunpack.c.l.b16 %v249
  %v1278 = vunpack.c.l.b16 %v250
  %v1279 = vunpack.c.l.b16 %v251
  %v1280 = vunpack.c.l.b16 %v252
  %v1281 = vunpack.c.l.b16 %v253
  %v1282 = vunpack.c.l.b16 %v254
  %v1283 = vunpack.c.l.b16 %v255
  %v1284 = vunpack.c.l.b16 %v256
  %v1285 = vunpack.c.l.b16 %v257
  %v1286 = vunpack.c.l.b16 %v258
  %v1287 = vunpack.c.l.b16 %v259
  %v1288 = vunpack.c.l.b16 %v260
  %v1289 = vunpack.c.l.b16 %v261
  %v1290 = vunpack.c.l.b16 %v262
  %v1291 = vunpack.c.l.b16 %v263
  %v1292 = vunpack.c.l.b16 %v264
  %v1293 = vunpack.c.l.b16 %v265
  %v1294 = vunpack.c.l.b16 %v266
  %v1295 = vunpack.c.l.b16 %v267
  %v1296 = vunpack.c.l.b16 %v268
  %v1297 = vunpack.c.l.b16 %v269
  %v1298 = vunpack.c.l.b16 %v270
  %v1299 = vunpack.c.l.b16 %v271
  %v1300 = vunpack.c.l.b16 %v272
  %v1301 = vunpack.c.l.b16 %v273
  %v1302 = vunpack.c.l.b16 %v274
  %v1303 = vunpack.c.l.b16 %v275
  %v1304 = vunpack.c.l.b16 %v276
  %v1305 = vunpack.c.l.b16 %v277
  %v1306 = vunpack.c.l.b16 %v278
  %v1307 = vunpack.c.l.b16 %v279
  %v1308 = vunpack.c.l.b16 %v280
  %v1309 = vunpack.c.l.b16 %v281
  %v1310 = vunpack.c.l.b16 %v282
  %v1311 = vunpack.c.l.b16 %v283
  %v1312 = vunpack.c.l.b16 %v284
  %v1313 = vunpack.c.l.b16 %v285
  %v1314 = vunpack.c.l.b16 %v286
  %v1315 = vunpack.c.l.b16 %v287
  %v1316 = vunpack.c.l.b16 %v288
  %v1317 = vunpack.c.l.b16 %v289
  %v1318 = vunpack.c.l.b16 %v290
  %v1319 = vunpack.c.l.b16 %v291
  %v1320 = vunpack.c.l.b16 %v292
  %v1321 = vunpack.c.l.b16 %v293
  %v1322 = vunpack.c.l.b16 %v294
  %v1323 = vunpack.c.l.b16 %v295
  %v1324 = vunpack.c.l.b16 %v296
  %v1325 = vunpack.c.l.b16 %v297
  %v1326 = vunpack.c.l.b16 %v298
  %v1327 = vunpack.c.l.b16 %v299
  %v1328 = vunpack.c.l.b16 %v300
  %v1329 = vunpack.c.l.b16 %v301
  %v1330 = vunpack.c.l.b16 %v302
  %v1331 = vunpack.c.l.b16 %v303
  %v1332 = vunpack.c.l.b16 %v304
  %v1333 = vunpack.c.l.b16 %v305
  %v1334 = vunpack.c.l.b16 %v306
  %v1335 = vunpack.c.l.b16 %v307
  %v1336 = vunpack.c.l.b16 %v308
  %v1337 = vunpack.c.l.b16 %v309
  %v1338 = vunpack.c.l.b16 %v310
  %v1339 = vunpack.c.l.b16 %v311
  %v1340 = vunpack.c.l.b16 %v312
  %v1341 = vunpack.c.l.b16 %v313
  %v1342 = vunpack.c.l.b16 %v314
  %v1343 = vunpack.c.l.b16 %v315
  %v1344 = vunpack.c.l.b16 %v316
  %v1345 = vunpack.c.l.b16 %v317
  %v1346 = vunpack.c.l.b16 %v318
  %v1347 = vunpack.c.l.b16 %v319
  %v1348 = vunpack.c.l.b16 %v320
  %v1349 = vunpack.c.l.b16 %v321
  %v1350 = vunpack.c.l.b16 %v322
  %v1351 = vunpack.c.l.b16 %v323
  %v1352 = vunpack.c.l.b16 %v324
  %v1353 = vunpack.c.l.b16 %v325
  %v1354 = vunpack.c.l.b16 %v326
  %v1355 = vunpack.c.l.b16 %v327
  %v1356 = vunpack.c.l.b16 %v328
  %v1357 = vunpack.c.l.b16 %v329
  %v1358 = vunpack.c.l.b16 %v330
  %v1359 = vunpack.c.l.b16 %v331
  %v1360 = vunpack.c.l.b16 %v332
  %v1361 = vunpack.c.l.b16 %v333
  %v1362 = vunpack.c.l.b16 %v334
  %v1363 = vunpack.c.l.b16 %v335
  %v1364 = vunpack.c.l.b16 %v336
  %v1365 = vunpack.c.l.b16 %v337
  %v1366 = vunpack.c.l.b16 %v338
  %v1367 = vunpack.c.l.b16 %v339
  %v1368 = vunpack.c.l.b16 %v340
  %v1369 = vunpack.c.l.b16 %v341
  %v1370 = vunpack.c.l.b16 %v342
  %v1371 = vunpack.c.l.b16 %v343
  %v1372 = vunpack.c.l.b16 %v344
  %v1373 = vunpack.c.l.b16 %v345
  %v1374 = vunpack.c.l.b16 %v346
  %v1375 = vunpack.c.l.b16 %v347
  %v1376 = vunpack.c.l.b16 %v348
  %v1377 = vunpack.c.l.b16 %v349
  %v1378 = vunpack.c.l.b16 %v350
  %v1379 = vunpack.c.l.b16 %v351
  %v1380 = vunpack.c.l.b16 %v352
  %v1381 = vunpack.c.l.b16 %v353
  %v1382 = vunpack.c.l.b16 %v354
  %v1383 = vunpack.c.l.b16 %v355
  %v1384 = vunpack.c.l.b16 %v356
  %v1385 = vunpack.c.l.b16 %v357
  %v1386 = vunpack.c.l.b16 %v358
  %v1387 = vunpack.c.l.b16 %v359
  %v1388 = vunpack.c.l.b16 %v360
  %v1389 = vunpack.c.l.b16 %v361
  %v1390 = vunpack.c.l.b16 %v362
  %v1391 = vunpack.c.l.b16 %v363
  %v1392 = vunpack.c.l.b16 %v364
  %v1393 = vunpack.c.l.b16 %v365
  %v1394 = vunpack.c.l.b16 %v366
  %v1395 = vunpack.c.l.b16 %v367
  %v1396 = vunpack.c.l.b16 %v368
  %v1397 = vunpack.c.l.b16 %v369
  %v1398 = vunpack.c.l.b16 %v370
  %v1399 = vunpack.c.l.b16 %v371
  %v1400 = vunpack.c.l.b16 %v372
  %v1401 = vunpack.c.l.b16 %v373
  %v1402 = vunpack.c.l.b16 %v374
  %v1403 = vunpack.c.l.b16 %v375
  %v1404 = vunpack.c.l.b16 %v376
  %v1405 = vunpack.c.l.b16 %v377
  %v1406 = vunpack.c.l.b16 %v378
  %v1407 = vunpack.c.l.b16 %v379
  %v1408 = vunpack.c.l.b16 %v380
  %v1409 = vunpack.c.l.b16 %v381
  %v1410 = vunpack.c.l.b16 %v382
  %v1411 = vunpack.c.l.b16 %v383
  %v1412 = vunpack.c.l.b16 %v384
  %v1413 = vunpack.c.l.b16 %v385
  %v1414 = vunpack.c.l.b16 %v386
  %v1415 = vunpack.c.l.b16 %v387
  %v1416 = vunpack.c.l.b16 %v388
  %v1417 = vunpack.c.l.b16 %v389
  %v1418 = vunpack.c.l.b16 %v390
  %v1419 = vunpack.c.l.b16 %v391
  %v1420 = vunpack.c.l.b16 %v392
  %v1421 = vunpack.c.l.b16 %v393
  %v1422 = vunpack.c.l.b16 %v394
  %v1423 = vunpack.c.l.b16 %v395
  %v1424 = vunpack.c.l.b16 %v396
  %v1425 = vunpack.c.l.b16 %v397
  %v1426 = vunpack.c.l.b16 %v398
  %v1427 = vunpack.c.l.b16 %v399
  %v1428 = vunpack.c.l.b16 %v400
  %v1429 = vunpack.c.l.b16 %v401
  %v1430 = vunpack.c.l.b16 %v402
  %v1431 = vunpack.c.l.b16 %v403
  %v1432 = vunpack.c.l.b16 %v404
  %v1433 = vunpack.c.l.b16 %v405
  %v1434 = vunpack.c.l.b16 %v406
  %v1435 = vunpack.c.l.b16 %v407
  %v1436 = vunpack.c.l.b16 %v408
  %v1437 = vunpack.c.l.b16 %v409
  %v1438 = vunpack.c.l.b16 %v410
  %v1439 = vunpack.c.l.b16 %v411
  %v1440 = vunpack.c.l.b16 %v412
  %v1441 = vunpack.c.l.b16 %v413
  %v1442 = vunpack.c.l.b16 %v414
  %v1443 = vunpack.c.l.b16 %v415
  %v1444 = vunpack.c.l.b16 %v416
  %v1445 = vunpack.c.l.b16 %v417
  %v1446 = vunpack.c.l.b16 %v418
  %v1447 = vunpack.c.l.b16 %v419
  %v1448 = vunpack.c.l.b16 %v420
  %v1449 = vunpack.c.l.b16 %v421
  %v1450 = vunpack.c.l.b16 %v422
  %v1451 = vunpack.c.l.b16 %v423
  %v1452 = vunpack.c.l.b16 %v424
  %v1453 = vunpack.c.l.b16 %v425
  %v1454 = vunpack.c.l.b16 %v426
  %v1455 = vunpack.c.l.b16 %v427
  %v1456 = vunpack.c.l.b16 %v428
  %v1457 = vunpack.c.l.b16 %v429
  %v1458 = vunpack.c.l.b16 %v430
  %v1459 = vunpack.c.l.b16 %v431
  %v1460 = vunpack.c.l.b16 %v432
  %v1461 = vunpack.c.l.b16 %v433
  %v1462 = vunpack.c.l.b16 %v434
  %v1463 = vunpack.c.l.b16 %v435
  %v1464 = vunpack.c.l.b16 %v436
  %v1465 = vunpack.c.l.b16 %v437
  %v1466 = vunpack.c.l.b16 %v438
  %v1467 = vunpack.c.l.b16 %v439
  %v1468 = vunpack.c.l.b16 %v440
  %v1469 = vunpack.c.l.b16 %v441
  %v1470 = vunpack.c.l.b16 %v442
  %v1471 = vunpack.c.l.b16 %v443
  %v1472 = vunpack.c.l.b16 %v444
  %v1473 = vunpack.c.l.b16 %v445
  %v1474 = vunpack.c.l.b16 %v446
  %v1475 = vunpack.c.l.b16 %v447
  %v1476 = vunpack.c.l.b16 %v448
  %v1477 = vunpack.c.l.b16 %v449
  %v1478 = vunpack.c.l.b16 %v450
  %v1479 = vunpack.c.l.b16 %v451
  %v1480 = vunpack.c.l.b16 %v452
  %v1481 = vunpack.c.l.b16 %v453
  %v1482 = vunpack.c.l.b16 %v454
  %v1483 = vunpack.c.l.b16 %v455
  %v1484 = vunpack.c.l.b16 %v456
  %v1485 = vunpack.c.l.b16 %v457
  %v1486 = vunpack.c.l.b16 %v458
  %v1487 = vunpack.c.l.b16 %v459
  %v1488 = vunpack.c.l.b16 %v460
  %v1489 = vunpack.c.l.b16 %v461
  %v1490 = vunpack.c.l.b16 %v462
  %v1491 = vunpack.c.l.b16 %v463
  %v1492 = vunpack.c.l.b16 %v464
  %v1493 = vunpack.c.l.b16 %v465
  %v1494 = vunpack.c.l.b16 %v466
  %v1495 = vunpack.c.l.b16 %v467
  %v1496 = vunpack.c.l.b16 %v468
  %v1497 = vunpack.c.l.b16 %v469
  %v1498 = vunpack.c.l.b16 %v470
  %v1499 = vunpack.c.l.b16 %v471
  %v1500 = vunpack.c.l.b16 %v472
  %v1501 = vunpack.c.l.b16 %v473
  %v1502 = vunpack.c.l.b16 %v474
  %v1503 = vunpack.c.l.b16 %v475
  %v1504 = vunpack.c.l.b16 %v476
  %v1505 = vunpack.c.l.b16 %v477
  %v1506 = vunpack.c.l.b16 %v478
  %v1507 = vunpack.c.l.b16 %v479
  %v1508 = vunpack.c.l.b16 %v480
  %v1509 = vunpack.c.l.b16 %v481
  %v1510 = vunpack.c.l.b16 %v482
  %v1511 = vunpack.c.l.b16 %v483
  %v1512 = vunpack.c.l.b16 %v484
  %v1513 = vunpack.c.l.b16 %v485
  %v1514 = vunpack.c.l.b16 %v486
  %v1515 = vunpack.c.l.b16 %v487
  %v1516 = vunpack.c.l.b16 %v488
  %v1517 = vunpack.c.l.b16 %v489
  %v1518 = vunpack.c.l.b16 %v490
  %v1519 = vunpack.c.l.b16 %v491
  %v1520 = vunpack.c.l.b16 %v492
  %v1521 = vunpack.c.l.b16 %v493
  %v1522 = vunpack.c.l.b16 %v494
  %v1523 = vunpack.c.l.b16 %v495
  %v1524 = vunpack.c.l.b16 %v496
  %v1525 = vunpack.c.l.b16 %v497
  %v1526 = vunpack.c.l.b16 %v498
  %v1527 = vunpack.c.l.b16 %v499
  %v1528 = vunpack.c.l.b16 %v500
  %v1529 = vunpack.c.l.b16 %v501
  %v1530 = vunpack.c.l.b16 %v502
  %v1531 = vunpack.c.l.b16 %v503
  %v1532 = vunpack.c.l.b16 %v504
  %v1533 = vunpack.c.l.b16 %v505
  %v1534 = vunpack.c.l.b16 %v506
  %v1535 = vunpack.c.l.b16 %v507
  %v1536 = vunpack.c.l.b16 %v508
  %v1537 = vunpack.c.l.b16 %v509
  %v1538 = vunpack.c.l.b16 %v510
  %v1539 = vunpack.c.l.b16 %v511
  %v1540 = vunpack.c.l.b16 %v512
  %v1541 = vunpack.c.l.b16 %v513
  %v1542 = vunpack.c.l.b16 %v514
  %v1543 = vunpack.c.l.b16 %v515
  %v1544 = vunpack.c.l.b16 %v516
  %v1545 = vunpack.c.l.b16 %v517
  %v1546 = vunpack.c.l.b16 %v518
  %v1547 = vunpack.c.l.b16 %v519
  %v1548 = vunpack.c.l.b16 %v520
  %v1549 = vunpack.c.l.b16 %v521
  %v1550 = vunpack.c.l.b16 %v522
  %v1551 = vunpack.c.l.b16 %v523
  %v1552 = vunpack.c.l.b16 %v524
  %v1553 = vunpack.c.l.b16 %v525
  %v1554 = vunpack.c.l.b16 %v526
  %v1555 = vunpack.c.l.b16 %v527
  %v1556 = vunpack.c.l.b16 %v528
  %v1557 = vunpack.c.l.b16 %v529
  %v1558 = vunpack.c.l.b16 %v530
  %v1559 = vunpack.c.l.b16 %v531
  %v1560 = vunpack.c.l.b16 %v532
  %v1561 = vunpack.c.l.b16 %v533
  %v1562 = vunpack.c.l.b16 %v534
  %v1563 = vunpack.c.l.b16 %v535
  %v1564 = vunpack.c.l.b16 %v536
  %v1565 = vunpack.c.l.b16 %v537
  %v1566 = vunpack.c.l.b16 %v538
  %v1567 = vunpack.c.l.b16 %v539
  %v1568 = vunpack.c.l.b16 %v540
  %v1569 = vunpack.c.l.b16 %v541
  %v1570 = vunpack.c.l.b16 %v542
  %v1571 = vunpack.c.l.b16 %v543
  %v1572 = vunpack.c.l.b16 %v544
  %v1573 = vunpack.c.l.b16 %v545
  %v1574 = vunpack.c.l.b16 %v546
  %v1575 = vpack.c.b16 %v1064, %v1063
  %v1576 = vpack.c.b16 %v1066, %v1065
  %v1577 = vpack.c.b16 %v1068, %v1067
  %v1578 = vpack.c.b16 %v1070, %v1069
  %v1579 = vpack.c.b16 %v1072, %v1071
  %v1580 = vpack.c.b16 %v1074, %v1073
  %v1581 = vpack.c.b16 %v1076, %v1075
  %v1582 = vpack.c.b16 %v1078, %v1077
  %v1583 = vpack.c.b16 %v1080, %v1079
  %v1584 = vpack.c.b16 %v1082, %v1081
  %v1585 = vpack.c.b16 %v1084, %v1083
  %v1586 = vpack.c.b16 %v1086, %v1085
  %v1587 = vpack.c.b16 %v1088, %v1087
  %v1588 = vpack.c.b16 %v1090, %v1089
  %v1589 = vpack.c.b16 %v1092, %v1091
  %v1590 = vpack.c.b16 %v1094, %v1093
  %v1591 = vpack.c.b16 %v1096, %v1095
  %v1592 = vpack.c.b16 %v1098, %v1097
  %v1593 = vpack.c.b16 %v1100, %v1099
  %v1594 = vpack.c.b16 %v1102, %v1101
  %v1595 = vpack.c.b16 %v1104, %v1103
  %v1596 = vpack.c.b16 %v1106, %v1105
  %v1597 = vpack.c.b16 %v1108, %v1107
  %v1598 = vpack.c.b16 %v1110, %v1109
  %v1599 = vpack.c.b16 %v1112, %v1111
  %v1600 = vpack.c.b16 %v1114, %v1113
  %v1601 = vpack.c.b16 %v1116, %v1115
  %v1602 = vpack.c.b16 %v1118, %v1117
  %v1603 = vpack.c.b16 %v1120, %v1119
  %v1604 = vpack.c.b16 %v1122, %v1121
  %v1605 = vpack.c.b16 %v1124, %v1123
  %v1606 = vpack.c.b16 %v1126, %v1125
  %v1607 = vpack.c.b16 %v1128, %v1127
  %v1608 = vpack.c.b16 %v1130, %v1129
  %v1609 = vpack.c.b16 %v1132, %v1131
  %v1610 = vpack.c.b16 %v1134, %v1133
  %v1611 = vpack.c.b16 %v1136, %v1135
  %v1612 = vpack.c.b16 %v1138, %v1137
  %v1613 = vpack.c.b16 %v1140, %v1139
  %v1614 = vpack.c.b16 %v1142, %v1141
  %v1615 = vpack.c.b16 %v1144, %v1143
  %v1616 = vpack.c.b16 %v1146, %v1145
  %v1617 = vpack.c.b16 %v1148, %v1147
  %v1618 = vpack.c.b16 %v1150, %v1149
  %v1619 = vpack.c.b16 %v1152, %v1151
  %v1620 = vpack.c.b16 %v1154, %v1153
  %v1621 = vpack.c.b16 %v1156, %v1155
  %v1622 = vpack.c.b16 %v1158, %v1157
  %v1623 = vpack.c.b16 %v1160, %v1159
  %v1624 = vpack.c.b16 %v1162, %v1161
  %v1625 = vpack.c.b16 %v1164, %v1163
  %v1626 = vpack.c.b16 %v1166, %v1165
  %v1627 = vpack.c.b16 %v1168, %v1167
  %v1628 = vpack.c.b16 %v1170, %v1169
  %v1629 = vpack.c.b16 %v1172, %v1171
  %v1630 = vpack.c.b16 %v1174, %v1173
  %v1631 = vpack.c.b16 %v1176, %v1175
  %v1632 = vpack.c.b16 %v1178, %v1177
  %v1633 = vpack.c.b16 %v1180, %v1179
  %v1634 = vpack.c.b16 %v1182, %v1181
  %v1635 = vpack.c.b16 %v1184, %v1183
  %v1636 = vpack.c.b16 %v1186, %v1185
  %v1637 = vpack.c.b16 %v1188, %v1187
  %v1638 = vpack.c.b16 %v1190, %v1189
  %v1639 = vpack.c.b16 %v1192, %v1191
  %v1640 = vpack.c.b16 %v1194, %v1193
  %v1641 = vpack.c.b16 %v1196, %v1195
  %v1642 = vpack.c.b16 %v1198, %v1197
  %v1643 = vpack.c.b16 %v1200, %v1199
  %v1644 = vpack.c.b16 %v1202, %v1201
  %v1645 = vpack.c.b16 %v1204, %v1203
  %v1646 = vpack.c.b16 %v1206, %v1205
  %v1647 = vpack.c.b16 %v1208, %v1207
  %v1648 = vpack.c.b16 %v1210, %v1209
  %v1649 = vpack.c.b16 %v1212, %v1211
  %v1650 = vpack.c.b16 %v1214, %v1213
  %v1651 = vpack.c.b16 %v1216, %v1215
  %v1652 = vpack.c.b16 %v1218, %v1217
  %v1653 = vpack.c.b16 %v1220, %v1219
  %v1654 = vpack.c.b16 %v1222, %v1221
  %v1655 = vpack.c.b16 %v1224, %v1223
  %v1656 = vpack.c.b16 %v1226, %v1225
  %v1657 = vpack.c.b16 %v1228, %v1227
  %v1658 = vpack.c.b16 %v1230, %v1229
  %v1659 = vpack.c.b16 %v1232, %v1231
  %v1660 = vpack.c.b16 %v1234, %v1233
  %v1661 = vpack.c.b16 %v1236, %v1235
  %v1662 = vpack.c.b16 %v1238, %v1237
  %v1663 = vpack.c.b16 %v1240, %v1239
  %v1664 = vpack.c.b16 %v1242, %v1241
  %v1665 = vpack.c.b16 %v1244, %v1243
  %v1666 = vpack.c.b16 %v1246, %v1245
  %v1667 = vpack.c.b16 %v1248, %v1247
  %v1668 = vpack.c.b16 %v1250, %v1249
  %v1669 = vpack.c.b16 %v1252, %v1251
  %v1670 = vpack.c.b16 %v1254, %v1253
  %v1671 = vpack.c.b16 %v1256, %v1255
  %v1672 = vpack.c.b16 %v1258, %v1257
  %v1673 = vpack.c.b16 %v1260, %v1259
  %v1674 = vpack.c.b16 %v1262, %v1261
  %v1675 = vpack.c.b16 %v1264, %v1263
  %v1676 = vpack.c.b16 %v1266, %v1265
  %v1677 = vpack.c.b16 %v1268, %v1267
  %v1678 = vpack.c.b16 %v1270, %v1269
  %v1679 = vpack.c.b16 %v1272, %v1271
  %v1680 = vpack.c.b16 %v1274, %v1273
  %v1681 = vpack.c.b16 %v1276, %v1275
  %v1682 = vpack.c.b16 %v1278, %v1277
  %v1683 = vpack.c.b16 %v1280, %v1279
  %v1684 = vpack.c.b16 %v1282, %v1281
  %v1685 = vpack.c.b16 %v1284, %v1283
  %v1686 = vpack.c.b16 %v1286, %v1285
  %v1687 = vpack.c.b16 %v1288, %v1287
  %v1688 = vpack.c.b16 %v1290, %v1289
  %v1689 = vpack.c.b16 %v1292, %v1291
  %v1690 = vpack.c.b16 %v1294, %v1293
  %v1691 = vpack.c.b16 %v1296, %v1295
  %v1692 = vpack.c.b16 %v1298, %v1297
  %v1693 = vpack.c.b16 %v1300, %v1299
  %v1694 = vpack.c.b16 %v1302, %v1301
  %v1695 = vpack.c.b16 %v1304, %v1303
  %v1696 = vpack.c.b16 %v1306, %v1305
  %v1697 = vpack.c.b16 %v1308, %v1307
  %v1698 = vpack.c.b16 %v1310, %v1309
  %v1699 = vpack.c.b16 %v1312, %v1311
  %v1700 = vpack.c.b16 %v1314, %v1313
  %v1701 = vpack.c.b16 %v1316, %v1315
  %v1702 = vpack.c.b16 %v1318, %v1317
  %v1703 = vpack.c.b16 %v1320, %v1319
  %v1704 = vpack.c.b16 %v1322, %v1321
  %v1705 = vpack.c.b16 %v1324, %v1323
  %v1706 = vpack.c.b16 %v1326, %v1325
  %v1707 = vpack.c.b16 %v1328, %v1327
  %v1708 = vpack.c.b16 %v1330, %v1329
  %v1709 = vpack.c.b16 %v1332, %v1331
  %v1710 = vpack.c.b16 %v1334, %v1333
  %v1711 = vpack.c.b16 %v1336, %v1335
  %v1712 = vpack.c.b16 %v1338, %v1337
  %v1713 = vpack.c.b16 %v1340, %v1339
  %v1714 = vpack.c.b16 %v1342, %v1341
  %v1715 = vpack.c.b16 %v1344, %v1343
  %v1716 = vpack.c.b16 %v1346, %v1345
  %v1717 = vpack.c.b16 %v1348, %v1347
  %v1718 = vpack.c.b16 %v1350, %v1349
  %v1719 = vpack.c.b16 %v1352, %v1351
  %v1720 = vpack.c.b16 %v1354, %v1353
  %v1721 = vpack.c.b16 %v1356, %v1355
  %v1722 = vpack.c.b16 %v1358, %v1357
  %v1723 = vpack.c.b16 %v1360, %v1359
  %v1724 = vpack.c.b16 %v1362, %v1361
  %v1725 = vpack.c.b16 %v1364, %v1363
  %v1726 = vpack.c.b16 %v1366, %v1365
  %v1727 = vpack.c.b16 %v1368, %v1367
  %v1728 = vpack.c.b16 %v1370, %v1369
  %v1729 = vpack.c.b16 %v1372, %v1371
  %v1730 = vpack.c.b16 %v1374, %v1373
  %v1731 = vpack.c.b16 %v1376, %v1375
  %v1732 = vpack.c.b16 %v1378, %v1377
  %v1733 = vpack.c.b16 %v1380, %v1379
  %v1734 = vpack.c.b16 %v1382, %v1381
  %v1735 = vpack.c.b16 %v1384, %v1383
  %v1736 = vpack.c.b16 %v1386, %v1385
  %v1737 = vpack.c.b16 %v1388, %v1387
  %v1738 = vpack.c.b16 %v1390, %v1389
  %v1739 = vpack.c.b16 %v1392, %v1391
  %v1740 = vpack.c.b16 %v1394, %v1393
  %v1741 = vpack.c.b16 %v1396, %v1395
  %v1742 = vpack.c.b16 %v1398, %v1397
  %v1743 = vpack.c.b16 %v1400, %v1399
  %v1744 = vpack.c.b16 %v1402, %v1401
  %v1745 = vpack.c.b16 %v1404, %v1403
  %v1746 = vpack.c.b16 %v1406, %v1405
  %v1747 = vpack.c.b16 %v1408, %v1407
  %v1748 = vpack.c.b16 %v1410, %v1409
  %v1749 = vpack.c.b16 %v1412, %v1411
  %v1750 = vpack.c.b16 %v1414, %v1413
  %v1751 = vpack.c.b16 %v1416, %v1415
  %v1752 = vpack.c.b16 %v1418, %v1417
  %v1753 = vpack.c.b16 %v1420, %v1419
  %v1754 = vpack.c.b16 %v1422, %v1421
  %v1755 = vpack.c.b16 %v1424, %v1423
  %v1756 = vpack.c.b16 %v1426, %v1425
  %v1757 = vpack.c.b16 %v1428, %v1427
  %v1758 = vpack.c.b16 %v1430, %v1429
  %v1759 = vpack.c.b16 %v1432, %v1431
  %v1760 = vpack.c.b16 %v1434, %v1433
  %v1761 = vpack.c.b16 %v1436, %v1435
  %v1762 = vpack.c.b16 %v1438, %v1437
  %v1763 = vpack.c.b16 %v1440, %v1439
  %v1764 = vpack.c.b16 %v1442, %v1441
  %v1765 = vpack.c.b16 %v1444, %v1443
  %v1766 = vpack.c.b16 %v1446, %v1445
  %v1767 = vpack.c.b16 %v1448, %v1447
  %v1768 = vpack.c.b16 %v1450, %v1449
  %v1769 = vpack.c.b16 %v1452, %v1451
  %v1770 = vpack.c.b16 %v1454, %v1453
  %v1771 = vpack.c.b16 %v1456, %v1455
  %v1772 = vpack.c.b16 %v1458, %v1457
  %v1773 = vpack.c.b16 %v1460, %v1459
  %v1774 = vpack.c.b16 %v1462, %v1461
  %v1775 = vpack.c.b16 %v1464, %v1463
  %v1776 = vpack.c.b16 %v1466, %v1465
  %v1777 = vpack.c.b16 %v1468, %v1467
  %v1778 = vpack.c.b16 %v1470, %v1469
  %v1779 = vpack.c.b16 %v1472, %v1471
  %v1780 = vpack.c.b16 %v1474, %v1473
  %v1781 = vpack.c.b16 %v1476, %v1475
  %v1782 = vpack.c.b16 %v1478, %v1477
  %v1783 = vpack.c.b16 %v1480, %v1479
  %v1784 = vpack.c.b16 %v1482, %v1481
  %v1785 = vpack.c.b16 %v1484, %v1483
  %v1786 = vpack.c.b16 %v1486, %v1485
  %v1787 = vpack.c.b16 %v1488, %v1487
  %v1788 = vpack.c.b16 %v1490, %v1489
  %v1789 = vpack.c.b16 %v1492, %v1491
  %v1790 = vpack.c.b16 %v1494, %v1493
  %v1791 = vpack.c.b16 %v1496, %v1495
  %v1792 = vpack.c.b16 %v1498, %v1497
  %v1793 = vpack.c.b16 %v1500, %v1499
  %v1794 = vpack.c.b16 %v1502, %v1501
  %v1795 = vpack.c.b16 %v1504, %v1503
  %v1796 = vpack.c.b16 %v1506, %v1505
  %v1797 = vpack.c.b16 %v1508, %v1507
  %v1798 = vpack.c.b16 %v1510, %v1509
  %v1799 = vpack.c.b16 %v1512, %v1511
  %v1800 = vpack.c.b16 %v1514, %v1513
  %v1801 = vpack.c.b16 %v1516, %v1515
  %v1802 = vpack.c.b16 %v1518, %v1517
  %v1803 = vpack.c.b16 %v1520, %v1519
  %v1804 = vpack.c.b16 %v1522, %v1521
  %v1805 = vpack.c.b16 %v1524, %v1523
  %v1806 = vpack.c.b16 %v1526, %v1525
  %v1807 = vpack.c.b16 %v1528, %v1527
  %v1808 = vpack.c.b16 %v1530, %v1529
  %v1809 = vpack.c.b16 %v1532, %v1531
  %v1810 = vpack.c.b16 %v1534, %v1533
  %v1811 = vpack.c.b16 %v1536, %v1535
  %v1812 = vpack.c.b16 %v1538, %v1537
  %v1813 = vpack.c.b16 %v1540, %v1539
  %v1814 = vpack.c.b16 %v1542, %v1541
  %v1815 = vpack.c.b16 %v1544, %v1543
  %v1816 = vpack.c.b16 %v1546, %v1545
  %v1817 = vpack.c.b16 %v1548, %v1547
  %v1818 = vpack.c.b16 %v1550, %v1549
  %v1819 = vpack.c.b16 %v1552, %v1551
  %v1820 = vpack.c.b16 %v1554, %v1553
  %v1821 = vpack.c.b16 %v1556, %v1555
  %v1822 = vpack.c.b16 %v1558, %v1557
  %v1823 = vpack.c.b16 %v1560, %v1559
  %v1824 = vpack.c.b16 %v1562, %v1561
  %v1825 = vpack.c.b16 %v1564, %v1563
  %v1826 = vpack.c.b16 %v1566, %v1565
  %v1827 = vpack.c.b16 %v1568, %v1567
  %v1828 = vpack.c.b16 %v1570, %v1569
  %v1829 = vpack.c.b16 %v1572, %v1571
  %v1830 = vpack.c.b16 %v1574, %v1573
  %v1835 = vunpack.c.l.b16 %v547
  %v1836 = vunpack.c.l.b16 %v548
  %v1837 = vunpack.c.l.b16 %v549
  %v1838 = vunpack.c.l.b16 %v550
  %v1839 = vpack.c.b16 %v1836, %v1835
  %v1840 = vpack.c.b16 %v1838, %v1837
  %vm1842 = vcmask 220160
  %v1844 = vsel %vm1842, %v1575, 0
  %v1847 = vsel %vm1842, %v1576, 0
  %v1850 = vsel %vm1842, %v1577, 0
  %v1853 = vsel %vm1842, %v1578, 0
  %v1856 = vsel %vm1842, %v1579, 0
  %v1859 = vsel %vm1842, %v1580, 0
  %v1862 = vsel %vm1842, %v1581, 0
  %v1865 = vsel %vm1842, %v1582, 0
  %v1868 = vsel %vm1842, %v1583, 0
  %v1871 = vsel %vm1842, %v1584, 0
  %v1874 = vsel %vm1842, %v1585, 0
  %v1877 = vsel %vm1842, %v1586, 0
  %v1880 = vsel %vm1842, %v1587, 0
  %v1883 = vsel %vm1842, %v1588, 0
  %v1886 = vsel %vm1842, %v1589, 0
  %v1889 = vsel %vm1842, %v1590, 0
  %v1892 = vsel %vm1842, %v1591, 0
  %v1895 = vsel %vm1842, %v1592, 0
  %v1898 = vsel %vm1842, %v1593, 0
  %v1901 = vsel %vm1842, %v1594, 0
  %v1904 = vsel %vm1842, %v1595, 0
  %v1907 = vsel %vm1842, %v1596, 0
  %v1910 = vsel %vm1842, %v1597, 0
  %v1913 = vsel %vm1842, %v1598, 0
  %v1916 = vsel %vm1842, %v1599, 0
  %v1919 = vsel %vm1842, %v1600, 0
  %v1922 = vsel %vm1842, %v1601, 0
  %v1925 = vsel %vm1842, %v1602, 0
  %v1928 = vsel %vm1842, %v1603, 0
  %v1931 = vsel %vm1842, %v1604, 0
  %v1934 = vsel %vm1842, %v1605, 0
  %v1937 = vsel %vm1842, %v1606, 0
  %v1940 = vsel %vm1842, %v1607, 0
  %v1943 = vsel %vm1842, %v1608, 0
  %v1946 = vsel %vm1842, %v1609, 0
  %v1949 = vsel %vm1842, %v1610, 0
  %v1952 = vsel %vm1842, %v1611, 0
  %v1955 = vsel %vm1842, %v1612, 0
  %v1958 = vsel %vm1842, %v1613, 0
  %v1961 = vsel %vm1842, %v1614, 0
  %v1964 = vsel %vm1842, %v1615, 0
  %v1967 = vsel %vm1842, %v1616, 0
  %v1970 = vsel %vm1842, %v1617, 0
  %v1973 = vsel %vm1842, %v1618, 0
  %v1976 = vsel %vm1842, %v1619, 0
  %v1979 = vsel %vm1842, %v1620, 0
  %v1982 = vsel %vm1842, %v1621, 0
  %v1985 = vsel %vm1842, %v1622, 0
  %v1988 = vsel %vm1842, %v1623, 0
  %v1991 = vsel %vm1842, %v1624, 0
  %v1994 = vsel %vm1842, %v1625, 0
  %v1997 = vsel %vm1842, %v1626, 0
  %v2000 = vsel %vm1842, %v1627, 0
  %v2003 = vsel %vm1842, %v1628, 0
  %v2006 = vsel %vm1842, %v1629, 0
  %v2009 = vsel %vm1842, %v1630, 0
  %v2012 = vsel %vm1842, %v1631, 0
  %v2015 = vsel %vm1842, %v1632, 0
  %v2018 = vsel %vm1842, %v1633, 0
  %v2021 = vsel %vm1842, %v1634, 0
  %v2024 = vsel %vm1842, %v1635, 0
  %v2027 = vsel %vm1842, %v1636, 0
  %v2030 = vsel %vm1842, %v1637, 0
  %v2033 = vsel %vm1842, %v1638, 0
  %v2036 = vsel %vm1842, %v1639, 0
  %v2039 = vsel %vm1842, %v1640, 0
  %v2042 = vsel %vm1842, %v1641, 0
  %v2045 = vsel %vm1842, %v1642, 0
  %v2048 = vsel %vm1842, %v1643, 0
  %v2051 = vsel %vm1842, %v1644, 0
  %v2054 = vsel %vm1842, %v1645, 0
  %v2057 = vsel %vm1842, %v1646, 0
  %v2060 = vsel %vm1842, %v1647, 0
  %v2063 = vsel %vm1842, %v1648, 0
  %v2066 = vsel %vm1842, %v1649, 0
  %v2069 = vsel %vm1842, %v1650, 0
  %v2072 = vsel %vm1842, %v1651, 0
  %v2075 = vsel %vm1842, %v1652, 0
  %v2078 = vsel %vm1842, %v1653, 0
  %v2081 = vsel %vm1842, %v1654, 0
  %v2084 = vsel %vm1842, %v1655, 0
  %v2087 = vsel %vm1842, %v1656, 0
  %v2090 = vsel %vm1842, %v1657, 0
  %v2093 = vsel %vm1842, %v1658, 0
  %v2096 = vsel %vm1842, %v1659, 0
  %v2099 = vsel %vm1842, %v1660, 0
  %v2102 = vsel %vm1842, %v1661, 0
  %v2105 = vsel %vm1842, %v1662, 0
  %v2108 = vsel %vm1842, %v1663, 0
  %v2111 = vsel %vm1842, %v1664, 0
  %v2114 = vsel %vm1842, %v1665, 0
  %v2117 = vsel %vm1842, %v1666, 0
  %v2120 = vsel %vm1842, %v1667, 0
  %v2123 = vsel %vm1842, %v1668, 0
  %v2126 = vsel %vm1842, %v1669, 0
  %v2129 = vsel %vm1842, %v1670, 0
  %v2132 = vsel %vm1842, %v1671, 0
  %v2135 = vsel %vm1842, %v1672, 0
  %v2138 = vsel %vm1842, %v1673, 0
  %v2141 = vsel %vm1842, %v1674, 0
  %v2144 = vsel %vm1842, %v1675, 0
  %v2147 = vsel %vm1842, %v1676, 0
  %v2150 = vsel %vm1842, %v1677, 0
  %v2153 = vsel %vm1842, %v1678, 0
  %v2156 = vsel %vm1842, %v1679, 0
  %v2159 = vsel %vm1842, %v1680, 0
  %v2162 = vsel %vm1842, %v1681, 0
  %v2165 = vsel %vm1842, %v1682, 0
  %v2168 = vsel %vm1842, %v1683, 0
  %v2171 = vsel %vm1842, %v1684, 0
  %v2174 = vsel %vm1842, %v1685, 0
  %v2177 = vsel %vm1842, %v1686, 0
  %v2180 = vsel %vm1842, %v1687, 0
  %v2183 = vsel %vm1842, %v1688, 0
  %v2186 = vsel %vm1842, %v1689, 0
  %v2189 = vsel %vm1842, %v1690, 0
  %v2192 = vsel %vm1842, %v1691, 0
  %v2195 = vsel %vm1842, %v1692, 0
  %v2198 = vsel %vm1842, %v1693, 0
  %v2201 = vsel %vm1842, %v1694, 0
  %v2204 = vsel %vm1842, %v1695, 0
  %v2207 = vsel %vm1842, %v1696, 0
  %v2210 = vsel %vm1842, %v1697, 0
  %v2213 = vsel %vm1842, %v1698, 0
  %v2216 = vsel %vm1842, %v1699, 0
  %v2219 = vsel %vm1842, %v1700, 0
  %v2222 = vsel %vm1842, %v1701, 0
  %v2225 = vsel %vm1842, %v1702, 0
  %v2228 = vsel %vm1842, %v1703, 0
  %v2231 = vsel %vm1842, %v1704, 0
  %v2234 = vsel %vm1842, %v1705, 0
  %v2237 = vsel %vm1842, %v1706, 0
  %v2240 = vsel %vm1842, %v1707, 0
  %v2243 = vsel %vm1842, %v1708, 0
  %v2246 = vsel %vm1842, %v1709, 0
  %v2249 = vsel %vm1842, %v1710, 0
  %v2252 = vsel %vm1842, %v1711, 0
  %v2255 = vsel %vm1842, %v1712, 0
  %v2258 = vsel %vm1842, %v1713, 0
  %v2261 = vsel %vm1842, %v1714, 0
  %v2264 = vsel %vm1842, %v1715, 0
  %v2267 = vsel %vm1842, %v1716, 0
  %v2270 = vsel %vm1842, %v1717, 0
  %v2273 = vsel %vm1842, %v1718, 0
  %v2276 = vsel %vm1842, %v1719, 0
  %v2279 = vsel %vm1842, %v1720, 0
  %v2282 = vsel %vm1842, %v1721, 0
  %v2285 = vsel %vm1842, %v1722, 0
  %v2288 = vsel %vm1842, %v1723, 0
  %v2291 = vsel %vm1842, %v1724, 0
  %v2294 = vsel %vm1842, %v1725, 0
  %v2297 = vsel %vm1842, %v1726, 0
  %v2300 = vsel %vm1842, %v1727, 0
  %v2303 = vsel %vm1842, %v1728, 0
  %v2306 = vsel %vm1842, %v1729, 0
  %v2309 = vsel %vm1842, %v1730, 0
  %v2312 = vsel %vm1842, %v1731, 0
  %v2315 = vsel %vm1842, %v1732, 0
  %v2318 = vsel %vm1842, %v1733, 0
  %v2321 = vsel %vm1842, %v1734, 0
  %v2324 = vsel %vm1842, %v1735, 0
  %v2327 = vsel %vm1842, %v1736, 0
  %v2330 = vsel %vm1842, %v1737, 0
  %v2333 = vsel %vm1842, %v1738, 0
  %v2336 = vsel %vm1842, %v1739, 0
  %v2339 = vsel %vm1842, %v1740, 0
  %v2342 = vsel %vm1842, %v1741, 0
  %v2345 = vsel %vm1842, %v1742, 0
  %v2348 = vsel %vm1842, %v1743, 0
  %v2351 = vsel %vm1842, %v1744, 0
  %v2354 = vsel %vm1842, %v1745, 0
  %v2357 = vsel %vm1842, %v1746, 0
  %v2360 = vsel %vm1842, %v1747, 0
  %v2363 = vsel %vm1842, %v1748, 0
  %v2366 = vsel %vm1842, %v1749, 0
  %v2369 = vsel %vm1842, %v1750, 0
  %v2372 = vsel %vm1842, %v1751, 0
  %v2375 = vsel %vm1842, %v1752, 0
  %v2378 = vsel %vm1842, %v1753, 0
  %v2381 = vsel %vm1842, %v1754, 0
  %v2384 = vsel %vm1842, %v1755, 0
  %v2387 = vsel %vm1842, %v1756, 0
  %v2390 = vsel %vm1842, %v1757, 0
  %v2393 = vsel %vm1842, %v1758, 0
  %v2396 = vsel %vm1842, %v1759, 0
  %v2399 = vsel %vm1842, %v1760, 0
  %v2402 = vsel %vm1842, %v1761, 0
  %v2405 = vsel %vm1842, %v1762, 0
  %v2408 = vsel %vm1842, %v1763, 0
  %v2411 = vsel %vm1842, %v1764, 0
  %v2414 = vsel %vm1842, %v1765, 0
  %v2417 = vsel %vm1842, %v1766, 0
  %v2420 = vsel %vm1842, %v1767, 0
  %v2423 = vsel %vm1842, %v1768, 0
  %v2426 = vsel %vm1842, %v1769, 0
  %v2429 = vsel %vm1842, %v1770, 0
  %v2432 = vsel %vm1842, %v1771, 0
  %v2435 = vsel %vm1842, %v1772, 0
  %v2438 = vsel %vm1842, %v1773, 0
  %v2441 = vsel %vm1842, %v1774, 0
  %v2444 = vsel %vm1842, %v1775, 0
  %v2447 = vsel %vm1842, %v1776, 0
  %v2450 = vsel %vm1842, %v1777, 0
  %v2453 = vsel %vm1842, %v1778, 0
  %v2456 = vsel %vm1842, %v1779, 0
  %v2459 = vsel %vm1842, %v1780, 0
  %v2462 = vsel %vm1842, %v1781, 0
  %v2465 = vsel %vm1842, %v1782, 0
  %v2468 = vsel %vm1842, %v1783, 0
  %v2471 = vsel %vm1842, %v1784, 0
  %v2474 = vsel %vm1842, %v1785, 0
  %v2477 = vsel %vm1842, %v1786, 0
  %v2480 = vsel %vm1842, %v1787, 0
  %v2483 = vsel %vm1842, %v1788, 0
  %v2486 = vsel %vm1842, %v1789, 0
  %v2489 = vsel %vm1842, %v1790, 0
  %v2492 = vsel %vm1842, %v1791, 0
  %v2495 = vsel %vm1842, %v1792, 0
  %v2498 = vsel %vm1842, %v1793, 0
  %v2501 = vsel %vm1842, %v1794, 0
  %v2504 = vsel %vm1842, %v1795, 0
  %v2507 = vsel %vm1842, %v1796, 0
  %v2510 = vsel %vm1842, %v1797, 0
  %v2513 = vsel %vm1842, %v1798, 0
  %v2516 = vsel %vm1842, %v1799, 0
  %v2519 = vsel %vm1842, %v1800, 0
  %v2522 = vsel %vm1842, %v1801, 0
  %v2525 = vsel %vm1842, %v1802, 0
  %v2528 = vsel %vm1842, %v1803, 0
  %v2531 = vsel %vm1842, %v1804, 0
  %v2534 = vsel %vm1842, %v1805, 0
  %v2537 = vsel %vm1842, %v1806, 0
  %v2540 = vsel %vm1842, %v1807, 0
  %v2543 = vsel %vm1842, %v1808, 0
  %v2546 = vsel %vm1842, %v1809, 0
  %v2549 = vsel %vm1842, %v1810, 0
  %v2552 = vsel %vm1842, %v1811, 0
  %v2555 = vsel %vm1842, %v1812, 0
  %v2558 = vsel %vm1842, %v1813, 0
  %v2561 = vsel %vm1842, %v1814, 0
  %v2564 = vsel %vm1842, %v1815, 0
  %v2567 = vsel %vm1842, %v1816, 0
  %v2570 = vsel %vm1842, %v1817, 0
  %v2573 = vsel %vm1842, %v1818, 0
  %v2576 = vsel %vm1842, %v1819, 0
  %v2579 = vsel %vm1842, %v1820, 0
  %v2582 = vsel %vm1842, %v1821, 0
  %v2585 = vsel %vm1842, %v1822, 0
  %v2588 = vsel %vm1842, %v1823, 0
  %v2591 = vsel %vm1842, %v1824, 0
  %v2594 = vsel %vm1842, %v1825, 0
  %v2597 = vsel %vm1842, %v1826, 0
  %v2600 = vsel %vm1842, %v1827, 0
  %v2603 = vsel %vm1842, %v1828, 0
  %v2606 = vsel %vm1842, %v1829, 0
  %v2609 = vsel %vm1842, %v1830, 0
  %vm2611 = vcmask 1044480
  %vm2612 = vcmask 1045504
  %v2613 = vsel %vm2611, 4294967295, 65535
  %v2614 = vsel %vm2612, %v2613, 0
  %v2616 = vand.u32 %v1840, %v2614
  %2618 = vmatprep.subr.bf16.mxu0 0
  %2619 = vmatpush1.bf16.msra.mxu0 %v1839
  %2620 = vmatprep.subr.bf16.mxu0 0
  %2621 = vmatpush1.bf16.msra.mxu0 %v2616
  %2622 = vmatprep.subr.bf16.mxu0 0
  %2623 = vmatpush1.bf16.msra.mxu0 0
  %2624 = vmatprep.subr.bf16.mxu0 0
  %2625 = vmatpush1.bf16.msra.mxu0 0
  %2626 = vmatprep.subr.bf16.mxu0 0
  %2627 = vmatpush1.bf16.msra.mxu0 0
  %2628 = vmatprep.subr.bf16.mxu0 0
  %2629 = vmatpush1.bf16.msra.mxu0 0
  %2630 = vmatprep.subr.bf16.mxu0 0
  %2631 = vmatpush1.bf16.msra.mxu0 0
  %2632 = vmatprep.subr.bf16.mxu0 0
  %2633 = vmatpush1.bf16.msra.mxu0 0
  %2634 = vmatprep.subr.bf16.mxu0 0
  %2635 = vmatpush1.bf16.msra.mxu0 0
  %2636 = vmatprep.subr.bf16.mxu0 0
  %2637 = vmatpush1.bf16.msra.mxu0 0
  %2638 = vmatprep.subr.bf16.mxu0 0
  %2639 = vmatpush1.bf16.msra.mxu0 0
  %2640 = vmatprep.subr.bf16.mxu0 0
  %2641 = vmatpush1.bf16.msra.mxu0 0
  %2642 = vmatprep.subr.bf16.mxu0 0
  %2643 = vmatpush1.bf16.msra.mxu0 0
  %2644 = vmatprep.subr.bf16.mxu0 0
  %2645 = vmatpush1.bf16.msra.mxu0 0
  %2646 = vmatprep.subr.bf16.mxu0 0
  %2647 = vmatpush1.bf16.msra.mxu0 0
  %2648 = vmatprep.subr.bf16.mxu0 0
  %2649 = vmatpush1.bf16.msra.mxu0 0
  %2650 = vmatprep.mubr.bf16.mxu0 0
  %2651 = vmatmul.mubr.bf16.gmra.mrb[0].mxu0 %v1844
  %v2652 = vpop.f32.mrb[0].mxu0
  %v2653 = vadd.f32 0.0, %v2652
  %v2654 = vpop.f32.mrb[0].mxu0
  %v2655 = vpop.f32.mrb[0].mxu0
  %v2656 = vadd.f32 0.0, %v2655
  %v2657 = vpop.f32.mrb[0].mxu0
  %2658 = vmatprep.mubr.bf16.mxu0 0
  %2659 = vmatmul.mubr.bf16.gmra.mrb[0].mxu0 %v1847
  %v2660 = vpop.f32.mrb[0].mxu0
  %v2661 = vadd.f32 0.0, %v2660
  %v2662 = vpop.f32.mrb[0].mxu0
  %v2663 = vpop.f32.mrb[0].mxu0
  %v2664 = vadd.f32 0.0, %v2663
  %v2665 = vpop.f32.mrb[0].mxu0
  %2666 = vmatprep.mubr.bf16.mxu0 0
  %2667 = vmatmul.mubr.bf16.gmra.mrb[0].mxu0 %v1850
  %v2668 = vpop.f32.mrb[0].mxu0
  %v2669 = vadd.f32 0.0, %v2668
  %v2670 = vpop.f32.mrb[0].mxu0
  %v2671 = vpop.f32.mrb[0].mxu0
  %v2672 = vadd.f32 0.0, %v2671
  %v2673 = vpop.f32.mrb[0].mxu0
  %2674 = vmatprep.mubr.bf16.mxu0 0
  %2675 = vmatmul.mubr.bf16.gmra.mrb[0].mxu0 %v1853
  %v2676 = vpop.f32.mrb[0].mxu0
  %v2677 = vadd.f32 0.0, %v2676
  %v2678 = vpop.f32.mrb[0].mxu0
  %v2679 = vpop.f32.mrb[0].mxu0
  %v2680 = vadd.f32 0.0, %v2679
  %v2681 = vpop.f32.mrb[0].mxu0
  %2682 = vmatprep.mubr.bf16.mxu0 0
  %2683 = vmatmul.mubr.bf16.gmra.mrb[0].mxu0 %v1856
  %v2684 = vpop.f32.mrb[0].mxu0
  %v2685 = vadd.f32 0.0, %v2684
  %v2686 = vpop.f32.mrb[0].mxu0
  %v2687 = vpop.f32.mrb[0].mxu0
  %v2688 = vadd.f32 0.0, %v2687
  %v2689 = vpop.f32.mrb[0].mxu0
  %2690 = vmatprep.mubr.bf16.mxu0 0
  %2691 = vmatmul.mubr.bf16.gmra.mrb[0].mxu0 %v1859
  %v2692 = vpop.f32.mrb[0].mxu0
  %v2693 = vadd.f32 0.0, %v2692
  %v2694 = vpop.f32.mrb[0].mxu0
  %v2695 = vpop.f32.mrb[0].mxu0
  %v2696 = vadd.f32 0.0, %v2695
  %v2697 = vpop.f32.mrb[0].mxu0
  %2698 = vmatprep.mubr.bf16.mxu0 0
  %2699 = vmatmul.mubr.bf16.gmra.mrb[0].mxu0 %v1862
  %v2700 = vpop.f32.mrb[0].mxu0
  %v2701 = vadd.f32 0.0, %v2700
  %v2702 = vpop.f32.mrb[0].mxu0
  %v2703 = vpop.f32.mrb[0].mxu0
  %v2704 = vadd.f32 0.0, %v2703
  %v2705 = vpop.f32.mrb[0].mxu0
  %2706 = vmatprep.mubr.bf16.mxu0 0
  %2707 = vmatmul.mubr.bf16.gmra.mrb[0].mxu0 %v1865
  %v2708 = vpop.f32.mrb[0].mxu0
  %v2709 = vadd.f32 0.0, %v2708
  %v2710 = vpop.f32.mrb[0].mxu0
  %v2711 = vpop.f32.mrb[0].mxu0
  %v2712 = vadd.f32 0.0, %v2711
  %v2713 = vpop.f32.mrb[0].mxu0
  %2714 = vmatprep.mubr.bf16.mxu0 0
  %2715 = vmatmul.mubr.bf16.gmra.mrb[0].mxu0 %v1868
  %v2716 = vpop.f32.mrb[0].mxu0
  %v2717 = vadd.f32 0.0, %v2716
  %v2718 = vpop.f32.mrb[0].mxu0
  %v2719 = vpop.f32.mrb[0].mxu0
  %v2720 = vadd.f32 0.0, %v2719
  %v2721 = vpop.f32.mrb[0].mxu0
  %2722 = vmatprep.mubr.bf16.mxu0 0
  %2723 = vmatmul.mubr.bf16.gmra.mrb[0].mxu0 %v1871
  %v2724 = vpop.f32.mrb[0].mxu0
  %v2725 = vadd.f32 0.0, %v2724
  %v2726 = vpop.f32.mrb[0].mxu0
  %v2727 = vpop.f32.mrb[0].mxu0
  %v2728 = vadd.f32 0.0, %v2727
  %v2729 = vpop.f32.mrb[0].mxu0
  %2730 = vmatprep.mubr.bf16.mxu0 0
  %2731 = vmatmul.mubr.bf16.gmra.mrb[0].mxu0 %v1874
  %v2732 = vpop.f32.mrb[0].mxu0
  %v2733 = vadd.f32 0.0, %v2732
  %v2734 = vpop.f32.mrb[0].mxu0
  %v2735 = vpop.f32.mrb[0].mxu0
  %v2736 = vadd.f32 0.0, %v2735
  %v2737 = vpop.f32.mrb[0].mxu0
  %2738 = vmatprep.mubr.bf16.mxu0 0
  %2739 = vmatmul.mubr.bf16.gmra.mrb[0].mxu0 %v1877
  %v2740 = vpop.f32.mrb[0].mxu0
  %v2741 = vadd.f32 0.0, %v2740
  %v2742 = vpop.f32.mrb[0].mxu0
  %v2743 = vpop.f32.mrb[0].mxu0
  %v2744 = vadd.f32 0.0, %v2743
  %v2745 = vpop.f32.mrb[0].mxu0
  %2746 = vmatprep.mubr.bf16.mxu0 0
  %2747 = vmatmul.mubr.bf16.gmra.mrb[0].mxu0 %v1880
  %v2748 = vpop.f32.mrb[0].mxu0
  %v2749 = vadd.f32 0.0, %v2748
  %v2750 = vpop.f32.mrb[0].mxu0
  %v2751 = vpop.f32.mrb[0].mxu0
  %v2752 = vadd.f32 0.0, %v2751
  %v2753 = vpop.f32.mrb[0].mxu0
  %2754 = vmatprep.mubr.bf16.mxu0 0
  %2755 = vmatmul.mubr.bf16.gmra.mrb[0].mxu0 %v1883
  %v2756 = vpop.f32.mrb[0].mxu0
  %v2757 = vadd.f32 0.0, %v2756
  %v2758 = vpop.f32.mrb[0].mxu0
  %v2759 = vpop.f32.mrb[0].mxu0
  %v2760 = vadd.f32 0.0, %v2759
  %v2761 = vpop.f32.mrb[0].mxu0
  %2762 = vmatprep.mubr.bf16.mxu0 0
  %2763 = vmatmul.mubr.bf16.gmra.mrb[0].mxu0 %v1886
  %v2764 = vpop.f32.mrb[0].mxu0
  %v2765 = vadd.f32 0.0, %v2764
  %v2766 = vpop.f32.mrb[0].mxu0
  %v2767 = vpop.f32.mrb[0].mxu0
  %v2768 = vadd.f32 0.0, %v2767
  %v2769 = vpop.f32.mrb[0].mxu0
  %2770 = vmatprep.mubr.bf16.mxu0 0
  %2771 = vmatmul.mubr.bf16.gmra.mrb[0].mxu0 %v1889
  %v2772 = vpop.f32.mrb[0].mxu0
  %v2773 = vadd.f32 0.0, %v2772
  %v2774 = vpop.f32.mrb[0].mxu0
  %v2775 = vpop.f32.mrb[0].mxu0
  %v2776 = vadd.f32 0.0, %v2775
  %v2777 = vpop.f32.mrb[0].mxu0
  %2778 = vmatprep.mubr.bf16.mxu0 0
  %2779 = vmatmul.mubr.bf16.gmra.mrb[0].mxu0 %v1892
  %v2780 = vpop.f32.mrb[0].mxu0
  %v2781 = vadd.f32 0.0, %v2780
  %v2782 = vpop.f32.mrb[0].mxu0
  %v2783 = vpop.f32.mrb[0].mxu0
  %v2784 = vadd.f32 0.0, %v2783
  %v2785 = vpop.f32.mrb[0].mxu0
  %2786 = vmatprep.mubr.bf16.mxu0 0
  %2787 = vmatmul.mubr.bf16.gmra.mrb[0].mxu0 %v1895
  %v2788 = vpop.f32.mrb[0].mxu0
  %v2789 = vadd.f32 0.0, %v2788
  %v2790 = vpop.f32.mrb[0].mxu0
  %v2791 = vpop.f32.mrb[0].mxu0
  %v2792 = vadd.f32 0.0, %v2791
  %v2793 = vpop.f32.mrb[0].mxu0
  %2794 = vmatprep.mubr.bf16.mxu0 0
  %2795 = vmatmul.mubr.bf16.gmra.mrb[0].mxu0 %v1898
  %v2796 = vpop.f32.mrb[0].mxu0
  %v2797 = vadd.f32 0.0, %v2796
  %v2798 = vpop.f32.mrb[0].mxu0
  %v2799 = vpop.f32.mrb[0].mxu0
  %v2800 = vadd.f32 0.0, %v2799
  %v2801 = vpop.f32.mrb[0].mxu0
  %2802 = vmatprep.mubr.bf16.mxu0 0
  %2803 = vmatmul.mubr.bf16.gmra.mrb[0].mxu0 %v1901
  %v2804 = vpop.f32.mrb[0].mxu0
  %v2805 = vadd.f32 0.0, %v2804
  %v2806 = vpop.f32.mrb[0].mxu0
  %v2807 = vpop.f32.mrb[0].mxu0
  %v2808 = vadd.f32 0.0, %v2807
  %v2809 = vpop.f32.mrb[0].mxu0
  %2810 = vmatprep.mubr.bf16.mxu0 0
  %2811 = vmatmul.mubr.bf16.gmra.mrb[0].mxu0 %v1904
  %v2812 = vpop.f32.mrb[0].mxu0
  %v2813 = vadd.f32 0.0, %v2812
  %v2814 = vpop.f32.mrb[0].mxu0
  %v2815 = vpop.f32.mrb[0].mxu0
  %v2816 = vadd.f32 0.0, %v2815
  %v2817 = vpop.f32.mrb[0].mxu0
  %2818 = vmatprep.mubr.bf16.mxu0 0
  %2819 = vmatmul.mubr.bf16.gmra.mrb[0].mxu0 %v1907
  %v2820 = vpop.f32.mrb[0].mxu0
  %v2821 = vadd.f32 0.0, %v2820
  %v2822 = vpop.f32.mrb[0].mxu0
  %v2823 = vpop.f32.mrb[0].mxu0
  %v2824 = vadd.f32 0.0, %v2823
  %v2825 = vpop.f32.mrb[0].mxu0
  %2826 = vmatprep.mubr.bf16.mxu0 0
  %2827 = vmatmul.mubr.bf16.gmra.mrb[0].mxu0 %v1910
  %v2828 = vpop.f32.mrb[0].mxu0
  %v2829 = vadd.f32 0.0, %v2828
  %v2830 = vpop.f32.mrb[0].mxu0
  %v2831 = vpop.f32.mrb[0].mxu0
  %v2832 = vadd.f32 0.0, %v2831
  %v2833 = vpop.f32.mrb[0].mxu0
  %2834 = vmatprep.mubr.bf16.mxu0 0
  %2835 = vmatmul.mubr.bf16.gmra.mrb[0].mxu0 %v1913
  %v2836 = vpop.f32.mrb[0].mxu0
  %v2837 = vadd.f32 0.0, %v2836
  %v2838 = vpop.f32.mrb[0].mxu0
  %v2839 = vpop.f32.mrb[0].mxu0
  %v2840 = vadd.f32 0.0, %v2839
  %v2841 = vpop.f32.mrb[0].mxu0
  %2842 = vmatprep.mubr.bf16.mxu0 0
  %2843 = vmatmul.mubr.bf16.gmra.mrb[0].mxu0 %v1916
  %v2844 = vpop.f32.mrb[0].mxu0
  %v2845 = vadd.f32 0.0, %v2844
  %v2846 = vpop.f32.mrb[0].mxu0
  %v2847 = vpop.f32.mrb[0].mxu0
  %v2848 = vadd.f32 0.0, %v2847
  %v2849 = vpop.f32.mrb[0].mxu0
  %2850 = vmatprep.mubr.bf16.mxu0 0
  %2851 = vmatmul.mubr.bf16.gmra.mrb[0].mxu0 %v1919
  %v2852 = vpop.f32.mrb[0].mxu0
  %v2853 = vadd.f32 0.0, %v2852
  %v2854 = vpop.f32.mrb[0].mxu0
  %v2855 = vpop.f32.mrb[0].mxu0
  %v2856 = vadd.f32 0.0, %v2855
  %v2857 = vpop.f32.mrb[0].mxu0
  %2858 = vmatprep.mubr.bf16.mxu0 0
  %2859 = vmatmul.mubr.bf16.gmra.mrb[0].mxu0 %v1922
  %v2860 = vpop.f32.mrb[0].mxu0
  %v2861 = vadd.f32 0.0, %v2860
  %v2862 = vpop.f32.mrb[0].mxu0
  %v2863 = vpop.f32.mrb[0].mxu0
  %v2864 = vadd.f32 0.0, %v2863
  %v2865 = vpop.f32.mrb[0].mxu0
  %2866 = vmatprep.mubr.bf16.mxu0 0
  %2867 = vmatmul.mubr.bf16.gmra.mrb[0].mxu0 %v1925
  %v2868 = vpop.f32.mrb[0].mxu0
  %v2869 = vadd.f32 0.0, %v2868
  %v2870 = vpop.f32.mrb[0].mxu0
  %v2871 = vpop.f32.mrb[0].mxu0
  %v2872 = vadd.f32 0.0, %v2871
  %v2873 = vpop.f32.mrb[0].mxu0
  %2874 = vmatprep.mubr.bf16.mxu0 0
  %2875 = vmatmul.mubr.bf16.gmra.mrb[0].mxu0 %v1928
  %v2876 = vpop.f32.mrb[0].mxu0
  %v2877 = vadd.f32 0.0, %v2876
  %v2878 = vpop.f32.mrb[0].mxu0
  %v2879 = vpop.f32.mrb[0].mxu0
  %v2880 = vadd.f32 0.0, %v2879
  %v2881 = vpop.f32.mrb[0].mxu0
  %2882 = vmatprep.mubr.bf16.mxu0 0
  %2883 = vmatmul.mubr.bf16.gmra.mrb[0].mxu0 %v1931
  %v2884 = vpop.f32.mrb[0].mxu0
  %v2885 = vadd.f32 0.0, %v2884
  %v2886 = vpop.f32.mrb[0].mxu0
  %v2887 = vpop.f32.mrb[0].mxu0
  %v2888 = vadd.f32 0.0, %v2887
  %v2889 = vpop.f32.mrb[0].mxu0
  %2890 = vmatprep.mubr.bf16.mxu0 0
  %2891 = vmatmul.mubr.bf16.gmra.mrb[0].mxu0 %v1934
  %v2892 = vpop.f32.mrb[0].mxu0
  %v2893 = vadd.f32 0.0, %v2892
  %v2894 = vpop.f32.mrb[0].mxu0
  %v2895 = vpop.f32.mrb[0].mxu0
  %v2896 = vadd.f32 0.0, %v2895
  %v2897 = vpop.f32.mrb[0].mxu0
  %2898 = vmatprep.mubr.bf16.mxu0 0
  %2899 = vmatmul.mubr.bf16.gmra.mrb[0].mxu0 %v1937
  %v2900 = vpop.f32.mrb[0].mxu0
  %v2901 = vadd.f32 0.0, %v2900
  %v2902 = vpop.f32.mrb[0].mxu0
  %v2903 = vpop.f32.mrb[0].mxu0
  %v2904 = vadd.f32 0.0, %v2903
  %v2905 = vpop.f32.mrb[0].mxu0
  %2906 = vmatprep.mubr.bf16.mxu0 0
  %2907 = vmatmul.mubr.bf16.gmra.mrb[0].mxu0 %v1940
  %v2908 = vpop.f32.mrb[0].mxu0
  %v2909 = vadd.f32 0.0, %v2908
  %v2910 = vpop.f32.mrb[0].mxu0
  %v2911 = vpop.f32.mrb[0].mxu0
  %v2912 = vadd.f32 0.0, %v2911
  %v2913 = vpop.f32.mrb[0].mxu0
  %2914 = vmatprep.mubr.bf16.mxu0 0
  %2915 = vmatmul.mubr.bf16.gmra.mrb[0].mxu0 %v1943
  %v2916 = vpop.f32.mrb[0].mxu0
  %v2917 = vadd.f32 0.0, %v2916
  %v2918 = vpop.f32.mrb[0].mxu0
  %v2919 = vpop.f32.mrb[0].mxu0
  %v2920 = vadd.f32 0.0, %v2919
  %v2921 = vpop.f32.mrb[0].mxu0
  %2922 = vmatprep.mubr.bf16.mxu0 0
  %2923 = vmatmul.mubr.bf16.gmra.mrb[0].mxu0 %v1946
  %v2924 = vpop.f32.mrb[0].mxu0
  %v2925 = vadd.f32 0.0, %v2924
  %v2926 = vpop.f32.mrb[0].mxu0
  %v2927 = vpop.f32.mrb[0].mxu0
  %v2928 = vadd.f32 0.0, %v2927
  %v2929 = vpop.f32.mrb[0].mxu0
  %2930 = vmatprep.mubr.bf16.mxu0 0
  %2931 = vmatmul.mubr.bf16.gmra.mrb[0].mxu0 %v1949
  %v2932 = vpop.f32.mrb[0].mxu0
  %v2933 = vadd.f32 0.0, %v2932
  %v2934 = vpop.f32.mrb[0].mxu0
  %v2935 = vpop.f32.mrb[0].mxu0
  %v2936 = vadd.f32 0.0, %v2935
  %v2937 = vpop.f32.mrb[0].mxu0
  %2938 = vmatprep.mubr.bf16.mxu0 0
  %2939 = vmatmul.mubr.bf16.gmra.mrb[0].mxu0 %v1952
  %v2940 = vpop.f32.mrb[0].mxu0
  %v2941 = vadd.f32 0.0, %v2940
  %v2942 = vpop.f32.mrb[0].mxu0
  %v2943 = vpop.f32.mrb[0].mxu0
  %v2944 = vadd.f32 0.0, %v2943
  %v2945 = vpop.f32.mrb[0].mxu0
  %2946 = vmatprep.mubr.bf16.mxu0 0
  %2947 = vmatmul.mubr.bf16.gmra.mrb[0].mxu0 %v1955
  %v2948 = vpop.f32.mrb[0].mxu0
  %v2949 = vadd.f32 0.0, %v2948
  %v2950 = vpop.f32.mrb[0].mxu0
  %v2951 = vpop.f32.mrb[0].mxu0
  %v2952 = vadd.f32 0.0, %v2951
  %v2953 = vpop.f32.mrb[0].mxu0
  %2954 = vmatprep.mubr.bf16.mxu0 0
  %2955 = vmatmul.mubr.bf16.gmra.mrb[0].mxu0 %v1958
  %v2956 = vpop.f32.mrb[0].mxu0
  %v2957 = vadd.f32 0.0, %v2956
  %v2958 = vpop.f32.mrb[0].mxu0
  %v2959 = vpop.f32.mrb[0].mxu0
  %v2960 = vadd.f32 0.0, %v2959
  %v2961 = vpop.f32.mrb[0].mxu0
  %2962 = vmatprep.mubr.bf16.mxu0 0
  %2963 = vmatmul.mubr.bf16.gmra.mrb[0].mxu0 %v1961
  %v2964 = vpop.f32.mrb[0].mxu0
  %v2965 = vadd.f32 0.0, %v2964
  %v2966 = vpop.f32.mrb[0].mxu0
  %v2967 = vpop.f32.mrb[0].mxu0
  %v2968 = vadd.f32 0.0, %v2967
  %v2969 = vpop.f32.mrb[0].mxu0
  %2970 = vmatprep.mubr.bf16.mxu0 0
  %2971 = vmatmul.mubr.bf16.gmra.mrb[0].mxu0 %v1964
  %v2972 = vpop.f32.mrb[0].mxu0
  %v2973 = vadd.f32 0.0, %v2972
  %v2974 = vpop.f32.mrb[0].mxu0
  %v2975 = vpop.f32.mrb[0].mxu0
  %v2976 = vadd.f32 0.0, %v2975
  %v2977 = vpop.f32.mrb[0].mxu0
  %2978 = vmatprep.mubr.bf16.mxu0 0
  %2979 = vmatmul.mubr.bf16.gmra.mrb[0].mxu0 %v1967
  %v2980 = vpop.f32.mrb[0].mxu0
  %v2981 = vadd.f32 0.0, %v2980
  %v2982 = vpop.f32.mrb[0].mxu0
  %v2983 = vpop.f32.mrb[0].mxu0
  %v2984 = vadd.f32 0.0, %v2983
  %v2985 = vpop.f32.mrb[0].mxu0
  %2986 = vmatprep.mubr.bf16.mxu0 0
  %2987 = vmatmul.mubr.bf16.gmra.mrb[0].mxu0 %v1970
  %v2988 = vpop.f32.mrb[0].mxu0
  %v2989 = vadd.f32 0.0, %v2988
  %v2990 = vpop.f32.mrb[0].mxu0
  %v2991 = vpop.f32.mrb[0].mxu0
  %v2992 = vadd.f32 0.0, %v2991
  %v2993 = vpop.f32.mrb[0].mxu0
  %2994 = vmatprep.mubr.bf16.mxu0 0
  %2995 = vmatmul.mubr.bf16.gmra.mrb[0].mxu0 %v1973
  %v2996 = vpop.f32.mrb[0].mxu0
  %v2997 = vadd.f32 0.0, %v2996
  %v2998 = vpop.f32.mrb[0].mxu0
  %v2999 = vpop.f32.mrb[0].mxu0
  %v3000 = vadd.f32 0.0, %v2999
  %v3001 = vpop.f32.mrb[0].mxu0
  %3002 = vmatprep.mubr.bf16.mxu0 0
  %3003 = vmatmul.mubr.bf16.gmra.mrb[0].mxu0 %v1976
  %v3004 = vpop.f32.mrb[0].mxu0
  %v3005 = vadd.f32 0.0, %v3004
  %v3006 = vpop.f32.mrb[0].mxu0
  %v3007 = vpop.f32.mrb[0].mxu0
  %v3008 = vadd.f32 0.0, %v3007
  %v3009 = vpop.f32.mrb[0].mxu0
  %3010 = vmatprep.mubr.bf16.mxu0 0
  %3011 = vmatmul.mubr.bf16.gmra.mrb[0].mxu0 %v1979
  %v3012 = vpop.f32.mrb[0].mxu0
  %v3013 = vadd.f32 0.0, %v3012
  %v3014 = vpop.f32.mrb[0].mxu0
  %v3015 = vpop.f32.mrb[0].mxu0
  %v3016 = vadd.f32 0.0, %v3015
  %v3017 = vpop.f32.mrb[0].mxu0
  %3018 = vmatprep.mubr.bf16.mxu0 0
  %3019 = vmatmul.mubr.bf16.gmra.mrb[0].mxu0 %v1982
  %v3020 = vpop.f32.mrb[0].mxu0
  %v3021 = vadd.f32 0.0, %v3020
  %v3022 = vpop.f32.mrb[0].mxu0
  %v3023 = vpop.f32.mrb[0].mxu0
  %v3024 = vadd.f32 0.0, %v3023
  %v3025 = vpop.f32.mrb[0].mxu0
  %3026 = vmatprep.mubr.bf16.mxu0 0
  %3027 = vmatmul.mubr.bf16.gmra.mrb[0].mxu0 %v1985
  %v3028 = vpop.f32.mrb[0].mxu0
  %v3029 = vadd.f32 0.0, %v3028
  %v3030 = vpop.f32.mrb[0].mxu0
  %v3031 = vpop.f32.mrb[0].mxu0
  %v3032 = vadd.f32 0.0, %v3031
  %v3033 = vpop.f32.mrb[0].mxu0
  %3034 = vmatprep.mubr.bf16.mxu0 0
  %3035 = vmatmul.mubr.bf16.gmra.mrb[0].mxu0 %v1988
  %v3036 = vpop.f32.mrb[0].mxu0
  %v3037 = vadd.f32 0.0, %v3036
  %v3038 = vpop.f32.mrb[0].mxu0
  %v3039 = vpop.f32.mrb[0].mxu0
  %v3040 = vadd.f32 0.0, %v3039
  %v3041 = vpop.f32.mrb[0].mxu0
  %3042 = vmatprep.mubr.bf16.mxu0 0
  %3043 = vmatmul.mubr.bf16.gmra.mrb[0].mxu0 %v1991
  %v3044 = vpop.f32.mrb[0].mxu0
  %v3045 = vadd.f32 0.0, %v3044
  %v3046 = vpop.f32.mrb[0].mxu0
  %v3047 = vpop.f32.mrb[0].mxu0
  %v3048 = vadd.f32 0.0, %v3047
  %v3049 = vpop.f32.mrb[0].mxu0
  %3050 = vmatprep.mubr.bf16.mxu0 0
  %3051 = vmatmul.mubr.bf16.gmra.mrb[0].mxu0 %v1994
  %v3052 = vpop.f32.mrb[0].mxu0
  %v3053 = vadd.f32 0.0, %v3052
  %v3054 = vpop.f32.mrb[0].mxu0
  %v3055 = vpop.f32.mrb[0].mxu0
  %v3056 = vadd.f32 0.0, %v3055
  %v3057 = vpop.f32.mrb[0].mxu0
  %3058 = vmatprep.mubr.bf16.mxu0 0
  %3059 = vmatmul.mubr.bf16.gmra.mrb[0].mxu0 %v1997
  %v3060 = vpop.f32.mrb[0].mxu0
  %v3061 = vadd.f32 0.0, %v3060
  %v3062 = vpop.f32.mrb[0].mxu0
  %v3063 = vpop.f32.mrb[0].mxu0
  %v3064 = vadd.f32 0.0, %v3063
  %v3065 = vpop.f32.mrb[0].mxu0
  %3066 = vmatprep.mubr.bf16.mxu0 0
  %3067 = vmatmul.mubr.bf16.gmra.mrb[0].mxu0 %v2000
  %v3068 = vpop.f32.mrb[0].mxu0
  %v3069 = vadd.f32 0.0, %v3068
  %v3070 = vpop.f32.mrb[0].mxu0
  %v3071 = vpop.f32.mrb[0].mxu0
  %v3072 = vadd.f32 0.0, %v3071
  %v3073 = vpop.f32.mrb[0].mxu0
  %3074 = vmatprep.mubr.bf16.mxu0 0
  %3075 = vmatmul.mubr.bf16.gmra.mrb[0].mxu0 %v2003
  %v3076 = vpop.f32.mrb[0].mxu0
  %v3077 = vadd.f32 0.0, %v3076
  %v3078 = vpop.f32.mrb[0].mxu0
  %v3079 = vpop.f32.mrb[0].mxu0
  %v3080 = vadd.f32 0.0, %v3079
  %v3081 = vpop.f32.mrb[0].mxu0
  %3082 = vmatprep.mubr.bf16.mxu0 0
  %3083 = vmatmul.mubr.bf16.gmra.mrb[0].mxu0 %v2006
  %v3084 = vpop.f32.mrb[0].mxu0
  %v3085 = vadd.f32 0.0, %v3084
  %v3086 = vpop.f32.mrb[0].mxu0
  %v3087 = vpop.f32.mrb[0].mxu0
  %v3088 = vadd.f32 0.0, %v3087
  %v3089 = vpop.f32.mrb[0].mxu0
  %3090 = vmatprep.mubr.bf16.mxu0 0
  %3091 = vmatmul.mubr.bf16.gmra.mrb[0].mxu0 %v2009
  %v3092 = vpop.f32.mrb[0].mxu0
  %v3093 = vadd.f32 0.0, %v3092
  %v3094 = vpop.f32.mrb[0].mxu0
  %v3095 = vpop.f32.mrb[0].mxu0
  %v3096 = vadd.f32 0.0, %v3095
  %v3097 = vpop.f32.mrb[0].mxu0
  %3098 = vmatprep.mubr.bf16.mxu0 0
  %3099 = vmatmul.mubr.bf16.gmra.mrb[0].mxu0 %v2012
  %v3100 = vpop.f32.mrb[0].mxu0
  %v3101 = vadd.f32 0.0, %v3100
  %v3102 = vpop.f32.mrb[0].mxu0
  %v3103 = vpop.f32.mrb[0].mxu0
  %v3104 = vadd.f32 0.0, %v3103
  %v3105 = vpop.f32.mrb[0].mxu0
  %3106 = vmatprep.mubr.bf16.mxu0 0
  %3107 = vmatmul.mubr.bf16.gmra.mrb[0].mxu0 %v2015
  %v3108 = vpop.f32.mrb[0].mxu0
  %v3109 = vadd.f32 0.0, %v3108
  %v3110 = vpop.f32.mrb[0].mxu0
  %v3111 = vpop.f32.mrb[0].mxu0
  %v3112 = vadd.f32 0.0, %v3111
  %v3113 = vpop.f32.mrb[0].mxu0
  %3114 = vmatprep.mubr.bf16.mxu0 0
  %3115 = vmatmul.mubr.bf16.gmra.mrb[0].mxu0 %v2018
  %v3116 = vpop.f32.mrb[0].mxu0
  %v3117 = vadd.f32 0.0, %v3116
  %v3118 = vpop.f32.mrb[0].mxu0
  %v3119 = vpop.f32.mrb[0].mxu0
  %v3120 = vadd.f32 0.0, %v3119
  %v3121 = vpop.f32.mrb[0].mxu0
  %3122 = vmatprep.mubr.bf16.mxu0 0
  %3123 = vmatmul.mubr.bf16.gmra.mrb[0].mxu0 %v2021
  %v3124 = vpop.f32.mrb[0].mxu0
  %v3125 = vadd.f32 0.0, %v3124
  %v3126 = vpop.f32.mrb[0].mxu0
  %v3127 = vpop.f32.mrb[0].mxu0
  %v3128 = vadd.f32 0.0, %v3127
  %v3129 = vpop.f32.mrb[0].mxu0
  %3130 = vmatprep.mubr.bf16.mxu0 0
  %3131 = vmatmul.mubr.bf16.gmra.mrb[0].mxu0 %v2024
  %v3132 = vpop.f32.mrb[0].mxu0
  %v3133 = vadd.f32 0.0, %v3132
  %v3134 = vpop.f32.mrb[0].mxu0
  %v3135 = vpop.f32.mrb[0].mxu0
  %v3136 = vadd.f32 0.0, %v3135
  %v3137 = vpop.f32.mrb[0].mxu0
  %3138 = vmatprep.mubr.bf16.mxu0 0
  %3139 = vmatmul.mubr.bf16.gmra.mrb[0].mxu0 %v2027
  %v3140 = vpop.f32.mrb[0].mxu0
  %v3141 = vadd.f32 0.0, %v3140
  %v3142 = vpop.f32.mrb[0].mxu0
  %v3143 = vpop.f32.mrb[0].mxu0
  %v3144 = vadd.f32 0.0, %v3143
  %v3145 = vpop.f32.mrb[0].mxu0
  %3146 = vmatprep.mubr.bf16.mxu0 0
  %3147 = vmatmul.mubr.bf16.gmra.mrb[0].mxu0 %v2030
  %v3148 = vpop.f32.mrb[0].mxu0
  %v3149 = vadd.f32 0.0, %v3148
  %v3150 = vpop.f32.mrb[0].mxu0
  %v3151 = vpop.f32.mrb[0].mxu0
  %v3152 = vadd.f32 0.0, %v3151
  %v3153 = vpop.f32.mrb[0].mxu0
  %3154 = vmatprep.mubr.bf16.mxu0 0
  %3155 = vmatmul.mubr.bf16.gmra.mrb[0].mxu0 %v2033
  %v3156 = vpop.f32.mrb[0].mxu0
  %v3157 = vadd.f32 0.0, %v3156
  %v3158 = vpop.f32.mrb[0].mxu0
  %v3159 = vpop.f32.mrb[0].mxu0
  %v3160 = vadd.f32 0.0, %v3159
  %v3161 = vpop.f32.mrb[0].mxu0
  %3162 = vmatprep.mubr.bf16.mxu0 0
  %3163 = vmatmul.mubr.bf16.gmra.mrb[0].mxu0 %v2036
  %v3164 = vpop.f32.mrb[0].mxu0
  %v3165 = vadd.f32 0.0, %v3164
  %v3166 = vpop.f32.mrb[0].mxu0
  %v3167 = vpop.f32.mrb[0].mxu0
  %v3168 = vadd.f32 0.0, %v3167
  %v3169 = vpop.f32.mrb[0].mxu0
  %3170 = vmatprep.mubr.bf16.mxu0 0
  %3171 = vmatmul.mubr.bf16.gmra.mrb[0].mxu0 %v2039
  %v3172 = vpop.f32.mrb[0].mxu0
  %v3173 = vadd.f32 0.0, %v3172
  %v3174 = vpop.f32.mrb[0].mxu0
  %v3175 = vpop.f32.mrb[0].mxu0
  %v3176 = vadd.f32 0.0, %v3175
  %v3177 = vpop.f32.mrb[0].mxu0
  %3178 = vmatprep.mubr.bf16.mxu0 0
  %3179 = vmatmul.mubr.bf16.gmra.mrb[0].mxu0 %v2042
  %v3180 = vpop.f32.mrb[0].mxu0
  %v3181 = vadd.f32 0.0, %v3180
  %v3182 = vpop.f32.mrb[0].mxu0
  %v3183 = vpop.f32.mrb[0].mxu0
  %v3184 = vadd.f32 0.0, %v3183
  %v3185 = vpop.f32.mrb[0].mxu0
  %3186 = vmatprep.mubr.bf16.mxu0 0
  %3187 = vmatmul.mubr.bf16.gmra.mrb[0].mxu0 %v2045
  %v3188 = vpop.f32.mrb[0].mxu0
  %v3189 = vadd.f32 0.0, %v3188
  %v3190 = vpop.f32.mrb[0].mxu0
  %v3191 = vpop.f32.mrb[0].mxu0
  %v3192 = vadd.f32 0.0, %v3191
  %v3193 = vpop.f32.mrb[0].mxu0
  %3194 = vmatprep.mubr.bf16.mxu0 0
  %3195 = vmatmul.mubr.bf16.gmra.mrb[0].mxu0 %v2048
  %v3196 = vpop.f32.mrb[0].mxu0
  %v3197 = vadd.f32 0.0, %v3196
  %v3198 = vpop.f32.mrb[0].mxu0
  %v3199 = vpop.f32.mrb[0].mxu0
  %v3200 = vadd.f32 0.0, %v3199
  %v3201 = vpop.f32.mrb[0].mxu0
  %3202 = vmatprep.mubr.bf16.mxu0 0
  %3203 = vmatmul.mubr.bf16.gmra.mrb[0].mxu0 %v2051
  %v3204 = vpop.f32.mrb[0].mxu0
  %v3205 = vadd.f32 0.0, %v3204
  %v3206 = vpop.f32.mrb[0].mxu0
  %v3207 = vpop.f32.mrb[0].mxu0
  %v3208 = vadd.f32 0.0, %v3207
  %v3209 = vpop.f32.mrb[0].mxu0
  %3210 = vmatprep.mubr.bf16.mxu0 0
  %3211 = vmatmul.mubr.bf16.gmra.mrb[0].mxu0 %v2054
  %v3212 = vpop.f32.mrb[0].mxu0
  %v3213 = vadd.f32 0.0, %v3212
  %v3214 = vpop.f32.mrb[0].mxu0
  %v3215 = vpop.f32.mrb[0].mxu0
  %v3216 = vadd.f32 0.0, %v3215
  %v3217 = vpop.f32.mrb[0].mxu0
  %3218 = vmatprep.mubr.bf16.mxu0 0
  %3219 = vmatmul.mubr.bf16.gmra.mrb[0].mxu0 %v2057
  %v3220 = vpop.f32.mrb[0].mxu0
  %v3221 = vadd.f32 0.0, %v3220
  %v3222 = vpop.f32.mrb[0].mxu0
  %v3223 = vpop.f32.mrb[0].mxu0
  %v3224 = vadd.f32 0.0, %v3223
  %v3225 = vpop.f32.mrb[0].mxu0
  %3226 = vmatprep.mubr.bf16.mxu0 0
  %3227 = vmatmul.mubr.bf16.gmra.mrb[0].mxu0 %v2060
  %v3228 = vpop.f32.mrb[0].mxu0
  %v3229 = vadd.f32 0.0, %v3228
  %v3230 = vpop.f32.mrb[0].mxu0
  %v3231 = vpop.f32.mrb[0].mxu0
  %v3232 = vadd.f32 0.0, %v3231
  %v3233 = vpop.f32.mrb[0].mxu0
  %3234 = vmatprep.mubr.bf16.mxu0 0
  %3235 = vmatmul.mubr.bf16.gmra.mrb[0].mxu0 %v2063
  %v3236 = vpop.f32.mrb[0].mxu0
  %v3237 = vadd.f32 0.0, %v3236
  %v3238 = vpop.f32.mrb[0].mxu0
  %v3239 = vpop.f32.mrb[0].mxu0
  %v3240 = vadd.f32 0.0, %v3239
  %v3241 = vpop.f32.mrb[0].mxu0
  %3242 = vmatprep.mubr.bf16.mxu0 0
  %3243 = vmatmul.mubr.bf16.gmra.mrb[0].mxu0 %v2066
  %v3244 = vpop.f32.mrb[0].mxu0
  %v3245 = vadd.f32 0.0, %v3244
  %v3246 = vpop.f32.mrb[0].mxu0
  %v3247 = vpop.f32.mrb[0].mxu0
  %v3248 = vadd.f32 0.0, %v3247
  %v3249 = vpop.f32.mrb[0].mxu0
  %3250 = vmatprep.mubr.bf16.mxu0 0
  %3251 = vmatmul.mubr.bf16.gmra.mrb[0].mxu0 %v2069
  %v3252 = vpop.f32.mrb[0].mxu0
  %v3253 = vadd.f32 0.0, %v3252
  %v3254 = vpop.f32.mrb[0].mxu0
  %v3255 = vpop.f32.mrb[0].mxu0
  %v3256 = vadd.f32 0.0, %v3255
  %v3257 = vpop.f32.mrb[0].mxu0
  %3258 = vmatprep.mubr.bf16.mxu0 0
  %3259 = vmatmul.mubr.bf16.gmra.mrb[0].mxu0 %v2072
  %v3260 = vpop.f32.mrb[0].mxu0
  %v3261 = vadd.f32 0.0, %v3260
  %v3262 = vpop.f32.mrb[0].mxu0
  %v3263 = vpop.f32.mrb[0].mxu0
  %v3264 = vadd.f32 0.0, %v3263
  %v3265 = vpop.f32.mrb[0].mxu0
  %3266 = vmatprep.mubr.bf16.mxu0 0
  %3267 = vmatmul.mubr.bf16.gmra.mrb[0].mxu0 %v2075
  %v3268 = vpop.f32.mrb[0].mxu0
  %v3269 = vadd.f32 0.0, %v3268
  %v3270 = vpop.f32.mrb[0].mxu0
  %v3271 = vpop.f32.mrb[0].mxu0
  %v3272 = vadd.f32 0.0, %v3271
  %v3273 = vpop.f32.mrb[0].mxu0
  %3274 = vmatprep.mubr.bf16.mxu0 0
  %3275 = vmatmul.mubr.bf16.gmra.mrb[0].mxu0 %v2078
  %v3276 = vpop.f32.mrb[0].mxu0
  %v3277 = vadd.f32 0.0, %v3276
  %v3278 = vpop.f32.mrb[0].mxu0
  %v3279 = vpop.f32.mrb[0].mxu0
  %v3280 = vadd.f32 0.0, %v3279
  %v3281 = vpop.f32.mrb[0].mxu0
  %3282 = vmatprep.mubr.bf16.mxu0 0
  %3283 = vmatmul.mubr.bf16.gmra.mrb[0].mxu0 %v2081
  %v3284 = vpop.f32.mrb[0].mxu0
  %v3285 = vadd.f32 0.0, %v3284
  %v3286 = vpop.f32.mrb[0].mxu0
  %v3287 = vpop.f32.mrb[0].mxu0
  %v3288 = vadd.f32 0.0, %v3287
  %v3289 = vpop.f32.mrb[0].mxu0
  %3290 = vmatprep.mubr.bf16.mxu0 0
  %3291 = vmatmul.mubr.bf16.gmra.mrb[0].mxu0 %v2084
  %v3292 = vpop.f32.mrb[0].mxu0
  %v3293 = vadd.f32 0.0, %v3292
  %v3294 = vpop.f32.mrb[0].mxu0
  %v3295 = vpop.f32.mrb[0].mxu0
  %v3296 = vadd.f32 0.0, %v3295
  %v3297 = vpop.f32.mrb[0].mxu0
  %3298 = vmatprep.mubr.bf16.mxu0 0
  %3299 = vmatmul.mubr.bf16.gmra.mrb[0].mxu0 %v2087
  %v3300 = vpop.f32.mrb[0].mxu0
  %v3301 = vadd.f32 0.0, %v3300
  %v3302 = vpop.f32.mrb[0].mxu0
  %v3303 = vpop.f32.mrb[0].mxu0
  %v3304 = vadd.f32 0.0, %v3303
  %v3305 = vpop.f32.mrb[0].mxu0
  %3306 = vmatprep.mubr.bf16.mxu0 0
  %3307 = vmatmul.mubr.bf16.gmra.mrb[0].mxu0 %v2090
  %v3308 = vpop.f32.mrb[0].mxu0
  %v3309 = vadd.f32 0.0, %v3308
  %v3310 = vpop.f32.mrb[0].mxu0
  %v3311 = vpop.f32.mrb[0].mxu0
  %v3312 = vadd.f32 0.0, %v3311
  %v3313 = vpop.f32.mrb[0].mxu0
  %3314 = vmatprep.mubr.bf16.mxu0 0
  %3315 = vmatmul.mubr.bf16.gmra.mrb[0].mxu0 %v2093
  %v3316 = vpop.f32.mrb[0].mxu0
  %v3317 = vadd.f32 0.0, %v3316
  %v3318 = vpop.f32.mrb[0].mxu0
  %v3319 = vpop.f32.mrb[0].mxu0
  %v3320 = vadd.f32 0.0, %v3319
  %v3321 = vpop.f32.mrb[0].mxu0
  %3322 = vmatprep.mubr.bf16.mxu0 0
  %3323 = vmatmul.mubr.bf16.gmra.mrb[0].mxu0 %v2096
  %v3324 = vpop.f32.mrb[0].mxu0
  %v3325 = vadd.f32 0.0, %v3324
  %v3326 = vpop.f32.mrb[0].mxu0
  %v3327 = vpop.f32.mrb[0].mxu0
  %v3328 = vadd.f32 0.0, %v3327
  %v3329 = vpop.f32.mrb[0].mxu0
  %3330 = vmatprep.mubr.bf16.mxu0 0
  %3331 = vmatmul.mubr.bf16.gmra.mrb[0].mxu0 %v2099
  %v3332 = vpop.f32.mrb[0].mxu0
  %v3333 = vadd.f32 0.0, %v3332
  %v3334 = vpop.f32.mrb[0].mxu0
  %v3335 = vpop.f32.mrb[0].mxu0
  %v3336 = vadd.f32 0.0, %v3335
  %v3337 = vpop.f32.mrb[0].mxu0
  %3338 = vmatprep.mubr.bf16.mxu0 0
  %3339 = vmatmul.mubr.bf16.gmra.mrb[0].mxu0 %v2102
  %v3340 = vpop.f32.mrb[0].mxu0
  %v3341 = vadd.f32 0.0, %v3340
  %v3342 = vpop.f32.mrb[0].mxu0
  %v3343 = vpop.f32.mrb[0].mxu0
  %v3344 = vadd.f32 0.0, %v3343
  %v3345 = vpop.f32.mrb[0].mxu0
  %3346 = vmatprep.mubr.bf16.mxu0 0
  %3347 = vmatmul.mubr.bf16.gmra.mrb[0].mxu0 %v2105
  %v3348 = vpop.f32.mrb[0].mxu0
  %v3349 = vadd.f32 0.0, %v3348
  %v3350 = vpop.f32.mrb[0].mxu0
  %v3351 = vpop.f32.mrb[0].mxu0
  %v3352 = vadd.f32 0.0, %v3351
  %v3353 = vpop.f32.mrb[0].mxu0
  %3354 = vmatprep.mubr.bf16.mxu0 0
  %3355 = vmatmul.mubr.bf16.gmra.mrb[0].mxu0 %v2108
  %v3356 = vpop.f32.mrb[0].mxu0
  %v3357 = vadd.f32 0.0, %v3356
  %v3358 = vpop.f32.mrb[0].mxu0
  %v3359 = vpop.f32.mrb[0].mxu0
  %v3360 = vadd.f32 0.0, %v3359
  %v3361 = vpop.f32.mrb[0].mxu0
  %3362 = vmatprep.mubr.bf16.mxu0 0
  %3363 = vmatmul.mubr.bf16.gmra.mrb[0].mxu0 %v2111
  %v3364 = vpop.f32.mrb[0].mxu0
  %v3365 = vadd.f32 0.0, %v3364
  %v3366 = vpop.f32.mrb[0].mxu0
  %v3367 = vpop.f32.mrb[0].mxu0
  %v3368 = vadd.f32 0.0, %v3367
  %v3369 = vpop.f32.mrb[0].mxu0
  %3370 = vmatprep.mubr.bf16.mxu0 0
  %3371 = vmatmul.mubr.bf16.gmra.mrb[0].mxu0 %v2114
  %v3372 = vpop.f32.mrb[0].mxu0
  %v3373 = vadd.f32 0.0, %v3372
  %v3374 = vpop.f32.mrb[0].mxu0
  %v3375 = vpop.f32.mrb[0].mxu0
  %v3376 = vadd.f32 0.0, %v3375
  %v3377 = vpop.f32.mrb[0].mxu0
  %3378 = vmatprep.mubr.bf16.mxu0 0
  %3379 = vmatmul.mubr.bf16.gmra.mrb[0].mxu0 %v2117
  %v3380 = vpop.f32.mrb[0].mxu0
  %v3381 = vadd.f32 0.0, %v3380
  %v3382 = vpop.f32.mrb[0].mxu0
  %v3383 = vpop.f32.mrb[0].mxu0
  %v3384 = vadd.f32 0.0, %v3383
  %v3385 = vpop.f32.mrb[0].mxu0
  %3386 = vmatprep.mubr.bf16.mxu0 0
  %3387 = vmatmul.mubr.bf16.gmra.mrb[0].mxu0 %v2120
  %v3388 = vpop.f32.mrb[0].mxu0
  %v3389 = vadd.f32 0.0, %v3388
  %v3390 = vpop.f32.mrb[0].mxu0
  %v3391 = vpop.f32.mrb[0].mxu0
  %v3392 = vadd.f32 0.0, %v3391
  %v3393 = vpop.f32.mrb[0].mxu0
  %3394 = vmatprep.mubr.bf16.mxu0 0
  %3395 = vmatmul.mubr.bf16.gmra.mrb[0].mxu0 %v2123
  %v3396 = vpop.f32.mrb[0].mxu0
  %v3397 = vadd.f32 0.0, %v3396
  %v3398 = vpop.f32.mrb[0].mxu0
  %v3399 = vpop.f32.mrb[0].mxu0
  %v3400 = vadd.f32 0.0, %v3399
  %v3401 = vpop.f32.mrb[0].mxu0
  %3402 = vmatprep.mubr.bf16.mxu0 0
  %3403 = vmatmul.mubr.bf16.gmra.mrb[0].mxu0 %v2126
  %v3404 = vpop.f32.mrb[0].mxu0
  %v3405 = vadd.f32 0.0, %v3404
  %v3406 = vpop.f32.mrb[0].mxu0
  %v3407 = vpop.f32.mrb[0].mxu0
  %v3408 = vadd.f32 0.0, %v3407
  %v3409 = vpop.f32.mrb[0].mxu0
  %3410 = vmatprep.mubr.bf16.mxu0 0
  %3411 = vmatmul.mubr.bf16.gmra.mrb[0].mxu0 %v2129
  %v3412 = vpop.f32.mrb[0].mxu0
  %v3413 = vadd.f32 0.0, %v3412
  %v3414 = vpop.f32.mrb[0].mxu0
  %v3415 = vpop.f32.mrb[0].mxu0
  %v3416 = vadd.f32 0.0, %v3415
  %v3417 = vpop.f32.mrb[0].mxu0
  %3418 = vmatprep.mubr.bf16.mxu0 0
  %3419 = vmatmul.mubr.bf16.gmra.mrb[0].mxu0 %v2132
  %v3420 = vpop.f32.mrb[0].mxu0
  %v3421 = vadd.f32 0.0, %v3420
  %v3422 = vpop.f32.mrb[0].mxu0
  %v3423 = vpop.f32.mrb[0].mxu0
  %v3424 = vadd.f32 0.0, %v3423
  %v3425 = vpop.f32.mrb[0].mxu0
  %3426 = vmatprep.mubr.bf16.mxu0 0
  %3427 = vmatmul.mubr.bf16.gmra.mrb[0].mxu0 %v2135
  %v3428 = vpop.f32.mrb[0].mxu0
  %v3429 = vadd.f32 0.0, %v3428
  %v3430 = vpop.f32.mrb[0].mxu0
  %v3431 = vpop.f32.mrb[0].mxu0
  %v3432 = vadd.f32 0.0, %v3431
  %v3433 = vpop.f32.mrb[0].mxu0
  %3434 = vmatprep.mubr.bf16.mxu0 0
  %3435 = vmatmul.mubr.bf16.gmra.mrb[0].mxu0 %v2138
  %v3436 = vpop.f32.mrb[0].mxu0
  %v3437 = vadd.f32 0.0, %v3436
  %v3438 = vpop.f32.mrb[0].mxu0
  %v3439 = vpop.f32.mrb[0].mxu0
  %v3440 = vadd.f32 0.0, %v3439
  %v3441 = vpop.f32.mrb[0].mxu0
  %3442 = vmatprep.mubr.bf16.mxu0 0
  %3443 = vmatmul.mubr.bf16.gmra.mrb[0].mxu0 %v2141
  %v3444 = vpop.f32.mrb[0].mxu0
  %v3445 = vadd.f32 0.0, %v3444
  %v3446 = vpop.f32.mrb[0].mxu0
  %v3447 = vpop.f32.mrb[0].mxu0
  %v3448 = vadd.f32 0.0, %v3447
  %v3449 = vpop.f32.mrb[0].mxu0
  %3450 = vmatprep.mubr.bf16.mxu0 0
  %3451 = vmatmul.mubr.bf16.gmra.mrb[0].mxu0 %v2144
  %v3452 = vpop.f32.mrb[0].mxu0
  %v3453 = vadd.f32 0.0, %v3452
  %v3454 = vpop.f32.mrb[0].mxu0
  %v3455 = vpop.f32.mrb[0].mxu0
  %v3456 = vadd.f32 0.0, %v3455
  %v3457 = vpop.f32.mrb[0].mxu0
  %3458 = vmatprep.mubr.bf16.mxu0 0
  %3459 = vmatmul.mubr.bf16.gmra.mrb[0].mxu0 %v2147
  %v3460 = vpop.f32.mrb[0].mxu0
  %v3461 = vadd.f32 0.0, %v3460
  %v3462 = vpop.f32.mrb[0].mxu0
  %v3463 = vpop.f32.mrb[0].mxu0
  %v3464 = vadd.f32 0.0, %v3463
  %v3465 = vpop.f32.mrb[0].mxu0
  %3466 = vmatprep.mubr.bf16.mxu0 0
  %3467 = vmatmul.mubr.bf16.gmra.mrb[0].mxu0 %v2150
  %v3468 = vpop.f32.mrb[0].mxu0
  %v3469 = vadd.f32 0.0, %v3468
  %v3470 = vpop.f32.mrb[0].mxu0
  %v3471 = vpop.f32.mrb[0].mxu0
  %v3472 = vadd.f32 0.0, %v3471
  %v3473 = vpop.f32.mrb[0].mxu0
  %3474 = vmatprep.mubr.bf16.mxu0 0
  %3475 = vmatmul.mubr.bf16.gmra.mrb[0].mxu0 %v2153
  %v3476 = vpop.f32.mrb[0].mxu0
  %v3477 = vadd.f32 0.0, %v3476
  %v3478 = vpop.f32.mrb[0].mxu0
  %v3479 = vpop.f32.mrb[0].mxu0
  %v3480 = vadd.f32 0.0, %v3479
  %v3481 = vpop.f32.mrb[0].mxu0
  %3482 = vmatprep.mubr.bf16.mxu0 0
  %3483 = vmatmul.mubr.bf16.gmra.mrb[0].mxu0 %v2156
  %v3484 = vpop.f32.mrb[0].mxu0
  %v3485 = vadd.f32 0.0, %v3484
  %v3486 = vpop.f32.mrb[0].mxu0
  %v3487 = vpop.f32.mrb[0].mxu0
  %v3488 = vadd.f32 0.0, %v3487
  %v3489 = vpop.f32.mrb[0].mxu0
  %3490 = vmatprep.mubr.bf16.mxu0 0
  %3491 = vmatmul.mubr.bf16.gmra.mrb[0].mxu0 %v2159
  %v3492 = vpop.f32.mrb[0].mxu0
  %v3493 = vadd.f32 0.0, %v3492
  %v3494 = vpop.f32.mrb[0].mxu0
  %v3495 = vpop.f32.mrb[0].mxu0
  %v3496 = vadd.f32 0.0, %v3495
  %v3497 = vpop.f32.mrb[0].mxu0
  %3498 = vmatprep.mubr.bf16.mxu0 0
  %3499 = vmatmul.mubr.bf16.gmra.mrb[0].mxu0 %v2162
  %v3500 = vpop.f32.mrb[0].mxu0
  %v3501 = vadd.f32 0.0, %v3500
  %v3502 = vpop.f32.mrb[0].mxu0
  %v3503 = vpop.f32.mrb[0].mxu0
  %v3504 = vadd.f32 0.0, %v3503
  %v3505 = vpop.f32.mrb[0].mxu0
  %3506 = vmatprep.mubr.bf16.mxu0 0
  %3507 = vmatmul.mubr.bf16.gmra.mrb[0].mxu0 %v2165
  %v3508 = vpop.f32.mrb[0].mxu0
  %v3509 = vadd.f32 0.0, %v3508
  %v3510 = vpop.f32.mrb[0].mxu0
  %v3511 = vpop.f32.mrb[0].mxu0
  %v3512 = vadd.f32 0.0, %v3511
  %v3513 = vpop.f32.mrb[0].mxu0
  %3514 = vmatprep.mubr.bf16.mxu0 0
  %3515 = vmatmul.mubr.bf16.gmra.mrb[0].mxu0 %v2168
  %v3516 = vpop.f32.mrb[0].mxu0
  %v3517 = vadd.f32 0.0, %v3516
  %v3518 = vpop.f32.mrb[0].mxu0
  %v3519 = vpop.f32.mrb[0].mxu0
  %v3520 = vadd.f32 0.0, %v3519
  %v3521 = vpop.f32.mrb[0].mxu0
  %3522 = vmatprep.mubr.bf16.mxu0 0
  %3523 = vmatmul.mubr.bf16.gmra.mrb[0].mxu0 %v2171
  %v3524 = vpop.f32.mrb[0].mxu0
  %v3525 = vadd.f32 0.0, %v3524
  %v3526 = vpop.f32.mrb[0].mxu0
  %v3527 = vpop.f32.mrb[0].mxu0
  %v3528 = vadd.f32 0.0, %v3527
  %v3529 = vpop.f32.mrb[0].mxu0
  %3530 = vmatprep.mubr.bf16.mxu0 0
  %3531 = vmatmul.mubr.bf16.gmra.mrb[0].mxu0 %v2174
  %v3532 = vpop.f32.mrb[0].mxu0
  %v3533 = vadd.f32 0.0, %v3532
  %v3534 = vpop.f32.mrb[0].mxu0
  %v3535 = vpop.f32.mrb[0].mxu0
  %v3536 = vadd.f32 0.0, %v3535
  %v3537 = vpop.f32.mrb[0].mxu0
  %3538 = vmatprep.mubr.bf16.mxu0 0
  %3539 = vmatmul.mubr.bf16.gmra.mrb[0].mxu0 %v2177
  %v3540 = vpop.f32.mrb[0].mxu0
  %v3541 = vadd.f32 0.0, %v3540
  %v3542 = vpop.f32.mrb[0].mxu0
  %v3543 = vpop.f32.mrb[0].mxu0
  %v3544 = vadd.f32 0.0, %v3543
  %v3545 = vpop.f32.mrb[0].mxu0
  %3546 = vmatprep.mubr.bf16.mxu0 0
  %3547 = vmatmul.mubr.bf16.gmra.mrb[0].mxu0 %v2180
  %v3548 = vpop.f32.mrb[0].mxu0
  %v3549 = vadd.f32 0.0, %v3548
  %v3550 = vpop.f32.mrb[0].mxu0
  %v3551 = vpop.f32.mrb[0].mxu0
  %v3552 = vadd.f32 0.0, %v3551
  %v3553 = vpop.f32.mrb[0].mxu0
  %3554 = vmatprep.mubr.bf16.mxu0 0
  %3555 = vmatmul.mubr.bf16.gmra.mrb[0].mxu0 %v2183
  %v3556 = vpop.f32.mrb[0].mxu0
  %v3557 = vadd.f32 0.0, %v3556
  %v3558 = vpop.f32.mrb[0].mxu0
  %v3559 = vpop.f32.mrb[0].mxu0
  %v3560 = vadd.f32 0.0, %v3559
  %v3561 = vpop.f32.mrb[0].mxu0
  %3562 = vmatprep.mubr.bf16.mxu0 0
  %3563 = vmatmul.mubr.bf16.gmra.mrb[0].mxu0 %v2186
  %v3564 = vpop.f32.mrb[0].mxu0
  %v3565 = vadd.f32 0.0, %v3564
  %v3566 = vpop.f32.mrb[0].mxu0
  %v3567 = vpop.f32.mrb[0].mxu0
  %v3568 = vadd.f32 0.0, %v3567
  %v3569 = vpop.f32.mrb[0].mxu0
  %3570 = vmatprep.mubr.bf16.mxu0 0
  %3571 = vmatmul.mubr.bf16.gmra.mrb[0].mxu0 %v2189
  %v3572 = vpop.f32.mrb[0].mxu0
  %v3573 = vadd.f32 0.0, %v3572
  %v3574 = vpop.f32.mrb[0].mxu0
  %v3575 = vpop.f32.mrb[0].mxu0
  %v3576 = vadd.f32 0.0, %v3575
  %v3577 = vpop.f32.mrb[0].mxu0
  %3578 = vmatprep.mubr.bf16.mxu0 0
  %3579 = vmatmul.mubr.bf16.gmra.mrb[0].mxu0 %v2192
  %v3580 = vpop.f32.mrb[0].mxu0
  %v3581 = vadd.f32 0.0, %v3580
  %v3582 = vpop.f32.mrb[0].mxu0
  %v3583 = vpop.f32.mrb[0].mxu0
  %v3584 = vadd.f32 0.0, %v3583
  %v3585 = vpop.f32.mrb[0].mxu0
  %3586 = vmatprep.mubr.bf16.mxu0 0
  %3587 = vmatmul.mubr.bf16.gmra.mrb[0].mxu0 %v2195
  %v3588 = vpop.f32.mrb[0].mxu0
  %v3589 = vadd.f32 0.0, %v3588
  %v3590 = vpop.f32.mrb[0].mxu0
  %v3591 = vpop.f32.mrb[0].mxu0
  %v3592 = vadd.f32 0.0, %v3591
  %v3593 = vpop.f32.mrb[0].mxu0
  %3594 = vmatprep.mubr.bf16.mxu0 0
  %3595 = vmatmul.mubr.bf16.gmra.mrb[0].mxu0 %v2198
  %v3596 = vpop.f32.mrb[0].mxu0
  %v3597 = vadd.f32 0.0, %v3596
  %v3598 = vpop.f32.mrb[0].mxu0
  %v3599 = vpop.f32.mrb[0].mxu0
  %v3600 = vadd.f32 0.0, %v3599
  %v3601 = vpop.f32.mrb[0].mxu0
  %3602 = vmatprep.mubr.bf16.mxu0 0
  %3603 = vmatmul.mubr.bf16.gmra.mrb[0].mxu0 %v2201
  %v3604 = vpop.f32.mrb[0].mxu0
  %v3605 = vadd.f32 0.0, %v3604
  %v3606 = vpop.f32.mrb[0].mxu0
  %v3607 = vpop.f32.mrb[0].mxu0
  %v3608 = vadd.f32 0.0, %v3607
  %v3609 = vpop.f32.mrb[0].mxu0
  %3610 = vmatprep.mubr.bf16.mxu0 0
  %3611 = vmatmul.mubr.bf16.gmra.mrb[0].mxu0 %v2204
  %v3612 = vpop.f32.mrb[0].mxu0
  %v3613 = vadd.f32 0.0, %v3612
  %v3614 = vpop.f32.mrb[0].mxu0
  %v3615 = vpop.f32.mrb[0].mxu0
  %v3616 = vadd.f32 0.0, %v3615
  %v3617 = vpop.f32.mrb[0].mxu0
  %3618 = vmatprep.mubr.bf16.mxu0 0
  %3619 = vmatmul.mubr.bf16.gmra.mrb[0].mxu0 %v2207
  %v3620 = vpop.f32.mrb[0].mxu0
  %v3621 = vadd.f32 0.0, %v3620
  %v3622 = vpop.f32.mrb[0].mxu0
  %v3623 = vpop.f32.mrb[0].mxu0
  %v3624 = vadd.f32 0.0, %v3623
  %v3625 = vpop.f32.mrb[0].mxu0
  %3626 = vmatprep.mubr.bf16.mxu0 0
  %3627 = vmatmul.mubr.bf16.gmra.mrb[0].mxu0 %v2210
  %v3628 = vpop.f32.mrb[0].mxu0
  %v3629 = vadd.f32 0.0, %v3628
  %v3630 = vpop.f32.mrb[0].mxu0
  %v3631 = vpop.f32.mrb[0].mxu0
  %v3632 = vadd.f32 0.0, %v3631
  %v3633 = vpop.f32.mrb[0].mxu0
  %3634 = vmatprep.mubr.bf16.mxu0 0
  %3635 = vmatmul.mubr.bf16.gmra.mrb[0].mxu0 %v2213
  %v3636 = vpop.f32.mrb[0].mxu0
  %v3637 = vadd.f32 0.0, %v3636
  %v3638 = vpop.f32.mrb[0].mxu0
  %v3639 = vpop.f32.mrb[0].mxu0
  %v3640 = vadd.f32 0.0, %v3639
  %v3641 = vpop.f32.mrb[0].mxu0
  %3642 = vmatprep.mubr.bf16.mxu0 0
  %3643 = vmatmul.mubr.bf16.gmra.mrb[0].mxu0 %v2216
  %v3644 = vpop.f32.mrb[0].mxu0
  %v3645 = vadd.f32 0.0, %v3644
  %v3646 = vpop.f32.mrb[0].mxu0
  %v3647 = vpop.f32.mrb[0].mxu0
  %v3648 = vadd.f32 0.0, %v3647
  %v3649 = vpop.f32.mrb[0].mxu0
  %3650 = vmatprep.mubr.bf16.mxu0 0
  %3651 = vmatmul.mubr.bf16.gmra.mrb[0].mxu0 %v2219
  %v3652 = vpop.f32.mrb[0].mxu0
  %v3653 = vadd.f32 0.0, %v3652
  %v3654 = vpop.f32.mrb[0].mxu0
  %v3655 = vpop.f32.mrb[0].mxu0
  %v3656 = vadd.f32 0.0, %v3655
  %v3657 = vpop.f32.mrb[0].mxu0
  %3658 = vmatprep.mubr.bf16.mxu0 0
  %3659 = vmatmul.mubr.bf16.gmra.mrb[0].mxu0 %v2222
  %v3660 = vpop.f32.mrb[0].mxu0
  %v3661 = vadd.f32 0.0, %v3660
  %v3662 = vpop.f32.mrb[0].mxu0
  %v3663 = vpop.f32.mrb[0].mxu0
  %v3664 = vadd.f32 0.0, %v3663
  %v3665 = vpop.f32.mrb[0].mxu0
  %3666 = vmatprep.mubr.bf16.mxu0 0
  %3667 = vmatmul.mubr.bf16.gmra.mrb[0].mxu0 %v2225
  %v3668 = vpop.f32.mrb[0].mxu0
  %v3669 = vadd.f32 0.0, %v3668
  %v3670 = vpop.f32.mrb[0].mxu0
  %v3671 = vpop.f32.mrb[0].mxu0
  %v3672 = vadd.f32 0.0, %v3671
  %v3673 = vpop.f32.mrb[0].mxu0
  %3674 = vmatprep.mubr.bf16.mxu0 0
  %3675 = vmatmul.mubr.bf16.gmra.mrb[0].mxu0 %v2228
  %v3676 = vpop.f32.mrb[0].mxu0
  %v3677 = vadd.f32 0.0, %v3676
  %v3678 = vpop.f32.mrb[0].mxu0
  %v3679 = vpop.f32.mrb[0].mxu0
  %v3680 = vadd.f32 0.0, %v3679
  %v3681 = vpop.f32.mrb[0].mxu0
  %3682 = vmatprep.mubr.bf16.mxu0 0
  %3683 = vmatmul.mubr.bf16.gmra.mrb[0].mxu0 %v2231
  %v3684 = vpop.f32.mrb[0].mxu0
  %v3685 = vadd.f32 0.0, %v3684
  %v3686 = vpop.f32.mrb[0].mxu0
  %v3687 = vpop.f32.mrb[0].mxu0
  %v3688 = vadd.f32 0.0, %v3687
  %v3689 = vpop.f32.mrb[0].mxu0
  %3690 = vmatprep.mubr.bf16.mxu0 0
  %3691 = vmatmul.mubr.bf16.gmra.mrb[0].mxu0 %v2234
  %v3692 = vpop.f32.mrb[0].mxu0
  %v3693 = vadd.f32 0.0, %v3692
  %v3694 = vpop.f32.mrb[0].mxu0
  %v3695 = vpop.f32.mrb[0].mxu0
  %v3696 = vadd.f32 0.0, %v3695
  %v3697 = vpop.f32.mrb[0].mxu0
  %3698 = vmatprep.mubr.bf16.mxu0 0
  %3699 = vmatmul.mubr.bf16.gmra.mrb[0].mxu0 %v2237
  %v3700 = vpop.f32.mrb[0].mxu0
  %v3701 = vadd.f32 0.0, %v3700
  %v3702 = vpop.f32.mrb[0].mxu0
  %v3703 = vpop.f32.mrb[0].mxu0
  %v3704 = vadd.f32 0.0, %v3703
  %v3705 = vpop.f32.mrb[0].mxu0
  %3706 = vmatprep.mubr.bf16.mxu0 0
  %3707 = vmatmul.mubr.bf16.gmra.mrb[0].mxu0 %v2240
  %v3708 = vpop.f32.mrb[0].mxu0
  %v3709 = vadd.f32 0.0, %v3708
  %v3710 = vpop.f32.mrb[0].mxu0
  %v3711 = vpop.f32.mrb[0].mxu0
  %v3712 = vadd.f32 0.0, %v3711
  %v3713 = vpop.f32.mrb[0].mxu0
  %3714 = vmatprep.mubr.bf16.mxu0 0
  %3715 = vmatmul.mubr.bf16.gmra.mrb[0].mxu0 %v2243
  %v3716 = vpop.f32.mrb[0].mxu0
  %v3717 = vadd.f32 0.0, %v3716
  %v3718 = vpop.f32.mrb[0].mxu0
  %v3719 = vpop.f32.mrb[0].mxu0
  %v3720 = vadd.f32 0.0, %v3719
  %v3721 = vpop.f32.mrb[0].mxu0
  %3722 = vmatprep.mubr.bf16.mxu0 0
  %3723 = vmatmul.mubr.bf16.gmra.mrb[0].mxu0 %v2246
  %v3724 = vpop.f32.mrb[0].mxu0
  %v3725 = vadd.f32 0.0, %v3724
  %v3726 = vpop.f32.mrb[0].mxu0
  %v3727 = vpop.f32.mrb[0].mxu0
  %v3728 = vadd.f32 0.0, %v3727
  %v3729 = vpop.f32.mrb[0].mxu0
  %3730 = vmatprep.mubr.bf16.mxu0 0
  %3731 = vmatmul.mubr.bf16.gmra.mrb[0].mxu0 %v2249
  %v3732 = vpop.f32.mrb[0].mxu0
  %v3733 = vadd.f32 0.0, %v3732
  %v3734 = vpop.f32.mrb[0].mxu0
  %v3735 = vpop.f32.mrb[0].mxu0
  %v3736 = vadd.f32 0.0, %v3735
  %v3737 = vpop.f32.mrb[0].mxu0
  %3738 = vmatprep.mubr.bf16.mxu0 0
  %3739 = vmatmul.mubr.bf16.gmra.mrb[0].mxu0 %v2252
  %v3740 = vpop.f32.mrb[0].mxu0
  %v3741 = vadd.f32 0.0, %v3740
  %v3742 = vpop.f32.mrb[0].mxu0
  %v3743 = vpop.f32.mrb[0].mxu0
  %v3744 = vadd.f32 0.0, %v3743
  %v3745 = vpop.f32.mrb[0].mxu0
  %3746 = vmatprep.mubr.bf16.mxu0 0
  %3747 = vmatmul.mubr.bf16.gmra.mrb[0].mxu0 %v2255
  %v3748 = vpop.f32.mrb[0].mxu0
  %v3749 = vadd.f32 0.0, %v3748
  %v3750 = vpop.f32.mrb[0].mxu0
  %v3751 = vpop.f32.mrb[0].mxu0
  %v3752 = vadd.f32 0.0, %v3751
  %v3753 = vpop.f32.mrb[0].mxu0
  %3754 = vmatprep.mubr.bf16.mxu0 0
  %3755 = vmatmul.mubr.bf16.gmra.mrb[0].mxu0 %v2258
  %v3756 = vpop.f32.mrb[0].mxu0
  %v3757 = vadd.f32 0.0, %v3756
  %v3758 = vpop.f32.mrb[0].mxu0
  %v3759 = vpop.f32.mrb[0].mxu0
  %v3760 = vadd.f32 0.0, %v3759
  %v3761 = vpop.f32.mrb[0].mxu0
  %3762 = vmatprep.mubr.bf16.mxu0 0
  %3763 = vmatmul.mubr.bf16.gmra.mrb[0].mxu0 %v2261
  %v3764 = vpop.f32.mrb[0].mxu0
  %v3765 = vadd.f32 0.0, %v3764
  %v3766 = vpop.f32.mrb[0].mxu0
  %v3767 = vpop.f32.mrb[0].mxu0
  %v3768 = vadd.f32 0.0, %v3767
  %v3769 = vpop.f32.mrb[0].mxu0
  %3770 = vmatprep.mubr.bf16.mxu0 0
  %3771 = vmatmul.mubr.bf16.gmra.mrb[0].mxu0 %v2264
  %v3772 = vpop.f32.mrb[0].mxu0
  %v3773 = vadd.f32 0.0, %v3772
  %v3774 = vpop.f32.mrb[0].mxu0
  %v3775 = vpop.f32.mrb[0].mxu0
  %v3776 = vadd.f32 0.0, %v3775
  %v3777 = vpop.f32.mrb[0].mxu0
  %3778 = vmatprep.mubr.bf16.mxu0 0
  %3779 = vmatmul.mubr.bf16.gmra.mrb[0].mxu0 %v2267
  %v3780 = vpop.f32.mrb[0].mxu0
  %v3781 = vadd.f32 0.0, %v3780
  %v3782 = vpop.f32.mrb[0].mxu0
  %v3783 = vpop.f32.mrb[0].mxu0
  %v3784 = vadd.f32 0.0, %v3783
  %v3785 = vpop.f32.mrb[0].mxu0
  %3786 = vmatprep.mubr.bf16.mxu0 0
  %3787 = vmatmul.mubr.bf16.gmra.mrb[0].mxu0 %v2270
  %v3788 = vpop.f32.mrb[0].mxu0
  %v3789 = vadd.f32 0.0, %v3788
  %v3790 = vpop.f32.mrb[0].mxu0
  %v3791 = vpop.f32.mrb[0].mxu0
  %v3792 = vadd.f32 0.0, %v3791
  %v3793 = vpop.f32.mrb[0].mxu0
  %3794 = vmatprep.mubr.bf16.mxu0 0
  %3795 = vmatmul.mubr.bf16.gmra.mrb[0].mxu0 %v2273
  %v3796 = vpop.f32.mrb[0].mxu0
  %v3797 = vadd.f32 0.0, %v3796
  %v3798 = vpop.f32.mrb[0].mxu0
  %v3799 = vpop.f32.mrb[0].mxu0
  %v3800 = vadd.f32 0.0, %v3799
  %v3801 = vpop.f32.mrb[0].mxu0
  %3802 = vmatprep.mubr.bf16.mxu0 0
  %3803 = vmatmul.mubr.bf16.gmra.mrb[0].mxu0 %v2276
  %v3804 = vpop.f32.mrb[0].mxu0
  %v3805 = vadd.f32 0.0, %v3804
  %v3806 = vpop.f32.mrb[0].mxu0
  %v3807 = vpop.f32.mrb[0].mxu0
  %v3808 = vadd.f32 0.0, %v3807
  %v3809 = vpop.f32.mrb[0].mxu0
  %3810 = vmatprep.mubr.bf16.mxu0 0
  %3811 = vmatmul.mubr.bf16.gmra.mrb[0].mxu0 %v2279
  %v3812 = vpop.f32.mrb[0].mxu0
  %v3813 = vadd.f32 0.0, %v3812
  %v3814 = vpop.f32.mrb[0].mxu0
  %v3815 = vpop.f32.mrb[0].mxu0
  %v3816 = vadd.f32 0.0, %v3815
  %v3817 = vpop.f32.mrb[0].mxu0
  %3818 = vmatprep.mubr.bf16.mxu0 0
  %3819 = vmatmul.mubr.bf16.gmra.mrb[0].mxu0 %v2282
  %v3820 = vpop.f32.mrb[0].mxu0
  %v3821 = vadd.f32 0.0, %v3820
  %v3822 = vpop.f32.mrb[0].mxu0
  %v3823 = vpop.f32.mrb[0].mxu0
  %v3824 = vadd.f32 0.0, %v3823
  %v3825 = vpop.f32.mrb[0].mxu0
  %3826 = vmatprep.mubr.bf16.mxu0 0
  %3827 = vmatmul.mubr.bf16.gmra.mrb[0].mxu0 %v2285
  %v3828 = vpop.f32.mrb[0].mxu0
  %v3829 = vadd.f32 0.0, %v3828
  %v3830 = vpop.f32.mrb[0].mxu0
  %v3831 = vpop.f32.mrb[0].mxu0
  %v3832 = vadd.f32 0.0, %v3831
  %v3833 = vpop.f32.mrb[0].mxu0
  %3834 = vmatprep.mubr.bf16.mxu0 0
  %3835 = vmatmul.mubr.bf16.gmra.mrb[0].mxu0 %v2288
  %v3836 = vpop.f32.mrb[0].mxu0
  %v3837 = vadd.f32 0.0, %v3836
  %v3838 = vpop.f32.mrb[0].mxu0
  %v3839 = vpop.f32.mrb[0].mxu0
  %v3840 = vadd.f32 0.0, %v3839
  %v3841 = vpop.f32.mrb[0].mxu0
  %3842 = vmatprep.mubr.bf16.mxu0 0
  %3843 = vmatmul.mubr.bf16.gmra.mrb[0].mxu0 %v2291
  %v3844 = vpop.f32.mrb[0].mxu0
  %v3845 = vadd.f32 0.0, %v3844
  %v3846 = vpop.f32.mrb[0].mxu0
  %v3847 = vpop.f32.mrb[0].mxu0
  %v3848 = vadd.f32 0.0, %v3847
  %v3849 = vpop.f32.mrb[0].mxu0
  %3850 = vmatprep.mubr.bf16.mxu0 0
  %3851 = vmatmul.mubr.bf16.gmra.mrb[0].mxu0 %v2294
  %v3852 = vpop.f32.mrb[0].mxu0
  %v3853 = vadd.f32 0.0, %v3852
  %v3854 = vpop.f32.mrb[0].mxu0
  %v3855 = vpop.f32.mrb[0].mxu0
  %v3856 = vadd.f32 0.0, %v3855
  %v3857 = vpop.f32.mrb[0].mxu0
  %3858 = vmatprep.mubr.bf16.mxu0 0
  %3859 = vmatmul.mubr.bf16.gmra.mrb[0].mxu0 %v2297
  %v3860 = vpop.f32.mrb[0].mxu0
  %v3861 = vadd.f32 0.0, %v3860
  %v3862 = vpop.f32.mrb[0].mxu0
  %v3863 = vpop.f32.mrb[0].mxu0
  %v3864 = vadd.f32 0.0, %v3863
  %v3865 = vpop.f32.mrb[0].mxu0
  %3866 = vmatprep.mubr.bf16.mxu0 0
  %3867 = vmatmul.mubr.bf16.gmra.mrb[0].mxu0 %v2300
  %v3868 = vpop.f32.mrb[0].mxu0
  %v3869 = vadd.f32 0.0, %v3868
  %v3870 = vpop.f32.mrb[0].mxu0
  %v3871 = vpop.f32.mrb[0].mxu0
  %v3872 = vadd.f32 0.0, %v3871
  %v3873 = vpop.f32.mrb[0].mxu0
  %3874 = vmatprep.mubr.bf16.mxu0 0
  %3875 = vmatmul.mubr.bf16.gmra.mrb[0].mxu0 %v2303
  %v3876 = vpop.f32.mrb[0].mxu0
  %v3877 = vadd.f32 0.0, %v3876
  %v3878 = vpop.f32.mrb[0].mxu0
  %v3879 = vpop.f32.mrb[0].mxu0
  %v3880 = vadd.f32 0.0, %v3879
  %v3881 = vpop.f32.mrb[0].mxu0
  %3882 = vmatprep.mubr.bf16.mxu0 0
  %3883 = vmatmul.mubr.bf16.gmra.mrb[0].mxu0 %v2306
  %v3884 = vpop.f32.mrb[0].mxu0
  %v3885 = vadd.f32 0.0, %v3884
  %v3886 = vpop.f32.mrb[0].mxu0
  %v3887 = vpop.f32.mrb[0].mxu0
  %v3888 = vadd.f32 0.0, %v3887
  %v3889 = vpop.f32.mrb[0].mxu0
  %3890 = vmatprep.mubr.bf16.mxu0 0
  %3891 = vmatmul.mubr.bf16.gmra.mrb[0].mxu0 %v2309
  %v3892 = vpop.f32.mrb[0].mxu0
  %v3893 = vadd.f32 0.0, %v3892
  %v3894 = vpop.f32.mrb[0].mxu0
  %v3895 = vpop.f32.mrb[0].mxu0
  %v3896 = vadd.f32 0.0, %v3895
  %v3897 = vpop.f32.mrb[0].mxu0
  %3898 = vmatprep.mubr.bf16.mxu0 0
  %3899 = vmatmul.mubr.bf16.gmra.mrb[0].mxu0 %v2312
  %v3900 = vpop.f32.mrb[0].mxu0
  %v3901 = vadd.f32 0.0, %v3900
  %v3902 = vpop.f32.mrb[0].mxu0
  %v3903 = vpop.f32.mrb[0].mxu0
  %v3904 = vadd.f32 0.0, %v3903
  %v3905 = vpop.f32.mrb[0].mxu0
  %3906 = vmatprep.mubr.bf16.mxu0 0
  %3907 = vmatmul.mubr.bf16.gmra.mrb[0].mxu0 %v2315
  %v3908 = vpop.f32.mrb[0].mxu0
  %v3909 = vadd.f32 0.0, %v3908
  %v3910 = vpop.f32.mrb[0].mxu0
  %v3911 = vpop.f32.mrb[0].mxu0
  %v3912 = vadd.f32 0.0, %v3911
  %v3913 = vpop.f32.mrb[0].mxu0
  %3914 = vmatprep.mubr.bf16.mxu0 0
  %3915 = vmatmul.mubr.bf16.gmra.mrb[0].mxu0 %v2318
  %v3916 = vpop.f32.mrb[0].mxu0
  %v3917 = vadd.f32 0.0, %v3916
  %v3918 = vpop.f32.mrb[0].mxu0
  %v3919 = vpop.f32.mrb[0].mxu0
  %v3920 = vadd.f32 0.0, %v3919
  %v3921 = vpop.f32.mrb[0].mxu0
  %3922 = vmatprep.mubr.bf16.mxu0 0
  %3923 = vmatmul.mubr.bf16.gmra.mrb[0].mxu0 %v2321
  %v3924 = vpop.f32.mrb[0].mxu0
  %v3925 = vadd.f32 0.0, %v3924
  %v3926 = vpop.f32.mrb[0].mxu0
  %v3927 = vpop.f32.mrb[0].mxu0
  %v3928 = vadd.f32 0.0, %v3927
  %v3929 = vpop.f32.mrb[0].mxu0
  %3930 = vmatprep.mubr.bf16.mxu0 0
  %3931 = vmatmul.mubr.bf16.gmra.mrb[0].mxu0 %v2324
  %v3932 = vpop.f32.mrb[0].mxu0
  %v3933 = vadd.f32 0.0, %v3932
  %v3934 = vpop.f32.mrb[0].mxu0
  %v3935 = vpop.f32.mrb[0].mxu0
  %v3936 = vadd.f32 0.0, %v3935
  %v3937 = vpop.f32.mrb[0].mxu0
  %3938 = vmatprep.mubr.bf16.mxu0 0
  %3939 = vmatmul.mubr.bf16.gmra.mrb[0].mxu0 %v2327
  %v3940 = vpop.f32.mrb[0].mxu0
  %v3941 = vadd.f32 0.0, %v3940
  %v3942 = vpop.f32.mrb[0].mxu0
  %v3943 = vpop.f32.mrb[0].mxu0
  %v3944 = vadd.f32 0.0, %v3943
  %v3945 = vpop.f32.mrb[0].mxu0
  %3946 = vmatprep.mubr.bf16.mxu0 0
  %3947 = vmatmul.mubr.bf16.gmra.mrb[0].mxu0 %v2330
  %v3948 = vpop.f32.mrb[0].mxu0
  %v3949 = vadd.f32 0.0, %v3948
  %v3950 = vpop.f32.mrb[0].mxu0
  %v3951 = vpop.f32.mrb[0].mxu0
  %v3952 = vadd.f32 0.0, %v3951
  %v3953 = vpop.f32.mrb[0].mxu0
  %3954 = vmatprep.mubr.bf16.mxu0 0
  %3955 = vmatmul.mubr.bf16.gmra.mrb[0].mxu0 %v2333
  %v3956 = vpop.f32.mrb[0].mxu0
  %v3957 = vadd.f32 0.0, %v3956
  %v3958 = vpop.f32.mrb[0].mxu0
  %v3959 = vpop.f32.mrb[0].mxu0
  %v3960 = vadd.f32 0.0, %v3959
  %v3961 = vpop.f32.mrb[0].mxu0
  %3962 = vmatprep.mubr.bf16.mxu0 0
  %3963 = vmatmul.mubr.bf16.gmra.mrb[0].mxu0 %v2336
  %v3964 = vpop.f32.mrb[0].mxu0
  %v3965 = vadd.f32 0.0, %v3964
  %v3966 = vpop.f32.mrb[0].mxu0
  %v3967 = vpop.f32.mrb[0].mxu0
  %v3968 = vadd.f32 0.0, %v3967
  %v3969 = vpop.f32.mrb[0].mxu0
  %3970 = vmatprep.mubr.bf16.mxu0 0
  %3971 = vmatmul.mubr.bf16.gmra.mrb[0].mxu0 %v2339
  %v3972 = vpop.f32.mrb[0].mxu0
  %v3973 = vadd.f32 0.0, %v3972
  %v3974 = vpop.f32.mrb[0].mxu0
  %v3975 = vpop.f32.mrb[0].mxu0
  %v3976 = vadd.f32 0.0, %v3975
  %v3977 = vpop.f32.mrb[0].mxu0
  %3978 = vmatprep.mubr.bf16.mxu0 0
  %3979 = vmatmul.mubr.bf16.gmra.mrb[0].mxu0 %v2342
  %v3980 = vpop.f32.mrb[0].mxu0
  %v3981 = vadd.f32 0.0, %v3980
  %v3982 = vpop.f32.mrb[0].mxu0
  %v3983 = vpop.f32.mrb[0].mxu0
  %v3984 = vadd.f32 0.0, %v3983
  %v3985 = vpop.f32.mrb[0].mxu0
  %3986 = vmatprep.mubr.bf16.mxu0 0
  %3987 = vmatmul.mubr.bf16.gmra.mrb[0].mxu0 %v2345
  %v3988 = vpop.f32.mrb[0].mxu0
  %v3989 = vadd.f32 0.0, %v3988
  %v3990 = vpop.f32.mrb[0].mxu0
  %v3991 = vpop.f32.mrb[0].mxu0
  %v3992 = vadd.f32 0.0, %v3991
  %v3993 = vpop.f32.mrb[0].mxu0
  %3994 = vmatprep.mubr.bf16.mxu0 0
  %3995 = vmatmul.mubr.bf16.gmra.mrb[0].mxu0 %v2348
  %v3996 = vpop.f32.mrb[0].mxu0
  %v3997 = vadd.f32 0.0, %v3996
  %v3998 = vpop.f32.mrb[0].mxu0
  %v3999 = vpop.f32.mrb[0].mxu0
  %v4000 = vadd.f32 0.0, %v3999
  %v4001 = vpop.f32.mrb[0].mxu0
  %4002 = vmatprep.mubr.bf16.mxu0 0
  %4003 = vmatmul.mubr.bf16.gmra.mrb[0].mxu0 %v2351
  %v4004 = vpop.f32.mrb[0].mxu0
  %v4005 = vadd.f32 0.0, %v4004
  %v4006 = vpop.f32.mrb[0].mxu0
  %v4007 = vpop.f32.mrb[0].mxu0
  %v4008 = vadd.f32 0.0, %v4007
  %v4009 = vpop.f32.mrb[0].mxu0
  %4010 = vmatprep.mubr.bf16.mxu0 0
  %4011 = vmatmul.mubr.bf16.gmra.mrb[0].mxu0 %v2354
  %v4012 = vpop.f32.mrb[0].mxu0
  %v4013 = vadd.f32 0.0, %v4012
  %v4014 = vpop.f32.mrb[0].mxu0
  %v4015 = vpop.f32.mrb[0].mxu0
  %v4016 = vadd.f32 0.0, %v4015
  %v4017 = vpop.f32.mrb[0].mxu0
  %4018 = vmatprep.mubr.bf16.mxu0 0
  %4019 = vmatmul.mubr.bf16.gmra.mrb[0].mxu0 %v2357
  %v4020 = vpop.f32.mrb[0].mxu0
  %v4021 = vadd.f32 0.0, %v4020
  %v4022 = vpop.f32.mrb[0].mxu0
  %v4023 = vpop.f32.mrb[0].mxu0
  %v4024 = vadd.f32 0.0, %v4023
  %v4025 = vpop.f32.mrb[0].mxu0
  %4026 = vmatprep.mubr.bf16.mxu0 0
  %4027 = vmatmul.mubr.bf16.gmra.mrb[0].mxu0 %v2360
  %v4028 = vpop.f32.mrb[0].mxu0
  %v4029 = vadd.f32 0.0, %v4028
  %v4030 = vpop.f32.mrb[0].mxu0
  %v4031 = vpop.f32.mrb[0].mxu0
  %v4032 = vadd.f32 0.0, %v4031
  %v4033 = vpop.f32.mrb[0].mxu0
  %4034 = vmatprep.mubr.bf16.mxu0 0
  %4035 = vmatmul.mubr.bf16.gmra.mrb[0].mxu0 %v2363
  %v4036 = vpop.f32.mrb[0].mxu0
  %v4037 = vadd.f32 0.0, %v4036
  %v4038 = vpop.f32.mrb[0].mxu0
  %v4039 = vpop.f32.mrb[0].mxu0
  %v4040 = vadd.f32 0.0, %v4039
  %v4041 = vpop.f32.mrb[0].mxu0
  %4042 = vmatprep.mubr.bf16.mxu0 0
  %4043 = vmatmul.mubr.bf16.gmra.mrb[0].mxu0 %v2366
  %v4044 = vpop.f32.mrb[0].mxu0
  %v4045 = vadd.f32 0.0, %v4044
  %v4046 = vpop.f32.mrb[0].mxu0
  %v4047 = vpop.f32.mrb[0].mxu0
  %v4048 = vadd.f32 0.0, %v4047
  %v4049 = vpop.f32.mrb[0].mxu0
  %4050 = vmatprep.mubr.bf16.mxu0 0
  %4051 = vmatmul.mubr.bf16.gmra.mrb[0].mxu0 %v2369
  %v4052 = vpop.f32.mrb[0].mxu0
  %v4053 = vadd.f32 0.0, %v4052
  %v4054 = vpop.f32.mrb[0].mxu0
  %v4055 = vpop.f32.mrb[0].mxu0
  %v4056 = vadd.f32 0.0, %v4055
  %v4057 = vpop.f32.mrb[0].mxu0
  %4058 = vmatprep.mubr.bf16.mxu0 0
  %4059 = vmatmul.mubr.bf16.gmra.mrb[0].mxu0 %v2372
  %v4060 = vpop.f32.mrb[0].mxu0
  %v4061 = vadd.f32 0.0, %v4060
  %v4062 = vpop.f32.mrb[0].mxu0
  %v4063 = vpop.f32.mrb[0].mxu0
  %v4064 = vadd.f32 0.0, %v4063
  %v4065 = vpop.f32.mrb[0].mxu0
  %4066 = vmatprep.mubr.bf16.mxu0 0
  %4067 = vmatmul.mubr.bf16.gmra.mrb[0].mxu0 %v2375
  %v4068 = vpop.f32.mrb[0].mxu0
  %v4069 = vadd.f32 0.0, %v4068
  %v4070 = vpop.f32.mrb[0].mxu0
  %v4071 = vpop.f32.mrb[0].mxu0
  %v4072 = vadd.f32 0.0, %v4071
  %v4073 = vpop.f32.mrb[0].mxu0
  %4074 = vmatprep.mubr.bf16.mxu0 0
  %4075 = vmatmul.mubr.bf16.gmra.mrb[0].mxu0 %v2378
  %v4076 = vpop.f32.mrb[0].mxu0
  %v4077 = vadd.f32 0.0, %v4076
  %v4078 = vpop.f32.mrb[0].mxu0
  %v4079 = vpop.f32.mrb[0].mxu0
  %v4080 = vadd.f32 0.0, %v4079
  %v4081 = vpop.f32.mrb[0].mxu0
  %4082 = vmatprep.mubr.bf16.mxu0 0
  %4083 = vmatmul.mubr.bf16.gmra.mrb[0].mxu0 %v2381
  %v4084 = vpop.f32.mrb[0].mxu0
  %v4085 = vadd.f32 0.0, %v4084
  %v4086 = vpop.f32.mrb[0].mxu0
  %v4087 = vpop.f32.mrb[0].mxu0
  %v4088 = vadd.f32 0.0, %v4087
  %v4089 = vpop.f32.mrb[0].mxu0
  %4090 = vmatprep.mubr.bf16.mxu0 0
  %4091 = vmatmul.mubr.bf16.gmra.mrb[0].mxu0 %v2384
  %v4092 = vpop.f32.mrb[0].mxu0
  %v4093 = vadd.f32 0.0, %v4092
  %v4094 = vpop.f32.mrb[0].mxu0
  %v4095 = vpop.f32.mrb[0].mxu0
  %v4096 = vadd.f32 0.0, %v4095
  %v4097 = vpop.f32.mrb[0].mxu0
  %4098 = vmatprep.mubr.bf16.mxu0 0
  %4099 = vmatmul.mubr.bf16.gmra.mrb[0].mxu0 %v2387
  %v4100 = vpop.f32.mrb[0].mxu0
  %v4101 = vadd.f32 0.0, %v4100
  %v4102 = vpop.f32.mrb[0].mxu0
  %v4103 = vpop.f32.mrb[0].mxu0
  %v4104 = vadd.f32 0.0, %v4103
  %v4105 = vpop.f32.mrb[0].mxu0
  %4106 = vmatprep.mubr.bf16.mxu0 0
  %4107 = vmatmul.mubr.bf16.gmra.mrb[0].mxu0 %v2390
  %v4108 = vpop.f32.mrb[0].mxu0
  %v4109 = vadd.f32 0.0, %v4108
  %v4110 = vpop.f32.mrb[0].mxu0
  %v4111 = vpop.f32.mrb[0].mxu0
  %v4112 = vadd.f32 0.0, %v4111
  %v4113 = vpop.f32.mrb[0].mxu0
  %4114 = vmatprep.mubr.bf16.mxu0 0
  %4115 = vmatmul.mubr.bf16.gmra.mrb[0].mxu0 %v2393
  %v4116 = vpop.f32.mrb[0].mxu0
  %v4117 = vadd.f32 0.0, %v4116
  %v4118 = vpop.f32.mrb[0].mxu0
  %v4119 = vpop.f32.mrb[0].mxu0
  %v4120 = vadd.f32 0.0, %v4119
  %v4121 = vpop.f32.mrb[0].mxu0
  %4122 = vmatprep.mubr.bf16.mxu0 0
  %4123 = vmatmul.mubr.bf16.gmra.mrb[0].mxu0 %v2396
  %v4124 = vpop.f32.mrb[0].mxu0
  %v4125 = vadd.f32 0.0, %v4124
  %v4126 = vpop.f32.mrb[0].mxu0
  %v4127 = vpop.f32.mrb[0].mxu0
  %v4128 = vadd.f32 0.0, %v4127
  %v4129 = vpop.f32.mrb[0].mxu0
  %4130 = vmatprep.mubr.bf16.mxu0 0
  %4131 = vmatmul.mubr.bf16.gmra.mrb[0].mxu0 %v2399
  %v4132 = vpop.f32.mrb[0].mxu0
  %v4133 = vadd.f32 0.0, %v4132
  %v4134 = vpop.f32.mrb[0].mxu0
  %v4135 = vpop.f32.mrb[0].mxu0
  %v4136 = vadd.f32 0.0, %v4135
  %v4137 = vpop.f32.mrb[0].mxu0
  %4138 = vmatprep.mubr.bf16.mxu0 0
  %4139 = vmatmul.mubr.bf16.gmra.mrb[0].mxu0 %v2402
  %v4140 = vpop.f32.mrb[0].mxu0
  %v4141 = vadd.f32 0.0, %v4140
  %v4142 = vpop.f32.mrb[0].mxu0
  %v4143 = vpop.f32.mrb[0].mxu0
  %v4144 = vadd.f32 0.0, %v4143
  %v4145 = vpop.f32.mrb[0].mxu0
  %4146 = vmatprep.mubr.bf16.mxu0 0
  %4147 = vmatmul.mubr.bf16.gmra.mrb[0].mxu0 %v2405
  %v4148 = vpop.f32.mrb[0].mxu0
  %v4149 = vadd.f32 0.0, %v4148
  %v4150 = vpop.f32.mrb[0].mxu0
  %v4151 = vpop.f32.mrb[0].mxu0
  %v4152 = vadd.f32 0.0, %v4151
  %v4153 = vpop.f32.mrb[0].mxu0
  %4154 = vmatprep.mubr.bf16.mxu0 0
  %4155 = vmatmul.mubr.bf16.gmra.mrb[0].mxu0 %v2408
  %v4156 = vpop.f32.mrb[0].mxu0
  %v4157 = vadd.f32 0.0, %v4156
  %v4158 = vpop.f32.mrb[0].mxu0
  %v4159 = vpop.f32.mrb[0].mxu0
  %v4160 = vadd.f32 0.0, %v4159
  %v4161 = vpop.f32.mrb[0].mxu0
  %4162 = vmatprep.mubr.bf16.mxu0 0
  %4163 = vmatmul.mubr.bf16.gmra.mrb[0].mxu0 %v2411
  %v4164 = vpop.f32.mrb[0].mxu0
  %v4165 = vadd.f32 0.0, %v4164
  %v4166 = vpop.f32.mrb[0].mxu0
  %v4167 = vpop.f32.mrb[0].mxu0
  %v4168 = vadd.f32 0.0, %v4167
  %v4169 = vpop.f32.mrb[0].mxu0
  %4170 = vmatprep.mubr.bf16.mxu0 0
  %4171 = vmatmul.mubr.bf16.gmra.mrb[0].mxu0 %v2414
  %v4172 = vpop.f32.mrb[0].mxu0
  %v4173 = vadd.f32 0.0, %v4172
  %v4174 = vpop.f32.mrb[0].mxu0
  %v4175 = vpop.f32.mrb[0].mxu0
  %v4176 = vadd.f32 0.0, %v4175
  %v4177 = vpop.f32.mrb[0].mxu0
  %4178 = vmatprep.mubr.bf16.mxu0 0
  %4179 = vmatmul.mubr.bf16.gmra.mrb[0].mxu0 %v2417
  %v4180 = vpop.f32.mrb[0].mxu0
  %v4181 = vadd.f32 0.0, %v4180
  %v4182 = vpop.f32.mrb[0].mxu0
  %v4183 = vpop.f32.mrb[0].mxu0
  %v4184 = vadd.f32 0.0, %v4183
  %v4185 = vpop.f32.mrb[0].mxu0
  %4186 = vmatprep.mubr.bf16.mxu0 0
  %4187 = vmatmul.mubr.bf16.gmra.mrb[0].mxu0 %v2420
  %v4188 = vpop.f32.mrb[0].mxu0
  %v4189 = vadd.f32 0.0, %v4188
  %v4190 = vpop.f32.mrb[0].mxu0
  %v4191 = vpop.f32.mrb[0].mxu0
  %v4192 = vadd.f32 0.0, %v4191
  %v4193 = vpop.f32.mrb[0].mxu0
  %4194 = vmatprep.mubr.bf16.mxu0 0
  %4195 = vmatmul.mubr.bf16.gmra.mrb[0].mxu0 %v2423
  %v4196 = vpop.f32.mrb[0].mxu0
  %v4197 = vadd.f32 0.0, %v4196
  %v4198 = vpop.f32.mrb[0].mxu0
  %v4199 = vpop.f32.mrb[0].mxu0
  %v4200 = vadd.f32 0.0, %v4199
  %v4201 = vpop.f32.mrb[0].mxu0
  %4202 = vmatprep.mubr.bf16.mxu0 0
  %4203 = vmatmul.mubr.bf16.gmra.mrb[0].mxu0 %v2426
  %v4204 = vpop.f32.mrb[0].mxu0
  %v4205 = vadd.f32 0.0, %v4204
  %v4206 = vpop.f32.mrb[0].mxu0
  %v4207 = vpop.f32.mrb[0].mxu0
  %v4208 = vadd.f32 0.0, %v4207
  %v4209 = vpop.f32.mrb[0].mxu0
  %4210 = vmatprep.mubr.bf16.mxu0 0
  %4211 = vmatmul.mubr.bf16.gmra.mrb[0].mxu0 %v2429
  %v4212 = vpop.f32.mrb[0].mxu0
  %v4213 = vadd.f32 0.0, %v4212
  %v4214 = vpop.f32.mrb[0].mxu0
  %v4215 = vpop.f32.mrb[0].mxu0
  %v4216 = vadd.f32 0.0, %v4215
  %v4217 = vpop.f32.mrb[0].mxu0
  %4218 = vmatprep.mubr.bf16.mxu0 0
  %4219 = vmatmul.mubr.bf16.gmra.mrb[0].mxu0 %v2432
  %v4220 = vpop.f32.mrb[0].mxu0
  %v4221 = vadd.f32 0.0, %v4220
  %v4222 = vpop.f32.mrb[0].mxu0
  %v4223 = vpop.f32.mrb[0].mxu0
  %v4224 = vadd.f32 0.0, %v4223
  %v4225 = vpop.f32.mrb[0].mxu0
  %4226 = vmatprep.mubr.bf16.mxu0 0
  %4227 = vmatmul.mubr.bf16.gmra.mrb[0].mxu0 %v2435
  %v4228 = vpop.f32.mrb[0].mxu0
  %v4229 = vadd.f32 0.0, %v4228
  %v4230 = vpop.f32.mrb[0].mxu0
  %v4231 = vpop.f32.mrb[0].mxu0
  %v4232 = vadd.f32 0.0, %v4231
  %v4233 = vpop.f32.mrb[0].mxu0
  %4234 = vmatprep.mubr.bf16.mxu0 0
  %4235 = vmatmul.mubr.bf16.gmra.mrb[0].mxu0 %v2438
  %v4236 = vpop.f32.mrb[0].mxu0
  %v4237 = vadd.f32 0.0, %v4236
  %v4238 = vpop.f32.mrb[0].mxu0
  %v4239 = vpop.f32.mrb[0].mxu0
  %v4240 = vadd.f32 0.0, %v4239
  %v4241 = vpop.f32.mrb[0].mxu0
  %4242 = vmatprep.mubr.bf16.mxu0 0
  %4243 = vmatmul.mubr.bf16.gmra.mrb[0].mxu0 %v2441
  %v4244 = vpop.f32.mrb[0].mxu0
  %v4245 = vadd.f32 0.0, %v4244
  %v4246 = vpop.f32.mrb[0].mxu0
  %v4247 = vpop.f32.mrb[0].mxu0
  %v4248 = vadd.f32 0.0, %v4247
  %v4249 = vpop.f32.mrb[0].mxu0
  %4250 = vmatprep.mubr.bf16.mxu0 0
  %4251 = vmatmul.mubr.bf16.gmra.mrb[0].mxu0 %v2444
  %v4252 = vpop.f32.mrb[0].mxu0
  %v4253 = vadd.f32 0.0, %v4252
  %v4254 = vpop.f32.mrb[0].mxu0
  %v4255 = vpop.f32.mrb[0].mxu0
  %v4256 = vadd.f32 0.0, %v4255
  %v4257 = vpop.f32.mrb[0].mxu0
  %4258 = vmatprep.mubr.bf16.mxu0 0
  %4259 = vmatmul.mubr.bf16.gmra.mrb[0].mxu0 %v2447
  %v4260 = vpop.f32.mrb[0].mxu0
  %v4261 = vadd.f32 0.0, %v4260
  %v4262 = vpop.f32.mrb[0].mxu0
  %v4263 = vpop.f32.mrb[0].mxu0
  %v4264 = vadd.f32 0.0, %v4263
  %v4265 = vpop.f32.mrb[0].mxu0
  %4266 = vmatprep.mubr.bf16.mxu0 0
  %4267 = vmatmul.mubr.bf16.gmra.mrb[0].mxu0 %v2450
  %v4268 = vpop.f32.mrb[0].mxu0
  %v4269 = vadd.f32 0.0, %v4268
  %v4270 = vpop.f32.mrb[0].mxu0
  %v4271 = vpop.f32.mrb[0].mxu0
  %v4272 = vadd.f32 0.0, %v4271
  %v4273 = vpop.f32.mrb[0].mxu0
  %4274 = vmatprep.mubr.bf16.mxu0 0
  %4275 = vmatmul.mubr.bf16.gmra.mrb[0].mxu0 %v2453
  %v4276 = vpop.f32.mrb[0].mxu0
  %v4277 = vadd.f32 0.0, %v4276
  %v4278 = vpop.f32.mrb[0].mxu0
  %v4279 = vpop.f32.mrb[0].mxu0
  %v4280 = vadd.f32 0.0, %v4279
  %v4281 = vpop.f32.mrb[0].mxu0
  %4282 = vmatprep.mubr.bf16.mxu0 0
  %4283 = vmatmul.mubr.bf16.gmra.mrb[0].mxu0 %v2456
  %v4284 = vpop.f32.mrb[0].mxu0
  %v4285 = vadd.f32 0.0, %v4284
  %v4286 = vpop.f32.mrb[0].mxu0
  %v4287 = vpop.f32.mrb[0].mxu0
  %v4288 = vadd.f32 0.0, %v4287
  %v4289 = vpop.f32.mrb[0].mxu0
  %4290 = vmatprep.mubr.bf16.mxu0 0
  %4291 = vmatmul.mubr.bf16.gmra.mrb[0].mxu0 %v2459
  %v4292 = vpop.f32.mrb[0].mxu0
  %v4293 = vadd.f32 0.0, %v4292
  %v4294 = vpop.f32.mrb[0].mxu0
  %v4295 = vpop.f32.mrb[0].mxu0
  %v4296 = vadd.f32 0.0, %v4295
  %v4297 = vpop.f32.mrb[0].mxu0
  %4298 = vmatprep.mubr.bf16.mxu0 0
  %4299 = vmatmul.mubr.bf16.gmra.mrb[0].mxu0 %v2462
  %v4300 = vpop.f32.mrb[0].mxu0
  %v4301 = vadd.f32 0.0, %v4300
  %v4302 = vpop.f32.mrb[0].mxu0
  %v4303 = vpop.f32.mrb[0].mxu0
  %v4304 = vadd.f32 0.0, %v4303
  %v4305 = vpop.f32.mrb[0].mxu0
  %4306 = vmatprep.mubr.bf16.mxu0 0
  %4307 = vmatmul.mubr.bf16.gmra.mrb[0].mxu0 %v2465
  %v4308 = vpop.f32.mrb[0].mxu0
  %v4309 = vadd.f32 0.0, %v4308
  %v4310 = vpop.f32.mrb[0].mxu0
  %v4311 = vpop.f32.mrb[0].mxu0
  %v4312 = vadd.f32 0.0, %v4311
  %v4313 = vpop.f32.mrb[0].mxu0
  %4314 = vmatprep.mubr.bf16.mxu0 0
  %4315 = vmatmul.mubr.bf16.gmra.mrb[0].mxu0 %v2468
  %v4316 = vpop.f32.mrb[0].mxu0
  %v4317 = vadd.f32 0.0, %v4316
  %v4318 = vpop.f32.mrb[0].mxu0
  %v4319 = vpop.f32.mrb[0].mxu0
  %v4320 = vadd.f32 0.0, %v4319
  %v4321 = vpop.f32.mrb[0].mxu0
  %4322 = vmatprep.mubr.bf16.mxu0 0
  %4323 = vmatmul.mubr.bf16.gmra.mrb[0].mxu0 %v2471
  %v4324 = vpop.f32.mrb[0].mxu0
  %v4325 = vadd.f32 0.0, %v4324
  %v4326 = vpop.f32.mrb[0].mxu0
  %v4327 = vpop.f32.mrb[0].mxu0
  %v4328 = vadd.f32 0.0, %v4327
  %v4329 = vpop.f32.mrb[0].mxu0
  %4330 = vmatprep.mubr.bf16.mxu0 0
  %4331 = vmatmul.mubr.bf16.gmra.mrb[0].mxu0 %v2474
  %v4332 = vpop.f32.mrb[0].mxu0
  %v4333 = vadd.f32 0.0, %v4332
  %v4334 = vpop.f32.mrb[0].mxu0
  %v4335 = vpop.f32.mrb[0].mxu0
  %v4336 = vadd.f32 0.0, %v4335
  %v4337 = vpop.f32.mrb[0].mxu0
  %4338 = vmatprep.mubr.bf16.mxu0 0
  %4339 = vmatmul.mubr.bf16.gmra.mrb[0].mxu0 %v2477
  %v4340 = vpop.f32.mrb[0].mxu0
  %v4341 = vadd.f32 0.0, %v4340
  %v4342 = vpop.f32.mrb[0].mxu0
  %v4343 = vpop.f32.mrb[0].mxu0
  %v4344 = vadd.f32 0.0, %v4343
  %v4345 = vpop.f32.mrb[0].mxu0
  %4346 = vmatprep.mubr.bf16.mxu0 0
  %4347 = vmatmul.mubr.bf16.gmra.mrb[0].mxu0 %v2480
  %v4348 = vpop.f32.mrb[0].mxu0
  %v4349 = vadd.f32 0.0, %v4348
  %v4350 = vpop.f32.mrb[0].mxu0
  %v4351 = vpop.f32.mrb[0].mxu0
  %v4352 = vadd.f32 0.0, %v4351
  %v4353 = vpop.f32.mrb[0].mxu0
  %4354 = vmatprep.mubr.bf16.mxu0 0
  %4355 = vmatmul.mubr.bf16.gmra.mrb[0].mxu0 %v2483
  %v4356 = vpop.f32.mrb[0].mxu0
  %v4357 = vadd.f32 0.0, %v4356
  %v4358 = vpop.f32.mrb[0].mxu0
  %v4359 = vpop.f32.mrb[0].mxu0
  %v4360 = vadd.f32 0.0, %v4359
  %v4361 = vpop.f32.mrb[0].mxu0
  %4362 = vmatprep.mubr.bf16.mxu0 0
  %4363 = vmatmul.mubr.bf16.gmra.mrb[0].mxu0 %v2486
  %v4364 = vpop.f32.mrb[0].mxu0
  %v4365 = vadd.f32 0.0, %v4364
  %v4366 = vpop.f32.mrb[0].mxu0
  %v4367 = vpop.f32.mrb[0].mxu0
  %v4368 = vadd.f32 0.0, %v4367
  %v4369 = vpop.f32.mrb[0].mxu0
  %4370 = vmatprep.mubr.bf16.mxu0 0
  %4371 = vmatmul.mubr.bf16.gmra.mrb[0].mxu0 %v2489
  %v4372 = vpop.f32.mrb[0].mxu0
  %v4373 = vadd.f32 0.0, %v4372
  %v4374 = vpop.f32.mrb[0].mxu0
  %v4375 = vpop.f32.mrb[0].mxu0
  %v4376 = vadd.f32 0.0, %v4375
  %v4377 = vpop.f32.mrb[0].mxu0
  %4378 = vmatprep.mubr.bf16.mxu0 0
  %4379 = vmatmul.mubr.bf16.gmra.mrb[0].mxu0 %v2492
  %v4380 = vpop.f32.mrb[0].mxu0
  %v4381 = vadd.f32 0.0, %v4380
  %v4382 = vpop.f32.mrb[0].mxu0
  %v4383 = vpop.f32.mrb[0].mxu0
  %v4384 = vadd.f32 0.0, %v4383
  %v4385 = vpop.f32.mrb[0].mxu0
  %4386 = vmatprep.mubr.bf16.mxu0 0
  %4387 = vmatmul.mubr.bf16.gmra.mrb[0].mxu0 %v2495
  %v4388 = vpop.f32.mrb[0].mxu0
  %v4389 = vadd.f32 0.0, %v4388
  %v4390 = vpop.f32.mrb[0].mxu0
  %v4391 = vpop.f32.mrb[0].mxu0
  %v4392 = vadd.f32 0.0, %v4391
  %v4393 = vpop.f32.mrb[0].mxu0
  %4394 = vmatprep.mubr.bf16.mxu0 0
  %4395 = vmatmul.mubr.bf16.gmra.mrb[0].mxu0 %v2498
  %v4396 = vpop.f32.mrb[0].mxu0
  %v4397 = vadd.f32 0.0, %v4396
  %v4398 = vpop.f32.mrb[0].mxu0
  %v4399 = vpop.f32.mrb[0].mxu0
  %v4400 = vadd.f32 0.0, %v4399
  %v4401 = vpop.f32.mrb[0].mxu0
  %4402 = vmatprep.mubr.bf16.mxu0 0
  %4403 = vmatmul.mubr.bf16.gmra.mrb[0].mxu0 %v2501
  %v4404 = vpop.f32.mrb[0].mxu0
  %v4405 = vadd.f32 0.0, %v4404
  %v4406 = vpop.f32.mrb[0].mxu0
  %v4407 = vpop.f32.mrb[0].mxu0
  %v4408 = vadd.f32 0.0, %v4407
  %v4409 = vpop.f32.mrb[0].mxu0
  %4410 = vmatprep.mubr.bf16.mxu0 0
  %4411 = vmatmul.mubr.bf16.gmra.mrb[0].mxu0 %v2504
  %v4412 = vpop.f32.mrb[0].mxu0
  %v4413 = vadd.f32 0.0, %v4412
  %v4414 = vpop.f32.mrb[0].mxu0
  %v4415 = vpop.f32.mrb[0].mxu0
  %v4416 = vadd.f32 0.0, %v4415
  %v4417 = vpop.f32.mrb[0].mxu0
  %4418 = vmatprep.mubr.bf16.mxu0 0
  %4419 = vmatmul.mubr.bf16.gmra.mrb[0].mxu0 %v2507
  %v4420 = vpop.f32.mrb[0].mxu0
  %v4421 = vadd.f32 0.0, %v4420
  %v4422 = vpop.f32.mrb[0].mxu0
  %v4423 = vpop.f32.mrb[0].mxu0
  %v4424 = vadd.f32 0.0, %v4423
  %v4425 = vpop.f32.mrb[0].mxu0
  %4426 = vmatprep.mubr.bf16.mxu0 0
  %4427 = vmatmul.mubr.bf16.gmra.mrb[0].mxu0 %v2510
  %v4428 = vpop.f32.mrb[0].mxu0
  %v4429 = vadd.f32 0.0, %v4428
  %v4430 = vpop.f32.mrb[0].mxu0
  %v4431 = vpop.f32.mrb[0].mxu0
  %v4432 = vadd.f32 0.0, %v4431
  %v4433 = vpop.f32.mrb[0].mxu0
  %4434 = vmatprep.mubr.bf16.mxu0 0
  %4435 = vmatmul.mubr.bf16.gmra.mrb[0].mxu0 %v2513
  %v4436 = vpop.f32.mrb[0].mxu0
  %v4437 = vadd.f32 0.0, %v4436
  %v4438 = vpop.f32.mrb[0].mxu0
  %v4439 = vpop.f32.mrb[0].mxu0
  %v4440 = vadd.f32 0.0, %v4439
  %v4441 = vpop.f32.mrb[0].mxu0
  %4442 = vmatprep.mubr.bf16.mxu0 0
  %4443 = vmatmul.mubr.bf16.gmra.mrb[0].mxu0 %v2516
  %v4444 = vpop.f32.mrb[0].mxu0
  %v4445 = vadd.f32 0.0, %v4444
  %v4446 = vpop.f32.mrb[0].mxu0
  %v4447 = vpop.f32.mrb[0].mxu0
  %v4448 = vadd.f32 0.0, %v4447
  %v4449 = vpop.f32.mrb[0].mxu0
  %4450 = vmatprep.mubr.bf16.mxu0 0
  %4451 = vmatmul.mubr.bf16.gmra.mrb[0].mxu0 %v2519
  %v4452 = vpop.f32.mrb[0].mxu0
  %v4453 = vadd.f32 0.0, %v4452
  %v4454 = vpop.f32.mrb[0].mxu0
  %v4455 = vpop.f32.mrb[0].mxu0
  %v4456 = vadd.f32 0.0, %v4455
  %v4457 = vpop.f32.mrb[0].mxu0
  %4458 = vmatprep.mubr.bf16.mxu0 0
  %4459 = vmatmul.mubr.bf16.gmra.mrb[0].mxu0 %v2522
  %v4460 = vpop.f32.mrb[0].mxu0
  %v4461 = vadd.f32 0.0, %v4460
  %v4462 = vpop.f32.mrb[0].mxu0
  %v4463 = vpop.f32.mrb[0].mxu0
  %v4464 = vadd.f32 0.0, %v4463
  %v4465 = vpop.f32.mrb[0].mxu0
  %4466 = vmatprep.mubr.bf16.mxu0 0
  %4467 = vmatmul.mubr.bf16.gmra.mrb[0].mxu0 %v2525
  %v4468 = vpop.f32.mrb[0].mxu0
  %v4469 = vadd.f32 0.0, %v4468
  %v4470 = vpop.f32.mrb[0].mxu0
  %v4471 = vpop.f32.mrb[0].mxu0
  %v4472 = vadd.f32 0.0, %v4471
  %v4473 = vpop.f32.mrb[0].mxu0
  %4474 = vmatprep.mubr.bf16.mxu0 0
  %4475 = vmatmul.mubr.bf16.gmra.mrb[0].mxu0 %v2528
  %v4476 = vpop.f32.mrb[0].mxu0
  %v4477 = vadd.f32 0.0, %v4476
  %v4478 = vpop.f32.mrb[0].mxu0
  %v4479 = vpop.f32.mrb[0].mxu0
  %v4480 = vadd.f32 0.0, %v4479
  %v4481 = vpop.f32.mrb[0].mxu0
  %4482 = vmatprep.mubr.bf16.mxu0 0
  %4483 = vmatmul.mubr.bf16.gmra.mrb[0].mxu0 %v2531
  %v4484 = vpop.f32.mrb[0].mxu0
  %v4485 = vadd.f32 0.0, %v4484
  %v4486 = vpop.f32.mrb[0].mxu0
  %v4487 = vpop.f32.mrb[0].mxu0
  %v4488 = vadd.f32 0.0, %v4487
  %v4489 = vpop.f32.mrb[0].mxu0
  %4490 = vmatprep.mubr.bf16.mxu0 0
  %4491 = vmatmul.mubr.bf16.gmra.mrb[0].mxu0 %v2534
  %v4492 = vpop.f32.mrb[0].mxu0
  %v4493 = vadd.f32 0.0, %v4492
  %v4494 = vpop.f32.mrb[0].mxu0
  %v4495 = vpop.f32.mrb[0].mxu0
  %v4496 = vadd.f32 0.0, %v4495
  %v4497 = vpop.f32.mrb[0].mxu0
  %4498 = vmatprep.mubr.bf16.mxu0 0
  %4499 = vmatmul.mubr.bf16.gmra.mrb[0].mxu0 %v2537
  %v4500 = vpop.f32.mrb[0].mxu0
  %v4501 = vadd.f32 0.0, %v4500
  %v4502 = vpop.f32.mrb[0].mxu0
  %v4503 = vpop.f32.mrb[0].mxu0
  %v4504 = vadd.f32 0.0, %v4503
  %v4505 = vpop.f32.mrb[0].mxu0
  %4506 = vmatprep.mubr.bf16.mxu0 0
  %4507 = vmatmul.mubr.bf16.gmra.mrb[0].mxu0 %v2540
  %v4508 = vpop.f32.mrb[0].mxu0
  %v4509 = vadd.f32 0.0, %v4508
  %v4510 = vpop.f32.mrb[0].mxu0
  %v4511 = vpop.f32.mrb[0].mxu0
  %v4512 = vadd.f32 0.0, %v4511
  %v4513 = vpop.f32.mrb[0].mxu0
  %4514 = vmatprep.mubr.bf16.mxu0 0
  %4515 = vmatmul.mubr.bf16.gmra.mrb[0].mxu0 %v2543
  %v4516 = vpop.f32.mrb[0].mxu0
  %v4517 = vadd.f32 0.0, %v4516
  %v4518 = vpop.f32.mrb[0].mxu0
  %v4519 = vpop.f32.mrb[0].mxu0
  %v4520 = vadd.f32 0.0, %v4519
  %v4521 = vpop.f32.mrb[0].mxu0
  %4522 = vmatprep.mubr.bf16.mxu0 0
  %4523 = vmatmul.mubr.bf16.gmra.mrb[0].mxu0 %v2546
  %v4524 = vpop.f32.mrb[0].mxu0
  %v4525 = vadd.f32 0.0, %v4524
  %v4526 = vpop.f32.mrb[0].mxu0
  %v4527 = vpop.f32.mrb[0].mxu0
  %v4528 = vadd.f32 0.0, %v4527
  %v4529 = vpop.f32.mrb[0].mxu0
  %4530 = vmatprep.mubr.bf16.mxu0 0
  %4531 = vmatmul.mubr.bf16.gmra.mrb[0].mxu0 %v2549
  %v4532 = vpop.f32.mrb[0].mxu0
  %v4533 = vadd.f32 0.0, %v4532
  %v4534 = vpop.f32.mrb[0].mxu0
  %v4535 = vpop.f32.mrb[0].mxu0
  %v4536 = vadd.f32 0.0, %v4535
  %v4537 = vpop.f32.mrb[0].mxu0
  %4538 = vmatprep.mubr.bf16.mxu0 0
  %4539 = vmatmul.mubr.bf16.gmra.mrb[0].mxu0 %v2552
  %v4540 = vpop.f32.mrb[0].mxu0
  %v4541 = vadd.f32 0.0, %v4540
  %v4542 = vpop.f32.mrb[0].mxu0
  %v4543 = vpop.f32.mrb[0].mxu0
  %v4544 = vadd.f32 0.0, %v4543
  %v4545 = vpop.f32.mrb[0].mxu0
  %4546 = vmatprep.mubr.bf16.mxu0 0
  %4547 = vmatmul.mubr.bf16.gmra.mrb[0].mxu0 %v2555
  %v4548 = vpop.f32.mrb[0].mxu0
  %v4549 = vadd.f32 0.0, %v4548
  %v4550 = vpop.f32.mrb[0].mxu0
  %v4551 = vpop.f32.mrb[0].mxu0
  %v4552 = vadd.f32 0.0, %v4551
  %v4553 = vpop.f32.mrb[0].mxu0
  %4554 = vmatprep.mubr.bf16.mxu0 0
  %4555 = vmatmul.mubr.bf16.gmra.mrb[0].mxu0 %v2558
  %v4556 = vpop.f32.mrb[0].mxu0
  %v4557 = vadd.f32 0.0, %v4556
  %v4558 = vpop.f32.mrb[0].mxu0
  %v4559 = vpop.f32.mrb[0].mxu0
  %v4560 = vadd.f32 0.0, %v4559
  %v4561 = vpop.f32.mrb[0].mxu0
  %4562 = vmatprep.mubr.bf16.mxu0 0
  %4563 = vmatmul.mubr.bf16.gmra.mrb[0].mxu0 %v2561
  %v4564 = vpop.f32.mrb[0].mxu0
  %v4565 = vadd.f32 0.0, %v4564
  %v4566 = vpop.f32.mrb[0].mxu0
  %v4567 = vpop.f32.mrb[0].mxu0
  %v4568 = vadd.f32 0.0, %v4567
  %v4569 = vpop.f32.mrb[0].mxu0
  %4570 = vmatprep.mubr.bf16.mxu0 0
  %4571 = vmatmul.mubr.bf16.gmra.mrb[0].mxu0 %v2564
  %v4572 = vpop.f32.mrb[0].mxu0
  %v4573 = vadd.f32 0.0, %v4572
  %v4574 = vpop.f32.mrb[0].mxu0
  %v4575 = vpop.f32.mrb[0].mxu0
  %v4576 = vadd.f32 0.0, %v4575
  %v4577 = vpop.f32.mrb[0].mxu0
  %4578 = vmatprep.mubr.bf16.mxu0 0
  %4579 = vmatmul.mubr.bf16.gmra.mrb[0].mxu0 %v2567
  %v4580 = vpop.f32.mrb[0].mxu0
  %v4581 = vadd.f32 0.0, %v4580
  %v4582 = vpop.f32.mrb[0].mxu0
  %v4583 = vpop.f32.mrb[0].mxu0
  %v4584 = vadd.f32 0.0, %v4583
  %v4585 = vpop.f32.mrb[0].mxu0
  %4586 = vmatprep.mubr.bf16.mxu0 0
  %4587 = vmatmul.mubr.bf16.gmra.mrb[0].mxu0 %v2570
  %v4588 = vpop.f32.mrb[0].mxu0
  %v4589 = vadd.f32 0.0, %v4588
  %v4590 = vpop.f32.mrb[0].mxu0
  %v4591 = vpop.f32.mrb[0].mxu0
  %v4592 = vadd.f32 0.0, %v4591
  %v4593 = vpop.f32.mrb[0].mxu0
  %4594 = vmatprep.mubr.bf16.mxu0 0
  %4595 = vmatmul.mubr.bf16.gmra.mrb[0].mxu0 %v2573
  %v4596 = vpop.f32.mrb[0].mxu0
  %v4597 = vadd.f32 0.0, %v4596
  %v4598 = vpop.f32.mrb[0].mxu0
  %v4599 = vpop.f32.mrb[0].mxu0
  %v4600 = vadd.f32 0.0, %v4599
  %v4601 = vpop.f32.mrb[0].mxu0
  %4602 = vmatprep.mubr.bf16.mxu0 0
  %4603 = vmatmul.mubr.bf16.gmra.mrb[0].mxu0 %v2576
  %v4604 = vpop.f32.mrb[0].mxu0
  %v4605 = vadd.f32 0.0, %v4604
  %v4606 = vpop.f32.mrb[0].mxu0
  %v4607 = vpop.f32.mrb[0].mxu0
  %v4608 = vadd.f32 0.0, %v4607
  %v4609 = vpop.f32.mrb[0].mxu0
  %4610 = vmatprep.mubr.bf16.mxu0 0
  %4611 = vmatmul.mubr.bf16.gmra.mrb[0].mxu0 %v2579
  %v4612 = vpop.f32.mrb[0].mxu0
  %v4613 = vadd.f32 0.0, %v4612
  %v4614 = vpop.f32.mrb[0].mxu0
  %v4615 = vpop.f32.mrb[0].mxu0
  %v4616 = vadd.f32 0.0, %v4615
  %v4617 = vpop.f32.mrb[0].mxu0
  %4618 = vmatprep.mubr.bf16.mxu0 0
  %4619 = vmatmul.mubr.bf16.gmra.mrb[0].mxu0 %v2582
  %v4620 = vpop.f32.mrb[0].mxu0
  %v4621 = vadd.f32 0.0, %v4620
  %v4622 = vpop.f32.mrb[0].mxu0
  %v4623 = vpop.f32.mrb[0].mxu0
  %v4624 = vadd.f32 0.0, %v4623
  %v4625 = vpop.f32.mrb[0].mxu0
  %4626 = vmatprep.mubr.bf16.mxu0 0
  %4627 = vmatmul.mubr.bf16.gmra.mrb[0].mxu0 %v2585
  %v4628 = vpop.f32.mrb[0].mxu0
  %v4629 = vadd.f32 0.0, %v4628
  %v4630 = vpop.f32.mrb[0].mxu0
  %v4631 = vpop.f32.mrb[0].mxu0
  %v4632 = vadd.f32 0.0, %v4631
  %v4633 = vpop.f32.mrb[0].mxu0
  %4634 = vmatprep.mubr.bf16.mxu0 0
  %4635 = vmatmul.mubr.bf16.gmra.mrb[0].mxu0 %v2588
  %v4636 = vpop.f32.mrb[0].mxu0
  %v4637 = vadd.f32 0.0, %v4636
  %v4638 = vpop.f32.mrb[0].mxu0
  %v4639 = vpop.f32.mrb[0].mxu0
  %v4640 = vadd.f32 0.0, %v4639
  %v4641 = vpop.f32.mrb[0].mxu0
  %4642 = vmatprep.mubr.bf16.mxu0 0
  %4643 = vmatmul.mubr.bf16.gmra.mrb[0].mxu0 %v2591
  %v4644 = vpop.f32.mrb[0].mxu0
  %v4645 = vadd.f32 0.0, %v4644
  %v4646 = vpop.f32.mrb[0].mxu0
  %v4647 = vpop.f32.mrb[0].mxu0
  %v4648 = vadd.f32 0.0, %v4647
  %v4649 = vpop.f32.mrb[0].mxu0
  %4650 = vmatprep.mubr.bf16.mxu0 0
  %4651 = vmatmul.mubr.bf16.gmra.mrb[0].mxu0 %v2594
  %v4652 = vpop.f32.mrb[0].mxu0
  %v4653 = vadd.f32 0.0, %v4652
  %v4654 = vpop.f32.mrb[0].mxu0
  %v4655 = vpop.f32.mrb[0].mxu0
  %v4656 = vadd.f32 0.0, %v4655
  %v4657 = vpop.f32.mrb[0].mxu0
  %4658 = vmatprep.mubr.bf16.mxu0 0
  %4659 = vmatmul.mubr.bf16.gmra.mrb[0].mxu0 %v2597
  %v4660 = vpop.f32.mrb[0].mxu0
  %v4661 = vadd.f32 0.0, %v4660
  %v4662 = vpop.f32.mrb[0].mxu0
  %v4663 = vpop.f32.mrb[0].mxu0
  %v4664 = vadd.f32 0.0, %v4663
  %v4665 = vpop.f32.mrb[0].mxu0
  %4666 = vmatprep.mubr.bf16.mxu0 0
  %4667 = vmatmul.mubr.bf16.gmra.mrb[0].mxu0 %v2600
  %v4668 = vpop.f32.mrb[0].mxu0
  %v4669 = vadd.f32 0.0, %v4668
  %v4670 = vpop.f32.mrb[0].mxu0
  %v4671 = vpop.f32.mrb[0].mxu0
  %v4672 = vadd.f32 0.0, %v4671
  %v4673 = vpop.f32.mrb[0].mxu0
  %4674 = vmatprep.mubr.bf16.mxu0 0
  %4675 = vmatmul.mubr.bf16.gmra.mrb[0].mxu0 %v2603
  %v4676 = vpop.f32.mrb[0].mxu0
  %v4677 = vadd.f32 0.0, %v4676
  %v4678 = vpop.f32.mrb[0].mxu0
  %v4679 = vpop.f32.mrb[0].mxu0
  %v4680 = vadd.f32 0.0, %v4679
  %v4681 = vpop.f32.mrb[0].mxu0
  %4682 = vmatprep.mubr.bf16.mxu0 0
  %4683 = vmatmul.mubr.bf16.gmra.mrb[0].mxu0 %v2606
  %v4684 = vpop.f32.mrb[0].mxu0
  %v4685 = vadd.f32 0.0, %v4684
  %v4686 = vpop.f32.mrb[0].mxu0
  %v4687 = vpop.f32.mrb[0].mxu0
  %v4688 = vadd.f32 0.0, %v4687
  %v4689 = vpop.f32.mrb[0].mxu0
  %4690 = vmatprep.mubr.bf16.mxu0 0
  %4691 = vmatmul.mubr.bf16.gmra.mrb[0].mxu0 %v2609
  %v4692 = vpop.f32.mrb[0].mxu0
  %v4693 = vadd.f32 0.0, %v4692
  %v4694 = vpop.f32.mrb[0].mxu0
  %v4695 = vpop.f32.mrb[0].mxu0
  %v4696 = vadd.f32 0.0, %v4695
  %v4697 = vpop.f32.mrb[0].mxu0
  %4698 = vdwg.mxu0
  %v4699 = vld [vmem:[%s2] sm:$0x1]
  %v4701 = vlaneseq
  %v4702 = vshrl.u32 %v4701, 7
  %v4703 = vsub.s32 0, %v4702
  %v4704 = vrot.slane %v4699, %v4703
  %v4706 = vmul.f32 %v2653, %v4704
  %v4707 = vmul.f32 %v2656, %v4704
  %v4708 = vmul.f32 %v2661, %v4704
  %v4709 = vmul.f32 %v2664, %v4704
  %v4710 = vmul.f32 %v2669, %v4704
  %v4711 = vmul.f32 %v2672, %v4704
  %v4712 = vmul.f32 %v2677, %v4704
  %v4713 = vmul.f32 %v2680, %v4704
  %v4714 = vmul.f32 %v2685, %v4704
  %v4715 = vmul.f32 %v2688, %v4704
  %v4716 = vmul.f32 %v2693, %v4704
  %v4717 = vmul.f32 %v2696, %v4704
  %v4718 = vmul.f32 %v2701, %v4704
  %v4719 = vmul.f32 %v2704, %v4704
  %v4720 = vmul.f32 %v2709, %v4704
  %v4721 = vmul.f32 %v2712, %v4704
  %v4722 = vmul.f32 %v2717, %v4704
  %v4723 = vmul.f32 %v2720, %v4704
  %v4724 = vmul.f32 %v2725, %v4704
  %v4725 = vmul.f32 %v2728, %v4704
  %v4726 = vmul.f32 %v2733, %v4704
  %v4727 = vmul.f32 %v2736, %v4704
  %v4728 = vmul.f32 %v2741, %v4704
  %v4729 = vmul.f32 %v2744, %v4704
  %v4730 = vmul.f32 %v2749, %v4704
  %v4731 = vmul.f32 %v2752, %v4704
  %v4732 = vmul.f32 %v2757, %v4704
  %v4733 = vmul.f32 %v2760, %v4704
  %v4734 = vmul.f32 %v2765, %v4704
  %v4735 = vmul.f32 %v2768, %v4704
  %v4736 = vmul.f32 %v2773, %v4704
  %v4737 = vmul.f32 %v2776, %v4704
  %v4738 = vmul.f32 %v2781, %v4704
  %v4739 = vmul.f32 %v2784, %v4704
  %v4740 = vmul.f32 %v2789, %v4704
  %v4741 = vmul.f32 %v2792, %v4704
  %v4742 = vmul.f32 %v2797, %v4704
  %v4743 = vmul.f32 %v2800, %v4704
  %v4744 = vmul.f32 %v2805, %v4704
  %v4745 = vmul.f32 %v2808, %v4704
  %v4746 = vmul.f32 %v2813, %v4704
  %v4747 = vmul.f32 %v2816, %v4704
  %v4748 = vmul.f32 %v2821, %v4704
  %v4749 = vmul.f32 %v2824, %v4704
  %v4750 = vmul.f32 %v2829, %v4704
  %v4751 = vmul.f32 %v2832, %v4704
  %v4752 = vmul.f32 %v2837, %v4704
  %v4753 = vmul.f32 %v2840, %v4704
  %v4754 = vmul.f32 %v2845, %v4704
  %v4755 = vmul.f32 %v2848, %v4704
  %v4756 = vmul.f32 %v2853, %v4704
  %v4757 = vmul.f32 %v2856, %v4704
  %v4758 = vmul.f32 %v2861, %v4704
  %v4759 = vmul.f32 %v2864, %v4704
  %v4760 = vmul.f32 %v2869, %v4704
  %v4761 = vmul.f32 %v2872, %v4704
  %v4762 = vmul.f32 %v2877, %v4704
  %v4763 = vmul.f32 %v2880, %v4704
  %v4764 = vmul.f32 %v2885, %v4704
  %v4765 = vmul.f32 %v2888, %v4704
  %v4766 = vmul.f32 %v2893, %v4704
  %v4767 = vmul.f32 %v2896, %v4704
  %v4768 = vmul.f32 %v2901, %v4704
  %v4769 = vmul.f32 %v2904, %v4704
  %v4770 = vmul.f32 %v2909, %v4704
  %v4771 = vmul.f32 %v2912, %v4704
  %v4772 = vmul.f32 %v2917, %v4704
  %v4773 = vmul.f32 %v2920, %v4704
  %v4774 = vmul.f32 %v2925, %v4704
  %v4775 = vmul.f32 %v2928, %v4704
  %v4776 = vmul.f32 %v2933, %v4704
  %v4777 = vmul.f32 %v2936, %v4704
  %v4778 = vmul.f32 %v2941, %v4704
  %v4779 = vmul.f32 %v2944, %v4704
  %v4780 = vmul.f32 %v2949, %v4704
  %v4781 = vmul.f32 %v2952, %v4704
  %v4782 = vmul.f32 %v2957, %v4704
  %v4783 = vmul.f32 %v2960, %v4704
  %v4784 = vmul.f32 %v2965, %v4704
  %v4785 = vmul.f32 %v2968, %v4704
  %v4786 = vmul.f32 %v2973, %v4704
  %v4787 = vmul.f32 %v2976, %v4704
  %v4788 = vmul.f32 %v2981, %v4704
  %v4789 = vmul.f32 %v2984, %v4704
  %v4790 = vmul.f32 %v2989, %v4704
  %v4791 = vmul.f32 %v2992, %v4704
  %v4792 = vmul.f32 %v2997, %v4704
  %v4793 = vmul.f32 %v3000, %v4704
  %v4794 = vmul.f32 %v3005, %v4704
  %v4795 = vmul.f32 %v3008, %v4704
  %v4796 = vmul.f32 %v3013, %v4704
  %v4797 = vmul.f32 %v3016, %v4704
  %v4798 = vmul.f32 %v3021, %v4704
  %v4799 = vmul.f32 %v3024, %v4704
  %v4800 = vmul.f32 %v3029, %v4704
  %v4801 = vmul.f32 %v3032, %v4704
  %v4802 = vmul.f32 %v3037, %v4704
  %v4803 = vmul.f32 %v3040, %v4704
  %v4804 = vmul.f32 %v3045, %v4704
  %v4805 = vmul.f32 %v3048, %v4704
  %v4806 = vmul.f32 %v3053, %v4704
  %v4807 = vmul.f32 %v3056, %v4704
  %v4808 = vmul.f32 %v3061, %v4704
  %v4809 = vmul.f32 %v3064, %v4704
  %v4810 = vmul.f32 %v3069, %v4704
  %v4811 = vmul.f32 %v3072, %v4704
  %v4812 = vmul.f32 %v3077, %v4704
  %v4813 = vmul.f32 %v3080, %v4704
  %v4814 = vmul.f32 %v3085, %v4704
  %v4815 = vmul.f32 %v3088, %v4704
  %v4816 = vmul.f32 %v3093, %v4704
  %v4817 = vmul.f32 %v3096, %v4704
  %v4818 = vmul.f32 %v3101, %v4704
  %v4819 = vmul.f32 %v3104, %v4704
  %v4820 = vmul.f32 %v3109, %v4704
  %v4821 = vmul.f32 %v3112, %v4704
  %v4822 = vmul.f32 %v3117, %v4704
  %v4823 = vmul.f32 %v3120, %v4704
  %v4824 = vmul.f32 %v3125, %v4704
  %v4825 = vmul.f32 %v3128, %v4704
  %v4826 = vmul.f32 %v3133, %v4704
  %v4827 = vmul.f32 %v3136, %v4704
  %v4828 = vmul.f32 %v3141, %v4704
  %v4829 = vmul.f32 %v3144, %v4704
  %v4830 = vmul.f32 %v3149, %v4704
  %v4831 = vmul.f32 %v3152, %v4704
  %v4832 = vmul.f32 %v3157, %v4704
  %v4833 = vmul.f32 %v3160, %v4704
  %v4834 = vmul.f32 %v3165, %v4704
  %v4835 = vmul.f32 %v3168, %v4704
  %v4836 = vmul.f32 %v3173, %v4704
  %v4837 = vmul.f32 %v3176, %v4704
  %v4838 = vmul.f32 %v3181, %v4704
  %v4839 = vmul.f32 %v3184, %v4704
  %v4840 = vmul.f32 %v3189, %v4704
  %v4841 = vmul.f32 %v3192, %v4704
  %v4842 = vmul.f32 %v3197, %v4704
  %v4843 = vmul.f32 %v3200, %v4704
  %v4844 = vmul.f32 %v3205, %v4704
  %v4845 = vmul.f32 %v3208, %v4704
  %v4846 = vmul.f32 %v3213, %v4704
  %v4847 = vmul.f32 %v3216, %v4704
  %v4848 = vmul.f32 %v3221, %v4704
  %v4849 = vmul.f32 %v3224, %v4704
  %v4850 = vmul.f32 %v3229, %v4704
  %v4851 = vmul.f32 %v3232, %v4704
  %v4852 = vmul.f32 %v3237, %v4704
  %v4853 = vmul.f32 %v3240, %v4704
  %v4854 = vmul.f32 %v3245, %v4704
  %v4855 = vmul.f32 %v3248, %v4704
  %v4856 = vmul.f32 %v3253, %v4704
  %v4857 = vmul.f32 %v3256, %v4704
  %v4858 = vmul.f32 %v3261, %v4704
  %v4859 = vmul.f32 %v3264, %v4704
  %v4860 = vmul.f32 %v3269, %v4704
  %v4861 = vmul.f32 %v3272, %v4704
  %v4862 = vmul.f32 %v3277, %v4704
  %v4863 = vmul.f32 %v3280, %v4704
  %v4864 = vmul.f32 %v3285, %v4704
  %v4865 = vmul.f32 %v3288, %v4704
  %v4866 = vmul.f32 %v3293, %v4704
  %v4867 = vmul.f32 %v3296, %v4704
  %v4868 = vmul.f32 %v3301, %v4704
  %v4869 = vmul.f32 %v3304, %v4704
  %v4870 = vmul.f32 %v3309, %v4704
  %v4871 = vmul.f32 %v3312, %v4704
  %v4872 = vmul.f32 %v3317, %v4704
  %v4873 = vmul.f32 %v3320, %v4704
  %v4874 = vmul.f32 %v3325, %v4704
  %v4875 = vmul.f32 %v3328, %v4704
  %v4876 = vmul.f32 %v3333, %v4704
  %v4877 = vmul.f32 %v3336, %v4704
  %v4878 = vmul.f32 %v3341, %v4704
  %v4879 = vmul.f32 %v3344, %v4704
  %v4880 = vmul.f32 %v3349, %v4704
  %v4881 = vmul.f32 %v3352, %v4704
  %v4882 = vmul.f32 %v3357, %v4704
  %v4883 = vmul.f32 %v3360, %v4704
  %v4884 = vmul.f32 %v3365, %v4704
  %v4885 = vmul.f32 %v3368, %v4704
  %v4886 = vmul.f32 %v3373, %v4704
  %v4887 = vmul.f32 %v3376, %v4704
  %v4888 = vmul.f32 %v3381, %v4704
  %v4889 = vmul.f32 %v3384, %v4704
  %v4890 = vmul.f32 %v3389, %v4704
  %v4891 = vmul.f32 %v3392, %v4704
  %v4892 = vmul.f32 %v3397, %v4704
  %v4893 = vmul.f32 %v3400, %v4704
  %v4894 = vmul.f32 %v3405, %v4704
  %v4895 = vmul.f32 %v3408, %v4704
  %v4896 = vmul.f32 %v3413, %v4704
  %v4897 = vmul.f32 %v3416, %v4704
  %v4898 = vmul.f32 %v3421, %v4704
  %v4899 = vmul.f32 %v3424, %v4704
  %v4900 = vmul.f32 %v3429, %v4704
  %v4901 = vmul.f32 %v3432, %v4704
  %v4902 = vmul.f32 %v3437, %v4704
  %v4903 = vmul.f32 %v3440, %v4704
  %v4904 = vmul.f32 %v3445, %v4704
  %v4905 = vmul.f32 %v3448, %v4704
  %v4906 = vmul.f32 %v3453, %v4704
  %v4907 = vmul.f32 %v3456, %v4704
  %v4908 = vmul.f32 %v3461, %v4704
  %v4909 = vmul.f32 %v3464, %v4704
  %v4910 = vmul.f32 %v3469, %v4704
  %v4911 = vmul.f32 %v3472, %v4704
  %v4912 = vmul.f32 %v3477, %v4704
  %v4913 = vmul.f32 %v3480, %v4704
  %v4914 = vmul.f32 %v3485, %v4704
  %v4915 = vmul.f32 %v3488, %v4704
  %v4916 = vmul.f32 %v3493, %v4704
  %v4917 = vmul.f32 %v3496, %v4704
  %v4918 = vmul.f32 %v3501, %v4704
  %v4919 = vmul.f32 %v3504, %v4704
  %v4920 = vmul.f32 %v3509, %v4704
  %v4921 = vmul.f32 %v3512, %v4704
  %v4922 = vmul.f32 %v3517, %v4704
  %v4923 = vmul.f32 %v3520, %v4704
  %v4924 = vmul.f32 %v3525, %v4704
  %v4925 = vmul.f32 %v3528, %v4704
  %v4926 = vmul.f32 %v3533, %v4704
  %v4927 = vmul.f32 %v3536, %v4704
  %v4928 = vmul.f32 %v3541, %v4704
  %v4929 = vmul.f32 %v3544, %v4704
  %v4930 = vmul.f32 %v3549, %v4704
  %v4931 = vmul.f32 %v3552, %v4704
  %v4932 = vmul.f32 %v3557, %v4704
  %v4933 = vmul.f32 %v3560, %v4704
  %v4934 = vmul.f32 %v3565, %v4704
  %v4935 = vmul.f32 %v3568, %v4704
  %v4936 = vmul.f32 %v3573, %v4704
  %v4937 = vmul.f32 %v3576, %v4704
  %v4938 = vmul.f32 %v3581, %v4704
  %v4939 = vmul.f32 %v3584, %v4704
  %v4940 = vmul.f32 %v3589, %v4704
  %v4941 = vmul.f32 %v3592, %v4704
  %v4942 = vmul.f32 %v3597, %v4704
  %v4943 = vmul.f32 %v3600, %v4704
  %v4944 = vmul.f32 %v3605, %v4704
  %v4945 = vmul.f32 %v3608, %v4704
  %v4946 = vmul.f32 %v3613, %v4704
  %v4947 = vmul.f32 %v3616, %v4704
  %v4948 = vmul.f32 %v3621, %v4704
  %v4949 = vmul.f32 %v3624, %v4704
  %v4950 = vmul.f32 %v3629, %v4704
  %v4951 = vmul.f32 %v3632, %v4704
  %v4952 = vmul.f32 %v3637, %v4704
  %v4953 = vmul.f32 %v3640, %v4704
  %v4954 = vmul.f32 %v3645, %v4704
  %v4955 = vmul.f32 %v3648, %v4704
  %v4956 = vmul.f32 %v3653, %v4704
  %v4957 = vmul.f32 %v3656, %v4704
  %v4958 = vmul.f32 %v3661, %v4704
  %v4959 = vmul.f32 %v3664, %v4704
  %v4960 = vmul.f32 %v3669, %v4704
  %v4961 = vmul.f32 %v3672, %v4704
  %v4962 = vmul.f32 %v3677, %v4704
  %v4963 = vmul.f32 %v3680, %v4704
  %v4964 = vmul.f32 %v3685, %v4704
  %v4965 = vmul.f32 %v3688, %v4704
  %v4966 = vmul.f32 %v3693, %v4704
  %v4967 = vmul.f32 %v3696, %v4704
  %v4968 = vmul.f32 %v3701, %v4704
  %v4969 = vmul.f32 %v3704, %v4704
  %v4970 = vmul.f32 %v3709, %v4704
  %v4971 = vmul.f32 %v3712, %v4704
  %v4972 = vmul.f32 %v3717, %v4704
  %v4973 = vmul.f32 %v3720, %v4704
  %v4974 = vmul.f32 %v3725, %v4704
  %v4975 = vmul.f32 %v3728, %v4704
  %v4976 = vmul.f32 %v3733, %v4704
  %v4977 = vmul.f32 %v3736, %v4704
  %v4978 = vmul.f32 %v3741, %v4704
  %v4979 = vmul.f32 %v3744, %v4704
  %v4980 = vmul.f32 %v3749, %v4704
  %v4981 = vmul.f32 %v3752, %v4704
  %v4982 = vmul.f32 %v3757, %v4704
  %v4983 = vmul.f32 %v3760, %v4704
  %v4984 = vmul.f32 %v3765, %v4704
  %v4985 = vmul.f32 %v3768, %v4704
  %v4986 = vmul.f32 %v3773, %v4704
  %v4987 = vmul.f32 %v3776, %v4704
  %v4988 = vmul.f32 %v3781, %v4704
  %v4989 = vmul.f32 %v3784, %v4704
  %v4990 = vmul.f32 %v3789, %v4704
  %v4991 = vmul.f32 %v3792, %v4704
  %v4992 = vmul.f32 %v3797, %v4704
  %v4993 = vmul.f32 %v3800, %v4704
  %v4994 = vmul.f32 %v3805, %v4704
  %v4995 = vmul.f32 %v3808, %v4704
  %v4996 = vmul.f32 %v3813, %v4704
  %v4997 = vmul.f32 %v3816, %v4704
  %v4998 = vmul.f32 %v3821, %v4704
  %v4999 = vmul.f32 %v3824, %v4704
  %v5000 = vmul.f32 %v3829, %v4704
  %v5001 = vmul.f32 %v3832, %v4704
  %v5002 = vmul.f32 %v3837, %v4704
  %v5003 = vmul.f32 %v3840, %v4704
  %v5004 = vmul.f32 %v3845, %v4704
  %v5005 = vmul.f32 %v3848, %v4704
  %v5006 = vmul.f32 %v3853, %v4704
  %v5007 = vmul.f32 %v3856, %v4704
  %v5008 = vmul.f32 %v3861, %v4704
  %v5009 = vmul.f32 %v3864, %v4704
  %v5010 = vmul.f32 %v3869, %v4704
  %v5011 = vmul.f32 %v3872, %v4704
  %v5012 = vmul.f32 %v3877, %v4704
  %v5013 = vmul.f32 %v3880, %v4704
  %v5014 = vmul.f32 %v3885, %v4704
  %v5015 = vmul.f32 %v3888, %v4704
  %v5016 = vmul.f32 %v3893, %v4704
  %v5017 = vmul.f32 %v3896, %v4704
  %v5018 = vmul.f32 %v3901, %v4704
  %v5019 = vmul.f32 %v3904, %v4704
  %v5020 = vmul.f32 %v3909, %v4704
  %v5021 = vmul.f32 %v3912, %v4704
  %v5022 = vmul.f32 %v3917, %v4704
  %v5023 = vmul.f32 %v3920, %v4704
  %v5024 = vmul.f32 %v3925, %v4704
  %v5025 = vmul.f32 %v3928, %v4704
  %v5026 = vmul.f32 %v3933, %v4704
  %v5027 = vmul.f32 %v3936, %v4704
  %v5028 = vmul.f32 %v3941, %v4704
  %v5029 = vmul.f32 %v3944, %v4704
  %v5030 = vmul.f32 %v3949, %v4704
  %v5031 = vmul.f32 %v3952, %v4704
  %v5032 = vmul.f32 %v3957, %v4704
  %v5033 = vmul.f32 %v3960, %v4704
  %v5034 = vmul.f32 %v3965, %v4704
  %v5035 = vmul.f32 %v3968, %v4704
  %v5036 = vmul.f32 %v3973, %v4704
  %v5037 = vmul.f32 %v3976, %v4704
  %v5038 = vmul.f32 %v3981, %v4704
  %v5039 = vmul.f32 %v3984, %v4704
  %v5040 = vmul.f32 %v3989, %v4704
  %v5041 = vmul.f32 %v3992, %v4704
  %v5042 = vmul.f32 %v3997, %v4704
  %v5043 = vmul.f32 %v4000, %v4704
  %v5044 = vmul.f32 %v4005, %v4704
  %v5045 = vmul.f32 %v4008, %v4704
  %v5046 = vmul.f32 %v4013, %v4704
  %v5047 = vmul.f32 %v4016, %v4704
  %v5048 = vmul.f32 %v4021, %v4704
  %v5049 = vmul.f32 %v4024, %v4704
  %v5050 = vmul.f32 %v4029, %v4704
  %v5051 = vmul.f32 %v4032, %v4704
  %v5052 = vmul.f32 %v4037, %v4704
  %v5053 = vmul.f32 %v4040, %v4704
  %v5054 = vmul.f32 %v4045, %v4704
  %v5055 = vmul.f32 %v4048, %v4704
  %v5056 = vmul.f32 %v4053, %v4704
  %v5057 = vmul.f32 %v4056, %v4704
  %v5058 = vmul.f32 %v4061, %v4704
  %v5059 = vmul.f32 %v4064, %v4704
  %v5060 = vmul.f32 %v4069, %v4704
  %v5061 = vmul.f32 %v4072, %v4704
  %v5062 = vmul.f32 %v4077, %v4704
  %v5063 = vmul.f32 %v4080, %v4704
  %v5064 = vmul.f32 %v4085, %v4704
  %v5065 = vmul.f32 %v4088, %v4704
  %v5066 = vmul.f32 %v4093, %v4704
  %v5067 = vmul.f32 %v4096, %v4704
  %v5068 = vmul.f32 %v4101, %v4704
  %v5069 = vmul.f32 %v4104, %v4704
  %v5070 = vmul.f32 %v4109, %v4704
  %v5071 = vmul.f32 %v4112, %v4704
  %v5072 = vmul.f32 %v4117, %v4704
  %v5073 = vmul.f32 %v4120, %v4704
  %v5074 = vmul.f32 %v4125, %v4704
  %v5075 = vmul.f32 %v4128, %v4704
  %v5076 = vmul.f32 %v4133, %v4704
  %v5077 = vmul.f32 %v4136, %v4704
  %v5078 = vmul.f32 %v4141, %v4704
  %v5079 = vmul.f32 %v4144, %v4704
  %v5080 = vmul.f32 %v4149, %v4704
  %v5081 = vmul.f32 %v4152, %v4704
  %v5082 = vmul.f32 %v4157, %v4704
  %v5083 = vmul.f32 %v4160, %v4704
  %v5084 = vmul.f32 %v4165, %v4704
  %v5085 = vmul.f32 %v4168, %v4704
  %v5086 = vmul.f32 %v4173, %v4704
  %v5087 = vmul.f32 %v4176, %v4704
  %v5088 = vmul.f32 %v4181, %v4704
  %v5089 = vmul.f32 %v4184, %v4704
  %v5090 = vmul.f32 %v4189, %v4704
  %v5091 = vmul.f32 %v4192, %v4704
  %v5092 = vmul.f32 %v4197, %v4704
  %v5093 = vmul.f32 %v4200, %v4704
  %v5094 = vmul.f32 %v4205, %v4704
  %v5095 = vmul.f32 %v4208, %v4704
  %v5096 = vmul.f32 %v4213, %v4704
  %v5097 = vmul.f32 %v4216, %v4704
  %v5098 = vmul.f32 %v4221, %v4704
  %v5099 = vmul.f32 %v4224, %v4704
  %v5100 = vmul.f32 %v4229, %v4704
  %v5101 = vmul.f32 %v4232, %v4704
  %v5102 = vmul.f32 %v4237, %v4704
  %v5103 = vmul.f32 %v4240, %v4704
  %v5104 = vmul.f32 %v4245, %v4704
  %v5105 = vmul.f32 %v4248, %v4704
  %v5106 = vmul.f32 %v4253, %v4704
  %v5107 = vmul.f32 %v4256, %v4704
  %v5108 = vmul.f32 %v4261, %v4704
  %v5109 = vmul.f32 %v4264, %v4704
  %v5110 = vmul.f32 %v4269, %v4704
  %v5111 = vmul.f32 %v4272, %v4704
  %v5112 = vmul.f32 %v4277, %v4704
  %v5113 = vmul.f32 %v4280, %v4704
  %v5114 = vmul.f32 %v4285, %v4704
  %v5115 = vmul.f32 %v4288, %v4704
  %v5116 = vmul.f32 %v4293, %v4704
  %v5117 = vmul.f32 %v4296, %v4704
  %v5118 = vmul.f32 %v4301, %v4704
  %v5119 = vmul.f32 %v4304, %v4704
  %v5120 = vmul.f32 %v4309, %v4704
  %v5121 = vmul.f32 %v4312, %v4704
  %v5122 = vmul.f32 %v4317, %v4704
  %v5123 = vmul.f32 %v4320, %v4704
  %v5124 = vmul.f32 %v4325, %v4704
  %v5125 = vmul.f32 %v4328, %v4704
  %v5126 = vmul.f32 %v4333, %v4704
  %v5127 = vmul.f32 %v4336, %v4704
  %v5128 = vmul.f32 %v4341, %v4704
  %v5129 = vmul.f32 %v4344, %v4704
  %v5130 = vmul.f32 %v4349, %v4704
  %v5131 = vmul.f32 %v4352, %v4704
  %v5132 = vmul.f32 %v4357, %v4704
  %v5133 = vmul.f32 %v4360, %v4704
  %v5134 = vmul.f32 %v4365, %v4704
  %v5135 = vmul.f32 %v4368, %v4704
  %v5136 = vmul.f32 %v4373, %v4704
  %v5137 = vmul.f32 %v4376, %v4704
  %v5138 = vmul.f32 %v4381, %v4704
  %v5139 = vmul.f32 %v4384, %v4704
  %v5140 = vmul.f32 %v4389, %v4704
  %v5141 = vmul.f32 %v4392, %v4704
  %v5142 = vmul.f32 %v4397, %v4704
  %v5143 = vmul.f32 %v4400, %v4704
  %v5144 = vmul.f32 %v4405, %v4704
  %v5145 = vmul.f32 %v4408, %v4704
  %v5146 = vmul.f32 %v4413, %v4704
  %v5147 = vmul.f32 %v4416, %v4704
  %v5148 = vmul.f32 %v4421, %v4704
  %v5149 = vmul.f32 %v4424, %v4704
  %v5150 = vmul.f32 %v4429, %v4704
  %v5151 = vmul.f32 %v4432, %v4704
  %v5152 = vmul.f32 %v4437, %v4704
  %v5153 = vmul.f32 %v4440, %v4704
  %v5154 = vmul.f32 %v4445, %v4704
  %v5155 = vmul.f32 %v4448, %v4704
  %v5156 = vmul.f32 %v4453, %v4704
  %v5157 = vmul.f32 %v4456, %v4704
  %v5158 = vmul.f32 %v4461, %v4704
  %v5159 = vmul.f32 %v4464, %v4704
  %v5160 = vmul.f32 %v4469, %v4704
  %v5161 = vmul.f32 %v4472, %v4704
  %v5162 = vmul.f32 %v4477, %v4704
  %v5163 = vmul.f32 %v4480, %v4704
  %v5164 = vmul.f32 %v4485, %v4704
  %v5165 = vmul.f32 %v4488, %v4704
  %v5166 = vmul.f32 %v4493, %v4704
  %v5167 = vmul.f32 %v4496, %v4704
  %v5168 = vmul.f32 %v4501, %v4704
  %v5169 = vmul.f32 %v4504, %v4704
  %v5170 = vmul.f32 %v4509, %v4704
  %v5171 = vmul.f32 %v4512, %v4704
  %v5172 = vmul.f32 %v4517, %v4704
  %v5173 = vmul.f32 %v4520, %v4704
  %v5174 = vmul.f32 %v4525, %v4704
  %v5175 = vmul.f32 %v4528, %v4704
  %v5176 = vmul.f32 %v4533, %v4704
  %v5177 = vmul.f32 %v4536, %v4704
  %v5178 = vmul.f32 %v4541, %v4704
  %v5179 = vmul.f32 %v4544, %v4704
  %v5180 = vmul.f32 %v4549, %v4704
  %v5181 = vmul.f32 %v4552, %v4704
  %v5182 = vmul.f32 %v4557, %v4704
  %v5183 = vmul.f32 %v4560, %v4704
  %v5184 = vmul.f32 %v4565, %v4704
  %v5185 = vmul.f32 %v4568, %v4704
  %v5186 = vmul.f32 %v4573, %v4704
  %v5187 = vmul.f32 %v4576, %v4704
  %v5188 = vmul.f32 %v4581, %v4704
  %v5189 = vmul.f32 %v4584, %v4704
  %v5190 = vmul.f32 %v4589, %v4704
  %v5191 = vmul.f32 %v4592, %v4704
  %v5192 = vmul.f32 %v4597, %v4704
  %v5193 = vmul.f32 %v4600, %v4704
  %v5194 = vmul.f32 %v4605, %v4704
  %v5195 = vmul.f32 %v4608, %v4704
  %v5196 = vmul.f32 %v4613, %v4704
  %v5197 = vmul.f32 %v4616, %v4704
  %v5198 = vmul.f32 %v4621, %v4704
  %v5199 = vmul.f32 %v4624, %v4704
  %v5200 = vmul.f32 %v4629, %v4704
  %v5201 = vmul.f32 %v4632, %v4704
  %v5202 = vmul.f32 %v4637, %v4704
  %v5203 = vmul.f32 %v4640, %v4704
  %v5204 = vmul.f32 %v4645, %v4704
  %v5205 = vmul.f32 %v4648, %v4704
  %v5206 = vmul.f32 %v4653, %v4704
  %v5207 = vmul.f32 %v4656, %v4704
  %v5208 = vmul.f32 %v4661, %v4704
  %v5209 = vmul.f32 %v4664, %v4704
  %v5210 = vmul.f32 %v4669, %v4704
  %v5211 = vmul.f32 %v4672, %v4704
  %v5212 = vmul.f32 %v4677, %v4704
  %v5213 = vmul.f32 %v4680, %v4704
  %v5214 = vmul.f32 %v4685, %v4704
  %v5215 = vmul.f32 %v4688, %v4704
  %v5216 = vmul.f32 %v4693, %v4704
  %v5217 = vmul.f32 %v4696, %v4704
  %v5218 = vld [vmem:[%s3] sm:$0x1]
  %v5220 = vlaneseq
  %v5221 = vshrl.u32 %v5220, 7
  %v5222 = vsub.s32 0, %v5221
  %v5223 = vrot.slane %v5218, %v5222
  %v5225 = vadd.f32 %v4706, %v5223
  %v5226 = vadd.f32 %v4707, %v5223
  %v5227 = vadd.f32 %v4708, %v5223
  %v5228 = vadd.f32 %v4709, %v5223
  %v5229 = vadd.f32 %v4710, %v5223
  %v5230 = vadd.f32 %v4711, %v5223
  %v5231 = vadd.f32 %v4712, %v5223
  %v5232 = vadd.f32 %v4713, %v5223
  %v5233 = vadd.f32 %v4714, %v5223
  %v5234 = vadd.f32 %v4715, %v5223
  %v5235 = vadd.f32 %v4716, %v5223
  %v5236 = vadd.f32 %v4717, %v5223
  %v5237 = vadd.f32 %v4718, %v5223
  %v5238 = vadd.f32 %v4719, %v5223
  %v5239 = vadd.f32 %v4720, %v5223
  %v5240 = vadd.f32 %v4721, %v5223
  %v5241 = vadd.f32 %v4722, %v5223
  %v5242 = vadd.f32 %v4723, %v5223
  %v5243 = vadd.f32 %v4724, %v5223
  %v5244 = vadd.f32 %v4725, %v5223
  %v5245 = vadd.f32 %v4726, %v5223
  %v5246 = vadd.f32 %v4727, %v5223
  %v5247 = vadd.f32 %v4728, %v5223
  %v5248 = vadd.f32 %v4729, %v5223
  %v5249 = vadd.f32 %v4730, %v5223
  %v5250 = vadd.f32 %v4731, %v5223
  %v5251 = vadd.f32 %v4732, %v5223
  %v5252 = vadd.f32 %v4733, %v5223
  %v5253 = vadd.f32 %v4734, %v5223
  %v5254 = vadd.f32 %v4735, %v5223
  %v5255 = vadd.f32 %v4736, %v5223
  %v5256 = vadd.f32 %v4737, %v5223
  %v5257 = vadd.f32 %v4738, %v5223
  %v5258 = vadd.f32 %v4739, %v5223
  %v5259 = vadd.f32 %v4740, %v5223
  %v5260 = vadd.f32 %v4741, %v5223
  %v5261 = vadd.f32 %v4742, %v5223
  %v5262 = vadd.f32 %v4743, %v5223
  %v5263 = vadd.f32 %v4744, %v5223
  %v5264 = vadd.f32 %v4745, %v5223
  %v5265 = vadd.f32 %v4746, %v5223
  %v5266 = vadd.f32 %v4747, %v5223
  %v5267 = vadd.f32 %v4748, %v5223
  %v5268 = vadd.f32 %v4749, %v5223
  %v5269 = vadd.f32 %v4750, %v5223
  %v5270 = vadd.f32 %v4751, %v5223
  %v5271 = vadd.f32 %v4752, %v5223
  %v5272 = vadd.f32 %v4753, %v5223
  %v5273 = vadd.f32 %v4754, %v5223
  %v5274 = vadd.f32 %v4755, %v5223
  %v5275 = vadd.f32 %v4756, %v5223
  %v5276 = vadd.f32 %v4757, %v5223
  %v5277 = vadd.f32 %v4758, %v5223
  %v5278 = vadd.f32 %v4759, %v5223
  %v5279 = vadd.f32 %v4760, %v5223
  %v5280 = vadd.f32 %v4761, %v5223
  %v5281 = vadd.f32 %v4762, %v5223
  %v5282 = vadd.f32 %v4763, %v5223
  %v5283 = vadd.f32 %v4764, %v5223
  %v5284 = vadd.f32 %v4765, %v5223
  %v5285 = vadd.f32 %v4766, %v5223
  %v5286 = vadd.f32 %v4767, %v5223
  %v5287 = vadd.f32 %v4768, %v5223
  %v5288 = vadd.f32 %v4769, %v5223
  %v5289 = vadd.f32 %v4770, %v5223
  %v5290 = vadd.f32 %v4771, %v5223
  %v5291 = vadd.f32 %v4772, %v5223
  %v5292 = vadd.f32 %v4773, %v5223
  %v5293 = vadd.f32 %v4774, %v5223
  %v5294 = vadd.f32 %v4775, %v5223
  %v5295 = vadd.f32 %v4776, %v5223
  %v5296 = vadd.f32 %v4777, %v5223
  %v5297 = vadd.f32 %v4778, %v5223
  %v5298 = vadd.f32 %v4779, %v5223
  %v5299 = vadd.f32 %v4780, %v5223
  %v5300 = vadd.f32 %v4781, %v5223
  %v5301 = vadd.f32 %v4782, %v5223
  %v5302 = vadd.f32 %v4783, %v5223
  %v5303 = vadd.f32 %v4784, %v5223
  %v5304 = vadd.f32 %v4785, %v5223
  %v5305 = vadd.f32 %v4786, %v5223
  %v5306 = vadd.f32 %v4787, %v5223
  %v5307 = vadd.f32 %v4788, %v5223
  %v5308 = vadd.f32 %v4789, %v5223
  %v5309 = vadd.f32 %v4790, %v5223
  %v5310 = vadd.f32 %v4791, %v5223
  %v5311 = vadd.f32 %v4792, %v5223
  %v5312 = vadd.f32 %v4793, %v5223
  %v5313 = vadd.f32 %v4794, %v5223
  %v5314 = vadd.f32 %v4795, %v5223
  %v5315 = vadd.f32 %v4796, %v5223
  %v5316 = vadd.f32 %v4797, %v5223
  %v5317 = vadd.f32 %v4798, %v5223
  %v5318 = vadd.f32 %v4799, %v5223
  %v5319 = vadd.f32 %v4800, %v5223
  %v5320 = vadd.f32 %v4801, %v5223
  %v5321 = vadd.f32 %v4802, %v5223
  %v5322 = vadd.f32 %v4803, %v5223
  %v5323 = vadd.f32 %v4804, %v5223
  %v5324 = vadd.f32 %v4805, %v5223
  %v5325 = vadd.f32 %v4806, %v5223
  %v5326 = vadd.f32 %v4807, %v5223
  %v5327 = vadd.f32 %v4808, %v5223
  %v5328 = vadd.f32 %v4809, %v5223
  %v5329 = vadd.f32 %v4810, %v5223
  %v5330 = vadd.f32 %v4811, %v5223
  %v5331 = vadd.f32 %v4812, %v5223
  %v5332 = vadd.f32 %v4813, %v5223
  %v5333 = vadd.f32 %v4814, %v5223
  %v5334 = vadd.f32 %v4815, %v5223
  %v5335 = vadd.f32 %v4816, %v5223
  %v5336 = vadd.f32 %v4817, %v5223
  %v5337 = vadd.f32 %v4818, %v5223
  %v5338 = vadd.f32 %v4819, %v5223
  %v5339 = vadd.f32 %v4820, %v5223
  %v5340 = vadd.f32 %v4821, %v5223
  %v5341 = vadd.f32 %v4822, %v5223
  %v5342 = vadd.f32 %v4823, %v5223
  %v5343 = vadd.f32 %v4824, %v5223
  %v5344 = vadd.f32 %v4825, %v5223
  %v5345 = vadd.f32 %v4826, %v5223
  %v5346 = vadd.f32 %v4827, %v5223
  %v5347 = vadd.f32 %v4828, %v5223
  %v5348 = vadd.f32 %v4829, %v5223
  %v5349 = vadd.f32 %v4830, %v5223
  %v5350 = vadd.f32 %v4831, %v5223
  %v5351 = vadd.f32 %v4832, %v5223
  %v5352 = vadd.f32 %v4833, %v5223
  %v5353 = vadd.f32 %v4834, %v5223
  %v5354 = vadd.f32 %v4835, %v5223
  %v5355 = vadd.f32 %v4836, %v5223
  %v5356 = vadd.f32 %v4837, %v5223
  %v5357 = vadd.f32 %v4838, %v5223
  %v5358 = vadd.f32 %v4839, %v5223
  %v5359 = vadd.f32 %v4840, %v5223
  %v5360 = vadd.f32 %v4841, %v5223
  %v5361 = vadd.f32 %v4842, %v5223
  %v5362 = vadd.f32 %v4843, %v5223
  %v5363 = vadd.f32 %v4844, %v5223
  %v5364 = vadd.f32 %v4845, %v5223
  %v5365 = vadd.f32 %v4846, %v5223
  %v5366 = vadd.f32 %v4847, %v5223
  %v5367 = vadd.f32 %v4848, %v5223
  %v5368 = vadd.f32 %v4849, %v5223
  %v5369 = vadd.f32 %v4850, %v5223
  %v5370 = vadd.f32 %v4851, %v5223
  %v5371 = vadd.f32 %v4852, %v5223
  %v5372 = vadd.f32 %v4853, %v5223
  %v5373 = vadd.f32 %v4854, %v5223
  %v5374 = vadd.f32 %v4855, %v5223
  %v5375 = vadd.f32 %v4856, %v5223
  %v5376 = vadd.f32 %v4857, %v5223
  %v5377 = vadd.f32 %v4858, %v5223
  %v5378 = vadd.f32 %v4859, %v5223
  %v5379 = vadd.f32 %v4860, %v5223
  %v5380 = vadd.f32 %v4861, %v5223
  %v5381 = vadd.f32 %v4862, %v5223
  %v5382 = vadd.f32 %v4863, %v5223
  %v5383 = vadd.f32 %v4864, %v5223
  %v5384 = vadd.f32 %v4865, %v5223
  %v5385 = vadd.f32 %v4866, %v5223
  %v5386 = vadd.f32 %v4867, %v5223
  %v5387 = vadd.f32 %v4868, %v5223
  %v5388 = vadd.f32 %v4869, %v5223
  %v5389 = vadd.f32 %v4870, %v5223
  %v5390 = vadd.f32 %v4871, %v5223
  %v5391 = vadd.f32 %v4872, %v5223
  %v5392 = vadd.f32 %v4873, %v5223
  %v5393 = vadd.f32 %v4874, %v5223
  %v5394 = vadd.f32 %v4875, %v5223
  %v5395 = vadd.f32 %v4876, %v5223
  %v5396 = vadd.f32 %v4877, %v5223
  %v5397 = vadd.f32 %v4878, %v5223
  %v5398 = vadd.f32 %v4879, %v5223
  %v5399 = vadd.f32 %v4880, %v5223
  %v5400 = vadd.f32 %v4881, %v5223
  %v5401 = vadd.f32 %v4882, %v5223
  %v5402 = vadd.f32 %v4883, %v5223
  %v5403 = vadd.f32 %v4884, %v5223
  %v5404 = vadd.f32 %v4885, %v5223
  %v5405 = vadd.f32 %v4886, %v5223
  %v5406 = vadd.f32 %v4887, %v5223
  %v5407 = vadd.f32 %v4888, %v5223
  %v5408 = vadd.f32 %v4889, %v5223
  %v5409 = vadd.f32 %v4890, %v5223
  %v5410 = vadd.f32 %v4891, %v5223
  %v5411 = vadd.f32 %v4892, %v5223
  %v5412 = vadd.f32 %v4893, %v5223
  %v5413 = vadd.f32 %v4894, %v5223
  %v5414 = vadd.f32 %v4895, %v5223
  %v5415 = vadd.f32 %v4896, %v5223
  %v5416 = vadd.f32 %v4897, %v5223
  %v5417 = vadd.f32 %v4898, %v5223
  %v5418 = vadd.f32 %v4899, %v5223
  %v5419 = vadd.f32 %v4900, %v5223
  %v5420 = vadd.f32 %v4901, %v5223
  %v5421 = vadd.f32 %v4902, %v5223
  %v5422 = vadd.f32 %v4903, %v5223
  %v5423 = vadd.f32 %v4904, %v5223
  %v5424 = vadd.f32 %v4905, %v5223
  %v5425 = vadd.f32 %v4906, %v5223
  %v5426 = vadd.f32 %v4907, %v5223
  %v5427 = vadd.f32 %v4908, %v5223
  %v5428 = vadd.f32 %v4909, %v5223
  %v5429 = vadd.f32 %v4910, %v5223
  %v5430 = vadd.f32 %v4911, %v5223
  %v5431 = vadd.f32 %v4912, %v5223
  %v5432 = vadd.f32 %v4913, %v5223
  %v5433 = vadd.f32 %v4914, %v5223
  %v5434 = vadd.f32 %v4915, %v5223
  %v5435 = vadd.f32 %v4916, %v5223
  %v5436 = vadd.f32 %v4917, %v5223
  %v5437 = vadd.f32 %v4918, %v5223
  %v5438 = vadd.f32 %v4919, %v5223
  %v5439 = vadd.f32 %v4920, %v5223
  %v5440 = vadd.f32 %v4921, %v5223
  %v5441 = vadd.f32 %v4922, %v5223
  %v5442 = vadd.f32 %v4923, %v5223
  %v5443 = vadd.f32 %v4924, %v5223
  %v5444 = vadd.f32 %v4925, %v5223
  %v5445 = vadd.f32 %v4926, %v5223
  %v5446 = vadd.f32 %v4927, %v5223
  %v5447 = vadd.f32 %v4928, %v5223
  %v5448 = vadd.f32 %v4929, %v5223
  %v5449 = vadd.f32 %v4930, %v5223
  %v5450 = vadd.f32 %v4931, %v5223
  %v5451 = vadd.f32 %v4932, %v5223
  %v5452 = vadd.f32 %v4933, %v5223
  %v5453 = vadd.f32 %v4934, %v5223
  %v5454 = vadd.f32 %v4935, %v5223
  %v5455 = vadd.f32 %v4936, %v5223
  %v5456 = vadd.f32 %v4937, %v5223
  %v5457 = vadd.f32 %v4938, %v5223
  %v5458 = vadd.f32 %v4939, %v5223
  %v5459 = vadd.f32 %v4940, %v5223
  %v5460 = vadd.f32 %v4941, %v5223
  %v5461 = vadd.f32 %v4942, %v5223
  %v5462 = vadd.f32 %v4943, %v5223
  %v5463 = vadd.f32 %v4944, %v5223
  %v5464 = vadd.f32 %v4945, %v5223
  %v5465 = vadd.f32 %v4946, %v5223
  %v5466 = vadd.f32 %v4947, %v5223
  %v5467 = vadd.f32 %v4948, %v5223
  %v5468 = vadd.f32 %v4949, %v5223
  %v5469 = vadd.f32 %v4950, %v5223
  %v5470 = vadd.f32 %v4951, %v5223
  %v5471 = vadd.f32 %v4952, %v5223
  %v5472 = vadd.f32 %v4953, %v5223
  %v5473 = vadd.f32 %v4954, %v5223
  %v5474 = vadd.f32 %v4955, %v5223
  %v5475 = vadd.f32 %v4956, %v5223
  %v5476 = vadd.f32 %v4957, %v5223
  %v5477 = vadd.f32 %v4958, %v5223
  %v5478 = vadd.f32 %v4959, %v5223
  %v5479 = vadd.f32 %v4960, %v5223
  %v5480 = vadd.f32 %v4961, %v5223
  %v5481 = vadd.f32 %v4962, %v5223
  %v5482 = vadd.f32 %v4963, %v5223
  %v5483 = vadd.f32 %v4964, %v5223
  %v5484 = vadd.f32 %v4965, %v5223
  %v5485 = vadd.f32 %v4966, %v5223
  %v5486 = vadd.f32 %v4967, %v5223
  %v5487 = vadd.f32 %v4968, %v5223
  %v5488 = vadd.f32 %v4969, %v5223
  %v5489 = vadd.f32 %v4970, %v5223
  %v5490 = vadd.f32 %v4971, %v5223
  %v5491 = vadd.f32 %v4972, %v5223
  %v5492 = vadd.f32 %v4973, %v5223
  %v5493 = vadd.f32 %v4974, %v5223
  %v5494 = vadd.f32 %v4975, %v5223
  %v5495 = vadd.f32 %v4976, %v5223
  %v5496 = vadd.f32 %v4977, %v5223
  %v5497 = vadd.f32 %v4978, %v5223
  %v5498 = vadd.f32 %v4979, %v5223
  %v5499 = vadd.f32 %v4980, %v5223
  %v5500 = vadd.f32 %v4981, %v5223
  %v5501 = vadd.f32 %v4982, %v5223
  %v5502 = vadd.f32 %v4983, %v5223
  %v5503 = vadd.f32 %v4984, %v5223
  %v5504 = vadd.f32 %v4985, %v5223
  %v5505 = vadd.f32 %v4986, %v5223
  %v5506 = vadd.f32 %v4987, %v5223
  %v5507 = vadd.f32 %v4988, %v5223
  %v5508 = vadd.f32 %v4989, %v5223
  %v5509 = vadd.f32 %v4990, %v5223
  %v5510 = vadd.f32 %v4991, %v5223
  %v5511 = vadd.f32 %v4992, %v5223
  %v5512 = vadd.f32 %v4993, %v5223
  %v5513 = vadd.f32 %v4994, %v5223
  %v5514 = vadd.f32 %v4995, %v5223
  %v5515 = vadd.f32 %v4996, %v5223
  %v5516 = vadd.f32 %v4997, %v5223
  %v5517 = vadd.f32 %v4998, %v5223
  %v5518 = vadd.f32 %v4999, %v5223
  %v5519 = vadd.f32 %v5000, %v5223
  %v5520 = vadd.f32 %v5001, %v5223
  %v5521 = vadd.f32 %v5002, %v5223
  %v5522 = vadd.f32 %v5003, %v5223
  %v5523 = vadd.f32 %v5004, %v5223
  %v5524 = vadd.f32 %v5005, %v5223
  %v5525 = vadd.f32 %v5006, %v5223
  %v5526 = vadd.f32 %v5007, %v5223
  %v5527 = vadd.f32 %v5008, %v5223
  %v5528 = vadd.f32 %v5009, %v5223
  %v5529 = vadd.f32 %v5010, %v5223
  %v5530 = vadd.f32 %v5011, %v5223
  %v5531 = vadd.f32 %v5012, %v5223
  %v5532 = vadd.f32 %v5013, %v5223
  %v5533 = vadd.f32 %v5014, %v5223
  %v5534 = vadd.f32 %v5015, %v5223
  %v5535 = vadd.f32 %v5016, %v5223
  %v5536 = vadd.f32 %v5017, %v5223
  %v5537 = vadd.f32 %v5018, %v5223
  %v5538 = vadd.f32 %v5019, %v5223
  %v5539 = vadd.f32 %v5020, %v5223
  %v5540 = vadd.f32 %v5021, %v5223
  %v5541 = vadd.f32 %v5022, %v5223
  %v5542 = vadd.f32 %v5023, %v5223
  %v5543 = vadd.f32 %v5024, %v5223
  %v5544 = vadd.f32 %v5025, %v5223
  %v5545 = vadd.f32 %v5026, %v5223
  %v5546 = vadd.f32 %v5027, %v5223
  %v5547 = vadd.f32 %v5028, %v5223
  %v5548 = vadd.f32 %v5029, %v5223
  %v5549 = vadd.f32 %v5030, %v5223
  %v5550 = vadd.f32 %v5031, %v5223
  %v5551 = vadd.f32 %v5032, %v5223
  %v5552 = vadd.f32 %v5033, %v5223
  %v5553 = vadd.f32 %v5034, %v5223
  %v5554 = vadd.f32 %v5035, %v5223
  %v5555 = vadd.f32 %v5036, %v5223
  %v5556 = vadd.f32 %v5037, %v5223
  %v5557 = vadd.f32 %v5038, %v5223
  %v5558 = vadd.f32 %v5039, %v5223
  %v5559 = vadd.f32 %v5040, %v5223
  %v5560 = vadd.f32 %v5041, %v5223
  %v5561 = vadd.f32 %v5042, %v5223
  %v5562 = vadd.f32 %v5043, %v5223
  %v5563 = vadd.f32 %v5044, %v5223
  %v5564 = vadd.f32 %v5045, %v5223
  %v5565 = vadd.f32 %v5046, %v5223
  %v5566 = vadd.f32 %v5047, %v5223
  %v5567 = vadd.f32 %v5048, %v5223
  %v5568 = vadd.f32 %v5049, %v5223
  %v5569 = vadd.f32 %v5050, %v5223
  %v5570 = vadd.f32 %v5051, %v5223
  %v5571 = vadd.f32 %v5052, %v5223
  %v5572 = vadd.f32 %v5053, %v5223
  %v5573 = vadd.f32 %v5054, %v5223
  %v5574 = vadd.f32 %v5055, %v5223
  %v5575 = vadd.f32 %v5056, %v5223
  %v5576 = vadd.f32 %v5057, %v5223
  %v5577 = vadd.f32 %v5058, %v5223
  %v5578 = vadd.f32 %v5059, %v5223
  %v5579 = vadd.f32 %v5060, %v5223
  %v5580 = vadd.f32 %v5061, %v5223
  %v5581 = vadd.f32 %v5062, %v5223
  %v5582 = vadd.f32 %v5063, %v5223
  %v5583 = vadd.f32 %v5064, %v5223
  %v5584 = vadd.f32 %v5065, %v5223
  %v5585 = vadd.f32 %v5066, %v5223
  %v5586 = vadd.f32 %v5067, %v5223
  %v5587 = vadd.f32 %v5068, %v5223
  %v5588 = vadd.f32 %v5069, %v5223
  %v5589 = vadd.f32 %v5070, %v5223
  %v5590 = vadd.f32 %v5071, %v5223
  %v5591 = vadd.f32 %v5072, %v5223
  %v5592 = vadd.f32 %v5073, %v5223
  %v5593 = vadd.f32 %v5074, %v5223
  %v5594 = vadd.f32 %v5075, %v5223
  %v5595 = vadd.f32 %v5076, %v5223
  %v5596 = vadd.f32 %v5077, %v5223
  %v5597 = vadd.f32 %v5078, %v5223
  %v5598 = vadd.f32 %v5079, %v5223
  %v5599 = vadd.f32 %v5080, %v5223
  %v5600 = vadd.f32 %v5081, %v5223
  %v5601 = vadd.f32 %v5082, %v5223
  %v5602 = vadd.f32 %v5083, %v5223
  %v5603 = vadd.f32 %v5084, %v5223
  %v5604 = vadd.f32 %v5085, %v5223
  %v5605 = vadd.f32 %v5086, %v5223
  %v5606 = vadd.f32 %v5087, %v5223
  %v5607 = vadd.f32 %v5088, %v5223
  %v5608 = vadd.f32 %v5089, %v5223
  %v5609 = vadd.f32 %v5090, %v5223
  %v5610 = vadd.f32 %v5091, %v5223
  %v5611 = vadd.f32 %v5092, %v5223
  %v5612 = vadd.f32 %v5093, %v5223
  %v5613 = vadd.f32 %v5094, %v5223
  %v5614 = vadd.f32 %v5095, %v5223
  %v5615 = vadd.f32 %v5096, %v5223
  %v5616 = vadd.f32 %v5097, %v5223
  %v5617 = vadd.f32 %v5098, %v5223
  %v5618 = vadd.f32 %v5099, %v5223
  %v5619 = vadd.f32 %v5100, %v5223
  %v5620 = vadd.f32 %v5101, %v5223
  %v5621 = vadd.f32 %v5102, %v5223
  %v5622 = vadd.f32 %v5103, %v5223
  %v5623 = vadd.f32 %v5104, %v5223
  %v5624 = vadd.f32 %v5105, %v5223
  %v5625 = vadd.f32 %v5106, %v5223
  %v5626 = vadd.f32 %v5107, %v5223
  %v5627 = vadd.f32 %v5108, %v5223
  %v5628 = vadd.f32 %v5109, %v5223
  %v5629 = vadd.f32 %v5110, %v5223
  %v5630 = vadd.f32 %v5111, %v5223
  %v5631 = vadd.f32 %v5112, %v5223
  %v5632 = vadd.f32 %v5113, %v5223
  %v5633 = vadd.f32 %v5114, %v5223
  %v5634 = vadd.f32 %v5115, %v5223
  %v5635 = vadd.f32 %v5116, %v5223
  %v5636 = vadd.f32 %v5117, %v5223
  %v5637 = vadd.f32 %v5118, %v5223
  %v5638 = vadd.f32 %v5119, %v5223
  %v5639 = vadd.f32 %v5120, %v5223
  %v5640 = vadd.f32 %v5121, %v5223
  %v5641 = vadd.f32 %v5122, %v5223
  %v5642 = vadd.f32 %v5123, %v5223
  %v5643 = vadd.f32 %v5124, %v5223
  %v5644 = vadd.f32 %v5125, %v5223
  %v5645 = vadd.f32 %v5126, %v5223
  %v5646 = vadd.f32 %v5127, %v5223
  %v5647 = vadd.f32 %v5128, %v5223
  %v5648 = vadd.f32 %v5129, %v5223
  %v5649 = vadd.f32 %v5130, %v5223
  %v5650 = vadd.f32 %v5131, %v5223
  %v5651 = vadd.f32 %v5132, %v5223
  %v5652 = vadd.f32 %v5133, %v5223
  %v5653 = vadd.f32 %v5134, %v5223
  %v5654 = vadd.f32 %v5135, %v5223
  %v5655 = vadd.f32 %v5136, %v5223
  %v5656 = vadd.f32 %v5137, %v5223
  %v5657 = vadd.f32 %v5138, %v5223
  %v5658 = vadd.f32 %v5139, %v5223
  %v5659 = vadd.f32 %v5140, %v5223
  %v5660 = vadd.f32 %v5141, %v5223
  %v5661 = vadd.f32 %v5142, %v5223
  %v5662 = vadd.f32 %v5143, %v5223
  %v5663 = vadd.f32 %v5144, %v5223
  %v5664 = vadd.f32 %v5145, %v5223
  %v5665 = vadd.f32 %v5146, %v5223
  %v5666 = vadd.f32 %v5147, %v5223
  %v5667 = vadd.f32 %v5148, %v5223
  %v5668 = vadd.f32 %v5149, %v5223
  %v5669 = vadd.f32 %v5150, %v5223
  %v5670 = vadd.f32 %v5151, %v5223
  %v5671 = vadd.f32 %v5152, %v5223
  %v5672 = vadd.f32 %v5153, %v5223
  %v5673 = vadd.f32 %v5154, %v5223
  %v5674 = vadd.f32 %v5155, %v5223
  %v5675 = vadd.f32 %v5156, %v5223
  %v5676 = vadd.f32 %v5157, %v5223
  %v5677 = vadd.f32 %v5158, %v5223
  %v5678 = vadd.f32 %v5159, %v5223
  %v5679 = vadd.f32 %v5160, %v5223
  %v5680 = vadd.f32 %v5161, %v5223
  %v5681 = vadd.f32 %v5162, %v5223
  %v5682 = vadd.f32 %v5163, %v5223
  %v5683 = vadd.f32 %v5164, %v5223
  %v5684 = vadd.f32 %v5165, %v5223
  %v5685 = vadd.f32 %v5166, %v5223
  %v5686 = vadd.f32 %v5167, %v5223
  %v5687 = vadd.f32 %v5168, %v5223
  %v5688 = vadd.f32 %v5169, %v5223
  %v5689 = vadd.f32 %v5170, %v5223
  %v5690 = vadd.f32 %v5171, %v5223
  %v5691 = vadd.f32 %v5172, %v5223
  %v5692 = vadd.f32 %v5173, %v5223
  %v5693 = vadd.f32 %v5174, %v5223
  %v5694 = vadd.f32 %v5175, %v5223
  %v5695 = vadd.f32 %v5176, %v5223
  %v5696 = vadd.f32 %v5177, %v5223
  %v5697 = vadd.f32 %v5178, %v5223
  %v5698 = vadd.f32 %v5179, %v5223
  %v5699 = vadd.f32 %v5180, %v5223
  %v5700 = vadd.f32 %v5181, %v5223
  %v5701 = vadd.f32 %v5182, %v5223
  %v5702 = vadd.f32 %v5183, %v5223
  %v5703 = vadd.f32 %v5184, %v5223
  %v5704 = vadd.f32 %v5185, %v5223
  %v5705 = vadd.f32 %v5186, %v5223
  %v5706 = vadd.f32 %v5187, %v5223
  %v5707 = vadd.f32 %v5188, %v5223
  %v5708 = vadd.f32 %v5189, %v5223
  %v5709 = vadd.f32 %v5190, %v5223
  %v5710 = vadd.f32 %v5191, %v5223
  %v5711 = vadd.f32 %v5192, %v5223
  %v5712 = vadd.f32 %v5193, %v5223
  %v5713 = vadd.f32 %v5194, %v5223
  %v5714 = vadd.f32 %v5195, %v5223
  %v5715 = vadd.f32 %v5196, %v5223
  %v5716 = vadd.f32 %v5197, %v5223
  %v5717 = vadd.f32 %v5198, %v5223
  %v5718 = vadd.f32 %v5199, %v5223
  %v5719 = vadd.f32 %v5200, %v5223
  %v5720 = vadd.f32 %v5201, %v5223
  %v5721 = vadd.f32 %v5202, %v5223
  %v5722 = vadd.f32 %v5203, %v5223
  %v5723 = vadd.f32 %v5204, %v5223
  %v5724 = vadd.f32 %v5205, %v5223
  %v5725 = vadd.f32 %v5206, %v5223
  %v5726 = vadd.f32 %v5207, %v5223
  %v5727 = vadd.f32 %v5208, %v5223
  %v5728 = vadd.f32 %v5209, %v5223
  %v5729 = vadd.f32 %v5210, %v5223
  %v5730 = vadd.f32 %v5211, %v5223
  %v5731 = vadd.f32 %v5212, %v5223
  %v5732 = vadd.f32 %v5213, %v5223
  %v5733 = vadd.f32 %v5214, %v5223
  %v5734 = vadd.f32 %v5215, %v5223
  %v5735 = vadd.f32 %v5216, %v5223
  %v5736 = vadd.f32 %v5217, %v5223
  %v5737 = vmul.f32 %v5225, 0.01
  %v5738 = vmul.f32 %v5226, 0.01
  %v5739 = vmul.f32 %v5227, 0.01
  %v5740 = vmul.f32 %v5228, 0.01
  %v5741 = vmul.f32 %v5229, 0.01
  %v5742 = vmul.f32 %v5230, 0.01
  %v5743 = vmul.f32 %v5231, 0.01
  %v5744 = vmul.f32 %v5232, 0.01
  %v5745 = vmul.f32 %v5233, 0.01
  %v5746 = vmul.f32 %v5234, 0.01
  %v5747 = vmul.f32 %v5235, 0.01
  %v5748 = vmul.f32 %v5236, 0.01
  %v5749 = vmul.f32 %v5237, 0.01
  %v5750 = vmul.f32 %v5238, 0.01
  %v5751 = vmul.f32 %v5239, 0.01
  %v5752 = vmul.f32 %v5240, 0.01
  %v5753 = vmul.f32 %v5241, 0.01
  %v5754 = vmul.f32 %v5242, 0.01
  %v5755 = vmul.f32 %v5243, 0.01
  %v5756 = vmul.f32 %v5244, 0.01
  %v5757 = vmul.f32 %v5245, 0.01
  %v5758 = vmul.f32 %v5246, 0.01
  %v5759 = vmul.f32 %v5247, 0.01
  %v5760 = vmul.f32 %v5248, 0.01
  %v5761 = vmul.f32 %v5249, 0.01
  %v5762 = vmul.f32 %v5250, 0.01
  %v5763 = vmul.f32 %v5251, 0.01
  %v5764 = vmul.f32 %v5252, 0.01
  %v5765 = vmul.f32 %v5253, 0.01
  %v5766 = vmul.f32 %v5254, 0.01
  %v5767 = vmul.f32 %v5255, 0.01
  %v5768 = vmul.f32 %v5256, 0.01
  %v5769 = vmul.f32 %v5257, 0.01
  %v5770 = vmul.f32 %v5258, 0.01
  %v5771 = vmul.f32 %v5259, 0.01
  %v5772 = vmul.f32 %v5260, 0.01
  %v5773 = vmul.f32 %v5261, 0.01
  %v5774 = vmul.f32 %v5262, 0.01
  %v5775 = vmul.f32 %v5263, 0.01
  %v5776 = vmul.f32 %v5264, 0.01
  %v5777 = vmul.f32 %v5265, 0.01
  %v5778 = vmul.f32 %v5266, 0.01
  %v5779 = vmul.f32 %v5267, 0.01
  %v5780 = vmul.f32 %v5268, 0.01
  %v5781 = vmul.f32 %v5269, 0.01
  %v5782 = vmul.f32 %v5270, 0.01
  %v5783 = vmul.f32 %v5271, 0.01
  %v5784 = vmul.f32 %v5272, 0.01
  %v5785 = vmul.f32 %v5273, 0.01
  %v5786 = vmul.f32 %v5274, 0.01
  %v5787 = vmul.f32 %v5275, 0.01
  %v5788 = vmul.f32 %v5276, 0.01
  %v5789 = vmul.f32 %v5277, 0.01
  %v5790 = vmul.f32 %v5278, 0.01
  %v5791 = vmul.f32 %v5279, 0.01
  %v5792 = vmul.f32 %v5280, 0.01
  %v5793 = vmul.f32 %v5281, 0.01
  %v5794 = vmul.f32 %v5282, 0.01
  %v5795 = vmul.f32 %v5283, 0.01
  %v5796 = vmul.f32 %v5284, 0.01
  %v5797 = vmul.f32 %v5285, 0.01
  %v5798 = vmul.f32 %v5286, 0.01
  %v5799 = vmul.f32 %v5287, 0.01
  %v5800 = vmul.f32 %v5288, 0.01
  %v5801 = vmul.f32 %v5289, 0.01
  %v5802 = vmul.f32 %v5290, 0.01
  %v5803 = vmul.f32 %v5291, 0.01
  %v5804 = vmul.f32 %v5292, 0.01
  %v5805 = vmul.f32 %v5293, 0.01
  %v5806 = vmul.f32 %v5294, 0.01
  %v5807 = vmul.f32 %v5295, 0.01
  %v5808 = vmul.f32 %v5296, 0.01
  %v5809 = vmul.f32 %v5297, 0.01
  %v5810 = vmul.f32 %v5298, 0.01
  %v5811 = vmul.f32 %v5299, 0.01
  %v5812 = vmul.f32 %v5300, 0.01
  %v5813 = vmul.f32 %v5301, 0.01
  %v5814 = vmul.f32 %v5302, 0.01
  %v5815 = vmul.f32 %v5303, 0.01
  %v5816 = vmul.f32 %v5304, 0.01
  %v5817 = vmul.f32 %v5305, 0.01
  %v5818 = vmul.f32 %v5306, 0.01
  %v5819 = vmul.f32 %v5307, 0.01
  %v5820 = vmul.f32 %v5308, 0.01
  %v5821 = vmul.f32 %v5309, 0.01
  %v5822 = vmul.f32 %v5310, 0.01
  %v5823 = vmul.f32 %v5311, 0.01
  %v5824 = vmul.f32 %v5312, 0.01
  %v5825 = vmul.f32 %v5313, 0.01
  %v5826 = vmul.f32 %v5314, 0.01
  %v5827 = vmul.f32 %v5315, 0.01
  %v5828 = vmul.f32 %v5316, 0.01
  %v5829 = vmul.f32 %v5317, 0.01
  %v5830 = vmul.f32 %v5318, 0.01
  %v5831 = vmul.f32 %v5319, 0.01
  %v5832 = vmul.f32 %v5320, 0.01
  %v5833 = vmul.f32 %v5321, 0.01
  %v5834 = vmul.f32 %v5322, 0.01
  %v5835 = vmul.f32 %v5323, 0.01
  %v5836 = vmul.f32 %v5324, 0.01
  %v5837 = vmul.f32 %v5325, 0.01
  %v5838 = vmul.f32 %v5326, 0.01
  %v5839 = vmul.f32 %v5327, 0.01
  %v5840 = vmul.f32 %v5328, 0.01
  %v5841 = vmul.f32 %v5329, 0.01
  %v5842 = vmul.f32 %v5330, 0.01
  %v5843 = vmul.f32 %v5331, 0.01
  %v5844 = vmul.f32 %v5332, 0.01
  %v5845 = vmul.f32 %v5333, 0.01
  %v5846 = vmul.f32 %v5334, 0.01
  %v5847 = vmul.f32 %v5335, 0.01
  %v5848 = vmul.f32 %v5336, 0.01
  %v5849 = vmul.f32 %v5337, 0.01
  %v5850 = vmul.f32 %v5338, 0.01
  %v5851 = vmul.f32 %v5339, 0.01
  %v5852 = vmul.f32 %v5340, 0.01
  %v5853 = vmul.f32 %v5341, 0.01
  %v5854 = vmul.f32 %v5342, 0.01
  %v5855 = vmul.f32 %v5343, 0.01
  %v5856 = vmul.f32 %v5344, 0.01
  %v5857 = vmul.f32 %v5345, 0.01
  %v5858 = vmul.f32 %v5346, 0.01
  %v5859 = vmul.f32 %v5347, 0.01
  %v5860 = vmul.f32 %v5348, 0.01
  %v5861 = vmul.f32 %v5349, 0.01
  %v5862 = vmul.f32 %v5350, 0.01
  %v5863 = vmul.f32 %v5351, 0.01
  %v5864 = vmul.f32 %v5352, 0.01
  %v5865 = vmul.f32 %v5353, 0.01
  %v5866 = vmul.f32 %v5354, 0.01
  %v5867 = vmul.f32 %v5355, 0.01
  %v5868 = vmul.f32 %v5356, 0.01
  %v5869 = vmul.f32 %v5357, 0.01
  %v5870 = vmul.f32 %v5358, 0.01
  %v5871 = vmul.f32 %v5359, 0.01
  %v5872 = vmul.f32 %v5360, 0.01
  %v5873 = vmul.f32 %v5361, 0.01
  %v5874 = vmul.f32 %v5362, 0.01
  %v5875 = vmul.f32 %v5363, 0.01
  %v5876 = vmul.f32 %v5364, 0.01
  %v5877 = vmul.f32 %v5365, 0.01
  %v5878 = vmul.f32 %v5366, 0.01
  %v5879 = vmul.f32 %v5367, 0.01
  %v5880 = vmul.f32 %v5368, 0.01
  %v5881 = vmul.f32 %v5369, 0.01
  %v5882 = vmul.f32 %v5370, 0.01
  %v5883 = vmul.f32 %v5371, 0.01
  %v5884 = vmul.f32 %v5372, 0.01
  %v5885 = vmul.f32 %v5373, 0.01
  %v5886 = vmul.f32 %v5374, 0.01
  %v5887 = vmul.f32 %v5375, 0.01
  %v5888 = vmul.f32 %v5376, 0.01
  %v5889 = vmul.f32 %v5377, 0.01
  %v5890 = vmul.f32 %v5378, 0.01
  %v5891 = vmul.f32 %v5379, 0.01
  %v5892 = vmul.f32 %v5380, 0.01
  %v5893 = vmul.f32 %v5381, 0.01
  %v5894 = vmul.f32 %v5382, 0.01
  %v5895 = vmul.f32 %v5383, 0.01
  %v5896 = vmul.f32 %v5384, 0.01
  %v5897 = vmul.f32 %v5385, 0.01
  %v5898 = vmul.f32 %v5386, 0.01
  %v5899 = vmul.f32 %v5387, 0.01
  %v5900 = vmul.f32 %v5388, 0.01
  %v5901 = vmul.f32 %v5389, 0.01
  %v5902 = vmul.f32 %v5390, 0.01
  %v5903 = vmul.f32 %v5391, 0.01
  %v5904 = vmul.f32 %v5392, 0.01
  %v5905 = vmul.f32 %v5393, 0.01
  %v5906 = vmul.f32 %v5394, 0.01
  %v5907 = vmul.f32 %v5395, 0.01
  %v5908 = vmul.f32 %v5396, 0.01
  %v5909 = vmul.f32 %v5397, 0.01
  %v5910 = vmul.f32 %v5398, 0.01
  %v5911 = vmul.f32 %v5399, 0.01
  %v5912 = vmul.f32 %v5400, 0.01
  %v5913 = vmul.f32 %v5401, 0.01
  %v5914 = vmul.f32 %v5402, 0.01
  %v5915 = vmul.f32 %v5403, 0.01
  %v5916 = vmul.f32 %v5404, 0.01
  %v5917 = vmul.f32 %v5405, 0.01
  %v5918 = vmul.f32 %v5406, 0.01
  %v5919 = vmul.f32 %v5407, 0.01
  %v5920 = vmul.f32 %v5408, 0.01
  %v5921 = vmul.f32 %v5409, 0.01
  %v5922 = vmul.f32 %v5410, 0.01
  %v5923 = vmul.f32 %v5411, 0.01
  %v5924 = vmul.f32 %v5412, 0.01
  %v5925 = vmul.f32 %v5413, 0.01
  %v5926 = vmul.f32 %v5414, 0.01
  %v5927 = vmul.f32 %v5415, 0.01
  %v5928 = vmul.f32 %v5416, 0.01
  %v5929 = vmul.f32 %v5417, 0.01
  %v5930 = vmul.f32 %v5418, 0.01
  %v5931 = vmul.f32 %v5419, 0.01
  %v5932 = vmul.f32 %v5420, 0.01
  %v5933 = vmul.f32 %v5421, 0.01
  %v5934 = vmul.f32 %v5422, 0.01
  %v5935 = vmul.f32 %v5423, 0.01
  %v5936 = vmul.f32 %v5424, 0.01
  %v5937 = vmul.f32 %v5425, 0.01
  %v5938 = vmul.f32 %v5426, 0.01
  %v5939 = vmul.f32 %v5427, 0.01
  %v5940 = vmul.f32 %v5428, 0.01
  %v5941 = vmul.f32 %v5429, 0.01
  %v5942 = vmul.f32 %v5430, 0.01
  %v5943 = vmul.f32 %v5431, 0.01
  %v5944 = vmul.f32 %v5432, 0.01
  %v5945 = vmul.f32 %v5433, 0.01
  %v5946 = vmul.f32 %v5434, 0.01
  %v5947 = vmul.f32 %v5435, 0.01
  %v5948 = vmul.f32 %v5436, 0.01
  %v5949 = vmul.f32 %v5437, 0.01
  %v5950 = vmul.f32 %v5438, 0.01
  %v5951 = vmul.f32 %v5439, 0.01
  %v5952 = vmul.f32 %v5440, 0.01
  %v5953 = vmul.f32 %v5441, 0.01
  %v5954 = vmul.f32 %v5442, 0.01
  %v5955 = vmul.f32 %v5443, 0.01
  %v5956 = vmul.f32 %v5444, 0.01
  %v5957 = vmul.f32 %v5445, 0.01
  %v5958 = vmul.f32 %v5446, 0.01
  %v5959 = vmul.f32 %v5447, 0.01
  %v5960 = vmul.f32 %v5448, 0.01
  %v5961 = vmul.f32 %v5449, 0.01
  %v5962 = vmul.f32 %v5450, 0.01
  %v5963 = vmul.f32 %v5451, 0.01
  %v5964 = vmul.f32 %v5452, 0.01
  %v5965 = vmul.f32 %v5453, 0.01
  %v5966 = vmul.f32 %v5454, 0.01
  %v5967 = vmul.f32 %v5455, 0.01
  %v5968 = vmul.f32 %v5456, 0.01
  %v5969 = vmul.f32 %v5457, 0.01
  %v5970 = vmul.f32 %v5458, 0.01
  %v5971 = vmul.f32 %v5459, 0.01
  %v5972 = vmul.f32 %v5460, 0.01
  %v5973 = vmul.f32 %v5461, 0.01
  %v5974 = vmul.f32 %v5462, 0.01
  %v5975 = vmul.f32 %v5463, 0.01
  %v5976 = vmul.f32 %v5464, 0.01
  %v5977 = vmul.f32 %v5465, 0.01
  %v5978 = vmul.f32 %v5466, 0.01
  %v5979 = vmul.f32 %v5467, 0.01
  %v5980 = vmul.f32 %v5468, 0.01
  %v5981 = vmul.f32 %v5469, 0.01
  %v5982 = vmul.f32 %v5470, 0.01
  %v5983 = vmul.f32 %v5471, 0.01
  %v5984 = vmul.f32 %v5472, 0.01
  %v5985 = vmul.f32 %v5473, 0.01
  %v5986 = vmul.f32 %v5474, 0.01
  %v5987 = vmul.f32 %v5475, 0.01
  %v5988 = vmul.f32 %v5476, 0.01
  %v5989 = vmul.f32 %v5477, 0.01
  %v5990 = vmul.f32 %v5478, 0.01
  %v5991 = vmul.f32 %v5479, 0.01
  %v5992 = vmul.f32 %v5480, 0.01
  %v5993 = vmul.f32 %v5481, 0.01
  %v5994 = vmul.f32 %v5482, 0.01
  %v5995 = vmul.f32 %v5483, 0.01
  %v5996 = vmul.f32 %v5484, 0.01
  %v5997 = vmul.f32 %v5485, 0.01
  %v5998 = vmul.f32 %v5486, 0.01
  %v5999 = vmul.f32 %v5487, 0.01
  %v6000 = vmul.f32 %v5488, 0.01
  %v6001 = vmul.f32 %v5489, 0.01
  %v6002 = vmul.f32 %v5490, 0.01
  %v6003 = vmul.f32 %v5491, 0.01
  %v6004 = vmul.f32 %v5492, 0.01
  %v6005 = vmul.f32 %v5493, 0.01
  %v6006 = vmul.f32 %v5494, 0.01
  %v6007 = vmul.f32 %v5495, 0.01
  %v6008 = vmul.f32 %v5496, 0.01
  %v6009 = vmul.f32 %v5497, 0.01
  %v6010 = vmul.f32 %v5498, 0.01
  %v6011 = vmul.f32 %v5499, 0.01
  %v6012 = vmul.f32 %v5500, 0.01
  %v6013 = vmul.f32 %v5501, 0.01
  %v6014 = vmul.f32 %v5502, 0.01
  %v6015 = vmul.f32 %v5503, 0.01
  %v6016 = vmul.f32 %v5504, 0.01
  %v6017 = vmul.f32 %v5505, 0.01
  %v6018 = vmul.f32 %v5506, 0.01
  %v6019 = vmul.f32 %v5507, 0.01
  %v6020 = vmul.f32 %v5508, 0.01
  %v6021 = vmul.f32 %v5509, 0.01
  %v6022 = vmul.f32 %v5510, 0.01
  %v6023 = vmul.f32 %v5511, 0.01
  %v6024 = vmul.f32 %v5512, 0.01
  %v6025 = vmul.f32 %v5513, 0.01
  %v6026 = vmul.f32 %v5514, 0.01
  %v6027 = vmul.f32 %v5515, 0.01
  %v6028 = vmul.f32 %v5516, 0.01
  %v6029 = vmul.f32 %v5517, 0.01
  %v6030 = vmul.f32 %v5518, 0.01
  %v6031 = vmul.f32 %v5519, 0.01
  %v6032 = vmul.f32 %v5520, 0.01
  %v6033 = vmul.f32 %v5521, 0.01
  %v6034 = vmul.f32 %v5522, 0.01
  %v6035 = vmul.f32 %v5523, 0.01
  %v6036 = vmul.f32 %v5524, 0.01
  %v6037 = vmul.f32 %v5525, 0.01
  %v6038 = vmul.f32 %v5526, 0.01
  %v6039 = vmul.f32 %v5527, 0.01
  %v6040 = vmul.f32 %v5528, 0.01
  %v6041 = vmul.f32 %v5529, 0.01
  %v6042 = vmul.f32 %v5530, 0.01
  %v6043 = vmul.f32 %v5531, 0.01
  %v6044 = vmul.f32 %v5532, 0.01
  %v6045 = vmul.f32 %v5533, 0.01
  %v6046 = vmul.f32 %v5534, 0.01
  %v6047 = vmul.f32 %v5535, 0.01
  %v6048 = vmul.f32 %v5536, 0.01
  %v6049 = vmul.f32 %v5537, 0.01
  %v6050 = vmul.f32 %v5538, 0.01
  %v6051 = vmul.f32 %v5539, 0.01
  %v6052 = vmul.f32 %v5540, 0.01
  %v6053 = vmul.f32 %v5541, 0.01
  %v6054 = vmul.f32 %v5542, 0.01
  %v6055 = vmul.f32 %v5543, 0.01
  %v6056 = vmul.f32 %v5544, 0.01
  %v6057 = vmul.f32 %v5545, 0.01
  %v6058 = vmul.f32 %v5546, 0.01
  %v6059 = vmul.f32 %v5547, 0.01
  %v6060 = vmul.f32 %v5548, 0.01
  %v6061 = vmul.f32 %v5549, 0.01
  %v6062 = vmul.f32 %v5550, 0.01
  %v6063 = vmul.f32 %v5551, 0.01
  %v6064 = vmul.f32 %v5552, 0.01
  %v6065 = vmul.f32 %v5553, 0.01
  %v6066 = vmul.f32 %v5554, 0.01
  %v6067 = vmul.f32 %v5555, 0.01
  %v6068 = vmul.f32 %v5556, 0.01
  %v6069 = vmul.f32 %v5557, 0.01
  %v6070 = vmul.f32 %v5558, 0.01
  %v6071 = vmul.f32 %v5559, 0.01
  %v6072 = vmul.f32 %v5560, 0.01
  %v6073 = vmul.f32 %v5561, 0.01
  %v6074 = vmul.f32 %v5562, 0.01
  %v6075 = vmul.f32 %v5563, 0.01
  %v6076 = vmul.f32 %v5564, 0.01
  %v6077 = vmul.f32 %v5565, 0.01
  %v6078 = vmul.f32 %v5566, 0.01
  %v6079 = vmul.f32 %v5567, 0.01
  %v6080 = vmul.f32 %v5568, 0.01
  %v6081 = vmul.f32 %v5569, 0.01
  %v6082 = vmul.f32 %v5570, 0.01
  %v6083 = vmul.f32 %v5571, 0.01
  %v6084 = vmul.f32 %v5572, 0.01
  %v6085 = vmul.f32 %v5573, 0.01
  %v6086 = vmul.f32 %v5574, 0.01
  %v6087 = vmul.f32 %v5575, 0.01
  %v6088 = vmul.f32 %v5576, 0.01
  %v6089 = vmul.f32 %v5577, 0.01
  %v6090 = vmul.f32 %v5578, 0.01
  %v6091 = vmul.f32 %v5579, 0.01
  %v6092 = vmul.f32 %v5580, 0.01
  %v6093 = vmul.f32 %v5581, 0.01
  %v6094 = vmul.f32 %v5582, 0.01
  %v6095 = vmul.f32 %v5583, 0.01
  %v6096 = vmul.f32 %v5584, 0.01
  %v6097 = vmul.f32 %v5585, 0.01
  %v6098 = vmul.f32 %v5586, 0.01
  %v6099 = vmul.f32 %v5587, 0.01
  %v6100 = vmul.f32 %v5588, 0.01
  %v6101 = vmul.f32 %v5589, 0.01
  %v6102 = vmul.f32 %v5590, 0.01
  %v6103 = vmul.f32 %v5591, 0.01
  %v6104 = vmul.f32 %v5592, 0.01
  %v6105 = vmul.f32 %v5593, 0.01
  %v6106 = vmul.f32 %v5594, 0.01
  %v6107 = vmul.f32 %v5595, 0.01
  %v6108 = vmul.f32 %v5596, 0.01
  %v6109 = vmul.f32 %v5597, 0.01
  %v6110 = vmul.f32 %v5598, 0.01
  %v6111 = vmul.f32 %v5599, 0.01
  %v6112 = vmul.f32 %v5600, 0.01
  %v6113 = vmul.f32 %v5601, 0.01
  %v6114 = vmul.f32 %v5602, 0.01
  %v6115 = vmul.f32 %v5603, 0.01
  %v6116 = vmul.f32 %v5604, 0.01
  %v6117 = vmul.f32 %v5605, 0.01
  %v6118 = vmul.f32 %v5606, 0.01
  %v6119 = vmul.f32 %v5607, 0.01
  %v6120 = vmul.f32 %v5608, 0.01
  %v6121 = vmul.f32 %v5609, 0.01
  %v6122 = vmul.f32 %v5610, 0.01
  %v6123 = vmul.f32 %v5611, 0.01
  %v6124 = vmul.f32 %v5612, 0.01
  %v6125 = vmul.f32 %v5613, 0.01
  %v6126 = vmul.f32 %v5614, 0.01
  %v6127 = vmul.f32 %v5615, 0.01
  %v6128 = vmul.f32 %v5616, 0.01
  %v6129 = vmul.f32 %v5617, 0.01
  %v6130 = vmul.f32 %v5618, 0.01
  %v6131 = vmul.f32 %v5619, 0.01
  %v6132 = vmul.f32 %v5620, 0.01
  %v6133 = vmul.f32 %v5621, 0.01
  %v6134 = vmul.f32 %v5622, 0.01
  %v6135 = vmul.f32 %v5623, 0.01
  %v6136 = vmul.f32 %v5624, 0.01
  %v6137 = vmul.f32 %v5625, 0.01
  %v6138 = vmul.f32 %v5626, 0.01
  %v6139 = vmul.f32 %v5627, 0.01
  %v6140 = vmul.f32 %v5628, 0.01
  %v6141 = vmul.f32 %v5629, 0.01
  %v6142 = vmul.f32 %v5630, 0.01
  %v6143 = vmul.f32 %v5631, 0.01
  %v6144 = vmul.f32 %v5632, 0.01
  %v6145 = vmul.f32 %v5633, 0.01
  %v6146 = vmul.f32 %v5634, 0.01
  %v6147 = vmul.f32 %v5635, 0.01
  %v6148 = vmul.f32 %v5636, 0.01
  %v6149 = vmul.f32 %v5637, 0.01
  %v6150 = vmul.f32 %v5638, 0.01
  %v6151 = vmul.f32 %v5639, 0.01
  %v6152 = vmul.f32 %v5640, 0.01
  %v6153 = vmul.f32 %v5641, 0.01
  %v6154 = vmul.f32 %v5642, 0.01
  %v6155 = vmul.f32 %v5643, 0.01
  %v6156 = vmul.f32 %v5644, 0.01
  %v6157 = vmul.f32 %v5645, 0.01
  %v6158 = vmul.f32 %v5646, 0.01
  %v6159 = vmul.f32 %v5647, 0.01
  %v6160 = vmul.f32 %v5648, 0.01
  %v6161 = vmul.f32 %v5649, 0.01
  %v6162 = vmul.f32 %v5650, 0.01
  %v6163 = vmul.f32 %v5651, 0.01
  %v6164 = vmul.f32 %v5652, 0.01
  %v6165 = vmul.f32 %v5653, 0.01
  %v6166 = vmul.f32 %v5654, 0.01
  %v6167 = vmul.f32 %v5655, 0.01
  %v6168 = vmul.f32 %v5656, 0.01
  %v6169 = vmul.f32 %v5657, 0.01
  %v6170 = vmul.f32 %v5658, 0.01
  %v6171 = vmul.f32 %v5659, 0.01
  %v6172 = vmul.f32 %v5660, 0.01
  %v6173 = vmul.f32 %v5661, 0.01
  %v6174 = vmul.f32 %v5662, 0.01
  %v6175 = vmul.f32 %v5663, 0.01
  %v6176 = vmul.f32 %v5664, 0.01
  %v6177 = vmul.f32 %v5665, 0.01
  %v6178 = vmul.f32 %v5666, 0.01
  %v6179 = vmul.f32 %v5667, 0.01
  %v6180 = vmul.f32 %v5668, 0.01
  %v6181 = vmul.f32 %v5669, 0.01
  %v6182 = vmul.f32 %v5670, 0.01
  %v6183 = vmul.f32 %v5671, 0.01
  %v6184 = vmul.f32 %v5672, 0.01
  %v6185 = vmul.f32 %v5673, 0.01
  %v6186 = vmul.f32 %v5674, 0.01
  %v6187 = vmul.f32 %v5675, 0.01
  %v6188 = vmul.f32 %v5676, 0.01
  %v6189 = vmul.f32 %v5677, 0.01
  %v6190 = vmul.f32 %v5678, 0.01
  %v6191 = vmul.f32 %v5679, 0.01
  %v6192 = vmul.f32 %v5680, 0.01
  %v6193 = vmul.f32 %v5681, 0.01
  %v6194 = vmul.f32 %v5682, 0.01
  %v6195 = vmul.f32 %v5683, 0.01
  %v6196 = vmul.f32 %v5684, 0.01
  %v6197 = vmul.f32 %v5685, 0.01
  %v6198 = vmul.f32 %v5686, 0.01
  %v6199 = vmul.f32 %v5687, 0.01
  %v6200 = vmul.f32 %v5688, 0.01
  %v6201 = vmul.f32 %v5689, 0.01
  %v6202 = vmul.f32 %v5690, 0.01
  %v6203 = vmul.f32 %v5691, 0.01
  %v6204 = vmul.f32 %v5692, 0.01
  %v6205 = vmul.f32 %v5693, 0.01
  %v6206 = vmul.f32 %v5694, 0.01
  %v6207 = vmul.f32 %v5695, 0.01
  %v6208 = vmul.f32 %v5696, 0.01
  %v6209 = vmul.f32 %v5697, 0.01
  %v6210 = vmul.f32 %v5698, 0.01
  %v6211 = vmul.f32 %v5699, 0.01
  %v6212 = vmul.f32 %v5700, 0.01
  %v6213 = vmul.f32 %v5701, 0.01
  %v6214 = vmul.f32 %v5702, 0.01
  %v6215 = vmul.f32 %v5703, 0.01
  %v6216 = vmul.f32 %v5704, 0.01
  %v6217 = vmul.f32 %v5705, 0.01
  %v6218 = vmul.f32 %v5706, 0.01
  %v6219 = vmul.f32 %v5707, 0.01
  %v6220 = vmul.f32 %v5708, 0.01
  %v6221 = vmul.f32 %v5709, 0.01
  %v6222 = vmul.f32 %v5710, 0.01
  %v6223 = vmul.f32 %v5711, 0.01
  %v6224 = vmul.f32 %v5712, 0.01
  %v6225 = vmul.f32 %v5713, 0.01
  %v6226 = vmul.f32 %v5714, 0.01
  %v6227 = vmul.f32 %v5715, 0.01
  %v6228 = vmul.f32 %v5716, 0.01
  %v6229 = vmul.f32 %v5717, 0.01
  %v6230 = vmul.f32 %v5718, 0.01
  %v6231 = vmul.f32 %v5719, 0.01
  %v6232 = vmul.f32 %v5720, 0.01
  %v6233 = vmul.f32 %v5721, 0.01
  %v6234 = vmul.f32 %v5722, 0.01
  %v6235 = vmul.f32 %v5723, 0.01
  %v6236 = vmul.f32 %v5724, 0.01
  %v6237 = vmul.f32 %v5725, 0.01
  %v6238 = vmul.f32 %v5726, 0.01
  %v6239 = vmul.f32 %v5727, 0.01
  %v6240 = vmul.f32 %v5728, 0.01
  %v6241 = vmul.f32 %v5729, 0.01
  %v6242 = vmul.f32 %v5730, 0.01
  %v6243 = vmul.f32 %v5731, 0.01
  %v6244 = vmul.f32 %v5732, 0.01
  %v6245 = vmul.f32 %v5733, 0.01
  %v6246 = vmul.f32 %v5734, 0.01
  %v6247 = vmul.f32 %v5735, 0.01
  %v6248 = vmul.f32 %v5736, 0.01
  %v6249 = vmax.f32 %v5225, %v5737
  %v6250 = vmax.f32 %v5226, %v5738
  %v6251 = vmax.f32 %v5227, %v5739
  %v6252 = vmax.f32 %v5228, %v5740
  %v6253 = vmax.f32 %v5229, %v5741
  %v6254 = vmax.f32 %v5230, %v5742
  %v6255 = vmax.f32 %v5231, %v5743
  %v6256 = vmax.f32 %v5232, %v5744
  %v6257 = vmax.f32 %v5233, %v5745
  %v6258 = vmax.f32 %v5234, %v5746
  %v6259 = vmax.f32 %v5235, %v5747
  %v6260 = vmax.f32 %v5236, %v5748
  %v6261 = vmax.f32 %v5237, %v5749
  %v6262 = vmax.f32 %v5238, %v5750
  %v6263 = vmax.f32 %v5239, %v5751
  %v6264 = vmax.f32 %v5240, %v5752
  %v6265 = vmax.f32 %v5241, %v5753
  %v6266 = vmax.f32 %v5242, %v5754
  %v6267 = vmax.f32 %v5243, %v5755
  %v6268 = vmax.f32 %v5244, %v5756
  %v6269 = vmax.f32 %v5245, %v5757
  %v6270 = vmax.f32 %v5246, %v5758
  %v6271 = vmax.f32 %v5247, %v5759
  %v6272 = vmax.f32 %v5248, %v5760
  %v6273 = vmax.f32 %v5249, %v5761
  %v6274 = vmax.f32 %v5250, %v5762
  %v6275 = vmax.f32 %v5251, %v5763
  %v6276 = vmax.f32 %v5252, %v5764
  %v6277 = vmax.f32 %v5253, %v5765
  %v6278 = vmax.f32 %v5254, %v5766
  %v6279 = vmax.f32 %v5255, %v5767
  %v6280 = vmax.f32 %v5256, %v5768
  %v6281 = vmax.f32 %v5257, %v5769
  %v6282 = vmax.f32 %v5258, %v5770
  %v6283 = vmax.f32 %v5259, %v5771
  %v6284 = vmax.f32 %v5260, %v5772
  %v6285 = vmax.f32 %v5261, %v5773
  %v6286 = vmax.f32 %v5262, %v5774
  %v6287 = vmax.f32 %v5263, %v5775
  %v6288 = vmax.f32 %v5264, %v5776
  %v6289 = vmax.f32 %v5265, %v5777
  %v6290 = vmax.f32 %v5266, %v5778
  %v6291 = vmax.f32 %v5267, %v5779
  %v6292 = vmax.f32 %v5268, %v5780
  %v6293 = vmax.f32 %v5269, %v5781
  %v6294 = vmax.f32 %v5270, %v5782
  %v6295 = vmax.f32 %v5271, %v5783
  %v6296 = vmax.f32 %v5272, %v5784
  %v6297 = vmax.f32 %v5273, %v5785
  %v6298 = vmax.f32 %v5274, %v5786
  %v6299 = vmax.f32 %v5275, %v5787
  %v6300 = vmax.f32 %v5276, %v5788
  %v6301 = vmax.f32 %v5277, %v5789
  %v6302 = vmax.f32 %v5278, %v5790
  %v6303 = vmax.f32 %v5279, %v5791
  %v6304 = vmax.f32 %v5280, %v5792
  %v6305 = vmax.f32 %v5281, %v5793
  %v6306 = vmax.f32 %v5282, %v5794
  %v6307 = vmax.f32 %v5283, %v5795
  %v6308 = vmax.f32 %v5284, %v5796
  %v6309 = vmax.f32 %v5285, %v5797
  %v6310 = vmax.f32 %v5286, %v5798
  %v6311 = vmax.f32 %v5287, %v5799
  %v6312 = vmax.f32 %v5288, %v5800
  %v6313 = vmax.f32 %v5289, %v5801
  %v6314 = vmax.f32 %v5290, %v5802
  %v6315 = vmax.f32 %v5291, %v5803
  %v6316 = vmax.f32 %v5292, %v5804
  %v6317 = vmax.f32 %v5293, %v5805
  %v6318 = vmax.f32 %v5294, %v5806
  %v6319 = vmax.f32 %v5295, %v5807
  %v6320 = vmax.f32 %v5296, %v5808
  %v6321 = vmax.f32 %v5297, %v5809
  %v6322 = vmax.f32 %v5298, %v5810
  %v6323 = vmax.f32 %v5299, %v5811
  %v6324 = vmax.f32 %v5300, %v5812
  %v6325 = vmax.f32 %v5301, %v5813
  %v6326 = vmax.f32 %v5302, %v5814
  %v6327 = vmax.f32 %v5303, %v5815
  %v6328 = vmax.f32 %v5304, %v5816
  %v6329 = vmax.f32 %v5305, %v5817
  %v6330 = vmax.f32 %v5306, %v5818
  %v6331 = vmax.f32 %v5307, %v5819
  %v6332 = vmax.f32 %v5308, %v5820
  %v6333 = vmax.f32 %v5309, %v5821
  %v6334 = vmax.f32 %v5310, %v5822
  %v6335 = vmax.f32 %v5311, %v5823
  %v6336 = vmax.f32 %v5312, %v5824
  %v6337 = vmax.f32 %v5313, %v5825
  %v6338 = vmax.f32 %v5314, %v5826
  %v6339 = vmax.f32 %v5315, %v5827
  %v6340 = vmax.f32 %v5316, %v5828
  %v6341 = vmax.f32 %v5317, %v5829
  %v6342 = vmax.f32 %v5318, %v5830
  %v6343 = vmax.f32 %v5319, %v5831
  %v6344 = vmax.f32 %v5320, %v5832
  %v6345 = vmax.f32 %v5321, %v5833
  %v6346 = vmax.f32 %v5322, %v5834
  %v6347 = vmax.f32 %v5323, %v5835
  %v6348 = vmax.f32 %v5324, %v5836
  %v6349 = vmax.f32 %v5325, %v5837
  %v6350 = vmax.f32 %v5326, %v5838
  %v6351 = vmax.f32 %v5327, %v5839
  %v6352 = vmax.f32 %v5328, %v5840
  %v6353 = vmax.f32 %v5329, %v5841
  %v6354 = vmax.f32 %v5330, %v5842
  %v6355 = vmax.f32 %v5331, %v5843
  %v6356 = vmax.f32 %v5332, %v5844
  %v6357 = vmax.f32 %v5333, %v5845
  %v6358 = vmax.f32 %v5334, %v5846
  %v6359 = vmax.f32 %v5335, %v5847
  %v6360 = vmax.f32 %v5336, %v5848
  %v6361 = vmax.f32 %v5337, %v5849
  %v6362 = vmax.f32 %v5338, %v5850
  %v6363 = vmax.f32 %v5339, %v5851
  %v6364 = vmax.f32 %v5340, %v5852
  %v6365 = vmax.f32 %v5341, %v5853
  %v6366 = vmax.f32 %v5342, %v5854
  %v6367 = vmax.f32 %v5343, %v5855
  %v6368 = vmax.f32 %v5344, %v5856
  %v6369 = vmax.f32 %v5345, %v5857
  %v6370 = vmax.f32 %v5346, %v5858
  %v6371 = vmax.f32 %v5347, %v5859
  %v6372 = vmax.f32 %v5348, %v5860
  %v6373 = vmax.f32 %v5349, %v5861
  %v6374 = vmax.f32 %v5350, %v5862
  %v6375 = vmax.f32 %v5351, %v5863
  %v6376 = vmax.f32 %v5352, %v5864
  %v6377 = vmax.f32 %v5353, %v5865
  %v6378 = vmax.f32 %v5354, %v5866
  %v6379 = vmax.f32 %v5355, %v5867
  %v6380 = vmax.f32 %v5356, %v5868
  %v6381 = vmax.f32 %v5357, %v5869
  %v6382 = vmax.f32 %v5358, %v5870
  %v6383 = vmax.f32 %v5359, %v5871
  %v6384 = vmax.f32 %v5360, %v5872
  %v6385 = vmax.f32 %v5361, %v5873
  %v6386 = vmax.f32 %v5362, %v5874
  %v6387 = vmax.f32 %v5363, %v5875
  %v6388 = vmax.f32 %v5364, %v5876
  %v6389 = vmax.f32 %v5365, %v5877
  %v6390 = vmax.f32 %v5366, %v5878
  %v6391 = vmax.f32 %v5367, %v5879
  %v6392 = vmax.f32 %v5368, %v5880
  %v6393 = vmax.f32 %v5369, %v5881
  %v6394 = vmax.f32 %v5370, %v5882
  %v6395 = vmax.f32 %v5371, %v5883
  %v6396 = vmax.f32 %v5372, %v5884
  %v6397 = vmax.f32 %v5373, %v5885
  %v6398 = vmax.f32 %v5374, %v5886
  %v6399 = vmax.f32 %v5375, %v5887
  %v6400 = vmax.f32 %v5376, %v5888
  %v6401 = vmax.f32 %v5377, %v5889
  %v6402 = vmax.f32 %v5378, %v5890
  %v6403 = vmax.f32 %v5379, %v5891
  %v6404 = vmax.f32 %v5380, %v5892
  %v6405 = vmax.f32 %v5381, %v5893
  %v6406 = vmax.f32 %v5382, %v5894
  %v6407 = vmax.f32 %v5383, %v5895
  %v6408 = vmax.f32 %v5384, %v5896
  %v6409 = vmax.f32 %v5385, %v5897
  %v6410 = vmax.f32 %v5386, %v5898
  %v6411 = vmax.f32 %v5387, %v5899
  %v6412 = vmax.f32 %v5388, %v5900
  %v6413 = vmax.f32 %v5389, %v5901
  %v6414 = vmax.f32 %v5390, %v5902
  %v6415 = vmax.f32 %v5391, %v5903
  %v6416 = vmax.f32 %v5392, %v5904
  %v6417 = vmax.f32 %v5393, %v5905
  %v6418 = vmax.f32 %v5394, %v5906
  %v6419 = vmax.f32 %v5395, %v5907
  %v6420 = vmax.f32 %v5396, %v5908
  %v6421 = vmax.f32 %v5397, %v5909
  %v6422 = vmax.f32 %v5398, %v5910
  %v6423 = vmax.f32 %v5399, %v5911
  %v6424 = vmax.f32 %v5400, %v5912
  %v6425 = vmax.f32 %v5401, %v5913
  %v6426 = vmax.f32 %v5402, %v5914
  %v6427 = vmax.f32 %v5403, %v5915
  %v6428 = vmax.f32 %v5404, %v5916
  %v6429 = vmax.f32 %v5405, %v5917
  %v6430 = vmax.f32 %v5406, %v5918
  %v6431 = vmax.f32 %v5407, %v5919
  %v6432 = vmax.f32 %v5408, %v5920
  %v6433 = vmax.f32 %v5409, %v5921
  %v6434 = vmax.f32 %v5410, %v5922
  %v6435 = vmax.f32 %v5411, %v5923
  %v6436 = vmax.f32 %v5412, %v5924
  %v6437 = vmax.f32 %v5413, %v5925
  %v6438 = vmax.f32 %v5414, %v5926
  %v6439 = vmax.f32 %v5415, %v5927
  %v6440 = vmax.f32 %v5416, %v5928
  %v6441 = vmax.f32 %v5417, %v5929
  %v6442 = vmax.f32 %v5418, %v5930
  %v6443 = vmax.f32 %v5419, %v5931
  %v6444 = vmax.f32 %v5420, %v5932
  %v6445 = vmax.f32 %v5421, %v5933
  %v6446 = vmax.f32 %v5422, %v5934
  %v6447 = vmax.f32 %v5423, %v5935
  %v6448 = vmax.f32 %v5424, %v5936
  %v6449 = vmax.f32 %v5425, %v5937
  %v6450 = vmax.f32 %v5426, %v5938
  %v6451 = vmax.f32 %v5427, %v5939
  %v6452 = vmax.f32 %v5428, %v5940
  %v6453 = vmax.f32 %v5429, %v5941
  %v6454 = vmax.f32 %v5430, %v5942
  %v6455 = vmax.f32 %v5431, %v5943
  %v6456 = vmax.f32 %v5432, %v5944
  %v6457 = vmax.f32 %v5433, %v5945
  %v6458 = vmax.f32 %v5434, %v5946
  %v6459 = vmax.f32 %v5435, %v5947
  %v6460 = vmax.f32 %v5436, %v5948
  %v6461 = vmax.f32 %v5437, %v5949
  %v6462 = vmax.f32 %v5438, %v5950
  %v6463 = vmax.f32 %v5439, %v5951
  %v6464 = vmax.f32 %v5440, %v5952
  %v6465 = vmax.f32 %v5441, %v5953
  %v6466 = vmax.f32 %v5442, %v5954
  %v6467 = vmax.f32 %v5443, %v5955
  %v6468 = vmax.f32 %v5444, %v5956
  %v6469 = vmax.f32 %v5445, %v5957
  %v6470 = vmax.f32 %v5446, %v5958
  %v6471 = vmax.f32 %v5447, %v5959
  %v6472 = vmax.f32 %v5448, %v5960
  %v6473 = vmax.f32 %v5449, %v5961
  %v6474 = vmax.f32 %v5450, %v5962
  %v6475 = vmax.f32 %v5451, %v5963
  %v6476 = vmax.f32 %v5452, %v5964
  %v6477 = vmax.f32 %v5453, %v5965
  %v6478 = vmax.f32 %v5454, %v5966
  %v6479 = vmax.f32 %v5455, %v5967
  %v6480 = vmax.f32 %v5456, %v5968
  %v6481 = vmax.f32 %v5457, %v5969
  %v6482 = vmax.f32 %v5458, %v5970
  %v6483 = vmax.f32 %v5459, %v5971
  %v6484 = vmax.f32 %v5460, %v5972
  %v6485 = vmax.f32 %v5461, %v5973
  %v6486 = vmax.f32 %v5462, %v5974
  %v6487 = vmax.f32 %v5463, %v5975
  %v6488 = vmax.f32 %v5464, %v5976
  %v6489 = vmax.f32 %v5465, %v5977
  %v6490 = vmax.f32 %v5466, %v5978
  %v6491 = vmax.f32 %v5467, %v5979
  %v6492 = vmax.f32 %v5468, %v5980
  %v6493 = vmax.f32 %v5469, %v5981
  %v6494 = vmax.f32 %v5470, %v5982
  %v6495 = vmax.f32 %v5471, %v5983
  %v6496 = vmax.f32 %v5472, %v5984
  %v6497 = vmax.f32 %v5473, %v5985
  %v6498 = vmax.f32 %v5474, %v5986
  %v6499 = vmax.f32 %v5475, %v5987
  %v6500 = vmax.f32 %v5476, %v5988
  %v6501 = vmax.f32 %v5477, %v5989
  %v6502 = vmax.f32 %v5478, %v5990
  %v6503 = vmax.f32 %v5479, %v5991
  %v6504 = vmax.f32 %v5480, %v5992
  %v6505 = vmax.f32 %v5481, %v5993
  %v6506 = vmax.f32 %v5482, %v5994
  %v6507 = vmax.f32 %v5483, %v5995
  %v6508 = vmax.f32 %v5484, %v5996
  %v6509 = vmax.f32 %v5485, %v5997
  %v6510 = vmax.f32 %v5486, %v5998
  %v6511 = vmax.f32 %v5487, %v5999
  %v6512 = vmax.f32 %v5488, %v6000
  %v6513 = vmax.f32 %v5489, %v6001
  %v6514 = vmax.f32 %v5490, %v6002
  %v6515 = vmax.f32 %v5491, %v6003
  %v6516 = vmax.f32 %v5492, %v6004
  %v6517 = vmax.f32 %v5493, %v6005
  %v6518 = vmax.f32 %v5494, %v6006
  %v6519 = vmax.f32 %v5495, %v6007
  %v6520 = vmax.f32 %v5496, %v6008
  %v6521 = vmax.f32 %v5497, %v6009
  %v6522 = vmax.f32 %v5498, %v6010
  %v6523 = vmax.f32 %v5499, %v6011
  %v6524 = vmax.f32 %v5500, %v6012
  %v6525 = vmax.f32 %v5501, %v6013
  %v6526 = vmax.f32 %v5502, %v6014
  %v6527 = vmax.f32 %v5503, %v6015
  %v6528 = vmax.f32 %v5504, %v6016
  %v6529 = vmax.f32 %v5505, %v6017
  %v6530 = vmax.f32 %v5506, %v6018
  %v6531 = vmax.f32 %v5507, %v6019
  %v6532 = vmax.f32 %v5508, %v6020
  %v6533 = vmax.f32 %v5509, %v6021
  %v6534 = vmax.f32 %v5510, %v6022
  %v6535 = vmax.f32 %v5511, %v6023
  %v6536 = vmax.f32 %v5512, %v6024
  %v6537 = vmax.f32 %v5513, %v6025
  %v6538 = vmax.f32 %v5514, %v6026
  %v6539 = vmax.f32 %v5515, %v6027
  %v6540 = vmax.f32 %v5516, %v6028
  %v6541 = vmax.f32 %v5517, %v6029
  %v6542 = vmax.f32 %v5518, %v6030
  %v6543 = vmax.f32 %v5519, %v6031
  %v6544 = vmax.f32 %v5520, %v6032
  %v6545 = vmax.f32 %v5521, %v6033
  %v6546 = vmax.f32 %v5522, %v6034
  %v6547 = vmax.f32 %v5523, %v6035
  %v6548 = vmax.f32 %v5524, %v6036
  %v6549 = vmax.f32 %v5525, %v6037
  %v6550 = vmax.f32 %v5526, %v6038
  %v6551 = vmax.f32 %v5527, %v6039
  %v6552 = vmax.f32 %v5528, %v6040
  %v6553 = vmax.f32 %v5529, %v6041
  %v6554 = vmax.f32 %v5530, %v6042
  %v6555 = vmax.f32 %v5531, %v6043
  %v6556 = vmax.f32 %v5532, %v6044
  %v6557 = vmax.f32 %v5533, %v6045
  %v6558 = vmax.f32 %v5534, %v6046
  %v6559 = vmax.f32 %v5535, %v6047
  %v6560 = vmax.f32 %v5536, %v6048
  %v6561 = vmax.f32 %v5537, %v6049
  %v6562 = vmax.f32 %v5538, %v6050
  %v6563 = vmax.f32 %v5539, %v6051
  %v6564 = vmax.f32 %v5540, %v6052
  %v6565 = vmax.f32 %v5541, %v6053
  %v6566 = vmax.f32 %v5542, %v6054
  %v6567 = vmax.f32 %v5543, %v6055
  %v6568 = vmax.f32 %v5544, %v6056
  %v6569 = vmax.f32 %v5545, %v6057
  %v6570 = vmax.f32 %v5546, %v6058
  %v6571 = vmax.f32 %v5547, %v6059
  %v6572 = vmax.f32 %v5548, %v6060
  %v6573 = vmax.f32 %v5549, %v6061
  %v6574 = vmax.f32 %v5550, %v6062
  %v6575 = vmax.f32 %v5551, %v6063
  %v6576 = vmax.f32 %v5552, %v6064
  %v6577 = vmax.f32 %v5553, %v6065
  %v6578 = vmax.f32 %v5554, %v6066
  %v6579 = vmax.f32 %v5555, %v6067
  %v6580 = vmax.f32 %v5556, %v6068
  %v6581 = vmax.f32 %v5557, %v6069
  %v6582 = vmax.f32 %v5558, %v6070
  %v6583 = vmax.f32 %v5559, %v6071
  %v6584 = vmax.f32 %v5560, %v6072
  %v6585 = vmax.f32 %v5561, %v6073
  %v6586 = vmax.f32 %v5562, %v6074
  %v6587 = vmax.f32 %v5563, %v6075
  %v6588 = vmax.f32 %v5564, %v6076
  %v6589 = vmax.f32 %v5565, %v6077
  %v6590 = vmax.f32 %v5566, %v6078
  %v6591 = vmax.f32 %v5567, %v6079
  %v6592 = vmax.f32 %v5568, %v6080
  %v6593 = vmax.f32 %v5569, %v6081
  %v6594 = vmax.f32 %v5570, %v6082
  %v6595 = vmax.f32 %v5571, %v6083
  %v6596 = vmax.f32 %v5572, %v6084
  %v6597 = vmax.f32 %v5573, %v6085
  %v6598 = vmax.f32 %v5574, %v6086
  %v6599 = vmax.f32 %v5575, %v6087
  %v6600 = vmax.f32 %v5576, %v6088
  %v6601 = vmax.f32 %v5577, %v6089
  %v6602 = vmax.f32 %v5578, %v6090
  %v6603 = vmax.f32 %v5579, %v6091
  %v6604 = vmax.f32 %v5580, %v6092
  %v6605 = vmax.f32 %v5581, %v6093
  %v6606 = vmax.f32 %v5582, %v6094
  %v6607 = vmax.f32 %v5583, %v6095
  %v6608 = vmax.f32 %v5584, %v6096
  %v6609 = vmax.f32 %v5585, %v6097
  %v6610 = vmax.f32 %v5586, %v6098
  %v6611 = vmax.f32 %v5587, %v6099
  %v6612 = vmax.f32 %v5588, %v6100
  %v6613 = vmax.f32 %v5589, %v6101
  %v6614 = vmax.f32 %v5590, %v6102
  %v6615 = vmax.f32 %v5591, %v6103
  %v6616 = vmax.f32 %v5592, %v6104
  %v6617 = vmax.f32 %v5593, %v6105
  %v6618 = vmax.f32 %v5594, %v6106
  %v6619 = vmax.f32 %v5595, %v6107
  %v6620 = vmax.f32 %v5596, %v6108
  %v6621 = vmax.f32 %v5597, %v6109
  %v6622 = vmax.f32 %v5598, %v6110
  %v6623 = vmax.f32 %v5599, %v6111
  %v6624 = vmax.f32 %v5600, %v6112
  %v6625 = vmax.f32 %v5601, %v6113
  %v6626 = vmax.f32 %v5602, %v6114
  %v6627 = vmax.f32 %v5603, %v6115
  %v6628 = vmax.f32 %v5604, %v6116
  %v6629 = vmax.f32 %v5605, %v6117
  %v6630 = vmax.f32 %v5606, %v6118
  %v6631 = vmax.f32 %v5607, %v6119
  %v6632 = vmax.f32 %v5608, %v6120
  %v6633 = vmax.f32 %v5609, %v6121
  %v6634 = vmax.f32 %v5610, %v6122
  %v6635 = vmax.f32 %v5611, %v6123
  %v6636 = vmax.f32 %v5612, %v6124
  %v6637 = vmax.f32 %v5613, %v6125
  %v6638 = vmax.f32 %v5614, %v6126
  %v6639 = vmax.f32 %v5615, %v6127
  %v6640 = vmax.f32 %v5616, %v6128
  %v6641 = vmax.f32 %v5617, %v6129
  %v6642 = vmax.f32 %v5618, %v6130
  %v6643 = vmax.f32 %v5619, %v6131
  %v6644 = vmax.f32 %v5620, %v6132
  %v6645 = vmax.f32 %v5621, %v6133
  %v6646 = vmax.f32 %v5622, %v6134
  %v6647 = vmax.f32 %v5623, %v6135
  %v6648 = vmax.f32 %v5624, %v6136
  %v6649 = vmax.f32 %v5625, %v6137
  %v6650 = vmax.f32 %v5626, %v6138
  %v6651 = vmax.f32 %v5627, %v6139
  %v6652 = vmax.f32 %v5628, %v6140
  %v6653 = vmax.f32 %v5629, %v6141
  %v6654 = vmax.f32 %v5630, %v6142
  %v6655 = vmax.f32 %v5631, %v6143
  %v6656 = vmax.f32 %v5632, %v6144
  %v6657 = vmax.f32 %v5633, %v6145
  %v6658 = vmax.f32 %v5634, %v6146
  %v6659 = vmax.f32 %v5635, %v6147
  %v6660 = vmax.f32 %v5636, %v6148
  %v6661 = vmax.f32 %v5637, %v6149
  %v6662 = vmax.f32 %v5638, %v6150
  %v6663 = vmax.f32 %v5639, %v6151
  %v6664 = vmax.f32 %v5640, %v6152
  %v6665 = vmax.f32 %v5641, %v6153
  %v6666 = vmax.f32 %v5642, %v6154
  %v6667 = vmax.f32 %v5643, %v6155
  %v6668 = vmax.f32 %v5644, %v6156
  %v6669 = vmax.f32 %v5645, %v6157
  %v6670 = vmax.f32 %v5646, %v6158
  %v6671 = vmax.f32 %v5647, %v6159
  %v6672 = vmax.f32 %v5648, %v6160
  %v6673 = vmax.f32 %v5649, %v6161
  %v6674 = vmax.f32 %v5650, %v6162
  %v6675 = vmax.f32 %v5651, %v6163
  %v6676 = vmax.f32 %v5652, %v6164
  %v6677 = vmax.f32 %v5653, %v6165
  %v6678 = vmax.f32 %v5654, %v6166
  %v6679 = vmax.f32 %v5655, %v6167
  %v6680 = vmax.f32 %v5656, %v6168
  %v6681 = vmax.f32 %v5657, %v6169
  %v6682 = vmax.f32 %v5658, %v6170
  %v6683 = vmax.f32 %v5659, %v6171
  %v6684 = vmax.f32 %v5660, %v6172
  %v6685 = vmax.f32 %v5661, %v6173
  %v6686 = vmax.f32 %v5662, %v6174
  %v6687 = vmax.f32 %v5663, %v6175
  %v6688 = vmax.f32 %v5664, %v6176
  %v6689 = vmax.f32 %v5665, %v6177
  %v6690 = vmax.f32 %v5666, %v6178
  %v6691 = vmax.f32 %v5667, %v6179
  %v6692 = vmax.f32 %v5668, %v6180
  %v6693 = vmax.f32 %v5669, %v6181
  %v6694 = vmax.f32 %v5670, %v6182
  %v6695 = vmax.f32 %v5671, %v6183
  %v6696 = vmax.f32 %v5672, %v6184
  %v6697 = vmax.f32 %v5673, %v6185
  %v6698 = vmax.f32 %v5674, %v6186
  %v6699 = vmax.f32 %v5675, %v6187
  %v6700 = vmax.f32 %v5676, %v6188
  %v6701 = vmax.f32 %v5677, %v6189
  %v6702 = vmax.f32 %v5678, %v6190
  %v6703 = vmax.f32 %v5679, %v6191
  %v6704 = vmax.f32 %v5680, %v6192
  %v6705 = vmax.f32 %v5681, %v6193
  %v6706 = vmax.f32 %v5682, %v6194
  %v6707 = vmax.f32 %v5683, %v6195
  %v6708 = vmax.f32 %v5684, %v6196
  %v6709 = vmax.f32 %v5685, %v6197
  %v6710 = vmax.f32 %v5686, %v6198
  %v6711 = vmax.f32 %v5687, %v6199
  %v6712 = vmax.f32 %v5688, %v6200
  %v6713 = vmax.f32 %v5689, %v6201
  %v6714 = vmax.f32 %v5690, %v6202
  %v6715 = vmax.f32 %v5691, %v6203
  %v6716 = vmax.f32 %v5692, %v6204
  %v6717 = vmax.f32 %v5693, %v6205
  %v6718 = vmax.f32 %v5694, %v6206
  %v6719 = vmax.f32 %v5695, %v6207
  %v6720 = vmax.f32 %v5696, %v6208
  %v6721 = vmax.f32 %v5697, %v6209
  %v6722 = vmax.f32 %v5698, %v6210
  %v6723 = vmax.f32 %v5699, %v6211
  %v6724 = vmax.f32 %v5700, %v6212
  %v6725 = vmax.f32 %v5701, %v6213
  %v6726 = vmax.f32 %v5702, %v6214
  %v6727 = vmax.f32 %v5703, %v6215
  %v6728 = vmax.f32 %v5704, %v6216
  %v6729 = vmax.f32 %v5705, %v6217
  %v6730 = vmax.f32 %v5706, %v6218
  %v6731 = vmax.f32 %v5707, %v6219
  %v6732 = vmax.f32 %v5708, %v6220
  %v6733 = vmax.f32 %v5709, %v6221
  %v6734 = vmax.f32 %v5710, %v6222
  %v6735 = vmax.f32 %v5711, %v6223
  %v6736 = vmax.f32 %v5712, %v6224
  %v6737 = vmax.f32 %v5713, %v6225
  %v6738 = vmax.f32 %v5714, %v6226
  %v6739 = vmax.f32 %v5715, %v6227
  %v6740 = vmax.f32 %v5716, %v6228
  %v6741 = vmax.f32 %v5717, %v6229
  %v6742 = vmax.f32 %v5718, %v6230
  %v6743 = vmax.f32 %v5719, %v6231
  %v6744 = vmax.f32 %v5720, %v6232
  %v6745 = vmax.f32 %v5721, %v6233
  %v6746 = vmax.f32 %v5722, %v6234
  %v6747 = vmax.f32 %v5723, %v6235
  %v6748 = vmax.f32 %v5724, %v6236
  %v6749 = vmax.f32 %v5725, %v6237
  %v6750 = vmax.f32 %v5726, %v6238
  %v6751 = vmax.f32 %v5727, %v6239
  %v6752 = vmax.f32 %v5728, %v6240
  %v6753 = vmax.f32 %v5729, %v6241
  %v6754 = vmax.f32 %v5730, %v6242
  %v6755 = vmax.f32 %v5731, %v6243
  %v6756 = vmax.f32 %v5732, %v6244
  %v6757 = vmax.f32 %v5733, %v6245
  %v6758 = vmax.f32 %v5734, %v6246
  %v6759 = vmax.f32 %v5735, %v6247
  %v6760 = vmax.f32 %v5736, %v6248
  %vm6761 = vcmask 523264
  %v6762 = vsel %vm6761, %v6249, 0.0
  %v6763 = vsel %vm6761, %v6250, 0.0
  %v6764 = vadd.f32 %v6762, %v6763
  %v6765 = vsel %vm6761, %v6251, 0.0
  %v6766 = vadd.f32 %v6764, %v6765
  %v6767 = vsel %vm6761, %v6252, 0.0
  %v6768 = vadd.f32 %v6766, %v6767
  %v6769 = vsel %vm6761, %v6253, 0.0
  %v6770 = vadd.f32 %v6768, %v6769
  %v6771 = vsel %vm6761, %v6254, 0.0
  %v6772 = vadd.f32 %v6770, %v6771
  %v6773 = vsel %vm6761, %v6255, 0.0
  %v6774 = vadd.f32 %v6772, %v6773
  %v6775 = vsel %vm6761, %v6256, 0.0
  %v6776 = vadd.f32 %v6774, %v6775
  %v6777 = vsel %vm6761, %v6257, 0.0
  %v6778 = vadd.f32 %v6776, %v6777
  %v6779 = vsel %vm6761, %v6258, 0.0
  %v6780 = vadd.f32 %v6778, %v6779
  %v6781 = vsel %vm6761, %v6259, 0.0
  %v6782 = vadd.f32 %v6780, %v6781
  %v6783 = vsel %vm6761, %v6260, 0.0
  %v6784 = vadd.f32 %v6782, %v6783
  %v6785 = vsel %vm6761, %v6261, 0.0
  %v6786 = vadd.f32 %v6784, %v6785
  %v6787 = vsel %vm6761, %v6262, 0.0
  %v6788 = vadd.f32 %v6786, %v6787
  %v6789 = vsel %vm6761, %v6263, 0.0
  %v6790 = vadd.f32 %v6788, %v6789
  %v6791 = vsel %vm6761, %v6264, 0.0
  %v6792 = vadd.f32 %v6790, %v6791
  %v6793 = vsel %vm6761, %v6265, 0.0
  %v6794 = vadd.f32 %v6792, %v6793
  %v6795 = vsel %vm6761, %v6266, 0.0
  %v6796 = vadd.f32 %v6794, %v6795
  %v6797 = vsel %vm6761, %v6267, 0.0
  %v6798 = vadd.f32 %v6796, %v6797
  %v6799 = vsel %vm6761, %v6268, 0.0
  %v6800 = vadd.f32 %v6798, %v6799
  %v6801 = vsel %vm6761, %v6269, 0.0
  %v6802 = vadd.f32 %v6800, %v6801
  %v6803 = vsel %vm6761, %v6270, 0.0
  %v6804 = vadd.f32 %v6802, %v6803
  %v6805 = vsel %vm6761, %v6271, 0.0
  %v6806 = vadd.f32 %v6804, %v6805
  %v6807 = vsel %vm6761, %v6272, 0.0
  %v6808 = vadd.f32 %v6806, %v6807
  %v6809 = vsel %vm6761, %v6273, 0.0
  %v6810 = vadd.f32 %v6808, %v6809
  %v6811 = vsel %vm6761, %v6274, 0.0
  %v6812 = vadd.f32 %v6810, %v6811
  %v6813 = vsel %vm6761, %v6275, 0.0
  %v6814 = vadd.f32 %v6812, %v6813
  %v6815 = vsel %vm6761, %v6276, 0.0
  %v6816 = vadd.f32 %v6814, %v6815
  %v6817 = vsel %vm6761, %v6277, 0.0
  %v6818 = vadd.f32 %v6816, %v6817
  %v6819 = vsel %vm6761, %v6278, 0.0
  %v6820 = vadd.f32 %v6818, %v6819
  %v6821 = vsel %vm6761, %v6279, 0.0
  %v6822 = vadd.f32 %v6820, %v6821
  %v6823 = vsel %vm6761, %v6280, 0.0
  %v6824 = vadd.f32 %v6822, %v6823
  %v6825 = vrot.slane %v6824, 4
  %v6826 = vadd.f32 %v6824, %v6825
  %v6827 = vrot.slane %v6826, 2
  %v6828 = vadd.f32 %v6826, %v6827
  %v6829 = vrot.slane %v6828, 1
  %v6830 = vadd.f32 %v6828, %v6829
  %v6831 = vsel %vm6761, %v6281, 0.0
  %v6832 = vsel %vm6761, %v6282, 0.0
  %v6833 = vadd.f32 %v6831, %v6832
  %v6834 = vsel %vm6761, %v6283, 0.0
  %v6835 = vadd.f32 %v6833, %v6834
  %v6836 = vsel %vm6761, %v6284, 0.0
  %v6837 = vadd.f32 %v6835, %v6836
  %v6838 = vsel %vm6761, %v6285, 0.0
  %v6839 = vadd.f32 %v6837, %v6838
  %v6840 = vsel %vm6761, %v6286, 0.0
  %v6841 = vadd.f32 %v6839, %v6840
  %v6842 = vsel %vm6761, %v6287, 0.0
  %v6843 = vadd.f32 %v6841, %v6842
  %v6844 = vsel %vm6761, %v6288, 0.0
  %v6845 = vadd.f32 %v6843, %v6844
  %v6846 = vsel %vm6761, %v6289, 0.0
  %v6847 = vadd.f32 %v6845, %v6846
  %v6848 = vsel %vm6761, %v6290, 0.0
  %v6849 = vadd.f32 %v6847, %v6848
  %v6850 = vsel %vm6761, %v6291, 0.0
  %v6851 = vadd.f32 %v6849, %v6850
  %v6852 = vsel %vm6761, %v6292, 0.0
  %v6853 = vadd.f32 %v6851, %v6852
  %v6854 = vsel %vm6761, %v6293, 0.0
  %v6855 = vadd.f32 %v6853, %v6854
  %v6856 = vsel %vm6761, %v6294, 0.0
  %v6857 = vadd.f32 %v6855, %v6856
  %v6858 = vsel %vm6761, %v6295, 0.0
  %v6859 = vadd.f32 %v6857, %v6858
  %v6860 = vsel %vm6761, %v6296, 0.0
  %v6861 = vadd.f32 %v6859, %v6860
  %v6862 = vsel %vm6761, %v6297, 0.0
  %v6863 = vadd.f32 %v6861, %v6862
  %v6864 = vsel %vm6761, %v6298, 0.0
  %v6865 = vadd.f32 %v6863, %v6864
  %v6866 = vsel %vm6761, %v6299, 0.0
  %v6867 = vadd.f32 %v6865, %v6866
  %v6868 = vsel %vm6761, %v6300, 0.0
  %v6869 = vadd.f32 %v6867, %v6868
  %v6870 = vsel %vm6761, %v6301, 0.0
  %v6871 = vadd.f32 %v6869, %v6870
  %v6872 = vsel %vm6761, %v6302, 0.0
  %v6873 = vadd.f32 %v6871, %v6872
  %v6874 = vsel %vm6761, %v6303, 0.0
  %v6875 = vadd.f32 %v6873, %v6874
  %v6876 = vsel %vm6761, %v6304, 0.0
  %v6877 = vadd.f32 %v6875, %v6876
  %v6878 = vsel %vm6761, %v6305, 0.0
  %v6879 = vadd.f32 %v6877, %v6878
  %v6880 = vsel %vm6761, %v6306, 0.0
  %v6881 = vadd.f32 %v6879, %v6880
  %v6882 = vsel %vm6761, %v6307, 0.0
  %v6883 = vadd.f32 %v6881, %v6882
  %v6884 = vsel %vm6761, %v6308, 0.0
  %v6885 = vadd.f32 %v6883, %v6884
  %v6886 = vsel %vm6761, %v6309, 0.0
  %v6887 = vadd.f32 %v6885, %v6886
  %v6888 = vsel %vm6761, %v6310, 0.0
  %v6889 = vadd.f32 %v6887, %v6888
  %v6890 = vsel %vm6761, %v6311, 0.0
  %v6891 = vadd.f32 %v6889, %v6890
  %v6892 = vsel %vm6761, %v6312, 0.0
  %v6893 = vadd.f32 %v6891, %v6892
  %v6894 = vrot.slane %v6893, 4
  %v6895 = vadd.f32 %v6893, %v6894
  %v6896 = vrot.slane %v6895, 2
  %v6897 = vadd.f32 %v6895, %v6896
  %v6898 = vrot.slane %v6897, 1
  %v6899 = vadd.f32 %v6897, %v6898
  %v6900 = vsel %vm6761, %v6313, 0.0
  %v6901 = vsel %vm6761, %v6314, 0.0
  %v6902 = vadd.f32 %v6900, %v6901
  %v6903 = vsel %vm6761, %v6315, 0.0
  %v6904 = vadd.f32 %v6902, %v6903
  %v6905 = vsel %vm6761, %v6316, 0.0
  %v6906 = vadd.f32 %v6904, %v6905
  %v6907 = vsel %vm6761, %v6317, 0.0
  %v6908 = vadd.f32 %v6906, %v6907
  %v6909 = vsel %vm6761, %v6318, 0.0
  %v6910 = vadd.f32 %v6908, %v6909
  %v6911 = vsel %vm6761, %v6319, 0.0
  %v6912 = vadd.f32 %v6910, %v6911
  %v6913 = vsel %vm6761, %v6320, 0.0
  %v6914 = vadd.f32 %v6912, %v6913
  %v6915 = vsel %vm6761, %v6321, 0.0
  %v6916 = vadd.f32 %v6914, %v6915
  %v6917 = vsel %vm6761, %v6322, 0.0
  %v6918 = vadd.f32 %v6916, %v6917
  %v6919 = vsel %vm6761, %v6323, 0.0
  %v6920 = vadd.f32 %v6918, %v6919
  %v6921 = vsel %vm6761, %v6324, 0.0
  %v6922 = vadd.f32 %v6920, %v6921
  %v6923 = vsel %vm6761, %v6325, 0.0
  %v6924 = vadd.f32 %v6922, %v6923
  %v6925 = vsel %vm6761, %v6326, 0.0
  %v6926 = vadd.f32 %v6924, %v6925
  %v6927 = vsel %vm6761, %v6327, 0.0
  %v6928 = vadd.f32 %v6926, %v6927
  %v6929 = vsel %vm6761, %v6328, 0.0
  %v6930 = vadd.f32 %v6928, %v6929
  %v6931 = vsel %vm6761, %v6329, 0.0
  %v6932 = vadd.f32 %v6930, %v6931
  %v6933 = vsel %vm6761, %v6330, 0.0
  %v6934 = vadd.f32 %v6932, %v6933
  %v6935 = vsel %vm6761, %v6331, 0.0
  %v6936 = vadd.f32 %v6934, %v6935
  %v6937 = vsel %vm6761, %v6332, 0.0
  %v6938 = vadd.f32 %v6936, %v6937
  %v6939 = vsel %vm6761, %v6333, 0.0
  %v6940 = vadd.f32 %v6938, %v6939
  %v6941 = vsel %vm6761, %v6334, 0.0
  %v6942 = vadd.f32 %v6940, %v6941
  %v6943 = vsel %vm6761, %v6335, 0.0
  %v6944 = vadd.f32 %v6942, %v6943
  %v6945 = vsel %vm6761, %v6336, 0.0
  %v6946 = vadd.f32 %v6944, %v6945
  %v6947 = vsel %vm6761, %v6337, 0.0
  %v6948 = vadd.f32 %v6946, %v6947
  %v6949 = vsel %vm6761, %v6338, 0.0
  %v6950 = vadd.f32 %v6948, %v6949
  %v6951 = vsel %vm6761, %v6339, 0.0
  %v6952 = vadd.f32 %v6950, %v6951
  %v6953 = vsel %vm6761, %v6340, 0.0
  %v6954 = vadd.f32 %v6952, %v6953
  %v6955 = vsel %vm6761, %v6341, 0.0
  %v6956 = vadd.f32 %v6954, %v6955
  %v6957 = vsel %vm6761, %v6342, 0.0
  %v6958 = vadd.f32 %v6956, %v6957
  %v6959 = vsel %vm6761, %v6343, 0.0
  %v6960 = vadd.f32 %v6958, %v6959
  %v6961 = vsel %vm6761, %v6344, 0.0
  %v6962 = vadd.f32 %v6960, %v6961
  %v6963 = vrot.slane %v6962, 4
  %v6964 = vadd.f32 %v6962, %v6963
  %v6965 = vrot.slane %v6964, 2
  %v6966 = vadd.f32 %v6964, %v6965
  %v6967 = vrot.slane %v6966, 1
  %v6968 = vadd.f32 %v6966, %v6967
  %v6969 = vsel %vm6761, %v6345, 0.0
  %v6970 = vsel %vm6761, %v6346, 0.0
  %v6971 = vadd.f32 %v6969, %v6970
  %v6972 = vsel %vm6761, %v6347, 0.0
  %v6973 = vadd.f32 %v6971, %v6972
  %v6974 = vsel %vm6761, %v6348, 0.0
  %v6975 = vadd.f32 %v6973, %v6974
  %v6976 = vsel %vm6761, %v6349, 0.0
  %v6977 = vadd.f32 %v6975, %v6976
  %v6978 = vsel %vm6761, %v6350, 0.0
  %v6979 = vadd.f32 %v6977, %v6978
  %v6980 = vsel %vm6761, %v6351, 0.0
  %v6981 = vadd.f32 %v6979, %v6980
  %v6982 = vsel %vm6761, %v6352, 0.0
  %v6983 = vadd.f32 %v6981, %v6982
  %v6984 = vsel %vm6761, %v6353, 0.0
  %v6985 = vadd.f32 %v6983, %v6984
  %v6986 = vsel %vm6761, %v6354, 0.0
  %v6987 = vadd.f32 %v6985, %v6986
  %v6988 = vsel %vm6761, %v6355, 0.0
  %v6989 = vadd.f32 %v6987, %v6988
  %v6990 = vsel %vm6761, %v6356, 0.0
  %v6991 = vadd.f32 %v6989, %v6990
  %v6992 = vsel %vm6761, %v6357, 0.0
  %v6993 = vadd.f32 %v6991, %v6992
  %v6994 = vsel %vm6761, %v6358, 0.0
  %v6995 = vadd.f32 %v6993, %v6994
  %v6996 = vsel %vm6761, %v6359, 0.0
  %v6997 = vadd.f32 %v6995, %v6996
  %v6998 = vsel %vm6761, %v6360, 0.0
  %v6999 = vadd.f32 %v6997, %v6998
  %v7000 = vsel %vm6761, %v6361, 0.0
  %v7001 = vadd.f32 %v6999, %v7000
  %v7002 = vsel %vm6761, %v6362, 0.0
  %v7003 = vadd.f32 %v7001, %v7002
  %v7004 = vsel %vm6761, %v6363, 0.0
  %v7005 = vadd.f32 %v7003, %v7004
  %v7006 = vsel %vm6761, %v6364, 0.0
  %v7007 = vadd.f32 %v7005, %v7006
  %v7008 = vsel %vm6761, %v6365, 0.0
  %v7009 = vadd.f32 %v7007, %v7008
  %v7010 = vsel %vm6761, %v6366, 0.0
  %v7011 = vadd.f32 %v7009, %v7010
  %v7012 = vsel %vm6761, %v6367, 0.0
  %v7013 = vadd.f32 %v7011, %v7012
  %v7014 = vsel %vm6761, %v6368, 0.0
  %v7015 = vadd.f32 %v7013, %v7014
  %v7016 = vsel %vm6761, %v6369, 0.0
  %v7017 = vadd.f32 %v7015, %v7016
  %v7018 = vsel %vm6761, %v6370, 0.0
  %v7019 = vadd.f32 %v7017, %v7018
  %v7020 = vsel %vm6761, %v6371, 0.0
  %v7021 = vadd.f32 %v7019, %v7020
  %v7022 = vsel %vm6761, %v6372, 0.0
  %v7023 = vadd.f32 %v7021, %v7022
  %v7024 = vsel %vm6761, %v6373, 0.0
  %v7025 = vadd.f32 %v7023, %v7024
  %v7026 = vsel %vm6761, %v6374, 0.0
  %v7027 = vadd.f32 %v7025, %v7026
  %v7028 = vsel %vm6761, %v6375, 0.0
  %v7029 = vadd.f32 %v7027, %v7028
  %v7030 = vsel %vm6761, %v6376, 0.0
  %v7031 = vadd.f32 %v7029, %v7030
  %v7032 = vrot.slane %v7031, 4
  %v7033 = vadd.f32 %v7031, %v7032
  %v7034 = vrot.slane %v7033, 2
  %v7035 = vadd.f32 %v7033, %v7034
  %v7036 = vrot.slane %v7035, 1
  %v7037 = vadd.f32 %v7035, %v7036
  %v7038 = vsel %vm6761, %v6377, 0.0
  %v7039 = vsel %vm6761, %v6378, 0.0
  %v7040 = vadd.f32 %v7038, %v7039
  %v7041 = vsel %vm6761, %v6379, 0.0
  %v7042 = vadd.f32 %v7040, %v7041
  %v7043 = vsel %vm6761, %v6380, 0.0
  %v7044 = vadd.f32 %v7042, %v7043
  %v7045 = vsel %vm6761, %v6381, 0.0
  %v7046 = vadd.f32 %v7044, %v7045
  %v7047 = vsel %vm6761, %v6382, 0.0
  %v7048 = vadd.f32 %v7046, %v7047
  %v7049 = vsel %vm6761, %v6383, 0.0
  %v7050 = vadd.f32 %v7048, %v7049
  %v7051 = vsel %vm6761, %v6384, 0.0
  %v7052 = vadd.f32 %v7050, %v7051
  %v7053 = vsel %vm6761, %v6385, 0.0
  %v7054 = vadd.f32 %v7052, %v7053
  %v7055 = vsel %vm6761, %v6386, 0.0
  %v7056 = vadd.f32 %v7054, %v7055
  %v7057 = vsel %vm6761, %v6387, 0.0
  %v7058 = vadd.f32 %v7056, %v7057
  %v7059 = vsel %vm6761, %v6388, 0.0
  %v7060 = vadd.f32 %v7058, %v7059
  %v7061 = vsel %vm6761, %v6389, 0.0
  %v7062 = vadd.f32 %v7060, %v7061
  %v7063 = vsel %vm6761, %v6390, 0.0
  %v7064 = vadd.f32 %v7062, %v7063
  %v7065 = vsel %vm6761, %v6391, 0.0
  %v7066 = vadd.f32 %v7064, %v7065
  %v7067 = vsel %vm6761, %v6392, 0.0
  %v7068 = vadd.f32 %v7066, %v7067
  %v7069 = vsel %vm6761, %v6393, 0.0
  %v7070 = vadd.f32 %v7068, %v7069
  %v7071 = vsel %vm6761, %v6394, 0.0
  %v7072 = vadd.f32 %v7070, %v7071
  %v7073 = vsel %vm6761, %v6395, 0.0
  %v7074 = vadd.f32 %v7072, %v7073
  %v7075 = vsel %vm6761, %v6396, 0.0
  %v7076 = vadd.f32 %v7074, %v7075
  %v7077 = vsel %vm6761, %v6397, 0.0
  %v7078 = vadd.f32 %v7076, %v7077
  %v7079 = vsel %vm6761, %v6398, 0.0
  %v7080 = vadd.f32 %v7078, %v7079
  %v7081 = vsel %vm6761, %v6399, 0.0
  %v7082 = vadd.f32 %v7080, %v7081
  %v7083 = vsel %vm6761, %v6400, 0.0
  %v7084 = vadd.f32 %v7082, %v7083
  %v7085 = vsel %vm6761, %v6401, 0.0
  %v7086 = vadd.f32 %v7084, %v7085
  %v7087 = vsel %vm6761, %v6402, 0.0
  %v7088 = vadd.f32 %v7086, %v7087
  %v7089 = vsel %vm6761, %v6403, 0.0
  %v7090 = vadd.f32 %v7088, %v7089
  %v7091 = vsel %vm6761, %v6404, 0.0
  %v7092 = vadd.f32 %v7090, %v7091
  %v7093 = vsel %vm6761, %v6405, 0.0
  %v7094 = vadd.f32 %v7092, %v7093
  %v7095 = vsel %vm6761, %v6406, 0.0
  %v7096 = vadd.f32 %v7094, %v7095
  %v7097 = vsel %vm6761, %v6407, 0.0
  %v7098 = vadd.f32 %v7096, %v7097
  %v7099 = vsel %vm6761, %v6408, 0.0
  %v7100 = vadd.f32 %v7098, %v7099
  %v7101 = vrot.slane %v7100, 4
  %v7102 = vadd.f32 %v7100, %v7101
  %v7103 = vrot.slane %v7102, 2
  %v7104 = vadd.f32 %v7102, %v7103
  %v7105 = vrot.slane %v7104, 1
  %v7106 = vadd.f32 %v7104, %v7105
  %v7107 = vsel %vm6761, %v6409, 0.0
  %v7108 = vsel %vm6761, %v6410, 0.0
  %v7109 = vadd.f32 %v7107, %v7108
  %v7110 = vsel %vm6761, %v6411, 0.0
  %v7111 = vadd.f32 %v7109, %v7110
  %v7112 = vsel %vm6761, %v6412, 0.0
  %v7113 = vadd.f32 %v7111, %v7112
  %v7114 = vsel %vm6761, %v6413, 0.0
  %v7115 = vadd.f32 %v7113, %v7114
  %v7116 = vsel %vm6761, %v6414, 0.0
  %v7117 = vadd.f32 %v7115, %v7116
  %v7118 = vsel %vm6761, %v6415, 0.0
  %v7119 = vadd.f32 %v7117, %v7118
  %v7120 = vsel %vm6761, %v6416, 0.0
  %v7121 = vadd.f32 %v7119, %v7120
  %v7122 = vsel %vm6761, %v6417, 0.0
  %v7123 = vadd.f32 %v7121, %v7122
  %v7124 = vsel %vm6761, %v6418, 0.0
  %v7125 = vadd.f32 %v7123, %v7124
  %v7126 = vsel %vm6761, %v6419, 0.0
  %v7127 = vadd.f32 %v7125, %v7126
  %v7128 = vsel %vm6761, %v6420, 0.0
  %v7129 = vadd.f32 %v7127, %v7128
  %v7130 = vsel %vm6761, %v6421, 0.0
  %v7131 = vadd.f32 %v7129, %v7130
  %v7132 = vsel %vm6761, %v6422, 0.0
  %v7133 = vadd.f32 %v7131, %v7132
  %v7134 = vsel %vm6761, %v6423, 0.0
  %v7135 = vadd.f32 %v7133, %v7134
  %v7136 = vsel %vm6761, %v6424, 0.0
  %v7137 = vadd.f32 %v7135, %v7136
  %v7138 = vsel %vm6761, %v6425, 0.0
  %v7139 = vadd.f32 %v7137, %v7138
  %v7140 = vsel %vm6761, %v6426, 0.0
  %v7141 = vadd.f32 %v7139, %v7140
  %v7142 = vsel %vm6761, %v6427, 0.0
  %v7143 = vadd.f32 %v7141, %v7142
  %v7144 = vsel %vm6761, %v6428, 0.0
  %v7145 = vadd.f32 %v7143, %v7144
  %v7146 = vsel %vm6761, %v6429, 0.0
  %v7147 = vadd.f32 %v7145, %v7146
  %v7148 = vsel %vm6761, %v6430, 0.0
  %v7149 = vadd.f32 %v7147, %v7148
  %v7150 = vsel %vm6761, %v6431, 0.0
  %v7151 = vadd.f32 %v7149, %v7150
  %v7152 = vsel %vm6761, %v6432, 0.0
  %v7153 = vadd.f32 %v7151, %v7152
  %v7154 = vsel %vm6761, %v6433, 0.0
  %v7155 = vadd.f32 %v7153, %v7154
  %v7156 = vsel %vm6761, %v6434, 0.0
  %v7157 = vadd.f32 %v7155, %v7156
  %v7158 = vsel %vm6761, %v6435, 0.0
  %v7159 = vadd.f32 %v7157, %v7158
  %v7160 = vsel %vm6761, %v6436, 0.0
  %v7161 = vadd.f32 %v7159, %v7160
  %v7162 = vsel %vm6761, %v6437, 0.0
  %v7163 = vadd.f32 %v7161, %v7162
  %v7164 = vsel %vm6761, %v6438, 0.0
  %v7165 = vadd.f32 %v7163, %v7164
  %v7166 = vsel %vm6761, %v6439, 0.0
  %v7167 = vadd.f32 %v7165, %v7166
  %v7168 = vsel %vm6761, %v6440, 0.0
  %v7169 = vadd.f32 %v7167, %v7168
  %v7170 = vrot.slane %v7169, 4
  %v7171 = vadd.f32 %v7169, %v7170
  %v7172 = vrot.slane %v7171, 2
  %v7173 = vadd.f32 %v7171, %v7172
  %v7174 = vrot.slane %v7173, 1
  %v7175 = vadd.f32 %v7173, %v7174
  %v7176 = vsel %vm6761, %v6441, 0.0
  %v7177 = vsel %vm6761, %v6442, 0.0
  %v7178 = vadd.f32 %v7176, %v7177
  %v7179 = vsel %vm6761, %v6443, 0.0
  %v7180 = vadd.f32 %v7178, %v7179
  %v7181 = vsel %vm6761, %v6444, 0.0
  %v7182 = vadd.f32 %v7180, %v7181
  %v7183 = vsel %vm6761, %v6445, 0.0
  %v7184 = vadd.f32 %v7182, %v7183
  %v7185 = vsel %vm6761, %v6446, 0.0
  %v7186 = vadd.f32 %v7184, %v7185
  %v7187 = vsel %vm6761, %v6447, 0.0
  %v7188 = vadd.f32 %v7186, %v7187
  %v7189 = vsel %vm6761, %v6448, 0.0
  %v7190 = vadd.f32 %v7188, %v7189
  %v7191 = vsel %vm6761, %v6449, 0.0
  %v7192 = vadd.f32 %v7190, %v7191
  %v7193 = vsel %vm6761, %v6450, 0.0
  %v7194 = vadd.f32 %v7192, %v7193
  %v7195 = vsel %vm6761, %v6451, 0.0
  %v7196 = vadd.f32 %v7194, %v7195
  %v7197 = vsel %vm6761, %v6452, 0.0
  %v7198 = vadd.f32 %v7196, %v7197
  %v7199 = vsel %vm6761, %v6453, 0.0
  %v7200 = vadd.f32 %v7198, %v7199
  %v7201 = vsel %vm6761, %v6454, 0.0
  %v7202 = vadd.f32 %v7200, %v7201
  %v7203 = vsel %vm6761, %v6455, 0.0
  %v7204 = vadd.f32 %v7202, %v7203
  %v7205 = vsel %vm6761, %v6456, 0.0
  %v7206 = vadd.f32 %v7204, %v7205
  %v7207 = vsel %vm6761, %v6457, 0.0
  %v7208 = vadd.f32 %v7206, %v7207
  %v7209 = vsel %vm6761, %v6458, 0.0
  %v7210 = vadd.f32 %v7208, %v7209
  %v7211 = vsel %vm6761, %v6459, 0.0
  %v7212 = vadd.f32 %v7210, %v7211
  %v7213 = vsel %vm6761, %v6460, 0.0
  %v7214 = vadd.f32 %v7212, %v7213
  %v7215 = vsel %vm6761, %v6461, 0.0
  %v7216 = vadd.f32 %v7214, %v7215
  %v7217 = vsel %vm6761, %v6462, 0.0
  %v7218 = vadd.f32 %v7216, %v7217
  %v7219 = vsel %vm6761, %v6463, 0.0
  %v7220 = vadd.f32 %v7218, %v7219
  %v7221 = vsel %vm6761, %v6464, 0.0
  %v7222 = vadd.f32 %v7220, %v7221
  %v7223 = vsel %vm6761, %v6465, 0.0
  %v7224 = vadd.f32 %v7222, %v7223
  %v7225 = vsel %vm6761, %v6466, 0.0
  %v7226 = vadd.f32 %v7224, %v7225
  %v7227 = vsel %vm6761, %v6467, 0.0
  %v7228 = vadd.f32 %v7226, %v7227
  %v7229 = vsel %vm6761, %v6468, 0.0
  %v7230 = vadd.f32 %v7228, %v7229
  %v7231 = vsel %vm6761, %v6469, 0.0
  %v7232 = vadd.f32 %v7230, %v7231
  %v7233 = vsel %vm6761, %v6470, 0.0
  %v7234 = vadd.f32 %v7232, %v7233
  %v7235 = vsel %vm6761, %v6471, 0.0
  %v7236 = vadd.f32 %v7234, %v7235
  %v7237 = vsel %vm6761, %v6472, 0.0
  %v7238 = vadd.f32 %v7236, %v7237
  %v7239 = vrot.slane %v7238, 4
  %v7240 = vadd.f32 %v7238, %v7239
  %v7241 = vrot.slane %v7240, 2
  %v7242 = vadd.f32 %v7240, %v7241
  %v7243 = vrot.slane %v7242, 1
  %v7244 = vadd.f32 %v7242, %v7243
  %v7245 = vsel %vm6761, %v6473, 0.0
  %v7246 = vsel %vm6761, %v6474, 0.0
  %v7247 = vadd.f32 %v7245, %v7246
  %v7248 = vsel %vm6761, %v6475, 0.0
  %v7249 = vadd.f32 %v7247, %v7248
  %v7250 = vsel %vm6761, %v6476, 0.0
  %v7251 = vadd.f32 %v7249, %v7250
  %v7252 = vsel %vm6761, %v6477, 0.0
  %v7253 = vadd.f32 %v7251, %v7252
  %v7254 = vsel %vm6761, %v6478, 0.0
  %v7255 = vadd.f32 %v7253, %v7254
  %v7256 = vsel %vm6761, %v6479, 0.0
  %v7257 = vadd.f32 %v7255, %v7256
  %v7258 = vsel %vm6761, %v6480, 0.0
  %v7259 = vadd.f32 %v7257, %v7258
  %v7260 = vsel %vm6761, %v6481, 0.0
  %v7261 = vadd.f32 %v7259, %v7260
  %v7262 = vsel %vm6761, %v6482, 0.0
  %v7263 = vadd.f32 %v7261, %v7262
  %v7264 = vsel %vm6761, %v6483, 0.0
  %v7265 = vadd.f32 %v7263, %v7264
  %v7266 = vsel %vm6761, %v6484, 0.0
  %v7267 = vadd.f32 %v7265, %v7266
  %v7268 = vsel %vm6761, %v6485, 0.0
  %v7269 = vadd.f32 %v7267, %v7268
  %v7270 = vsel %vm6761, %v6486, 0.0
  %v7271 = vadd.f32 %v7269, %v7270
  %v7272 = vsel %vm6761, %v6487, 0.0
  %v7273 = vadd.f32 %v7271, %v7272
  %v7274 = vsel %vm6761, %v6488, 0.0
  %v7275 = vadd.f32 %v7273, %v7274
  %v7276 = vsel %vm6761, %v6489, 0.0
  %v7277 = vadd.f32 %v7275, %v7276
  %v7278 = vsel %vm6761, %v6490, 0.0
  %v7279 = vadd.f32 %v7277, %v7278
  %v7280 = vsel %vm6761, %v6491, 0.0
  %v7281 = vadd.f32 %v7279, %v7280
  %v7282 = vsel %vm6761, %v6492, 0.0
  %v7283 = vadd.f32 %v7281, %v7282
  %v7284 = vsel %vm6761, %v6493, 0.0
  %v7285 = vadd.f32 %v7283, %v7284
  %v7286 = vsel %vm6761, %v6494, 0.0
  %v7287 = vadd.f32 %v7285, %v7286
  %v7288 = vsel %vm6761, %v6495, 0.0
  %v7289 = vadd.f32 %v7287, %v7288
  %v7290 = vsel %vm6761, %v6496, 0.0
  %v7291 = vadd.f32 %v7289, %v7290
  %v7292 = vsel %vm6761, %v6497, 0.0
  %v7293 = vadd.f32 %v7291, %v7292
  %v7294 = vsel %vm6761, %v6498, 0.0
  %v7295 = vadd.f32 %v7293, %v7294
  %v7296 = vsel %vm6761, %v6499, 0.0
  %v7297 = vadd.f32 %v7295, %v7296
  %v7298 = vsel %vm6761, %v6500, 0.0
  %v7299 = vadd.f32 %v7297, %v7298
  %v7300 = vsel %vm6761, %v6501, 0.0
  %v7301 = vadd.f32 %v7299, %v7300
  %v7302 = vsel %vm6761, %v6502, 0.0
  %v7303 = vadd.f32 %v7301, %v7302
  %v7304 = vsel %vm6761, %v6503, 0.0
  %v7305 = vadd.f32 %v7303, %v7304
  %v7306 = vsel %vm6761, %v6504, 0.0
  %v7307 = vadd.f32 %v7305, %v7306
  %v7308 = vrot.slane %v7307, 4
  %v7309 = vadd.f32 %v7307, %v7308
  %v7310 = vrot.slane %v7309, 2
  %v7311 = vadd.f32 %v7309, %v7310
  %v7312 = vrot.slane %v7311, 1
  %v7313 = vadd.f32 %v7311, %v7312
  %v7314 = vsel %vm6761, %v6505, 0.0
  %v7315 = vsel %vm6761, %v6506, 0.0
  %v7316 = vadd.f32 %v7314, %v7315
  %v7317 = vsel %vm6761, %v6507, 0.0
  %v7318 = vadd.f32 %v7316, %v7317
  %v7319 = vsel %vm6761, %v6508, 0.0
  %v7320 = vadd.f32 %v7318, %v7319
  %v7321 = vsel %vm6761, %v6509, 0.0
  %v7322 = vadd.f32 %v7320, %v7321
  %v7323 = vsel %vm6761, %v6510, 0.0
  %v7324 = vadd.f32 %v7322, %v7323
  %v7325 = vsel %vm6761, %v6511, 0.0
  %v7326 = vadd.f32 %v7324, %v7325
  %v7327 = vsel %vm6761, %v6512, 0.0
  %v7328 = vadd.f32 %v7326, %v7327
  %v7329 = vsel %vm6761, %v6513, 0.0
  %v7330 = vadd.f32 %v7328, %v7329
  %v7331 = vsel %vm6761, %v6514, 0.0
  %v7332 = vadd.f32 %v7330, %v7331
  %v7333 = vsel %vm6761, %v6515, 0.0
  %v7334 = vadd.f32 %v7332, %v7333
  %v7335 = vsel %vm6761, %v6516, 0.0
  %v7336 = vadd.f32 %v7334, %v7335
  %v7337 = vsel %vm6761, %v6517, 0.0
  %v7338 = vadd.f32 %v7336, %v7337
  %v7339 = vsel %vm6761, %v6518, 0.0
  %v7340 = vadd.f32 %v7338, %v7339
  %v7341 = vsel %vm6761, %v6519, 0.0
  %v7342 = vadd.f32 %v7340, %v7341
  %v7343 = vsel %vm6761, %v6520, 0.0
  %v7344 = vadd.f32 %v7342, %v7343
  %v7345 = vsel %vm6761, %v6521, 0.0
  %v7346 = vadd.f32 %v7344, %v7345
  %v7347 = vsel %vm6761, %v6522, 0.0
  %v7348 = vadd.f32 %v7346, %v7347
  %v7349 = vsel %vm6761, %v6523, 0.0
  %v7350 = vadd.f32 %v7348, %v7349
  %v7351 = vsel %vm6761, %v6524, 0.0
  %v7352 = vadd.f32 %v7350, %v7351
  %v7353 = vsel %vm6761, %v6525, 0.0
  %v7354 = vadd.f32 %v7352, %v7353
  %v7355 = vsel %vm6761, %v6526, 0.0
  %v7356 = vadd.f32 %v7354, %v7355
  %v7357 = vsel %vm6761, %v6527, 0.0
  %v7358 = vadd.f32 %v7356, %v7357
  %v7359 = vsel %vm6761, %v6528, 0.0
  %v7360 = vadd.f32 %v7358, %v7359
  %v7361 = vsel %vm6761, %v6529, 0.0
  %v7362 = vadd.f32 %v7360, %v7361
  %v7363 = vsel %vm6761, %v6530, 0.0
  %v7364 = vadd.f32 %v7362, %v7363
  %v7365 = vsel %vm6761, %v6531, 0.0
  %v7366 = vadd.f32 %v7364, %v7365
  %v7367 = vsel %vm6761, %v6532, 0.0
  %v7368 = vadd.f32 %v7366, %v7367
  %v7369 = vsel %vm6761, %v6533, 0.0
  %v7370 = vadd.f32 %v7368, %v7369
  %v7371 = vsel %vm6761, %v6534, 0.0
  %v7372 = vadd.f32 %v7370, %v7371
  %v7373 = vsel %vm6761, %v6535, 0.0
  %v7374 = vadd.f32 %v7372, %v7373
  %v7375 = vsel %vm6761, %v6536, 0.0
  %v7376 = vadd.f32 %v7374, %v7375
  %v7377 = vrot.slane %v7376, 4
  %v7378 = vadd.f32 %v7376, %v7377
  %v7379 = vrot.slane %v7378, 2
  %v7380 = vadd.f32 %v7378, %v7379
  %v7381 = vrot.slane %v7380, 1
  %v7382 = vadd.f32 %v7380, %v7381
  %v7383 = vsel %vm6761, %v6537, 0.0
  %v7384 = vsel %vm6761, %v6538, 0.0
  %v7385 = vadd.f32 %v7383, %v7384
  %v7386 = vsel %vm6761, %v6539, 0.0
  %v7387 = vadd.f32 %v7385, %v7386
  %v7388 = vsel %vm6761, %v6540, 0.0
  %v7389 = vadd.f32 %v7387, %v7388
  %v7390 = vsel %vm6761, %v6541, 0.0
  %v7391 = vadd.f32 %v7389, %v7390
  %v7392 = vsel %vm6761, %v6542, 0.0
  %v7393 = vadd.f32 %v7391, %v7392
  %v7394 = vsel %vm6761, %v6543, 0.0
  %v7395 = vadd.f32 %v7393, %v7394
  %v7396 = vsel %vm6761, %v6544, 0.0
  %v7397 = vadd.f32 %v7395, %v7396
  %v7398 = vsel %vm6761, %v6545, 0.0
  %v7399 = vadd.f32 %v7397, %v7398
  %v7400 = vsel %vm6761, %v6546, 0.0
  %v7401 = vadd.f32 %v7399, %v7400
  %v7402 = vsel %vm6761, %v6547, 0.0
  %v7403 = vadd.f32 %v7401, %v7402
  %v7404 = vsel %vm6761, %v6548, 0.0
  %v7405 = vadd.f32 %v7403, %v7404
  %v7406 = vsel %vm6761, %v6549, 0.0
  %v7407 = vadd.f32 %v7405, %v7406
  %v7408 = vsel %vm6761, %v6550, 0.0
  %v7409 = vadd.f32 %v7407, %v7408
  %v7410 = vsel %vm6761, %v6551, 0.0
  %v7411 = vadd.f32 %v7409, %v7410
  %v7412 = vsel %vm6761, %v6552, 0.0
  %v7413 = vadd.f32 %v7411, %v7412
  %v7414 = vsel %vm6761, %v6553, 0.0
  %v7415 = vadd.f32 %v7413, %v7414
  %v7416 = vsel %vm6761, %v6554, 0.0
  %v7417 = vadd.f32 %v7415, %v7416
  %v7418 = vsel %vm6761, %v6555, 0.0
  %v7419 = vadd.f32 %v7417, %v7418
  %v7420 = vsel %vm6761, %v6556, 0.0
  %v7421 = vadd.f32 %v7419, %v7420
  %v7422 = vsel %vm6761, %v6557, 0.0
  %v7423 = vadd.f32 %v7421, %v7422
  %v7424 = vsel %vm6761, %v6558, 0.0
  %v7425 = vadd.f32 %v7423, %v7424
  %v7426 = vsel %vm6761, %v6559, 0.0
  %v7427 = vadd.f32 %v7425, %v7426
  %v7428 = vsel %vm6761, %v6560, 0.0
  %v7429 = vadd.f32 %v7427, %v7428
  %v7430 = vsel %vm6761, %v6561, 0.0
  %v7431 = vadd.f32 %v7429, %v7430
  %v7432 = vsel %vm6761, %v6562, 0.0
  %v7433 = vadd.f32 %v7431, %v7432
  %v7434 = vsel %vm6761, %v6563, 0.0
  %v7435 = vadd.f32 %v7433, %v7434
  %v7436 = vsel %vm6761, %v6564, 0.0
  %v7437 = vadd.f32 %v7435, %v7436
  %v7438 = vsel %vm6761, %v6565, 0.0
  %v7439 = vadd.f32 %v7437, %v7438
  %v7440 = vsel %vm6761, %v6566, 0.0
  %v7441 = vadd.f32 %v7439, %v7440
  %v7442 = vsel %vm6761, %v6567, 0.0
  %v7443 = vadd.f32 %v7441, %v7442
  %v7444 = vsel %vm6761, %v6568, 0.0
  %v7445 = vadd.f32 %v7443, %v7444
  %v7446 = vrot.slane %v7445, 4
  %v7447 = vadd.f32 %v7445, %v7446
  %v7448 = vrot.slane %v7447, 2
  %v7449 = vadd.f32 %v7447, %v7448
  %v7450 = vrot.slane %v7449, 1
  %v7451 = vadd.f32 %v7449, %v7450
  %v7452 = vsel %vm6761, %v6569, 0.0
  %v7453 = vsel %vm6761, %v6570, 0.0
  %v7454 = vadd.f32 %v7452, %v7453
  %v7455 = vsel %vm6761, %v6571, 0.0
  %v7456 = vadd.f32 %v7454, %v7455
  %v7457 = vsel %vm6761, %v6572, 0.0
  %v7458 = vadd.f32 %v7456, %v7457
  %v7459 = vsel %vm6761, %v6573, 0.0
  %v7460 = vadd.f32 %v7458, %v7459
  %v7461 = vsel %vm6761, %v6574, 0.0
  %v7462 = vadd.f32 %v7460, %v7461
  %v7463 = vsel %vm6761, %v6575, 0.0
  %v7464 = vadd.f32 %v7462, %v7463
  %v7465 = vsel %vm6761, %v6576, 0.0
  %v7466 = vadd.f32 %v7464, %v7465
  %v7467 = vsel %vm6761, %v6577, 0.0
  %v7468 = vadd.f32 %v7466, %v7467
  %v7469 = vsel %vm6761, %v6578, 0.0
  %v7470 = vadd.f32 %v7468, %v7469
  %v7471 = vsel %vm6761, %v6579, 0.0
  %v7472 = vadd.f32 %v7470, %v7471
  %v7473 = vsel %vm6761, %v6580, 0.0
  %v7474 = vadd.f32 %v7472, %v7473
  %v7475 = vsel %vm6761, %v6581, 0.0
  %v7476 = vadd.f32 %v7474, %v7475
  %v7477 = vsel %vm6761, %v6582, 0.0
  %v7478 = vadd.f32 %v7476, %v7477
  %v7479 = vsel %vm6761, %v6583, 0.0
  %v7480 = vadd.f32 %v7478, %v7479
  %v7481 = vsel %vm6761, %v6584, 0.0
  %v7482 = vadd.f32 %v7480, %v7481
  %v7483 = vsel %vm6761, %v6585, 0.0
  %v7484 = vadd.f32 %v7482, %v7483
  %v7485 = vsel %vm6761, %v6586, 0.0
  %v7486 = vadd.f32 %v7484, %v7485
  %v7487 = vsel %vm6761, %v6587, 0.0
  %v7488 = vadd.f32 %v7486, %v7487
  %v7489 = vsel %vm6761, %v6588, 0.0
  %v7490 = vadd.f32 %v7488, %v7489
  %v7491 = vsel %vm6761, %v6589, 0.0
  %v7492 = vadd.f32 %v7490, %v7491
  %v7493 = vsel %vm6761, %v6590, 0.0
  %v7494 = vadd.f32 %v7492, %v7493
  %v7495 = vsel %vm6761, %v6591, 0.0
  %v7496 = vadd.f32 %v7494, %v7495
  %v7497 = vsel %vm6761, %v6592, 0.0
  %v7498 = vadd.f32 %v7496, %v7497
  %v7499 = vsel %vm6761, %v6593, 0.0
  %v7500 = vadd.f32 %v7498, %v7499
  %v7501 = vsel %vm6761, %v6594, 0.0
  %v7502 = vadd.f32 %v7500, %v7501
  %v7503 = vsel %vm6761, %v6595, 0.0
  %v7504 = vadd.f32 %v7502, %v7503
  %v7505 = vsel %vm6761, %v6596, 0.0
  %v7506 = vadd.f32 %v7504, %v7505
  %v7507 = vsel %vm6761, %v6597, 0.0
  %v7508 = vadd.f32 %v7506, %v7507
  %v7509 = vsel %vm6761, %v6598, 0.0
  %v7510 = vadd.f32 %v7508, %v7509
  %v7511 = vsel %vm6761, %v6599, 0.0
  %v7512 = vadd.f32 %v7510, %v7511
  %v7513 = vsel %vm6761, %v6600, 0.0
  %v7514 = vadd.f32 %v7512, %v7513
  %v7515 = vrot.slane %v7514, 4
  %v7516 = vadd.f32 %v7514, %v7515
  %v7517 = vrot.slane %v7516, 2
  %v7518 = vadd.f32 %v7516, %v7517
  %v7519 = vrot.slane %v7518, 1
  %v7520 = vadd.f32 %v7518, %v7519
  %v7521 = vsel %vm6761, %v6601, 0.0
  %v7522 = vsel %vm6761, %v6602, 0.0
  %v7523 = vadd.f32 %v7521, %v7522
  %v7524 = vsel %vm6761, %v6603, 0.0
  %v7525 = vadd.f32 %v7523, %v7524
  %v7526 = vsel %vm6761, %v6604, 0.0
  %v7527 = vadd.f32 %v7525, %v7526
  %v7528 = vsel %vm6761, %v6605, 0.0
  %v7529 = vadd.f32 %v7527, %v7528
  %v7530 = vsel %vm6761, %v6606, 0.0
  %v7531 = vadd.f32 %v7529, %v7530
  %v7532 = vsel %vm6761, %v6607, 0.0
  %v7533 = vadd.f32 %v7531, %v7532
  %v7534 = vsel %vm6761, %v6608, 0.0
  %v7535 = vadd.f32 %v7533, %v7534
  %v7536 = vsel %vm6761, %v6609, 0.0
  %v7537 = vadd.f32 %v7535, %v7536
  %v7538 = vsel %vm6761, %v6610, 0.0
  %v7539 = vadd.f32 %v7537, %v7538
  %v7540 = vsel %vm6761, %v6611, 0.0
  %v7541 = vadd.f32 %v7539, %v7540
  %v7542 = vsel %vm6761, %v6612, 0.0
  %v7543 = vadd.f32 %v7541, %v7542
  %v7544 = vsel %vm6761, %v6613, 0.0
  %v7545 = vadd.f32 %v7543, %v7544
  %v7546 = vsel %vm6761, %v6614, 0.0
  %v7547 = vadd.f32 %v7545, %v7546
  %v7548 = vsel %vm6761, %v6615, 0.0
  %v7549 = vadd.f32 %v7547, %v7548
  %v7550 = vsel %vm6761, %v6616, 0.0
  %v7551 = vadd.f32 %v7549, %v7550
  %v7552 = vsel %vm6761, %v6617, 0.0
  %v7553 = vadd.f32 %v7551, %v7552
  %v7554 = vsel %vm6761, %v6618, 0.0
  %v7555 = vadd.f32 %v7553, %v7554
  %v7556 = vsel %vm6761, %v6619, 0.0
  %v7557 = vadd.f32 %v7555, %v7556
  %v7558 = vsel %vm6761, %v6620, 0.0
  %v7559 = vadd.f32 %v7557, %v7558
  %v7560 = vsel %vm6761, %v6621, 0.0
  %v7561 = vadd.f32 %v7559, %v7560
  %v7562 = vsel %vm6761, %v6622, 0.0
  %v7563 = vadd.f32 %v7561, %v7562
  %v7564 = vsel %vm6761, %v6623, 0.0
  %v7565 = vadd.f32 %v7563, %v7564
  %v7566 = vsel %vm6761, %v6624, 0.0
  %v7567 = vadd.f32 %v7565, %v7566
  %v7568 = vsel %vm6761, %v6625, 0.0
  %v7569 = vadd.f32 %v7567, %v7568
  %v7570 = vsel %vm6761, %v6626, 0.0
  %v7571 = vadd.f32 %v7569, %v7570
  %v7572 = vsel %vm6761, %v6627, 0.0
  %v7573 = vadd.f32 %v7571, %v7572
  %v7574 = vsel %vm6761, %v6628, 0.0
  %v7575 = vadd.f32 %v7573, %v7574
  %v7576 = vsel %vm6761, %v6629, 0.0
  %v7577 = vadd.f32 %v7575, %v7576
  %v7578 = vsel %vm6761, %v6630, 0.0
  %v7579 = vadd.f32 %v7577, %v7578
  %v7580 = vsel %vm6761, %v6631, 0.0
  %v7581 = vadd.f32 %v7579, %v7580
  %v7582 = vsel %vm6761, %v6632, 0.0
  %v7583 = vadd.f32 %v7581, %v7582
  %v7584 = vrot.slane %v7583, 4
  %v7585 = vadd.f32 %v7583, %v7584
  %v7586 = vrot.slane %v7585, 2
  %v7587 = vadd.f32 %v7585, %v7586
  %v7588 = vrot.slane %v7587, 1
  %v7589 = vadd.f32 %v7587, %v7588
  %v7590 = vsel %vm6761, %v6633, 0.0
  %v7591 = vsel %vm6761, %v6634, 0.0
  %v7592 = vadd.f32 %v7590, %v7591
  %v7593 = vsel %vm6761, %v6635, 0.0
  %v7594 = vadd.f32 %v7592, %v7593
  %v7595 = vsel %vm6761, %v6636, 0.0
  %v7596 = vadd.f32 %v7594, %v7595
  %v7597 = vsel %vm6761, %v6637, 0.0
  %v7598 = vadd.f32 %v7596, %v7597
  %v7599 = vsel %vm6761, %v6638, 0.0
  %v7600 = vadd.f32 %v7598, %v7599
  %v7601 = vsel %vm6761, %v6639, 0.0
  %v7602 = vadd.f32 %v7600, %v7601
  %v7603 = vsel %vm6761, %v6640, 0.0
  %v7604 = vadd.f32 %v7602, %v7603
  %v7605 = vsel %vm6761, %v6641, 0.0
  %v7606 = vadd.f32 %v7604, %v7605
  %v7607 = vsel %vm6761, %v6642, 0.0
  %v7608 = vadd.f32 %v7606, %v7607
  %v7609 = vsel %vm6761, %v6643, 0.0
  %v7610 = vadd.f32 %v7608, %v7609
  %v7611 = vsel %vm6761, %v6644, 0.0
  %v7612 = vadd.f32 %v7610, %v7611
  %v7613 = vsel %vm6761, %v6645, 0.0
  %v7614 = vadd.f32 %v7612, %v7613
  %v7615 = vsel %vm6761, %v6646, 0.0
  %v7616 = vadd.f32 %v7614, %v7615
  %v7617 = vsel %vm6761, %v6647, 0.0
  %v7618 = vadd.f32 %v7616, %v7617
  %v7619 = vsel %vm6761, %v6648, 0.0
  %v7620 = vadd.f32 %v7618, %v7619
  %v7621 = vsel %vm6761, %v6649, 0.0
  %v7622 = vadd.f32 %v7620, %v7621
  %v7623 = vsel %vm6761, %v6650, 0.0
  %v7624 = vadd.f32 %v7622, %v7623
  %v7625 = vsel %vm6761, %v6651, 0.0
  %v7626 = vadd.f32 %v7624, %v7625
  %v7627 = vsel %vm6761, %v6652, 0.0
  %v7628 = vadd.f32 %v7626, %v7627
  %v7629 = vsel %vm6761, %v6653, 0.0
  %v7630 = vadd.f32 %v7628, %v7629
  %v7631 = vsel %vm6761, %v6654, 0.0
  %v7632 = vadd.f32 %v7630, %v7631
  %v7633 = vsel %vm6761, %v6655, 0.0
  %v7634 = vadd.f32 %v7632, %v7633
  %v7635 = vsel %vm6761, %v6656, 0.0
  %v7636 = vadd.f32 %v7634, %v7635
  %v7637 = vsel %vm6761, %v6657, 0.0
  %v7638 = vadd.f32 %v7636, %v7637
  %v7639 = vsel %vm6761, %v6658, 0.0
  %v7640 = vadd.f32 %v7638, %v7639
  %v7641 = vsel %vm6761, %v6659, 0.0
  %v7642 = vadd.f32 %v7640, %v7641
  %v7643 = vsel %vm6761, %v6660, 0.0
  %v7644 = vadd.f32 %v7642, %v7643
  %v7645 = vsel %vm6761, %v6661, 0.0
  %v7646 = vadd.f32 %v7644, %v7645
  %v7647 = vsel %vm6761, %v6662, 0.0
  %v7648 = vadd.f32 %v7646, %v7647
  %v7649 = vsel %vm6761, %v6663, 0.0
  %v7650 = vadd.f32 %v7648, %v7649
  %v7651 = vsel %vm6761, %v6664, 0.0
  %v7652 = vadd.f32 %v7650, %v7651
  %v7653 = vrot.slane %v7652, 4
  %v7654 = vadd.f32 %v7652, %v7653
  %v7655 = vrot.slane %v7654, 2
  %v7656 = vadd.f32 %v7654, %v7655
  %v7657 = vrot.slane %v7656, 1
  %v7658 = vadd.f32 %v7656, %v7657
  %v7659 = vsel %vm6761, %v6665, 0.0
  %v7660 = vsel %vm6761, %v6666, 0.0
  %v7661 = vadd.f32 %v7659, %v7660
  %v7662 = vsel %vm6761, %v6667, 0.0
  %v7663 = vadd.f32 %v7661, %v7662
  %v7664 = vsel %vm6761, %v6668, 0.0
  %v7665 = vadd.f32 %v7663, %v7664
  %v7666 = vsel %vm6761, %v6669, 0.0
  %v7667 = vadd.f32 %v7665, %v7666
  %v7668 = vsel %vm6761, %v6670, 0.0
  %v7669 = vadd.f32 %v7667, %v7668
  %v7670 = vsel %vm6761, %v6671, 0.0
  %v7671 = vadd.f32 %v7669, %v7670
  %v7672 = vsel %vm6761, %v6672, 0.0
  %v7673 = vadd.f32 %v7671, %v7672
  %v7674 = vsel %vm6761, %v6673, 0.0
  %v7675 = vadd.f32 %v7673, %v7674
  %v7676 = vsel %vm6761, %v6674, 0.0
  %v7677 = vadd.f32 %v7675, %v7676
  %v7678 = vsel %vm6761, %v6675, 0.0
  %v7679 = vadd.f32 %v7677, %v7678
  %v7680 = vsel %vm6761, %v6676, 0.0
  %v7681 = vadd.f32 %v7679, %v7680
  %v7682 = vsel %vm6761, %v6677, 0.0
  %v7683 = vadd.f32 %v7681, %v7682
  %v7684 = vsel %vm6761, %v6678, 0.0
  %v7685 = vadd.f32 %v7683, %v7684
  %v7686 = vsel %vm6761, %v6679, 0.0
  %v7687 = vadd.f32 %v7685, %v7686
  %v7688 = vsel %vm6761, %v6680, 0.0
  %v7689 = vadd.f32 %v7687, %v7688
  %v7690 = vsel %vm6761, %v6681, 0.0
  %v7691 = vadd.f32 %v7689, %v7690
  %v7692 = vsel %vm6761, %v6682, 0.0
  %v7693 = vadd.f32 %v7691, %v7692
  %v7694 = vsel %vm6761, %v6683, 0.0
  %v7695 = vadd.f32 %v7693, %v7694
  %v7696 = vsel %vm6761, %v6684, 0.0
  %v7697 = vadd.f32 %v7695, %v7696
  %v7698 = vsel %vm6761, %v6685, 0.0
  %v7699 = vadd.f32 %v7697, %v7698
  %v7700 = vsel %vm6761, %v6686, 0.0
  %v7701 = vadd.f32 %v7699, %v7700
  %v7702 = vsel %vm6761, %v6687, 0.0
  %v7703 = vadd.f32 %v7701, %v7702
  %v7704 = vsel %vm6761, %v6688, 0.0
  %v7705 = vadd.f32 %v7703, %v7704
  %v7706 = vsel %vm6761, %v6689, 0.0
  %v7707 = vadd.f32 %v7705, %v7706
  %v7708 = vsel %vm6761, %v6690, 0.0
  %v7709 = vadd.f32 %v7707, %v7708
  %v7710 = vsel %vm6761, %v6691, 0.0
  %v7711 = vadd.f32 %v7709, %v7710
  %v7712 = vsel %vm6761, %v6692, 0.0
  %v7713 = vadd.f32 %v7711, %v7712
  %v7714 = vsel %vm6761, %v6693, 0.0
  %v7715 = vadd.f32 %v7713, %v7714
  %v7716 = vsel %vm6761, %v6694, 0.0
  %v7717 = vadd.f32 %v7715, %v7716
  %v7718 = vsel %vm6761, %v6695, 0.0
  %v7719 = vadd.f32 %v7717, %v7718
  %v7720 = vsel %vm6761, %v6696, 0.0
  %v7721 = vadd.f32 %v7719, %v7720
  %v7722 = vrot.slane %v7721, 4
  %v7723 = vadd.f32 %v7721, %v7722
  %v7724 = vrot.slane %v7723, 2
  %v7725 = vadd.f32 %v7723, %v7724
  %v7726 = vrot.slane %v7725, 1
  %v7727 = vadd.f32 %v7725, %v7726
  %v7728 = vsel %vm6761, %v6697, 0.0
  %v7729 = vsel %vm6761, %v6698, 0.0
  %v7730 = vadd.f32 %v7728, %v7729
  %v7731 = vsel %vm6761, %v6699, 0.0
  %v7732 = vadd.f32 %v7730, %v7731
  %v7733 = vsel %vm6761, %v6700, 0.0
  %v7734 = vadd.f32 %v7732, %v7733
  %v7735 = vsel %vm6761, %v6701, 0.0
  %v7736 = vadd.f32 %v7734, %v7735
  %v7737 = vsel %vm6761, %v6702, 0.0
  %v7738 = vadd.f32 %v7736, %v7737
  %v7739 = vsel %vm6761, %v6703, 0.0
  %v7740 = vadd.f32 %v7738, %v7739
  %v7741 = vsel %vm6761, %v6704, 0.0
  %v7742 = vadd.f32 %v7740, %v7741
  %v7743 = vsel %vm6761, %v6705, 0.0
  %v7744 = vadd.f32 %v7742, %v7743
  %v7745 = vsel %vm6761, %v6706, 0.0
  %v7746 = vadd.f32 %v7744, %v7745
  %v7747 = vsel %vm6761, %v6707, 0.0
  %v7748 = vadd.f32 %v7746, %v7747
  %v7749 = vsel %vm6761, %v6708, 0.0
  %v7750 = vadd.f32 %v7748, %v7749
  %v7751 = vsel %vm6761, %v6709, 0.0
  %v7752 = vadd.f32 %v7750, %v7751
  %v7753 = vsel %vm6761, %v6710, 0.0
  %v7754 = vadd.f32 %v7752, %v7753
  %v7755 = vsel %vm6761, %v6711, 0.0
  %v7756 = vadd.f32 %v7754, %v7755
  %v7757 = vsel %vm6761, %v6712, 0.0
  %v7758 = vadd.f32 %v7756, %v7757
  %v7759 = vsel %vm6761, %v6713, 0.0
  %v7760 = vadd.f32 %v7758, %v7759
  %v7761 = vsel %vm6761, %v6714, 0.0
  %v7762 = vadd.f32 %v7760, %v7761
  %v7763 = vsel %vm6761, %v6715, 0.0
  %v7764 = vadd.f32 %v7762, %v7763
  %v7765 = vsel %vm6761, %v6716, 0.0
  %v7766 = vadd.f32 %v7764, %v7765
  %v7767 = vsel %vm6761, %v6717, 0.0
  %v7768 = vadd.f32 %v7766, %v7767
  %v7769 = vsel %vm6761, %v6718, 0.0
  %v7770 = vadd.f32 %v7768, %v7769
  %v7771 = vsel %vm6761, %v6719, 0.0
  %v7772 = vadd.f32 %v7770, %v7771
  %v7773 = vsel %vm6761, %v6720, 0.0
  %v7774 = vadd.f32 %v7772, %v7773
  %v7775 = vsel %vm6761, %v6721, 0.0
  %v7776 = vadd.f32 %v7774, %v7775
  %v7777 = vsel %vm6761, %v6722, 0.0
  %v7778 = vadd.f32 %v7776, %v7777
  %v7779 = vsel %vm6761, %v6723, 0.0
  %v7780 = vadd.f32 %v7778, %v7779
  %v7781 = vsel %vm6761, %v6724, 0.0
  %v7782 = vadd.f32 %v7780, %v7781
  %v7783 = vsel %vm6761, %v6725, 0.0
  %v7784 = vadd.f32 %v7782, %v7783
  %v7785 = vsel %vm6761, %v6726, 0.0
  %v7786 = vadd.f32 %v7784, %v7785
  %v7787 = vsel %vm6761, %v6727, 0.0
  %v7788 = vadd.f32 %v7786, %v7787
  %v7789 = vsel %vm6761, %v6728, 0.0
  %v7790 = vadd.f32 %v7788, %v7789
  %v7791 = vrot.slane %v7790, 4
  %v7792 = vadd.f32 %v7790, %v7791
  %v7793 = vrot.slane %v7792, 2
  %v7794 = vadd.f32 %v7792, %v7793
  %v7795 = vrot.slane %v7794, 1
  %v7796 = vadd.f32 %v7794, %v7795
  %v7797 = vsel %vm6761, %v6729, 0.0
  %v7798 = vsel %vm6761, %v6730, 0.0
  %v7799 = vadd.f32 %v7797, %v7798
  %v7800 = vsel %vm6761, %v6731, 0.0
  %v7801 = vadd.f32 %v7799, %v7800
  %v7802 = vsel %vm6761, %v6732, 0.0
  %v7803 = vadd.f32 %v7801, %v7802
  %v7804 = vsel %vm6761, %v6733, 0.0
  %v7805 = vadd.f32 %v7803, %v7804
  %v7806 = vsel %vm6761, %v6734, 0.0
  %v7807 = vadd.f32 %v7805, %v7806
  %v7808 = vsel %vm6761, %v6735, 0.0
  %v7809 = vadd.f32 %v7807, %v7808
  %v7810 = vsel %vm6761, %v6736, 0.0
  %v7811 = vadd.f32 %v7809, %v7810
  %v7812 = vsel %vm6761, %v6737, 0.0
  %v7813 = vadd.f32 %v7811, %v7812
  %v7814 = vsel %vm6761, %v6738, 0.0
  %v7815 = vadd.f32 %v7813, %v7814
  %v7816 = vsel %vm6761, %v6739, 0.0
  %v7817 = vadd.f32 %v7815, %v7816
  %v7818 = vsel %vm6761, %v6740, 0.0
  %v7819 = vadd.f32 %v7817, %v7818
  %v7820 = vsel %vm6761, %v6741, 0.0
  %v7821 = vadd.f32 %v7819, %v7820
  %v7822 = vsel %vm6761, %v6742, 0.0
  %v7823 = vadd.f32 %v7821, %v7822
  %v7824 = vsel %vm6761, %v6743, 0.0
  %v7825 = vadd.f32 %v7823, %v7824
  %v7826 = vsel %vm6761, %v6744, 0.0
  %v7827 = vadd.f32 %v7825, %v7826
  %v7828 = vsel %vm6761, %v6745, 0.0
  %v7829 = vadd.f32 %v7827, %v7828
  %v7830 = vsel %vm6761, %v6746, 0.0
  %v7831 = vadd.f32 %v7829, %v7830
  %v7832 = vsel %vm6761, %v6747, 0.0
  %v7833 = vadd.f32 %v7831, %v7832
  %v7834 = vsel %vm6761, %v6748, 0.0
  %v7835 = vadd.f32 %v7833, %v7834
  %v7836 = vsel %vm6761, %v6749, 0.0
  %v7837 = vadd.f32 %v7835, %v7836
  %v7838 = vsel %vm6761, %v6750, 0.0
  %v7839 = vadd.f32 %v7837, %v7838
  %v7840 = vsel %vm6761, %v6751, 0.0
  %v7841 = vadd.f32 %v7839, %v7840
  %v7842 = vsel %vm6761, %v6752, 0.0
  %v7843 = vadd.f32 %v7841, %v7842
  %v7844 = vsel %vm6761, %v6753, 0.0
  %v7845 = vadd.f32 %v7843, %v7844
  %v7846 = vsel %vm6761, %v6754, 0.0
  %v7847 = vadd.f32 %v7845, %v7846
  %v7848 = vsel %vm6761, %v6755, 0.0
  %v7849 = vadd.f32 %v7847, %v7848
  %v7850 = vsel %vm6761, %v6756, 0.0
  %v7851 = vadd.f32 %v7849, %v7850
  %v7852 = vsel %vm6761, %v6757, 0.0
  %v7853 = vadd.f32 %v7851, %v7852
  %v7854 = vsel %vm6761, %v6758, 0.0
  %v7855 = vadd.f32 %v7853, %v7854
  %v7856 = vsel %vm6761, %v6759, 0.0
  %v7857 = vadd.f32 %v7855, %v7856
  %v7858 = vsel %vm6761, %v6760, 0.0
  %v7859 = vadd.f32 %v7857, %v7858
  %v7860 = vrot.slane %v7859, 4
  %v7861 = vadd.f32 %v7859, %v7860
  %v7862 = vrot.slane %v7861, 2
  %v7863 = vadd.f32 %v7861, %v7862
  %v7864 = vrot.slane %v7863, 1
  %v7865 = vadd.f32 %v7863, %v7864
  %v7866 = vmul.f32 %v6830, 0.00390625
  %v7867 = vmul.f32 %v6899, 0.00390625
  %v7868 = vmul.f32 %v6968, 0.00390625
  %v7869 = vmul.f32 %v7037, 0.00390625
  %v7870 = vmul.f32 %v7106, 0.00390625
  %v7871 = vmul.f32 %v7175, 0.00390625
  %v7872 = vmul.f32 %v7244, 0.00390625
  %v7873 = vmul.f32 %v7313, 0.00390625
  %v7874 = vmul.f32 %v7382, 0.00390625
  %v7875 = vmul.f32 %v7451, 0.00390625
  %v7876 = vmul.f32 %v7520, 0.00390625
  %v7877 = vmul.f32 %v7589, 0.00390625
  %v7878 = vmul.f32 %v7658, 0.00390625
  %v7879 = vmul.f32 %v7727, 0.00390625
  %v7880 = vmul.f32 %v7796, 0.00390625
  %v7881 = vmul.f32 %v7865, 0.00390625
  %v7882 = vld [vmem:[%s4] sm:$0xff]
  %v7883 = vld [vmem:[%s4 + $0x8] sm:$0xff]
  %v7884 = vld [vmem:[%s4 + $0x10] sm:$0xff]
  %v7885 = vld [vmem:[%s4 + $0x18] sm:$0xff]
  %v7886 = vld [vmem:[%s4 + $0x20] sm:$0xff]
  %v7887 = vld [vmem:[%s4 + $0x28] sm:$0xff]
  %v7888 = vld [vmem:[%s4 + $0x30] sm:$0xff]
  %v7889 = vld [vmem:[%s4 + $0x38] sm:$0xff]
  %v7890 = vld [vmem:[%s4 + $0x40] sm:$0xff]
  %v7891 = vld [vmem:[%s4 + $0x48] sm:$0xff]
  %v7892 = vld [vmem:[%s4 + $0x50] sm:$0xff]
  %v7893 = vld [vmem:[%s4 + $0x58] sm:$0xff]
  %v7894 = vld [vmem:[%s4 + $0x60] sm:$0xff]
  %v7895 = vld [vmem:[%s4 + $0x68] sm:$0xff]
  %v7896 = vld [vmem:[%s4 + $0x70] sm:$0xff]
  %v7897 = vld [vmem:[%s4 + $0x78] sm:$0xff]
  %v7898 = vld [vmem:[%s5] sm:$0x3]
  %v7900 = vlaneseq
  %v7901 = vshrl.u32 %v7900, 7
  %v7902 = vsub.s32 0, %v7901
  %v7903 = vrot.slane %v7898, %v7902
  %v7904 = vlaneseq
  %v7905 = vshrl.u32 %v7904, 7
  %v7906 = vsub.s32 1, %v7905
  %v7907 = vrot.slane %v7898, %v7906
  %vm7926 = vcmask 1041409
  %v7927 = vsel %vm7926, %v7867, %v7866
  %vm7928 = vcmask 1042434
  %v7929 = vsel %vm7928, %v7868, %v7927
  %vm7930 = vcmask 1043459
  %v7931 = vsel %vm7930, %v7869, %v7929
  %vm7932 = vcmask 1044484
  %v7933 = vsel %vm7932, %v7870, %v7931
  %vm7934 = vcmask 1045509
  %v7935 = vsel %vm7934, %v7871, %v7933
  %vm7936 = vcmask 1046534
  %v7937 = vsel %vm7936, %v7872, %v7935
  %vm7938 = vcmask 1047559
  %v7939 = vsel %vm7938, %v7873, %v7937
  %v7940 = vsel %vm7926, %v7875, %v7874
  %v7941 = vsel %vm7928, %v7876, %v7940
  %v7942 = vsel %vm7930, %v7877, %v7941
  %v7943 = vsel %vm7932, %v7878, %v7942
  %v7944 = vsel %vm7934, %v7879, %v7943
  %v7945 = vsel %vm7936, %v7880, %v7944
  %v7946 = vsel %vm7938, %v7881, %v7945
  %v7947 = vsel %vm6761, %v7939, 0
  %v7949 = vsel %vm6761, %v7946, 0
  %7951 = vmatprep.subr.mxu0 %v7883
  %7952 = vmatpush1.msra.mxu0 %v7882
  %7953 = vmatprep.subr.mxu0 %v7885
  %7954 = vmatpush1.msra.mxu0 %v7884
  %7955 = vmatprep.subr.mxu0 %v7887
  %7956 = vmatpush1.msra.mxu0 %v7886
  %7957 = vmatprep.subr.mxu0 %v7889
  %7958 = vmatpush1.msra.mxu0 %v7888
  %7959 = vmatprep.subr.mxu0 %v7891
  %7960 = vmatpush1.msra.mxu0 %v7890
  %7961 = vmatprep.subr.mxu0 %v7893
  %7962 = vmatpush1.msra.mxu0 %v7892
  %7963 = vmatprep.subr.mxu0 %v7895
  %7964 = vmatpush1.msra.mxu0 %v7894
  %7965 = vmatprep.subr.mxu0 %v7897
  %7966 = vmatpush1.msra.mxu0 %v7896
  %7967 = vmatprep.subr.mxu0 0.0
  %7968 = vmatpush1.msra.mxu0 0.0
  %7969 = vmatprep.subr.mxu0 0.0
  %7970 = vmatpush1.msra.mxu0 0.0
  %7971 = vmatprep.subr.mxu0 0.0
  %7972 = vmatpush1.msra.mxu0 0.0
  %7973 = vmatprep.subr.mxu0 0.0
  %7974 = vmatpush1.msra.mxu0 0.0
  %7975 = vmatprep.subr.mxu0 0.0
  %7976 = vmatpush1.msra.mxu0 0.0
  %7977 = vmatprep.subr.mxu0 0.0
  %7978 = vmatpush1.msra.mxu0 0.0
  %7979 = vmatprep.subr.mxu0 0.0
  %7980 = vmatpush1.msra.mxu0 0.0
  %7981 = vmatprep.subr.mxu0 0.0
  %7982 = vmatpush1.msra.mxu0 0.0
  %7983 = vmatprep.subr.mxu0 0.0
  %7984 = vmatpush1.msra.mxu0 0.0
  %7985 = vmatprep.subr.mxu0 0.0
  %7986 = vmatpush1.msra.mxu0 0.0
  %7987 = vmatprep.subr.mxu0 0.0
  %7988 = vmatpush1.msra.mxu0 0.0
  %7989 = vmatprep.subr.mxu0 0.0
  %7990 = vmatpush1.msra.mxu0 0.0
  %7991 = vmatprep.subr.mxu0 0.0
  %7992 = vmatpush1.msra.mxu0 0.0
  %7993 = vmatprep.subr.mxu0 0.0
  %7994 = vmatpush1.msra.mxu0 0.0
  %7995 = vmatprep.subr.mxu0 0.0
  %7996 = vmatpush1.msra.mxu0 0.0
  %7997 = vmatprep.subr.mxu0 0.0
  %7998 = vmatpush1.msra.mxu0 0.0
  %7999 = vmatprep.subr.mxu0 0.0
  %8000 = vmatpush1.msra.mxu0 0.0
  %8001 = vmatprep.subr.mxu0 0.0
  %8002 = vmatpush1.msra.mxu0 0.0
  %8003 = vmatprep.subr.mxu0 0.0
  %8004 = vmatpush1.msra.mxu0 0.0
  %8005 = vmatprep.subr.mxu0 0.0
  %8006 = vmatpush1.msra.mxu0 0.0
  %8007 = vmatprep.subr.mxu0 0.0
  %8008 = vmatpush1.msra.mxu0 0.0
  %8009 = vmatprep.subr.mxu0 0.0
  %8010 = vmatpush1.msra.mxu0 0.0
  %8011 = vmatprep.subr.mxu0 0.0
  %8012 = vmatpush1.msra.mxu0 0.0
  %8013 = vmatprep.subr.mxu0 0.0
  %8014 = vmatpush1.msra.mxu0 0.0
  %8015 = vmatprep.mubr.f32.mxu0 0.0
  %8016 = vmatmul.mubr.f32.gmra.mrb[0].mxu0 %v7947
  %v8017 = vpop.f32.mrb[0].mxu0
  %v8018 = vadd.f32 %v7903, %v8017
  %v8019 = vpop.f32.mrb[0].mxu0
  %v8020 = vadd.f32 %v7907, %v8019
  %8021 = vmatprep.mubr.f32.mxu0 0.0
  %8022 = vmatmul.mubr.f32.gmra.mrb[0].mxu0 %v7949
  %v8023 = vpop.f32.mrb[0].mxu0
  %v8024 = vadd.f32 %v7903, %v8023
  %v8025 = vpop.f32.mrb[0].mxu0
  %v8026 = vadd.f32 %v7907, %v8025
  %8027 = vdwg.mxu0
  %v8028 = vld [vmem:[%s6] sm:$0xff]
  %v8029 = vld [vmem:[%s6 + $0x8] sm:$0xff]
  %v8030 = vld [vmem:[%s6 + $0x10] sm:$0xff]
  %v8031 = vld [vmem:[%s6 + $0x18] sm:$0xff]
  %v8032 = vld [vmem:[%s6 + $0x20] sm:$0xff]
  %v8033 = vld [vmem:[%s6 + $0x28] sm:$0xff]
  %v8034 = vld [vmem:[%s6 + $0x30] sm:$0xff]
  %v8035 = vld [vmem:[%s6 + $0x38] sm:$0xff]
  %v8044 = vunpack.c.l.b16 %v8028
  %v8045 = vunpack.c.h.b16 %v8028
  %v8046 = vunpack.c.l.b16 %v8029
  %v8047 = vunpack.c.h.b16 %v8029
  %v8048 = vunpack.c.l.b16 %v8030
  %v8049 = vunpack.c.h.b16 %v8030
  %v8050 = vunpack.c.l.b16 %v8031
  %v8051 = vunpack.c.h.b16 %v8031
  %v8052 = vunpack.c.l.b16 %v8032
  %v8053 = vunpack.c.h.b16 %v8032
  %v8054 = vunpack.c.l.b16 %v8033
  %v8055 = vunpack.c.h.b16 %v8033
  %v8056 = vunpack.c.l.b16 %v8034
  %v8057 = vunpack.c.h.b16 %v8034
  %v8058 = vunpack.c.l.b16 %v8035
  %v8059 = vunpack.c.h.b16 %v8035
  %v8060 = vpack.c.b16 %v8046, %v8044
  %v8061 = vpack.c.b16 %v8047, %v8045
  %v8062 = vpack.c.b16 %v8050, %v8048
  %v8063 = vpack.c.b16 %v8051, %v8049
  %v8064 = vpack.c.b16 %v8054, %v8052
  %v8065 = vpack.c.b16 %v8055, %v8053
  %v8066 = vpack.c.b16 %v8058, %v8056
  %v8067 = vpack.c.b16 %v8059, %v8057
  %v8077 = vsel %vm6761, 0, 0
  %8079 = vmatprep.subr.bf16.mxu0 %v8061
  %8080 = vmatpush1.bf16.msra.mxu0 %v8060
  %8081 = vmatprep.subr.bf16.mxu0 %v8063
  %8082 = vmatpush1.bf16.msra.mxu0 %v8062
  %8083 = vmatprep.subr.bf16.mxu0 %v8065
  %8084 = vmatpush1.bf16.msra.mxu0 %v8064
  %8085 = vmatprep.subr.bf16.mxu0 %v8067
  %8086 = vmatpush1.bf16.msra.mxu0 %v8066
  %8087 = vmatprep.subr.bf16.mxu0 0
  %8088 = vmatpush1.bf16.msra.mxu0 0
  %8089 = vmatprep.subr.bf16.mxu0 0
  %8090 = vmatpush1.bf16.msra.mxu0 0
  %8091 = vmatprep.subr.bf16.mxu0 0
  %8092 = vmatpush1.bf16.msra.mxu0 0
  %8093 = vmatprep.subr.bf16.mxu0 0
  %8094 = vmatpush1.bf16.msra.mxu0 0
  %8095 = vmatprep.subr.bf16.mxu0 0
  %8096 = vmatpush1.bf16.msra.mxu0 0
  %8097 = vmatprep.subr.bf16.mxu0 0
  %8098 = vmatpush1.bf16.msra.mxu0 0
  %8099 = vmatprep.subr.bf16.mxu0 0
  %8100 = vmatpush1.bf16.msra.mxu0 0
  %8101 = vmatprep.subr.bf16.mxu0 0
  %8102 = vmatpush1.bf16.msra.mxu0 0
  %8103 = vmatprep.subr.bf16.mxu0 0
  %8104 = vmatpush1.bf16.msra.mxu0 0
  %8105 = vmatprep.subr.bf16.mxu0 0
  %8106 = vmatpush1.bf16.msra.mxu0 0
  %8107 = vmatprep.subr.bf16.mxu0 0
  %8108 = vmatpush1.bf16.msra.mxu0 0
  %8109 = vmatprep.subr.bf16.mxu0 0
  %8110 = vmatpush1.bf16.msra.mxu0 0
  %8111 = vmatprep.mubr.bf16.mxu0 0
  %8112 = vmatmul.mubr.bf16.gmra.mrb[0].mxu0 %v8077
  %v8113 = vpop.f32.mrb[0].mxu0
  %v8114 = vadd.f32 0.0, %v8113
  %v8115 = vpop.f32.mrb[0].mxu0
  %v8116 = vadd.f32 0.0, %v8115
  %v8117 = vpop.f32.mrb[0].mxu0
  %v8118 = vpop.f32.mrb[0].mxu0
  %8119 = vdwg.mxu0
  %v8120 = vadd.f32 %v8018, %v8114
  %v8121 = vadd.f32 %v8020, %v8116
  %v8122 = vxor.u32 %v8120, 2147483648
  %v8123 = vmul.f32 %v8122, 1.442695
  %v8124 = vpow.pop %v8123
  %v8125 = vadd.f32 %v8124, 1.0
  %v8126 = vrcp.pop %v8125
  %v8127 = vmul.f32 1.0, %v8126
  %v8128 = vtanh.pop %v8121
  %v8129 = vxor.u32 %v8121, 2147483648
  %v8130 = vmul.f32 %v8129, 1.442695
  %v8131 = vpow.pop %v8130
  %v8132 = vadd.f32 %v8131, 1.0
  %v8133 = vrcp.pop %v8132
  %v8134 = vmul.f32 1.0, %v8133
  %v8135 = vmul.f32 %v8127, 0.0
  %v8136 = vmul.f32 %v8127, %v8128
  %8138 = vrot.lane.b32.xlu0 %v8136, 64
  %v8139 = vpop.permute.xlu0 %8138
  %v8141 = vadd.f32 %v8135, %v8139
  %v8142 = vtanh.pop %v8141
  %v8143 = vmul.f32 %v8134, %v8142
  %v8144 = vpack.c.bf16 %v8143, %v8143
  %8146 = vrot.lane.b32.xlu0 %v8144, 64
  %v8147 = vpop.permute.xlu0 %8146
  %v8149 = vsel %vm6761, %v8147, 0
  %8151 = vmatprep.subr.bf16.mxu0 %v8061
  %8152 = vmatpush1.bf16.msra.mxu0 %v8060
  %8153 = vmatprep.subr.bf16.mxu0 %v8063
  %8154 = vmatpush1.bf16.msra.mxu0 %v8062
  %8155 = vmatprep.subr.bf16.mxu0 %v8065
  %8156 = vmatpush1.bf16.msra.mxu0 %v8064
  %8157 = vmatprep.subr.bf16.mxu0 %v8067
  %8158 = vmatpush1.bf16.msra.mxu0 %v8066
  %8159 = vmatprep.subr.bf16.mxu0 0
  %8160 = vmatpush1.bf16.msra.mxu0 0
  %8161 = vmatprep.subr.bf16.mxu0 0
  %8162 = vmatpush1.bf16.msra.mxu0 0
  %8163 = vmatprep.subr.bf16.mxu0 0
  %8164 = vmatpush1.bf16.msra.mxu0 0
  %8165 = vmatprep.subr.bf16.mxu0 0
  %8166 = vmatpush1.bf16.msra.mxu0 0
  %8167 = vmatprep.subr.bf16.mxu0 0
  %8168 = vmatpush1.bf16.msra.mxu0 0
  %8169 = vmatprep.subr.bf16.mxu0 0
  %8170 = vmatpush1.bf16.msra.mxu0 0
  %8171 = vmatprep.subr.bf16.mxu0 0
  %8172 = vmatpush1.bf16.msra.mxu0 0
  %8173 = vmatprep.subr.bf16.mxu0 0
  %8174 = vmatpush1.bf16.msra.mxu0 0
  %8175 = vmatprep.subr.bf16.mxu0 0
  %8176 = vmatpush1.bf16.msra.mxu0 0
  %8177 = vmatprep.subr.bf16.mxu0 0
  %8178 = vmatpush1.bf16.msra.mxu0 0
  %8179 = vmatprep.subr.bf16.mxu0 0
  %8180 = vmatpush1.bf16.msra.mxu0 0
  %8181 = vmatprep.subr.bf16.mxu0 0
  %8182 = vmatpush1.bf16.msra.mxu0 0
  %8183 = vmatprep.mubr.bf16.mxu0 0
  %8184 = vmatmul.mubr.bf16.gmra.mrb[0].mxu0 %v8149
  %v8185 = vpop.f32.mrb[0].mxu0
  %v8186 = vadd.f32 0.0, %v8185
  %v8187 = vpop.f32.mrb[0].mxu0
  %v8188 = vadd.f32 0.0, %v8187
  %v8189 = vpop.f32.mrb[0].mxu0
  %v8190 = vpop.f32.mrb[0].mxu0
  %8191 = vdwg.mxu0
  %v8194 = vrot.slane %v8186, 6
  %v8195 = vrot.slane %v8188, 6
  %v8198 = vadd.f32 %v8018, %v8194
  %v8199 = vadd.f32 %v8020, %v8195
  %v8200 = vxor.u32 %v8198, 2147483648
  %v8201 = vmul.f32 %v8200, 1.442695
  %v8202 = vpow.pop %v8201
  %v8203 = vadd.f32 %v8202, 1.0
  %v8204 = vrcp.pop %v8203
  %v8205 = vmul.f32 1.0, %v8204
  %v8206 = vtanh.pop %v8199
  %v8207 = vxor.u32 %v8199, 2147483648
  %v8208 = vmul.f32 %v8207, 1.442695
  %v8209 = vpow.pop %v8208
  %v8210 = vadd.f32 %v8209, 1.0
  %v8211 = vrcp.pop %v8210
  %v8212 = vmul.f32 1.0, %v8211
  %v8214 = vrot.slane %v8141, 6
  %v8216 = vmul.f32 %v8205, %v8214
  %v8217 = vmul.f32 %v8205, %v8206
  %8219 = vrot.lane.b32.xlu0 %v8217, 64
  %v8220 = vpop.permute.xlu0 %8219
  %v8222 = vadd.f32 %v8216, %v8220
  %v8223 = vtanh.pop %v8222
  %v8224 = vmul.f32 %v8212, %v8223
  %v8225 = vpack.c.bf16 %v8224, %v8224
  %v8227 = vrot.slane %v8225, 1
  %8228 = vrot.lane.b32.xlu0 %v8227, 64
  %v8229 = vpop.permute.xlu0 %8228
  %v8231 = vsel %vm6761, %v8229, 0
  %8233 = vmatprep.subr.bf16.mxu0 %v8061
  %8234 = vmatpush1.bf16.msra.mxu0 %v8060
  %8235 = vmatprep.subr.bf16.mxu0 %v8063
  %8236 = vmatpush1.bf16.msra.mxu0 %v8062
  %8237 = vmatprep.subr.bf16.mxu0 %v8065
  %8238 = vmatpush1.bf16.msra.mxu0 %v8064
  %8239 = vmatprep.subr.bf16.mxu0 %v8067
  %8240 = vmatpush1.bf16.msra.mxu0 %v8066
  %8241 = vmatprep.subr.bf16.mxu0 0
  %8242 = vmatpush1.bf16.msra.mxu0 0
  %8243 = vmatprep.subr.bf16.mxu0 0
  %8244 = vmatpush1.bf16.msra.mxu0 0
  %8245 = vmatprep.subr.bf16.mxu0 0
  %8246 = vmatpush1.bf16.msra.mxu0 0
  %8247 = vmatprep.subr.bf16.mxu0 0
  %8248 = vmatpush1.bf16.msra.mxu0 0
  %8249 = vmatprep.subr.bf16.mxu0 0
  %8250 = vmatpush1.bf16.msra.mxu0 0
  %8251 = vmatprep.subr.bf16.mxu0 0
  %8252 = vmatpush1.bf16.msra.mxu0 0
  %8253 = vmatprep.subr.bf16.mxu0 0
  %8254 = vmatpush1.bf16.msra.mxu0 0
  %8255 = vmatprep.subr.bf16.mxu0 0
  %8256 = vmatpush1.bf16.msra.mxu0 0
  %8257 = vmatprep.subr.bf16.mxu0 0
  %8258 = vmatpush1.bf16.msra.mxu0 0
  %8259 = vmatprep.subr.bf16.mxu0 0
  %8260 = vmatpush1.bf16.msra.mxu0 0
  %8261 = vmatprep.subr.bf16.mxu0 0
  %8262 = vmatpush1.bf16.msra.mxu0 0
  %8263 = vmatprep.subr.bf16.mxu0 0
  %8264 = vmatpush1.bf16.msra.mxu0 0
  %8265 = vmatprep.mubr.bf16.mxu0 0
  %8266 = vmatmul.mubr.bf16.gmra.mrb[0].mxu0 %v8231
  %v8267 = vpop.f32.mrb[0].mxu0
  %v8268 = vadd.f32 0.0, %v8267
  %v8269 = vpop.f32.mrb[0].mxu0
  %v8270 = vadd.f32 0.0, %v8269
  %v8271 = vpop.f32.mrb[0].mxu0
  %v8272 = vpop.f32.mrb[0].mxu0
  %8273 = vdwg.mxu0
  %v8276 = vrot.slane %v8268, 4
  %v8277 = vrot.slane %v8270, 4
  %v8280 = vadd.f32 %v8018, %v8276
  %v8281 = vadd.f32 %v8020, %v8277
  %v8282 = vxor.u32 %v8280, 2147483648
  %v8283 = vmul.f32 %v8282, 1.442695
  %v8284 = vpow.pop %v8283
  %v8285 = vadd.f32 %v8284, 1.0
  %v8286 = vrcp.pop %v8285
  %v8287 = vmul.f32 1.0, %v8286
  %v8288 = vtanh.pop %v8281
  %v8289 = vxor.u32 %v8281, 2147483648
  %v8290 = vmul.f32 %v8289, 1.442695
  %v8291 = vpow.pop %v8290
  %v8292 = vadd.f32 %v8291, 1.0
  %v8293 = vrcp.pop %v8292
  %v8294 = vmul.f32 1.0, %v8293
  %v8296 = vrot.slane %v8222, 6
  %v8298 = vmul.f32 %v8287, %v8296
  %v8299 = vmul.f32 %v8287, %v8288
  %8301 = vrot.lane.b32.xlu0 %v8299, 64
  %v8302 = vpop.permute.xlu0 %8301
  %v8304 = vadd.f32 %v8298, %v8302
  %v8305 = vtanh.pop %v8304
  %v8306 = vmul.f32 %v8294, %v8305
  %v8307 = vpack.c.bf16 %v8306, %v8306
  %v8309 = vrot.slane %v8307, 2
  %8310 = vrot.lane.b32.xlu0 %v8309, 64
  %v8311 = vpop.permute.xlu0 %8310
  %v8313 = vsel %vm6761, %v8311, 0
  %8315 = vmatprep.subr.bf16.mxu0 %v8061
  %8316 = vmatpush1.bf16.msra.mxu0 %v8060
  %8317 = vmatprep.subr.bf16.mxu0 %v8063
  %8318 = vmatpush1.bf16.msra.mxu0 %v8062
  %8319 = vmatprep.subr.bf16.mxu0 %v8065
  %8320 = vmatpush1.bf16.msra.mxu0 %v8064
  %8321 = vmatprep.subr.bf16.mxu0 %v8067
  %8322 = vmatpush1.bf16.msra.mxu0 %v8066
  %8323 = vmatprep.subr.bf16.mxu0 0
  %8324 = vmatpush1.bf16.msra.mxu0 0
  %8325 = vmatprep.subr.bf16.mxu0 0
  %8326 = vmatpush1.bf16.msra.mxu0 0
  %8327 = vmatprep.subr.bf16.mxu0 0
  %8328 = vmatpush1.bf16.msra.mxu0 0
  %8329 = vmatprep.subr.bf16.mxu0 0
  %8330 = vmatpush1.bf16.msra.mxu0 0
  %8331 = vmatprep.subr.bf16.mxu0 0
  %8332 = vmatpush1.bf16.msra.mxu0 0
  %8333 = vmatprep.subr.bf16.mxu0 0
  %8334 = vmatpush1.bf16.msra.mxu0 0
  %8335 = vmatprep.subr.bf16.mxu0 0
  %8336 = vmatpush1.bf16.msra.mxu0 0
  %8337 = vmatprep.subr.bf16.mxu0 0
  %8338 = vmatpush1.bf16.msra.mxu0 0
  %8339 = vmatprep.subr.bf16.mxu0 0
  %8340 = vmatpush1.bf16.msra.mxu0 0
  %8341 = vmatprep.subr.bf16.mxu0 0
  %8342 = vmatpush1.bf16.msra.mxu0 0
  %8343 = vmatprep.subr.bf16.mxu0 0
  %8344 = vmatpush1.bf16.msra.mxu0 0
  %8345 = vmatprep.subr.bf16.mxu0 0
  %8346 = vmatpush1.bf16.msra.mxu0 0
  %8347 = vmatprep.mubr.bf16.mxu0 0
  %8348 = vmatmul.mubr.bf16.gmra.mrb[0].mxu0 %v8313
  %v8349 = vpop.f32.mrb[0].mxu0
  %v8350 = vadd.f32 0.0, %v8349
  %v8351 = vpop.f32.mrb[0].mxu0
  %v8352 = vadd.f32 0.0, %v8351
  %v8353 = vpop.f32.mrb[0].mxu0
  %v8354 = vpop.f32.mrb[0].mxu0
  %8355 = vdwg.mxu0
  %v8358 = vrot.slane %v8350, 2
  %v8359 = vrot.slane %v8352, 2
  %v8362 = vadd.f32 %v8018, %v8358
  %v8363 = vadd.f32 %v8020, %v8359
  %v8364 = vxor.u32 %v8362, 2147483648
  %v8365 = vmul.f32 %v8364, 1.442695
  %v8366 = vpow.pop %v8365
  %v8367 = vadd.f32 %v8366, 1.0
  %v8368 = vrcp.pop %v8367
  %v8369 = vmul.f32 1.0, %v8368
  %v8370 = vtanh.pop %v8363
  %v8371 = vxor.u32 %v8363, 2147483648
  %v8372 = vmul.f32 %v8371, 1.442695
  %v8373 = vpow.pop %v8372
  %v8374 = vadd.f32 %v8373, 1.0
  %v8375 = vrcp.pop %v8374
  %v8376 = vmul.f32 1.0, %v8375
  %v8378 = vrot.slane %v8304, 6
  %v8380 = vmul.f32 %v8369, %v8378
  %v8381 = vmul.f32 %v8369, %v8370
  %8383 = vrot.lane.b32.xlu0 %v8381, 64
  %v8384 = vpop.permute.xlu0 %8383
  %v8386 = vadd.f32 %v8380, %v8384
  %v8387 = vtanh.pop %v8386
  %v8388 = vmul.f32 %v8376, %v8387
  %v8389 = vpack.c.bf16 %v8388, %v8388
  %v8391 = vrot.slane %v8389, 3
  %8392 = vrot.lane.b32.xlu0 %v8391, 64
  %v8393 = vpop.permute.xlu0 %8392
  %v8395 = vsel %vm6761, %v8393, 0
  %8397 = vmatprep.subr.bf16.mxu0 %v8061
  %8398 = vmatpush1.bf16.msra.mxu0 %v8060
  %8399 = vmatprep.subr.bf16.mxu0 %v8063
  %8400 = vmatpush1.bf16.msra.mxu0 %v8062
  %8401 = vmatprep.subr.bf16.mxu0 %v8065
  %8402 = vmatpush1.bf16.msra.mxu0 %v8064
  %8403 = vmatprep.subr.bf16.mxu0 %v8067
  %8404 = vmatpush1.bf16.msra.mxu0 %v8066
  %8405 = vmatprep.subr.bf16.mxu0 0
  %8406 = vmatpush1.bf16.msra.mxu0 0
  %8407 = vmatprep.subr.bf16.mxu0 0
  %8408 = vmatpush1.bf16.msra.mxu0 0
  %8409 = vmatprep.subr.bf16.mxu0 0
  %8410 = vmatpush1.bf16.msra.mxu0 0
  %8411 = vmatprep.subr.bf16.mxu0 0
  %8412 = vmatpush1.bf16.msra.mxu0 0
  %8413 = vmatprep.subr.bf16.mxu0 0
  %8414 = vmatpush1.bf16.msra.mxu0 0
  %8415 = vmatprep.subr.bf16.mxu0 0
  %8416 = vmatpush1.bf16.msra.mxu0 0
  %8417 = vmatprep.subr.bf16.mxu0 0
  %8418 = vmatpush1.bf16.msra.mxu0 0
  %8419 = vmatprep.subr.bf16.mxu0 0
  %8420 = vmatpush1.bf16.msra.mxu0 0
  %8421 = vmatprep.subr.bf16.mxu0 0
  %8422 = vmatpush1.bf16.msra.mxu0 0
  %8423 = vmatprep.subr.bf16.mxu0 0
  %8424 = vmatpush1.bf16.msra.mxu0 0
  %8425 = vmatprep.subr.bf16.mxu0 0
  %8426 = vmatpush1.bf16.msra.mxu0 0
  %8427 = vmatprep.subr.bf16.mxu0 0
  %8428 = vmatpush1.bf16.msra.mxu0 0
  %8429 = vmatprep.mubr.bf16.mxu0 0
  %8430 = vmatmul.mubr.bf16.gmra.mrb[0].mxu0 %v8395
  %v8431 = vpop.f32.mrb[0].mxu0
  %v8432 = vadd.f32 0.0, %v8431
  %v8433 = vpop.f32.mrb[0].mxu0
  %v8434 = vadd.f32 0.0, %v8433
  %v8435 = vpop.f32.mrb[0].mxu0
  %v8436 = vpop.f32.mrb[0].mxu0
  %8437 = vdwg.mxu0
  %v8438 = vadd.f32 %v8024, %v8432
  %v8439 = vadd.f32 %v8026, %v8434
  %v8440 = vxor.u32 %v8438, 2147483648
  %v8441 = vmul.f32 %v8440, 1.442695
  %v8442 = vpow.pop %v8441
  %v8443 = vadd.f32 %v8442, 1.0
  %v8444 = vrcp.pop %v8443
  %v8445 = vmul.f32 1.0, %v8444
  %v8446 = vtanh.pop %v8439
  %v8447 = vxor.u32 %v8439, 2147483648
  %v8448 = vmul.f32 %v8447, 1.442695
  %v8449 = vpow.pop %v8448
  %v8450 = vadd.f32 %v8449, 1.0
  %v8451 = vrcp.pop %v8450
  %v8452 = vmul.f32 1.0, %v8451
  %v8454 = vrot.slane %v8386, 6
  %v8456 = vmul.f32 %v8445, %v8454
  %v8457 = vmul.f32 %v8445, %v8446
  %8459 = vrot.lane.b32.xlu0 %v8457, 64
  %v8460 = vpop.permute.xlu0 %8459
  %v8462 = vadd.f32 %v8456, %v8460
  %v8463 = vtanh.pop %v8462
  %v8464 = vmul.f32 %v8452, %v8463
  %v8465 = vpack.c.bf16 %v8464, %v8464
  %8467 = vrot.lane.b32.xlu0 %v8465, 64
  %v8468 = vpop.permute.xlu0 %8467
  %v8470 = vsel %vm6761, %v8468, 0
  %8472 = vmatprep.subr.bf16.mxu0 %v8061
  %8473 = vmatpush1.bf16.msra.mxu0 %v8060
  %8474 = vmatprep.subr.bf16.mxu0 %v8063
  %8475 = vmatpush1.bf16.msra.mxu0 %v8062
  %8476 = vmatprep.subr.bf16.mxu0 %v8065
  %8477 = vmatpush1.bf16.msra.mxu0 %v8064
  %8478 = vmatprep.subr.bf16.mxu0 %v8067
  %8479 = vmatpush1.bf16.msra.mxu0 %v8066
  %8480 = vmatprep.subr.bf16.mxu0 0
  %8481 = vmatpush1.bf16.msra.mxu0 0
  %8482 = vmatprep.subr.bf16.mxu0 0
  %8483 = vmatpush1.bf16.msra.mxu0 0
  %8484 = vmatprep.subr.bf16.mxu0 0
  %8485 = vmatpush1.bf16.msra.mxu0 0
  %8486 = vmatprep.subr.bf16.mxu0 0
  %8487 = vmatpush1.bf16.msra.mxu0 0
  %8488 = vmatprep.subr.bf16.mxu0 0
  %8489 = vmatpush1.bf16.msra.mxu0 0
  %8490 = vmatprep.subr.bf16.mxu0 0
  %8491 = vmatpush1.bf16.msra.mxu0 0
  %8492 = vmatprep.subr.bf16.mxu0 0
  %8493 = vmatpush1.bf16.msra.mxu0 0
  %8494 = vmatprep.subr.bf16.mxu0 0
  %8495 = vmatpush1.bf16.msra.mxu0 0
  %8496 = vmatprep.subr.bf16.mxu0 0
  %8497 = vmatpush1.bf16.msra.mxu0 0
  %8498 = vmatprep.subr.bf16.mxu0 0
  %8499 = vmatpush1.bf16.msra.mxu0 0
  %8500 = vmatprep.subr.bf16.mxu0 0
  %8501 = vmatpush1.bf16.msra.mxu0 0
  %8502 = vmatprep.subr.bf16.mxu0 0
  %8503 = vmatpush1.bf16.msra.mxu0 0
  %8504 = vmatprep.mubr.bf16.mxu0 0
  %8505 = vmatmul.mubr.bf16.gmra.mrb[0].mxu0 %v8470
  %v8506 = vpop.f32.mrb[0].mxu0
  %v8507 = vadd.f32 0.0, %v8506
  %v8508 = vpop.f32.mrb[0].mxu0
  %v8509 = vadd.f32 0.0, %v8508
  %v8510 = vpop.f32.mrb[0].mxu0
  %v8511 = vpop.f32.mrb[0].mxu0
  %8512 = vdwg.mxu0
  %v8515 = vrot.slane %v8507, 6
  %v8516 = vrot.slane %v8509, 6
  %v8519 = vadd.f32 %v8024, %v8515
  %v8520 = vadd.f32 %v8026, %v8516
  %v8521 = vxor.u32 %v8519, 2147483648
  %v8522 = vmul.f32 %v8521, 1.442695
  %v8523 = vpow.pop %v8522
  %v8524 = vadd.f32 %v8523, 1.0
  %v8525 = vrcp.pop %v8524
  %v8526 = vmul.f32 1.0, %v8525
  %v8527 = vtanh.pop %v8520
  %v8528 = vxor.u32 %v8520, 2147483648
  %v8529 = vmul.f32 %v8528, 1.442695
  %v8530 = vpow.pop %v8529
  %v8531 = vadd.f32 %v8530, 1.0
  %v8532 = vrcp.pop %v8531
  %v8533 = vmul.f32 1.0, %v8532
  %v8535 = vrot.slane %v8462, 6
  %v8537 = vmul.f32 %v8526, %v8535
  %v8538 = vmul.f32 %v8526, %v8527
  %8540 = vrot.lane.b32.xlu0 %v8538, 64
  %v8541 = vpop.permute.xlu0 %8540
  %v8543 = vadd.f32 %v8537, %v8541
  %v8544 = vtanh.pop %v8543
  %v8545 = vmul.f32 %v8533, %v8544
  %v8546 = vpack.c.bf16 %v8545, %v8545
  %v8548 = vrot.slane %v8546, 1
  %8549 = vrot.lane.b32.xlu0 %v8548, 64
  %v8550 = vpop.permute.xlu0 %8549
  %v8552 = vsel %vm6761, %v8550, 0
  %8554 = vmatprep.subr.bf16.mxu0 %v8061
  %8555 = vmatpush1.bf16.msra.mxu0 %v8060
  %8556 = vmatprep.subr.bf16.mxu0 %v8063
  %8557 = vmatpush1.bf16.msra.mxu0 %v8062
  %8558 = vmatprep.subr.bf16.mxu0 %v8065
  %8559 = vmatpush1.bf16.msra.mxu0 %v8064
  %8560 = vmatprep.subr.bf16.mxu0 %v8067
  %8561 = vmatpush1.bf16.msra.mxu0 %v8066
  %8562 = vmatprep.subr.bf16.mxu0 0
  %8563 = vmatpush1.bf16.msra.mxu0 0
  %8564 = vmatprep.subr.bf16.mxu0 0
  %8565 = vmatpush1.bf16.msra.mxu0 0
  %8566 = vmatprep.subr.bf16.mxu0 0
  %8567 = vmatpush1.bf16.msra.mxu0 0
  %8568 = vmatprep.subr.bf16.mxu0 0
  %8569 = vmatpush1.bf16.msra.mxu0 0
  %8570 = vmatprep.subr.bf16.mxu0 0
  %8571 = vmatpush1.bf16.msra.mxu0 0
  %8572 = vmatprep.subr.bf16.mxu0 0
  %8573 = vmatpush1.bf16.msra.mxu0 0
  %8574 = vmatprep.subr.bf16.mxu0 0
  %8575 = vmatpush1.bf16.msra.mxu0 0
  %8576 = vmatprep.subr.bf16.mxu0 0
  %8577 = vmatpush1.bf16.msra.mxu0 0
  %8578 = vmatprep.subr.bf16.mxu0 0
  %8579 = vmatpush1.bf16.msra.mxu0 0
  %8580 = vmatprep.subr.bf16.mxu0 0
  %8581 = vmatpush1.bf16.msra.mxu0 0
  %8582 = vmatprep.subr.bf16.mxu0 0
  %8583 = vmatpush1.bf16.msra.mxu0 0
  %8584 = vmatprep.subr.bf16.mxu0 0
  %8585 = vmatpush1.bf16.msra.mxu0 0
  %8586 = vmatprep.mubr.bf16.mxu0 0
  %8587 = vmatmul.mubr.bf16.gmra.mrb[0].mxu0 %v8552
  %v8588 = vpop.f32.mrb[0].mxu0
  %v8589 = vadd.f32 0.0, %v8588
  %v8590 = vpop.f32.mrb[0].mxu0
  %v8591 = vadd.f32 0.0, %v8590
  %v8592 = vpop.f32.mrb[0].mxu0
  %v8593 = vpop.f32.mrb[0].mxu0
  %8594 = vdwg.mxu0
  %v8597 = vrot.slane %v8589, 4
  %v8598 = vrot.slane %v8591, 4
  %v8601 = vadd.f32 %v8024, %v8597
  %v8602 = vadd.f32 %v8026, %v8598
  %v8603 = vxor.u32 %v8601, 2147483648
  %v8604 = vmul.f32 %v8603, 1.442695
  %v8605 = vpow.pop %v8604
  %v8606 = vadd.f32 %v8605, 1.0
  %v8607 = vrcp.pop %v8606
  %v8608 = vmul.f32 1.0, %v8607
  %v8609 = vtanh.pop %v8602
  %v8610 = vxor.u32 %v8602, 2147483648
  %v8611 = vmul.f32 %v8610, 1.442695
  %v8612 = vpow.pop %v8611
  %v8613 = vadd.f32 %v8612, 1.0
  %v8614 = vrcp.pop %v8613
  %v8615 = vmul.f32 1.0, %v8614
  %v8617 = vrot.slane %v8543, 6
  %v8619 = vmul.f32 %v8608, %v8617
  %v8620 = vmul.f32 %v8608, %v8609
  %8622 = vrot.lane.b32.xlu0 %v8620, 64
  %v8623 = vpop.permute.xlu0 %8622
  %v8625 = vadd.f32 %v8619, %v8623
  %v8626 = vtanh.pop %v8625
  %v8627 = vmul.f32 %v8615, %v8626
  %v8628 = vpack.c.bf16 %v8627, %v8627
  %v8630 = vrot.slane %v8628, 2
  %8631 = vrot.lane.b32.xlu0 %v8630, 64
  %v8632 = vpop.permute.xlu0 %8631
  %v8634 = vsel %vm6761, %v8632, 0
  %8636 = vmatprep.subr.bf16.mxu0 %v8061
  %8637 = vmatpush1.bf16.msra.mxu0 %v8060
  %8638 = vmatprep.subr.bf16.mxu0 %v8063
  %8639 = vmatpush1.bf16.msra.mxu0 %v8062
  %8640 = vmatprep.subr.bf16.mxu0 %v8065
  %8641 = vmatpush1.bf16.msra.mxu0 %v8064
  %8642 = vmatprep.subr.bf16.mxu0 %v8067
  %8643 = vmatpush1.bf16.msra.mxu0 %v8066
  %8644 = vmatprep.subr.bf16.mxu0 0
  %8645 = vmatpush1.bf16.msra.mxu0 0
  %8646 = vmatprep.subr.bf16.mxu0 0
  %8647 = vmatpush1.bf16.msra.mxu0 0
  %8648 = vmatprep.subr.bf16.mxu0 0
  %8649 = vmatpush1.bf16.msra.mxu0 0
  %8650 = vmatprep.subr.bf16.mxu0 0
  %8651 = vmatpush1.bf16.msra.mxu0 0
  %8652 = vmatprep.subr.bf16.mxu0 0
  %8653 = vmatpush1.bf16.msra.mxu0 0
  %8654 = vmatprep.subr.bf16.mxu0 0
  %8655 = vmatpush1.bf16.msra.mxu0 0
  %8656 = vmatprep.subr.bf16.mxu0 0
  %8657 = vmatpush1.bf16.msra.mxu0 0
  %8658 = vmatprep.subr.bf16.mxu0 0
  %8659 = vmatpush1.bf16.msra.mxu0 0
  %8660 = vmatprep.subr.bf16.mxu0 0
  %8661 = vmatpush1.bf16.msra.mxu0 0
  %8662 = vmatprep.subr.bf16.mxu0 0
  %8663 = vmatpush1.bf16.msra.mxu0 0
  %8664 = vmatprep.subr.bf16.mxu0 0
  %8665 = vmatpush1.bf16.msra.mxu0 0
  %8666 = vmatprep.subr.bf16.mxu0 0
  %8667 = vmatpush1.bf16.msra.mxu0 0
  %8668 = vmatprep.mubr.bf16.mxu0 0
  %8669 = vmatmul.mubr.bf16.gmra.mrb[0].mxu0 %v8634
  %v8670 = vpop.f32.mrb[0].mxu0
  %v8671 = vadd.f32 0.0, %v8670
  %v8672 = vpop.f32.mrb[0].mxu0
  %v8673 = vadd.f32 0.0, %v8672
  %v8674 = vpop.f32.mrb[0].mxu0
  %v8675 = vpop.f32.mrb[0].mxu0
  %8676 = vdwg.mxu0
  %v8679 = vrot.slane %v8671, 2
  %v8680 = vrot.slane %v8673, 2
  %v8683 = vadd.f32 %v8024, %v8679
  %v8684 = vadd.f32 %v8026, %v8680
  %v8685 = vxor.u32 %v8683, 2147483648
  %v8686 = vmul.f32 %v8685, 1.442695
  %v8687 = vpow.pop %v8686
  %v8688 = vadd.f32 %v8687, 1.0
  %v8689 = vrcp.pop %v8688
  %v8690 = vmul.f32 1.0, %v8689
  %v8691 = vtanh.pop %v8684
  %v8692 = vxor.u32 %v8684, 2147483648
  %v8693 = vmul.f32 %v8692, 1.442695
  %v8694 = vpow.pop %v8693
  %v8695 = vadd.f32 %v8694, 1.0
  %v8696 = vrcp.pop %v8695
  %v8697 = vmul.f32 1.0, %v8696
  %v8699 = vrot.slane %v8625, 6
  %v8701 = vmul.f32 %v8690, %v8699
  %v8702 = vmul.f32 %v8690, %v8691
  %8704 = vrot.lane.b32.xlu0 %v8702, 64
  %v8705 = vpop.permute.xlu0 %8704
  %v8707 = vadd.f32 %v8701, %v8705
  %v8708 = vtanh.pop %v8707
  %v8709 = vmul.f32 %v8697, %v8708
  %vm8710 = vcmask 1041408
  %v8711 = vsel %vm8710, %v8143, %v8224
  %vm8712 = vcmask 1043456
  %v8713 = vsel %vm8712, %v8711, %v8306
  %v8714 = vsel %vm2612, %v8713, %v8388
  %v8715 = vsel %vm8710, %v8464, %v8545
  %v8716 = vsel %vm8712, %v8715, %v8627
  %v8717 = vsel %vm2612, %v8716, %v8709
  %v8718 = vld [vmem:[%s7] sm:$0xff]
  %v8719 = vld [vmem:[%s7 + $0x8] sm:$0xff]
  %8722 = vrot.lane.b32.xlu0 %v8718, 64
  %v8723 = vpop.permute.xlu0 %8722
  %8724 = vrot.lane.b32.xlu0 %v8719, 64
  %v8725 = vpop.permute.xlu0 %8724
  %v8728 = vmul.f32 %v8714, %v8723
  %v8729 = vmul.f32 %v8717, %v8725
  %8732 = vrot.lane.b32.xlu0 %v8728, 64
  %v8733 = vpop.permute.xlu0 %8732
  %8734 = vrot.lane.b32.xlu0 %v8729, 64
  %v8735 = vpop.permute.xlu0 %8734
  %v8738 = vsel %vm6761, %v8733, 0.0
  %8739 = vadd.xlane.f32.xlu0 %v8738
  %v8740 = vpop.xlane.xlu0 %8739
  %v8741 = vsel %vm6761, %v8735, 0.0
  %8742 = vadd.xlane.f32.xlu0 %v8741
  %v8743 = vpop.xlane.xlu0 %8742
  %v8744 = vrot.slane %v8740, 4
  %v8745 = vadd.f32 %v8740, %v8744
  %v8746 = vrot.slane %v8745, 2
  %v8747 = vadd.f32 %v8745, %v8746
  %v8748 = vrot.slane %v8747, 1
  %v8749 = vadd.f32 %v8747, %v8748
  %v8750 = vrot.slane %v8743, 4
  %v8751 = vadd.f32 %v8743, %v8750
  %v8752 = vrot.slane %v8751, 2
  %v8753 = vadd.f32 %v8751, %v8752
  %v8754 = vrot.slane %v8753, 1
  %v8755 = vadd.f32 %v8753, %v8754
  %vm8756 = vcmask 1040384
  %v8757 = vsel %vm8756, %v8749, %v8755
  %v8758 = vld [vmem:[#allocation2] sm:$0x1]
  %v8760 = vlaneseq
  %v8761 = vshrl.u32 %v8760, 7
  %v8762 = vsub.s32 0, %v8761
  %v8763 = vrot.slane %v8758, %v8762
  %v8765 = vadd.f32 %v8757, %v8763
  %vm8766 = vcmask 1024
  %8767 = vst.msk [vmem:[%s9] sm:$0x3] %vm8766, %v8765
  // Predicated region
  $region38: #{classifier_forward.1} parent=0 // pred_check
    _
  $region39: #{classifier_forward.1} parent=0 // pred_check_branch
    %8769 = sbr.rel (0) target = $region41
  $region40: #{classifier_forward.1} parent=0 // pred_region
    _
  $region41: #{classifier_forward.1} parent=0 // pred_fallthru
    _
  // Predicated region
  $region42: #{classifier_forward.1} parent=0 // pred_check
    _
  $region43: #{classifier_forward.1} parent=0 // pred_check_branch
    %8771 = sbr.rel (0) target = $region45
  $region44: #{classifier_forward.1} parent=0 // pred_region
    _
  $region45: #{classifier_forward.1} parent=0 // pred_fallthru
    _

</llo_original>
